<compile_context>
chip_gen: v6e
topology: v6e:2x2x1
jax: 0.10.0
libtpu: 0.0.40
codegen_flags: <defaults>
</compile_context>

<pallas_src>
import numpy as np

import jax
import jax.numpy as jnp
from jax.experimental import pallas as pl
from jax.experimental.pallas import tpu as pltpu  # noqa: F401  (TPU backend)


CHANNELS = [64, 128, 128, 256, 256, 256, 256, 256, 256, 256]


# ---------------------------------------------------------------------------
# Host / XLA glue (tiny): im2col of the *raw* mask + constant gather matrices
# ---------------------------------------------------------------------------
def _im2col(x_nhwc, ksize=3, stride=2, pad=1):
    N, H, W, C = x_nhwc.shape
    xp = jnp.pad(x_nhwc, ((0, 0), (pad, pad), (pad, pad), (0, 0)))
    Ho = (H + 2 * pad - ksize) // stride + 1
    Wo = (W + 2 * pad - ksize) // stride + 1
    cols = []
    for kh in range(ksize):
        for kw in range(ksize):
            patch = jax.lax.slice(
                xp,
                (0, kh, kw, 0),
                (N, kh + stride * (Ho - 1) + 1, kw + stride * (Wo - 1) + 1, C),
                (1, stride, stride, 1),
            )
            cols.append(patch)  # ordered kh, kw, cin  (matches HWIO reshape)
    cols = jnp.concatenate(cols, axis=-1)                  # (N, Ho, Wo, 9*C)
    return cols.reshape(N * Ho * Wo, ksize * ksize * C), (N, Ho, Wo)


def _gather_mats(N, H, W):
    """0/1 matrices (9, N*Ho*Wo, N*H*W) for a 3x3 / stride-2 / pad-1 conv.

    Row o of G[k] selects the input row that kernel-tap k reads for output
    position o; out-of-range taps (zero padding) give an all-zero row.
    Rows/cols are ordered (n, h, w), n-major — the same flattening used for
    all in-kernel activations.
    """
    Ho, Wo = H // 2, W // 2
    G = np.zeros((9, N * Ho * Wo, N * H * W), np.float32)
    for kh in range(3):
        for kw in range(3):
            k = kh * 3 + kw
            for n in range(N):
                for ho in range(Ho):
                    h = 2 * ho + kh - 1
                    if h < 0 or h >= H:
                        continue
                    for wo in range(Wo):
                        w = 2 * wo + kw - 1
                        if w < 0 or w >= W:
                            continue
                        G[k, (n * Ho + ho) * Wo + wo, (n * H + h) * W + w] = 1.0
    return G


# ---------------------------------------------------------------------------
# The single fused Pallas kernel
# ---------------------------------------------------------------------------
def _make_encoder_kernel(num_blocks):
    def kernel(*refs):
        f32 = jnp.float32
        bf16 = jnp.bfloat16

        # ---- conv1: pre-im2col'd, K lane-padded -> one MXU pass ------------
        cols1_ref, w1_ref, b1_ref = refs[0], refs[1], refs[2]
        a = jnp.dot(cols1_ref[...], w1_ref[...],
                    preferred_element_type=f32) + b1_ref[...]
        pos = 3

        # ---- conv2..convN: in-kernel im2col via 0/1 gather matmuls ---------
        for _ in range(num_blocks - 1):
            g_ref, w_ref, b_ref = refs[pos], refs[pos + 1], refs[pos + 2]
            pos += 3
            a_bf = a.astype(bf16)
            m_out = g_ref.shape[1]
            c_out = w_ref.shape[2]
            acc = jnp.zeros((m_out, c_out), f32)
            for k in range(9):
                # gather the rows this kernel tap reads (exact: G is 0/1)
                p = jnp.dot(g_ref[k], a_bf, preferred_element_type=f32)
                acc = acc + jnp.dot(p.astype(bf16), w_ref[k],
                                    preferred_element_type=f32)
            a = acc + b_ref[...]                    # (N, Cout_l)  float32

        # ---- image projection (folded in: no extra launch) -----------------
        img_ref, wimg_ref, bimg_ref = refs[pos], refs[pos + 1], refs[pos + 2]
        out_ref = refs[pos + 3]
        img = jnp.dot(img_ref[...], wimg_ref[...],
                      preferred_element_type=f32) + bimg_ref[...]

        # ---- lane-dense (N, 128) output slab: [img | mask | zero pad] ------
        iw, mw = img.shape[1], a.shape[1]
        out_ref[:, 0:iw] = img
        out_ref[:, iw:iw + mw] = a
        rem = out_ref.shape[1] - (iw + mw)
        if rem > 0:
            out_ref[:, iw + mw:] = jnp.zeros((a.shape[0], rem), f32)

    return kernel


# ---------------------------------------------------------------------------
# Parameters (deterministic, in-script) and the public forward
# ---------------------------------------------------------------------------
def init_encoder_params(key, num_blocks, mask_in_dim, mask_out_dim,
                        img_feat_dim, img_emb_dim):
    dims = [mask_in_dim] + CHANNELS[: num_blocks - 1] + [mask_out_dim]
    params = {"convs": []}
    for i in range(num_blocks):
        key, kw, kb = jax.random.split(key, 3)
        cin, cout = dims[i], dims[i + 1]
        w = jax.random.normal(kw, (3, 3, cin, cout), jnp.float32) / jnp.sqrt(9.0 * cin)
        b = 0.01 * jax.random.normal(kb, (cout,), jnp.float32)
        params["convs"].append((w, b))
    key, kw, _ = jax.random.split(key, 3)
    # TODO(synk): original uses a frozen pretrained CLIP image encoder
    # (clip.load); replaced by a deterministic linear projection stand-in.
    params["img_proj_w"] = jax.random.normal(
        kw, (img_feat_dim, img_emb_dim), jnp.float32) / jnp.sqrt(float(img_feat_dim))
    params["img_proj_b"] = jnp.zeros((img_emb_dim,), jnp.float32)
    return params


def encoder_forward(params, image, mask):
    """Fused Encoder.forward: returns (cat([img_emb, mask_emb], dim=1), None)."""
    # mask_norm_name == 'none' -> norm layers are identity (nn.Sequential()).
    # TODO(synk): 'batch'/'instance' norm variants not implemented (unused here).
    convs = params["convs"]
    num_blocks = len(convs)
    N, _, H, W = mask.shape
    bf16 = jnp.bfloat16

    # conv1 im2col on the raw mask (tiny), contraction dim padded to 128 lanes
    x_nhwc = jnp.transpose(mask.astype(jnp.float32), (0, 2, 3, 1))
    cols1, _ = _im2col(x_nhwc)                              # (N*Ho*Wo, 9*Cin)
    k1 = cols1.shape[1]
    k1p = ((k1 + 127) // 128) * 128
    cols1 = jnp.pad(cols1, ((0, 0), (0, k1p - k1))).astype(bf16)
    w1, b1 = convs[0]
    w1p = jnp.pad(w1.reshape(9 * w1.shape[2], w1.shape[3]),
                  ((0, k1p - k1), (0, 0))).astype(bf16)

    args = [cols1, w1p, b1.reshape(1, -1).astype(jnp.float32)]

    h, w = H // 2, W // 2                                   # input size of conv2
    for i in range(1, num_blocks):
        wi, bi = convs[i]
        G = _gather_mats(N, h, w)                           # exact 0/1 -> bf16 exact
        args += [jnp.asarray(G, bf16),
                 wi.reshape(9, wi.shape[2], wi.shape[3]).astype(bf16),
                 bi.reshape(1, -1).astype(jnp.float32)]
        h, w = h // 2, w // 2
    assert h == 1 and w == 1, "mask spatial size must be 2**num_blocks"

    img_flat = image.reshape(N, -1).astype(bf16)
    args += [img_flat,
             params["img_proj_w"].astype(bf16),
             params["img_proj_b"].reshape(1, -1).astype(jnp.float32)]

    img_dim = params["img_proj_w"].shape[1]
    mask_dim = convs[-1][0].shape[-1]
    out_w = ((img_dim + mask_dim + 127) // 128) * 128       # lane-dense HBM store

    out = pl.pallas_call(
        _make_encoder_kernel(num_blocks),
        out_shape=jax.ShapeDtypeStruct((N, out_w), jnp.float32),
    )(*args)

    # (N, 1x1 spatial) mask embedding == torch.squeeze for batch >= 2.
    y = out[:, : img_dim + mask_dim]
    return y, None


# ---------------------------------------------------------------------------
# Pure-JAX f32 references (correctness check of the fused bf16 Pallas path)
# ---------------------------------------------------------------------------
def ref_mask_embedding(params, mask_nchw):
    x = mask_nchw.astype(jnp.float32)
    for (w, b) in params["convs"]:
        x = jax.lax.conv_general_dilated(
            x, w, window_strides=(2, 2), padding=((1, 1), (1, 1)),
            dimension_numbers=("NCHW", "HWIO", "NCHW"))
        x = x + b[None, :, None, None]
    return jnp.squeeze(x)


def ref_image_embedding(params, image_nchw):
    flat = image_nchw.reshape(image_nchw.shape[0], -1).astype(jnp.float32)
    return flat @ params["img_proj_w"] + params["img_proj_b"]


if __name__ == "__main__":
    key = jax.random.PRNGKey(0)
    num_blocks = 4
    mask_in_dim, mask_out_dim = 1, 32
    batch = 2
    img_c, img_hw = 3, 32
    img_emb_dim = 64
    mask_hw = 16

    k_params, k_img, k_mask = jax.random.split(key, 3)
    params = init_encoder_params(k_params, num_blocks, mask_in_dim, mask_out_dim,
                                 img_c * img_hw * img_hw, img_emb_dim)
    image = jax.random.normal(k_img, (batch, img_c, img_hw, img_hw), jnp.float32)
    mask = jax.random.normal(k_mask, (batch, mask_in_dim, mask_hw, mask_hw),
                             jnp.float32)

    fwd = jax.jit(encoder_forward)
    y, aux = fwd(params, image, mask)
    y = jax.block_until_ready(y)
    assert y.shape == (batch, img_emb_dim + mask_out_dim), y.shape
    assert aux is None

    # Fused bf16 Pallas path vs f32 XLA references (loose tol for bf16 operands).
    m_ref = ref_mask_embedding(params, mask)
    i_ref = ref_image_embedding(params, image)
    assert jnp.allclose(y[:, img_emb_dim:], m_ref, atol=5e-2, rtol=5e-2)
    assert jnp.allclose(y[:, :img_emb_dim], i_ref, atol=5e-2, rtol=5e-2)

    print("KERNEL_OK")
</pallas_src>

<mosaic_0001>
module attributes {stable_mosaic.version = 11 : i64} {
  func.func @kernel(%arg0: memref<128x128xbf16, #tpu.memory_space<vmem>>, %arg1: memref<128x64xbf16, #tpu.memory_space<vmem>>, %arg2: memref<1x64xf32, #tpu.memory_space<vmem>>, %arg3: memref<9x32x128xbf16, #tpu.memory_space<vmem>>, %arg4: memref<9x64x128xbf16, #tpu.memory_space<vmem>>, %arg5: memref<1x128xf32, #tpu.memory_space<vmem>>, %arg6: memref<9x8x32xbf16, #tpu.memory_space<vmem>>, %arg7: memref<9x128x128xbf16, #tpu.memory_space<vmem>>, %arg8: memref<1x128xf32, #tpu.memory_space<vmem>>, %arg9: memref<9x2x8xbf16, #tpu.memory_space<vmem>>, %arg10: memref<9x128x32xbf16, #tpu.memory_space<vmem>>, %arg11: memref<1x32xf32, #tpu.memory_space<vmem>>, %arg12: memref<2x3072xbf16, #tpu.memory_space<vmem>>, %arg13: memref<3072x64xbf16, #tpu.memory_space<vmem>>, %arg14: memref<1x64xf32, #tpu.memory_space<vmem>>, %arg15: memref<2x128xf32, #tpu.memory_space<vmem>>) attributes {dimension_semantics = [], scalar_prefetch = 0 : i64, scratch_operands = 0 : i64, tpu.core_type = #tpu.core_type<tc>} {
    %c0 = arith.constant 0 : index
    %c0_0 = arith.constant 0 : index
    %0 = vector.load %arg0[%c0, %c0_0] : memref<128x128xbf16, #tpu.memory_space<vmem>>, vector<128x128xbf16>
    %c0_1 = arith.constant 0 : index
    %c0_2 = arith.constant 0 : index
    %1 = vector.load %arg1[%c0_1, %c0_2] : memref<128x64xbf16, #tpu.memory_space<vmem>>, vector<128x64xbf16>
    %cst = arith.constant dense<0.000000e+00> : vector<128x64xf32>
    %2 = tpu.matmul %0, %1, %cst {dimension_numbers = #tpu.dot_dimension_numbers<[1], [0], [0], [1], [0, 0, 1, 1], [], []>} : vector<128x128xbf16>, vector<128x64xbf16>, vector<128x64xf32> -> vector<128x64xf32>
    %c0_3 = arith.constant 0 : index
    %c0_4 = arith.constant 0 : index
    %3 = vector.load %arg2[%c0_3, %c0_4] : memref<1x64xf32, #tpu.memory_space<vmem>>, vector<1x64xf32>
    %4 = vector.broadcast %3 : vector<1x64xf32> to vector<128x64xf32>
    %5 = arith.addf %2, %4 : vector<128x64xf32>
    %6 = arith.truncf %5 : vector<128x64xf32> to vector<128x64xbf16>
    %cst_5 = arith.constant 0.000000e+00 : f32
    %7 = vector.broadcast %cst_5 : f32 to vector<32x128xf32>
    %c0_6 = arith.constant 0 : index
    %c0_7 = arith.constant 0 : index
    %c0_8 = arith.constant 0 : index
    %8 = vector.load %arg3[%c0_6, %c0_7, %c0_8] : memref<9x32x128xbf16, #tpu.memory_space<vmem>>, vector<1x32x128xbf16>
    %9 = vector.shape_cast %8 : vector<1x32x128xbf16> to vector<32x128xbf16>
    %cst_9 = arith.constant dense<0.000000e+00> : vector<32x64xf32>
    %10 = tpu.matmul %9, %6, %cst_9 {dimension_numbers = #tpu.dot_dimension_numbers<[1], [0], [0], [1], [0, 0, 1, 1], [], []>} : vector<32x128xbf16>, vector<128x64xbf16>, vector<32x64xf32> -> vector<32x64xf32>
    %11 = arith.truncf %10 : vector<32x64xf32> to vector<32x64xbf16>
    %c0_10 = arith.constant 0 : index
    %c0_11 = arith.constant 0 : index
    %c0_12 = arith.constant 0 : index
    %12 = vector.load %arg4[%c0_10, %c0_11, %c0_12] : memref<9x64x128xbf16, #tpu.memory_space<vmem>>, vector<1x64x128xbf16>
    %13 = vector.shape_cast %12 : vector<1x64x128xbf16> to vector<64x128xbf16>
    %cst_13 = arith.constant dense<0.000000e+00> : vector<32x128xf32>
    %14 = tpu.matmul %11, %13, %cst_13 {dimension_numbers = #tpu.dot_dimension_numbers<[1], [0], [0], [1], [0, 0, 1, 1], [], []>} : vector<32x64xbf16>, vector<64x128xbf16>, vector<32x128xf32> -> vector<32x128xf32>
    %15 = arith.addf %7, %14 : vector<32x128xf32>
    %c1 = arith.constant 1 : index
    %c0_14 = arith.constant 0 : index
    %c0_15 = arith.constant 0 : index
    %16 = vector.load %arg3[%c1, %c0_14, %c0_15] : memref<9x32x128xbf16, #tpu.memory_space<vmem>>, vector<1x32x128xbf16>
    %17 = vector.shape_cast %16 : vector<1x32x128xbf16> to vector<32x128xbf16>
    %cst_16 = arith.constant dense<0.000000e+00> : vector<32x64xf32>
    %18 = tpu.matmul %17, %6, %cst_16 {dimension_numbers = #tpu.dot_dimension_numbers<[1], [0], [0], [1], [0, 0, 1, 1], [], []>} : vector<32x128xbf16>, vector<128x64xbf16>, vector<32x64xf32> -> vector<32x64xf32>
    %19 = arith.truncf %18 : vector<32x64xf32> to vector<32x64xbf16>
    %c1_17 = arith.constant 1 : index
    %c0_18 = arith.constant 0 : index
    %c0_19 = arith.constant 0 : index
    %20 = vector.load %arg4[%c1_17, %c0_18, %c0_19] : memref<9x64x128xbf16, #tpu.memory_space<vmem>>, vector<1x64x128xbf16>
    %21 = vector.shape_cast %20 : vector<1x64x128xbf16> to vector<64x128xbf16>
    %cst_20 = arith.constant dense<0.000000e+00> : vector<32x128xf32>
    %22 = tpu.matmul %19, %21, %cst_20 {dimension_numbers = #tpu.dot_dimension_numbers<[1], [0], [0], [1], [0, 0, 1, 1], [], []>} : vector<32x64xbf16>, vector<64x128xbf16>, vector<32x128xf32> -> vector<32x128xf32>
    %23 = arith.addf %15, %22 : vector<32x128xf32>
    %c2 = arith.constant 2 : index
    %c0_21 = arith.constant 0 : index
    %c0_22 = arith.constant 0 : index
    %24 = vector.load %arg3[%c2, %c0_21, %c0_22] : memref<9x32x128xbf16, #tpu.memory_space<vmem>>, vector<1x32x128xbf16>
    %25 = vector.shape_cast %24 : vector<1x32x128xbf16> to vector<32x128xbf16>
    %cst_23 = arith.constant dense<0.000000e+00> : vector<32x64xf32>
    %26 = tpu.matmul %25, %6, %cst_23 {dimension_numbers = #tpu.dot_dimension_numbers<[1], [0], [0], [1], [0, 0, 1, 1], [], []>} : vector<32x128xbf16>, vector<128x64xbf16>, vector<32x64xf32> -> vector<32x64xf32>
    %27 = arith.truncf %26 : vector<32x64xf32> to vector<32x64xbf16>
    %c2_24 = arith.constant 2 : index
    %c0_25 = arith.constant 0 : index
    %c0_26 = arith.constant 0 : index
    %28 = vector.load %arg4[%c2_24, %c0_25, %c0_26] : memref<9x64x128xbf16, #tpu.memory_space<vmem>>, vector<1x64x128xbf16>
    %29 = vector.shape_cast %28 : vector<1x64x128xbf16> to vector<64x128xbf16>
    %cst_27 = arith.constant dense<0.000000e+00> : vector<32x128xf32>
    %30 = tpu.matmul %27, %29, %cst_27 {dimension_numbers = #tpu.dot_dimension_numbers<[1], [0], [0], [1], [0, 0, 1, 1], [], []>} : vector<32x64xbf16>, vector<64x128xbf16>, vector<32x128xf32> -> vector<32x128xf32>
    %31 = arith.addf %23, %30 : vector<32x128xf32>
    %c3 = arith.constant 3 : index
    %c0_28 = arith.constant 0 : index
    %c0_29 = arith.constant 0 : index
    %32 = vector.load %arg3[%c3, %c0_28, %c0_29] : memref<9x32x128xbf16, #tpu.memory_space<vmem>>, vector<1x32x128xbf16>
    %33 = vector.shape_cast %32 : vector<1x32x128xbf16> to vector<32x128xbf16>
    %cst_30 = arith.constant dense<0.000000e+00> : vector<32x64xf32>
    %34 = tpu.matmul %33, %6, %cst_30 {dimension_numbers = #tpu.dot_dimension_numbers<[1], [0], [0], [1], [0, 0, 1, 1], [], []>} : vector<32x128xbf16>, vector<128x64xbf16>, vector<32x64xf32> -> vector<32x64xf32>
    %35 = arith.truncf %34 : vector<32x64xf32> to vector<32x64xbf16>
    %c3_31 = arith.constant 3 : index
    %c0_32 = arith.constant 0 : index
    %c0_33 = arith.constant 0 : index
    %36 = vector.load %arg4[%c3_31, %c0_32, %c0_33] : memref<9x64x128xbf16, #tpu.memory_space<vmem>>, vector<1x64x128xbf16>
    %37 = vector.shape_cast %36 : vector<1x64x128xbf16> to vector<64x128xbf16>
    %cst_34 = arith.constant dense<0.000000e+00> : vector<32x128xf32>
    %38 = tpu.matmul %35, %37, %cst_34 {dimension_numbers = #tpu.dot_dimension_numbers<[1], [0], [0], [1], [0, 0, 1, 1], [], []>} : vector<32x64xbf16>, vector<64x128xbf16>, vector<32x128xf32> -> vector<32x128xf32>
    %39 = arith.addf %31, %38 : vector<32x128xf32>
    %c4 = arith.constant 4 : index
    %c0_35 = arith.constant 0 : index
    %c0_36 = arith.constant 0 : index
    %40 = vector.load %arg3[%c4, %c0_35, %c0_36] : memref<9x32x128xbf16, #tpu.memory_space<vmem>>, vector<1x32x128xbf16>
    %41 = vector.shape_cast %40 : vector<1x32x128xbf16> to vector<32x128xbf16>
    %cst_37 = arith.constant dense<0.000000e+00> : vector<32x64xf32>
    %42 = tpu.matmul %41, %6, %cst_37 {dimension_numbers = #tpu.dot_dimension_numbers<[1], [0], [0], [1], [0, 0, 1, 1], [], []>} : vector<32x128xbf16>, vector<128x64xbf16>, vector<32x64xf32> -> vector<32x64xf32>
    %43 = arith.truncf %42 : vector<32x64xf32> to vector<32x64xbf16>
    %c4_38 = arith.constant 4 : index
    %c0_39 = arith.constant 0 : index
    %c0_40 = arith.constant 0 : index
    %44 = vector.load %arg4[%c4_38, %c0_39, %c0_40] : memref<9x64x128xbf16, #tpu.memory_space<vmem>>, vector<1x64x128xbf16>
    %45 = vector.shape_cast %44 : vector<1x64x128xbf16> to vector<64x128xbf16>
    %cst_41 = arith.constant dense<0.000000e+00> : vector<32x128xf32>
    %46 = tpu.matmul %43, %45, %cst_41 {dimension_numbers = #tpu.dot_dimension_numbers<[1], [0], [0], [1], [0, 0, 1, 1], [], []>} : vector<32x64xbf16>, vector<64x128xbf16>, vector<32x128xf32> -> vector<32x128xf32>
    %47 = arith.addf %39, %46 : vector<32x128xf32>
    %c5 = arith.constant 5 : index
    %c0_42 = arith.constant 0 : index
    %c0_43 = arith.constant 0 : index
    %48 = vector.load %arg3[%c5, %c0_42, %c0_43] : memref<9x32x128xbf16, #tpu.memory_space<vmem>>, vector<1x32x128xbf16>
    %49 = vector.shape_cast %48 : vector<1x32x128xbf16> to vector<32x128xbf16>
    %cst_44 = arith.constant dense<0.000000e+00> : vector<32x64xf32>
    %50 = tpu.matmul %49, %6, %cst_44 {dimension_numbers = #tpu.dot_dimension_numbers<[1], [0], [0], [1], [0, 0, 1, 1], [], []>} : vector<32x128xbf16>, vector<128x64xbf16>, vector<32x64xf32> -> vector<32x64xf32>
    %51 = arith.truncf %50 : vector<32x64xf32> to vector<32x64xbf16>
    %c5_45 = arith.constant 5 : index
    %c0_46 = arith.constant 0 : index
    %c0_47 = arith.constant 0 : index
    %52 = vector.load %arg4[%c5_45, %c0_46, %c0_47] : memref<9x64x128xbf16, #tpu.memory_space<vmem>>, vector<1x64x128xbf16>
    %53 = vector.shape_cast %52 : vector<1x64x128xbf16> to vector<64x128xbf16>
    %cst_48 = arith.constant dense<0.000000e+00> : vector<32x128xf32>
    %54 = tpu.matmul %51, %53, %cst_48 {dimension_numbers = #tpu.dot_dimension_numbers<[1], [0], [0], [1], [0, 0, 1, 1], [], []>} : vector<32x64xbf16>, vector<64x128xbf16>, vector<32x128xf32> -> vector<32x128xf32>
    %55 = arith.addf %47, %54 : vector<32x128xf32>
    %c6 = arith.constant 6 : index
    %c0_49 = arith.constant 0 : index
    %c0_50 = arith.constant 0 : index
    %56 = vector.load %arg3[%c6, %c0_49, %c0_50] : memref<9x32x128xbf16, #tpu.memory_space<vmem>>, vector<1x32x128xbf16>
    %57 = vector.shape_cast %56 : vector<1x32x128xbf16> to vector<32x128xbf16>
    %cst_51 = arith.constant dense<0.000000e+00> : vector<32x64xf32>
    %58 = tpu.matmul %57, %6, %cst_51 {dimension_numbers = #tpu.dot_dimension_numbers<[1], [0], [0], [1], [0, 0, 1, 1], [], []>} : vector<32x128xbf16>, vector<128x64xbf16>, vector<32x64xf32> -> vector<32x64xf32>
    %59 = arith.truncf %58 : vector<32x64xf32> to vector<32x64xbf16>
    %c6_52 = arith.constant 6 : index
    %c0_53 = arith.constant 0 : index
    %c0_54 = arith.constant 0 : index
    %60 = vector.load %arg4[%c6_52, %c0_53, %c0_54] : memref<9x64x128xbf16, #tpu.memory_space<vmem>>, vector<1x64x128xbf16>
    %61 = vector.shape_cast %60 : vector<1x64x128xbf16> to vector<64x128xbf16>
    %cst_55 = arith.constant dense<0.000000e+00> : vector<32x128xf32>
    %62 = tpu.matmul %59, %61, %cst_55 {dimension_numbers = #tpu.dot_dimension_numbers<[1], [0], [0], [1], [0, 0, 1, 1], [], []>} : vector<32x64xbf16>, vector<64x128xbf16>, vector<32x128xf32> -> vector<32x128xf32>
    %63 = arith.addf %55, %62 : vector<32x128xf32>
    %c7 = arith.constant 7 : index
    %c0_56 = arith.constant 0 : index
    %c0_57 = arith.constant 0 : index
    %64 = vector.load %arg3[%c7, %c0_56, %c0_57] : memref<9x32x128xbf16, #tpu.memory_space<vmem>>, vector<1x32x128xbf16>
    %65 = vector.shape_cast %64 : vector<1x32x128xbf16> to vector<32x128xbf16>
    %cst_58 = arith.constant dense<0.000000e+00> : vector<32x64xf32>
    %66 = tpu.matmul %65, %6, %cst_58 {dimension_numbers = #tpu.dot_dimension_numbers<[1], [0], [0], [1], [0, 0, 1, 1], [], []>} : vector<32x128xbf16>, vector<128x64xbf16>, vector<32x64xf32> -> vector<32x64xf32>
    %67 = arith.truncf %66 : vector<32x64xf32> to vector<32x64xbf16>
    %c7_59 = arith.constant 7 : index
    %c0_60 = arith.constant 0 : index
    %c0_61 = arith.constant 0 : index
    %68 = vector.load %arg4[%c7_59, %c0_60, %c0_61] : memref<9x64x128xbf16, #tpu.memory_space<vmem>>, vector<1x64x128xbf16>
    %69 = vector.shape_cast %68 : vector<1x64x128xbf16> to vector<64x128xbf16>
    %cst_62 = arith.constant dense<0.000000e+00> : vector<32x128xf32>
    %70 = tpu.matmul %67, %69, %cst_62 {dimension_numbers = #tpu.dot_dimension_numbers<[1], [0], [0], [1], [0, 0, 1, 1], [], []>} : vector<32x64xbf16>, vector<64x128xbf16>, vector<32x128xf32> -> vector<32x128xf32>
    %71 = arith.addf %63, %70 : vector<32x128xf32>
    %c8 = arith.constant 8 : index
    %c0_63 = arith.constant 0 : index
    %c0_64 = arith.constant 0 : index
    %72 = vector.load %arg3[%c8, %c0_63, %c0_64] : memref<9x32x128xbf16, #tpu.memory_space<vmem>>, vector<1x32x128xbf16>
    %73 = vector.shape_cast %72 : vector<1x32x128xbf16> to vector<32x128xbf16>
    %cst_65 = arith.constant dense<0.000000e+00> : vector<32x64xf32>
    %74 = tpu.matmul %73, %6, %cst_65 {dimension_numbers = #tpu.dot_dimension_numbers<[1], [0], [0], [1], [0, 0, 1, 1], [], []>} : vector<32x128xbf16>, vector<128x64xbf16>, vector<32x64xf32> -> vector<32x64xf32>
    %75 = arith.truncf %74 : vector<32x64xf32> to vector<32x64xbf16>
    %c8_66 = arith.constant 8 : index
    %c0_67 = arith.constant 0 : index
    %c0_68 = arith.constant 0 : index
    %76 = vector.load %arg4[%c8_66, %c0_67, %c0_68] : memref<9x64x128xbf16, #tpu.memory_space<vmem>>, vector<1x64x128xbf16>
    %77 = vector.shape_cast %76 : vector<1x64x128xbf16> to vector<64x128xbf16>
    %cst_69 = arith.constant dense<0.000000e+00> : vector<32x128xf32>
    %78 = tpu.matmul %75, %77, %cst_69 {dimension_numbers = #tpu.dot_dimension_numbers<[1], [0], [0], [1], [0, 0, 1, 1], [], []>} : vector<32x64xbf16>, vector<64x128xbf16>, vector<32x128xf32> -> vector<32x128xf32>
    %79 = arith.addf %71, %78 : vector<32x128xf32>
    %c0_70 = arith.constant 0 : index
    %c0_71 = arith.constant 0 : index
    %80 = vector.load %arg5[%c0_70, %c0_71] : memref<1x128xf32, #tpu.memory_space<vmem>>, vector<1x128xf32>
    %81 = vector.broadcast %80 : vector<1x128xf32> to vector<32x128xf32>
    %82 = arith.addf %79, %81 : vector<32x128xf32>
    %83 = arith.truncf %82 : vector<32x128xf32> to vector<32x128xbf16>
    %cst_72 = arith.constant 0.000000e+00 : f32
    %84 = vector.broadcast %cst_72 : f32 to vector<8x128xf32>
    %c0_73 = arith.constant 0 : index
    %c0_74 = arith.constant 0 : index
    %c0_75 = arith.constant 0 : index
    %85 = vector.load %arg6[%c0_73, %c0_74, %c0_75] : memref<9x8x32xbf16, #tpu.memory_space<vmem>>, vector<1x8x32xbf16>
    %86 = vector.shape_cast %85 : vector<1x8x32xbf16> to vector<8x32xbf16>
    %cst_76 = arith.constant dense<0.000000e+00> : vector<8x128xf32>
    %87 = tpu.matmul %86, %83, %cst_76 {dimension_numbers = #tpu.dot_dimension_numbers<[1], [0], [0], [1], [0, 0, 1, 1], [], []>} : vector<8x32xbf16>, vector<32x128xbf16>, vector<8x128xf32> -> vector<8x128xf32>
    %88 = arith.truncf %87 : vector<8x128xf32> to vector<8x128xbf16>
    %c0_77 = arith.constant 0 : index
    %c0_78 = arith.constant 0 : index
    %c0_79 = arith.constant 0 : index
    %89 = vector.load %arg7[%c0_77, %c0_78, %c0_79] : memref<9x128x128xbf16, #tpu.memory_space<vmem>>, vector<1x128x128xbf16>
    %90 = vector.shape_cast %89 : vector<1x128x128xbf16> to vector<128x128xbf16>
    %cst_80 = arith.constant dense<0.000000e+00> : vector<8x128xf32>
    %91 = tpu.matmul %88, %90, %cst_80 {dimension_numbers = #tpu.dot_dimension_numbers<[1], [0], [0], [1], [0, 0, 1, 1], [], []>} : vector<8x128xbf16>, vector<128x128xbf16>, vector<8x128xf32> -> vector<8x128xf32>
    %92 = arith.addf %84, %91 : vector<8x128xf32>
    %c1_81 = arith.constant 1 : index
    %c0_82 = arith.constant 0 : index
    %c0_83 = arith.constant 0 : index
    %93 = vector.load %arg6[%c1_81, %c0_82, %c0_83] : memref<9x8x32xbf16, #tpu.memory_space<vmem>>, vector<1x8x32xbf16>
    %94 = vector.shape_cast %93 : vector<1x8x32xbf16> to vector<8x32xbf16>
    %cst_84 = arith.constant dense<0.000000e+00> : vector<8x128xf32>
    %95 = tpu.matmul %94, %83, %cst_84 {dimension_numbers = #tpu.dot_dimension_numbers<[1], [0], [0], [1], [0, 0, 1, 1], [], []>} : vector<8x32xbf16>, vector<32x128xbf16>, vector<8x128xf32> -> vector<8x128xf32>
    %96 = arith.truncf %95 : vector<8x128xf32> to vector<8x128xbf16>
    %c1_85 = arith.constant 1 : index
    %c0_86 = arith.constant 0 : index
    %c0_87 = arith.constant 0 : index
    %97 = vector.load %arg7[%c1_85, %c0_86, %c0_87] : memref<9x128x128xbf16, #tpu.memory_space<vmem>>, vector<1x128x128xbf16>
    %98 = vector.shape_cast %97 : vector<1x128x128xbf16> to vector<128x128xbf16>
    %cst_88 = arith.constant dense<0.000000e+00> : vector<8x128xf32>
    %99 = tpu.matmul %96, %98, %cst_88 {dimension_numbers = #tpu.dot_dimension_numbers<[1], [0], [0], [1], [0, 0, 1, 1], [], []>} : vector<8x128xbf16>, vector<128x128xbf16>, vector<8x128xf32> -> vector<8x128xf32>
    %100 = arith.addf %92, %99 : vector<8x128xf32>
    %c2_89 = arith.constant 2 : index
    %c0_90 = arith.constant 0 : index
    %c0_91 = arith.constant 0 : index
    %101 = vector.load %arg6[%c2_89, %c0_90, %c0_91] : memref<9x8x32xbf16, #tpu.memory_space<vmem>>, vector<1x8x32xbf16>
    %102 = vector.shape_cast %101 : vector<1x8x32xbf16> to vector<8x32xbf16>
    %cst_92 = arith.constant dense<0.000000e+00> : vector<8x128xf32>
    %103 = tpu.matmul %102, %83, %cst_92 {dimension_numbers = #tpu.dot_dimension_numbers<[1], [0], [0], [1], [0, 0, 1, 1], [], []>} : vector<8x32xbf16>, vector<32x128xbf16>, vector<8x128xf32> -> vector<8x128xf32>
    %104 = arith.truncf %103 : vector<8x128xf32> to vector<8x128xbf16>
    %c2_93 = arith.constant 2 : index
    %c0_94 = arith.constant 0 : index
    %c0_95 = arith.constant 0 : index
    %105 = vector.load %arg7[%c2_93, %c0_94, %c0_95] : memref<9x128x128xbf16, #tpu.memory_space<vmem>>, vector<1x128x128xbf16>
    %106 = vector.shape_cast %105 : vector<1x128x128xbf16> to vector<128x128xbf16>
    %cst_96 = arith.constant dense<0.000000e+00> : vector<8x128xf32>
    %107 = tpu.matmul %104, %106, %cst_96 {dimension_numbers = #tpu.dot_dimension_numbers<[1], [0], [0], [1], [0, 0, 1, 1], [], []>} : vector<8x128xbf16>, vector<128x128xbf16>, vector<8x128xf32> -> vector<8x128xf32>
    %108 = arith.addf %100, %107 : vector<8x128xf32>
    %c3_97 = arith.constant 3 : index
    %c0_98 = arith.constant 0 : index
    %c0_99 = arith.constant 0 : index
    %109 = vector.load %arg6[%c3_97, %c0_98, %c0_99] : memref<9x8x32xbf16, #tpu.memory_space<vmem>>, vector<1x8x32xbf16>
    %110 = vector.shape_cast %109 : vector<1x8x32xbf16> to vector<8x32xbf16>
    %cst_100 = arith.constant dense<0.000000e+00> : vector<8x128xf32>
    %111 = tpu.matmul %110, %83, %cst_100 {dimension_numbers = #tpu.dot_dimension_numbers<[1], [0], [0], [1], [0, 0, 1, 1], [], []>} : vector<8x32xbf16>, vector<32x128xbf16>, vector<8x128xf32> -> vector<8x128xf32>
    %112 = arith.truncf %111 : vector<8x128xf32> to vector<8x128xbf16>
    %c3_101 = arith.constant 3 : index
    %c0_102 = arith.constant 0 : index
    %c0_103 = arith.constant 0 : index
    %113 = vector.load %arg7[%c3_101, %c0_102, %c0_103] : memref<9x128x128xbf16, #tpu.memory_space<vmem>>, vector<1x128x128xbf16>
    %114 = vector.shape_cast %113 : vector<1x128x128xbf16> to vector<128x128xbf16>
    %cst_104 = arith.constant dense<0.000000e+00> : vector<8x128xf32>
    %115 = tpu.matmul %112, %114, %cst_104 {dimension_numbers = #tpu.dot_dimension_numbers<[1], [0], [0], [1], [0, 0, 1, 1], [], []>} : vector<8x128xbf16>, vector<128x128xbf16>, vector<8x128xf32> -> vector<8x128xf32>
    %116 = arith.addf %108, %115 : vector<8x128xf32>
    %c4_105 = arith.constant 4 : index
    %c0_106 = arith.constant 0 : index
    %c0_107 = arith.constant 0 : index
    %117 = vector.load %arg6[%c4_105, %c0_106, %c0_107] : memref<9x8x32xbf16, #tpu.memory_space<vmem>>, vector<1x8x32xbf16>
    %118 = vector.shape_cast %117 : vector<1x8x32xbf16> to vector<8x32xbf16>
    %cst_108 = arith.constant dense<0.000000e+00> : vector<8x128xf32>
    %119 = tpu.matmul %118, %83, %cst_108 {dimension_numbers = #tpu.dot_dimension_numbers<[1], [0], [0], [1], [0, 0, 1, 1], [], []>} : vector<8x32xbf16>, vector<32x128xbf16>, vector<8x128xf32> -> vector<8x128xf32>
    %120 = arith.truncf %119 : vector<8x128xf32> to vector<8x128xbf16>
    %c4_109 = arith.constant 4 : index
    %c0_110 = arith.constant 0 : index
    %c0_111 = arith.constant 0 : index
    %121 = vector.load %arg7[%c4_109, %c0_110, %c0_111] : memref<9x128x128xbf16, #tpu.memory_space<vmem>>, vector<1x128x128xbf16>
    %122 = vector.shape_cast %121 : vector<1x128x128xbf16> to vector<128x128xbf16>
    %cst_112 = arith.constant dense<0.000000e+00> : vector<8x128xf32>
    %123 = tpu.matmul %120, %122, %cst_112 {dimension_numbers = #tpu.dot_dimension_numbers<[1], [0], [0], [1], [0, 0, 1, 1], [], []>} : vector<8x128xbf16>, vector<128x128xbf16>, vector<8x128xf32> -> vector<8x128xf32>
    %124 = arith.addf %116, %123 : vector<8x128xf32>
    %c5_113 = arith.constant 5 : index
    %c0_114 = arith.constant 0 : index
    %c0_115 = arith.constant 0 : index
    %125 = vector.load %arg6[%c5_113, %c0_114, %c0_115] : memref<9x8x32xbf16, #tpu.memory_space<vmem>>, vector<1x8x32xbf16>
    %126 = vector.shape_cast %125 : vector<1x8x32xbf16> to vector<8x32xbf16>
    %cst_116 = arith.constant dense<0.000000e+00> : vector<8x128xf32>
    %127 = tpu.matmul %126, %83, %cst_116 {dimension_numbers = #tpu.dot_dimension_numbers<[1], [0], [0], [1], [0, 0, 1, 1], [], []>} : vector<8x32xbf16>, vector<32x128xbf16>, vector<8x128xf32> -> vector<8x128xf32>
    %128 = arith.truncf %127 : vector<8x128xf32> to vector<8x128xbf16>
    %c5_117 = arith.constant 5 : index
    %c0_118 = arith.constant 0 : index
    %c0_119 = arith.constant 0 : index
    %129 = vector.load %arg7[%c5_117, %c0_118, %c0_119] : memref<9x128x128xbf16, #tpu.memory_space<vmem>>, vector<1x128x128xbf16>
    %130 = vector.shape_cast %129 : vector<1x128x128xbf16> to vector<128x128xbf16>
    %cst_120 = arith.constant dense<0.000000e+00> : vector<8x128xf32>
    %131 = tpu.matmul %128, %130, %cst_120 {dimension_numbers = #tpu.dot_dimension_numbers<[1], [0], [0], [1], [0, 0, 1, 1], [], []>} : vector<8x128xbf16>, vector<128x128xbf16>, vector<8x128xf32> -> vector<8x128xf32>
    %132 = arith.addf %124, %131 : vector<8x128xf32>
    %c6_121 = arith.constant 6 : index
    %c0_122 = arith.constant 0 : index
    %c0_123 = arith.constant 0 : index
    %133 = vector.load %arg6[%c6_121, %c0_122, %c0_123] : memref<9x8x32xbf16, #tpu.memory_space<vmem>>, vector<1x8x32xbf16>
    %134 = vector.shape_cast %133 : vector<1x8x32xbf16> to vector<8x32xbf16>
    %cst_124 = arith.constant dense<0.000000e+00> : vector<8x128xf32>
    %135 = tpu.matmul %134, %83, %cst_124 {dimension_numbers = #tpu.dot_dimension_numbers<[1], [0], [0], [1], [0, 0, 1, 1], [], []>} : vector<8x32xbf16>, vector<32x128xbf16>, vector<8x128xf32> -> vector<8x128xf32>
    %136 = arith.truncf %135 : vector<8x128xf32> to vector<8x128xbf16>
    %c6_125 = arith.constant 6 : index
    %c0_126 = arith.constant 0 : index
    %c0_127 = arith.constant 0 : index
    %137 = vector.load %arg7[%c6_125, %c0_126, %c0_127] : memref<9x128x128xbf16, #tpu.memory_space<vmem>>, vector<1x128x128xbf16>
    %138 = vector.shape_cast %137 : vector<1x128x128xbf16> to vector<128x128xbf16>
    %cst_128 = arith.constant dense<0.000000e+00> : vector<8x128xf32>
    %139 = tpu.matmul %136, %138, %cst_128 {dimension_numbers = #tpu.dot_dimension_numbers<[1], [0], [0], [1], [0, 0, 1, 1], [], []>} : vector<8x128xbf16>, vector<128x128xbf16>, vector<8x128xf32> -> vector<8x128xf32>
    %140 = arith.addf %132, %139 : vector<8x128xf32>
    %c7_129 = arith.constant 7 : index
    %c0_130 = arith.constant 0 : index
    %c0_131 = arith.constant 0 : index
    %141 = vector.load %arg6[%c7_129, %c0_130, %c0_131] : memref<9x8x32xbf16, #tpu.memory_space<vmem>>, vector<1x8x32xbf16>
    %142 = vector.shape_cast %141 : vector<1x8x32xbf16> to vector<8x32xbf16>
    %cst_132 = arith.constant dense<0.000000e+00> : vector<8x128xf32>
    %143 = tpu.matmul %142, %83, %cst_132 {dimension_numbers = #tpu.dot_dimension_numbers<[1], [0], [0], [1], [0, 0, 1, 1], [], []>} : vector<8x32xbf16>, vector<32x128xbf16>, vector<8x128xf32> -> vector<8x128xf32>
    %144 = arith.truncf %143 : vector<8x128xf32> to vector<8x128xbf16>
    %c7_133 = arith.constant 7 : index
    %c0_134 = arith.constant 0 : index
    %c0_135 = arith.constant 0 : index
    %145 = vector.load %arg7[%c7_133, %c0_134, %c0_135] : memref<9x128x128xbf16, #tpu.memory_space<vmem>>, vector<1x128x128xbf16>
    %146 = vector.shape_cast %145 : vector<1x128x128xbf16> to vector<128x128xbf16>
    %cst_136 = arith.constant dense<0.000000e+00> : vector<8x128xf32>
    %147 = tpu.matmul %144, %146, %cst_136 {dimension_numbers = #tpu.dot_dimension_numbers<[1], [0], [0], [1], [0, 0, 1, 1], [], []>} : vector<8x128xbf16>, vector<128x128xbf16>, vector<8x128xf32> -> vector<8x128xf32>
    %148 = arith.addf %140, %147 : vector<8x128xf32>
    %c8_137 = arith.constant 8 : index
    %c0_138 = arith.constant 0 : index
    %c0_139 = arith.constant 0 : index
    %149 = vector.load %arg6[%c8_137, %c0_138, %c0_139] : memref<9x8x32xbf16, #tpu.memory_space<vmem>>, vector<1x8x32xbf16>
    %150 = vector.shape_cast %149 : vector<1x8x32xbf16> to vector<8x32xbf16>
    %cst_140 = arith.constant dense<0.000000e+00> : vector<8x128xf32>
    %151 = tpu.matmul %150, %83, %cst_140 {dimension_numbers = #tpu.dot_dimension_numbers<[1], [0], [0], [1], [0, 0, 1, 1], [], []>} : vector<8x32xbf16>, vector<32x128xbf16>, vector<8x128xf32> -> vector<8x128xf32>
    %152 = arith.truncf %151 : vector<8x128xf32> to vector<8x128xbf16>
    %c8_141 = arith.constant 8 : index
    %c0_142 = arith.constant 0 : index
    %c0_143 = arith.constant 0 : index
    %153 = vector.load %arg7[%c8_141, %c0_142, %c0_143] : memref<9x128x128xbf16, #tpu.memory_space<vmem>>, vector<1x128x128xbf16>
    %154 = vector.shape_cast %153 : vector<1x128x128xbf16> to vector<128x128xbf16>
    %cst_144 = arith.constant dense<0.000000e+00> : vector<8x128xf32>
    %155 = tpu.matmul %152, %154, %cst_144 {dimension_numbers = #tpu.dot_dimension_numbers<[1], [0], [0], [1], [0, 0, 1, 1], [], []>} : vector<8x128xbf16>, vector<128x128xbf16>, vector<8x128xf32> -> vector<8x128xf32>
    %156 = arith.addf %148, %155 : vector<8x128xf32>
    %c0_145 = arith.constant 0 : index
    %c0_146 = arith.constant 0 : index
    %157 = vector.load %arg8[%c0_145, %c0_146] : memref<1x128xf32, #tpu.memory_space<vmem>>, vector<1x128xf32>
    %158 = vector.broadcast %157 : vector<1x128xf32> to vector<8x128xf32>
    %159 = arith.addf %156, %158 : vector<8x128xf32>
    %160 = arith.truncf %159 : vector<8x128xf32> to vector<8x128xbf16>
    %cst_147 = arith.constant 0.000000e+00 : f32
    %161 = vector.broadcast %cst_147 : f32 to vector<2x32xf32>
    %c0_148 = arith.constant 0 : index
    %c0_149 = arith.constant 0 : index
    %c0_150 = arith.constant 0 : index
    %162 = vector.load %arg9[%c0_148, %c0_149, %c0_150] : memref<9x2x8xbf16, #tpu.memory_space<vmem>>, vector<1x2x8xbf16>
    %163 = vector.shape_cast %162 : vector<1x2x8xbf16> to vector<2x8xbf16>
    %cst_151 = arith.constant dense<0.000000e+00> : vector<2x128xf32>
    %164 = tpu.matmul %163, %160, %cst_151 {dimension_numbers = #tpu.dot_dimension_numbers<[1], [0], [0], [1], [0, 0, 1, 1], [], []>} : vector<2x8xbf16>, vector<8x128xbf16>, vector<2x128xf32> -> vector<2x128xf32>
    %165 = arith.truncf %164 : vector<2x128xf32> to vector<2x128xbf16>
    %c0_152 = arith.constant 0 : index
    %c0_153 = arith.constant 0 : index
    %c0_154 = arith.constant 0 : index
    %166 = vector.load %arg10[%c0_152, %c0_153, %c0_154] : memref<9x128x32xbf16, #tpu.memory_space<vmem>>, vector<1x128x32xbf16>
    %167 = vector.shape_cast %166 : vector<1x128x32xbf16> to vector<128x32xbf16>
    %cst_155 = arith.constant dense<0.000000e+00> : vector<2x32xf32>
    %168 = tpu.matmul %165, %167, %cst_155 {dimension_numbers = #tpu.dot_dimension_numbers<[1], [0], [0], [1], [0, 0, 1, 1], [], []>} : vector<2x128xbf16>, vector<128x32xbf16>, vector<2x32xf32> -> vector<2x32xf32>
    %169 = arith.addf %161, %168 : vector<2x32xf32>
    %c1_156 = arith.constant 1 : index
    %c0_157 = arith.constant 0 : index
    %c0_158 = arith.constant 0 : index
    %170 = vector.load %arg9[%c1_156, %c0_157, %c0_158] : memref<9x2x8xbf16, #tpu.memory_space<vmem>>, vector<1x2x8xbf16>
    %171 = vector.shape_cast %170 : vector<1x2x8xbf16> to vector<2x8xbf16>
    %cst_159 = arith.constant dense<0.000000e+00> : vector<2x128xf32>
    %172 = tpu.matmul %171, %160, %cst_159 {dimension_numbers = #tpu.dot_dimension_numbers<[1], [0], [0], [1], [0, 0, 1, 1], [], []>} : vector<2x8xbf16>, vector<8x128xbf16>, vector<2x128xf32> -> vector<2x128xf32>
    %173 = arith.truncf %172 : vector<2x128xf32> to vector<2x128xbf16>
    %c1_160 = arith.constant 1 : index
    %c0_161 = arith.constant 0 : index
    %c0_162 = arith.constant 0 : index
    %174 = vector.load %arg10[%c1_160, %c0_161, %c0_162] : memref<9x128x32xbf16, #tpu.memory_space<vmem>>, vector<1x128x32xbf16>
    %175 = vector.shape_cast %174 : vector<1x128x32xbf16> to vector<128x32xbf16>
    %cst_163 = arith.constant dense<0.000000e+00> : vector<2x32xf32>
    %176 = tpu.matmul %173, %175, %cst_163 {dimension_numbers = #tpu.dot_dimension_numbers<[1], [0], [0], [1], [0, 0, 1, 1], [], []>} : vector<2x128xbf16>, vector<128x32xbf16>, vector<2x32xf32> -> vector<2x32xf32>
    %177 = arith.addf %169, %176 : vector<2x32xf32>
    %c2_164 = arith.constant 2 : index
    %c0_165 = arith.constant 0 : index
    %c0_166 = arith.constant 0 : index
    %178 = vector.load %arg9[%c2_164, %c0_165, %c0_166] : memref<9x2x8xbf16, #tpu.memory_space<vmem>>, vector<1x2x8xbf16>
    %179 = vector.shape_cast %178 : vector<1x2x8xbf16> to vector<2x8xbf16>
    %cst_167 = arith.constant dense<0.000000e+00> : vector<2x128xf32>
    %180 = tpu.matmul %179, %160, %cst_167 {dimension_numbers = #tpu.dot_dimension_numbers<[1], [0], [0], [1], [0, 0, 1, 1], [], []>} : vector<2x8xbf16>, vector<8x128xbf16>, vector<2x128xf32> -> vector<2x128xf32>
    %181 = arith.truncf %180 : vector<2x128xf32> to vector<2x128xbf16>
    %c2_168 = arith.constant 2 : index
    %c0_169 = arith.constant 0 : index
    %c0_170 = arith.constant 0 : index
    %182 = vector.load %arg10[%c2_168, %c0_169, %c0_170] : memref<9x128x32xbf16, #tpu.memory_space<vmem>>, vector<1x128x32xbf16>
    %183 = vector.shape_cast %182 : vector<1x128x32xbf16> to vector<128x32xbf16>
    %cst_171 = arith.constant dense<0.000000e+00> : vector<2x32xf32>
    %184 = tpu.matmul %181, %183, %cst_171 {dimension_numbers = #tpu.dot_dimension_numbers<[1], [0], [0], [1], [0, 0, 1, 1], [], []>} : vector<2x128xbf16>, vector<128x32xbf16>, vector<2x32xf32> -> vector<2x32xf32>
    %185 = arith.addf %177, %184 : vector<2x32xf32>
    %c3_172 = arith.constant 3 : index
    %c0_173 = arith.constant 0 : index
    %c0_174 = arith.constant 0 : index
    %186 = vector.load %arg9[%c3_172, %c0_173, %c0_174] : memref<9x2x8xbf16, #tpu.memory_space<vmem>>, vector<1x2x8xbf16>
    %187 = vector.shape_cast %186 : vector<1x2x8xbf16> to vector<2x8xbf16>
    %cst_175 = arith.constant dense<0.000000e+00> : vector<2x128xf32>
    %188 = tpu.matmul %187, %160, %cst_175 {dimension_numbers = #tpu.dot_dimension_numbers<[1], [0], [0], [1], [0, 0, 1, 1], [], []>} : vector<2x8xbf16>, vector<8x128xbf16>, vector<2x128xf32> -> vector<2x128xf32>
    %189 = arith.truncf %188 : vector<2x128xf32> to vector<2x128xbf16>
    %c3_176 = arith.constant 3 : index
    %c0_177 = arith.constant 0 : index
    %c0_178 = arith.constant 0 : index
    %190 = vector.load %arg10[%c3_176, %c0_177, %c0_178] : memref<9x128x32xbf16, #tpu.memory_space<vmem>>, vector<1x128x32xbf16>
    %191 = vector.shape_cast %190 : vector<1x128x32xbf16> to vector<128x32xbf16>
    %cst_179 = arith.constant dense<0.000000e+00> : vector<2x32xf32>
    %192 = tpu.matmul %189, %191, %cst_179 {dimension_numbers = #tpu.dot_dimension_numbers<[1], [0], [0], [1], [0, 0, 1, 1], [], []>} : vector<2x128xbf16>, vector<128x32xbf16>, vector<2x32xf32> -> vector<2x32xf32>
    %193 = arith.addf %185, %192 : vector<2x32xf32>
    %c4_180 = arith.constant 4 : index
    %c0_181 = arith.constant 0 : index
    %c0_182 = arith.constant 0 : index
    %194 = vector.load %arg9[%c4_180, %c0_181, %c0_182] : memref<9x2x8xbf16, #tpu.memory_space<vmem>>, vector<1x2x8xbf16>
    %195 = vector.shape_cast %194 : vector<1x2x8xbf16> to vector<2x8xbf16>
    %cst_183 = arith.constant dense<0.000000e+00> : vector<2x128xf32>
    %196 = tpu.matmul %195, %160, %cst_183 {dimension_numbers = #tpu.dot_dimension_numbers<[1], [0], [0], [1], [0, 0, 1, 1], [], []>} : vector<2x8xbf16>, vector<8x128xbf16>, vector<2x128xf32> -> vector<2x128xf32>
    %197 = arith.truncf %196 : vector<2x128xf32> to vector<2x128xbf16>
    %c4_184 = arith.constant 4 : index
    %c0_185 = arith.constant 0 : index
    %c0_186 = arith.constant 0 : index
    %198 = vector.load %arg10[%c4_184, %c0_185, %c0_186] : memref<9x128x32xbf16, #tpu.memory_space<vmem>>, vector<1x128x32xbf16>
    %199 = vector.shape_cast %198 : vector<1x128x32xbf16> to vector<128x32xbf16>
    %cst_187 = arith.constant dense<0.000000e+00> : vector<2x32xf32>
    %200 = tpu.matmul %197, %199, %cst_187 {dimension_numbers = #tpu.dot_dimension_numbers<[1], [0], [0], [1], [0, 0, 1, 1], [], []>} : vector<2x128xbf16>, vector<128x32xbf16>, vector<2x32xf32> -> vector<2x32xf32>
    %201 = arith.addf %193, %200 : vector<2x32xf32>
    %c5_188 = arith.constant 5 : index
    %c0_189 = arith.constant 0 : index
    %c0_190 = arith.constant 0 : index
    %202 = vector.load %arg9[%c5_188, %c0_189, %c0_190] : memref<9x2x8xbf16, #tpu.memory_space<vmem>>, vector<1x2x8xbf16>
    %203 = vector.shape_cast %202 : vector<1x2x8xbf16> to vector<2x8xbf16>
    %cst_191 = arith.constant dense<0.000000e+00> : vector<2x128xf32>
    %204 = tpu.matmul %203, %160, %cst_191 {dimension_numbers = #tpu.dot_dimension_numbers<[1], [0], [0], [1], [0, 0, 1, 1], [], []>} : vector<2x8xbf16>, vector<8x128xbf16>, vector<2x128xf32> -> vector<2x128xf32>
    %205 = arith.truncf %204 : vector<2x128xf32> to vector<2x128xbf16>
    %c5_192 = arith.constant 5 : index
    %c0_193 = arith.constant 0 : index
    %c0_194 = arith.constant 0 : index
    %206 = vector.load %arg10[%c5_192, %c0_193, %c0_194] : memref<9x128x32xbf16, #tpu.memory_space<vmem>>, vector<1x128x32xbf16>
    %207 = vector.shape_cast %206 : vector<1x128x32xbf16> to vector<128x32xbf16>
    %cst_195 = arith.constant dense<0.000000e+00> : vector<2x32xf32>
    %208 = tpu.matmul %205, %207, %cst_195 {dimension_numbers = #tpu.dot_dimension_numbers<[1], [0], [0], [1], [0, 0, 1, 1], [], []>} : vector<2x128xbf16>, vector<128x32xbf16>, vector<2x32xf32> -> vector<2x32xf32>
    %209 = arith.addf %201, %208 : vector<2x32xf32>
    %c6_196 = arith.constant 6 : index
    %c0_197 = arith.constant 0 : index
    %c0_198 = arith.constant 0 : index
    %210 = vector.load %arg9[%c6_196, %c0_197, %c0_198] : memref<9x2x8xbf16, #tpu.memory_space<vmem>>, vector<1x2x8xbf16>
    %211 = vector.shape_cast %210 : vector<1x2x8xbf16> to vector<2x8xbf16>
    %cst_199 = arith.constant dense<0.000000e+00> : vector<2x128xf32>
    %212 = tpu.matmul %211, %160, %cst_199 {dimension_numbers = #tpu.dot_dimension_numbers<[1], [0], [0], [1], [0, 0, 1, 1], [], []>} : vector<2x8xbf16>, vector<8x128xbf16>, vector<2x128xf32> -> vector<2x128xf32>
    %213 = arith.truncf %212 : vector<2x128xf32> to vector<2x128xbf16>
    %c6_200 = arith.constant 6 : index
    %c0_201 = arith.constant 0 : index
    %c0_202 = arith.constant 0 : index
    %214 = vector.load %arg10[%c6_200, %c0_201, %c0_202] : memref<9x128x32xbf16, #tpu.memory_space<vmem>>, vector<1x128x32xbf16>
    %215 = vector.shape_cast %214 : vector<1x128x32xbf16> to vector<128x32xbf16>
    %cst_203 = arith.constant dense<0.000000e+00> : vector<2x32xf32>
    %216 = tpu.matmul %213, %215, %cst_203 {dimension_numbers = #tpu.dot_dimension_numbers<[1], [0], [0], [1], [0, 0, 1, 1], [], []>} : vector<2x128xbf16>, vector<128x32xbf16>, vector<2x32xf32> -> vector<2x32xf32>
    %217 = arith.addf %209, %216 : vector<2x32xf32>
    %c7_204 = arith.constant 7 : index
    %c0_205 = arith.constant 0 : index
    %c0_206 = arith.constant 0 : index
    %218 = vector.load %arg9[%c7_204, %c0_205, %c0_206] : memref<9x2x8xbf16, #tpu.memory_space<vmem>>, vector<1x2x8xbf16>
    %219 = vector.shape_cast %218 : vector<1x2x8xbf16> to vector<2x8xbf16>
    %cst_207 = arith.constant dense<0.000000e+00> : vector<2x128xf32>
    %220 = tpu.matmul %219, %160, %cst_207 {dimension_numbers = #tpu.dot_dimension_numbers<[1], [0], [0], [1], [0, 0, 1, 1], [], []>} : vector<2x8xbf16>, vector<8x128xbf16>, vector<2x128xf32> -> vector<2x128xf32>
    %221 = arith.truncf %220 : vector<2x128xf32> to vector<2x128xbf16>
    %c7_208 = arith.constant 7 : index
    %c0_209 = arith.constant 0 : index
    %c0_210 = arith.constant 0 : index
    %222 = vector.load %arg10[%c7_208, %c0_209, %c0_210] : memref<9x128x32xbf16, #tpu.memory_space<vmem>>, vector<1x128x32xbf16>
    %223 = vector.shape_cast %222 : vector<1x128x32xbf16> to vector<128x32xbf16>
    %cst_211 = arith.constant dense<0.000000e+00> : vector<2x32xf32>
    %224 = tpu.matmul %221, %223, %cst_211 {dimension_numbers = #tpu.dot_dimension_numbers<[1], [0], [0], [1], [0, 0, 1, 1], [], []>} : vector<2x128xbf16>, vector<128x32xbf16>, vector<2x32xf32> -> vector<2x32xf32>
    %225 = arith.addf %217, %224 : vector<2x32xf32>
    %c8_212 = arith.constant 8 : index
    %c0_213 = arith.constant 0 : index
    %c0_214 = arith.constant 0 : index
    %226 = vector.load %arg9[%c8_212, %c0_213, %c0_214] : memref<9x2x8xbf16, #tpu.memory_space<vmem>>, vector<1x2x8xbf16>
    %227 = vector.shape_cast %226 : vector<1x2x8xbf16> to vector<2x8xbf16>
    %cst_215 = arith.constant dense<0.000000e+00> : vector<2x128xf32>
    %228 = tpu.matmul %227, %160, %cst_215 {dimension_numbers = #tpu.dot_dimension_numbers<[1], [0], [0], [1], [0, 0, 1, 1], [], []>} : vector<2x8xbf16>, vector<8x128xbf16>, vector<2x128xf32> -> vector<2x128xf32>
    %229 = arith.truncf %228 : vector<2x128xf32> to vector<2x128xbf16>
    %c8_216 = arith.constant 8 : index
    %c0_217 = arith.constant 0 : index
    %c0_218 = arith.constant 0 : index
    %230 = vector.load %arg10[%c8_216, %c0_217, %c0_218] : memref<9x128x32xbf16, #tpu.memory_space<vmem>>, vector<1x128x32xbf16>
    %231 = vector.shape_cast %230 : vector<1x128x32xbf16> to vector<128x32xbf16>
    %cst_219 = arith.constant dense<0.000000e+00> : vector<2x32xf32>
    %232 = tpu.matmul %229, %231, %cst_219 {dimension_numbers = #tpu.dot_dimension_numbers<[1], [0], [0], [1], [0, 0, 1, 1], [], []>} : vector<2x128xbf16>, vector<128x32xbf16>, vector<2x32xf32> -> vector<2x32xf32>
    %233 = arith.addf %225, %232 : vector<2x32xf32>
    %c0_220 = arith.constant 0 : index
    %c0_221 = arith.constant 0 : index
    %234 = vector.load %arg11[%c0_220, %c0_221] : memref<1x32xf32, #tpu.memory_space<vmem>>, vector<1x32xf32>
    %235 = vector.broadcast %234 : vector<1x32xf32> to vector<2x32xf32>
    %236 = arith.addf %233, %235 : vector<2x32xf32>
    %c0_222 = arith.constant 0 : index
    %c0_223 = arith.constant 0 : index
    %237 = vector.load %arg12[%c0_222, %c0_223] : memref<2x3072xbf16, #tpu.memory_space<vmem>>, vector<2x3072xbf16>
    %c0_224 = arith.constant 0 : index
    %c0_225 = arith.constant 0 : index
    %238 = vector.load %arg13[%c0_224, %c0_225] : memref<3072x64xbf16, #tpu.memory_space<vmem>>, vector<3072x64xbf16>
    %cst_226 = arith.constant dense<0.000000e+00> : vector<2x64xf32>
    %239 = tpu.matmul %237, %238, %cst_226 {dimension_numbers = #tpu.dot_dimension_numbers<[1], [0], [0], [1], [0, 0, 1, 1], [], []>} : vector<2x3072xbf16>, vector<3072x64xbf16>, vector<2x64xf32> -> vector<2x64xf32>
    %c0_227 = arith.constant 0 : index
    %c0_228 = arith.constant 0 : index
    %240 = vector.load %arg14[%c0_227, %c0_228] : memref<1x64xf32, #tpu.memory_space<vmem>>, vector<1x64xf32>
    %241 = vector.broadcast %240 : vector<1x64xf32> to vector<2x64xf32>
    %242 = arith.addf %239, %241 : vector<2x64xf32>
    %c0_229 = arith.constant 0 : index
    %c0_230 = arith.constant 0 : index
    %243 = vector.load %arg15[%c0_229, %c0_230] : memref<2x128xf32, #tpu.memory_space<vmem>>, vector<2x64xf32>
    tpu.vector_store %arg15[%c0_229, %c0_230], %242 {strides = array<i32>} : memref<2x128xf32, #tpu.memory_space<vmem>>, vector<2x64xf32>,
    %c0_231 = arith.constant 0 : index
    %c64 = arith.constant 64 : index
    %244 = vector.load %arg15[%c0_231, %c64] : memref<2x128xf32, #tpu.memory_space<vmem>>, vector<2x32xf32>
    tpu.vector_store %arg15[%c0_231, %c64], %236 {strides = array<i32>} : memref<2x128xf32, #tpu.memory_space<vmem>>, vector<2x32xf32>,
    %cst_232 = arith.constant 0.000000e+00 : f32
    %245 = vector.broadcast %cst_232 : f32 to vector<2x32xf32>
    %c0_233 = arith.constant 0 : index
    %c96 = arith.constant 96 : index
    %246 = vector.load %arg15[%c0_233, %c96] : memref<2x128xf32, #tpu.memory_space<vmem>>, vector<2x32xf32>
    tpu.vector_store %arg15[%c0_233, %c96], %245 {strides = array<i32>} : memref<2x128xf32, #tpu.memory_space<vmem>>, vector<2x32xf32>,
    return
  }
}

</mosaic_0001>

<llo_original>
// kernel: encoder_forward.1
$region0: #{encoder_forward.1}
  #allocation0 [shape = 'u32[]', space=smem, size = 0x4, offset = 0x4, fixed_abs, tag = 'smem constant byte address 0x4 - core index']
  #allocation1 [shape = 'u32[144,128]{1,0:T(1,128)}', space=vmem, size = 0x12000, scoped, tag = 'internal scratch']
  %s0 = inlined_call_operand.vmem [shape: bf16[128,128], index: 0, kind: input, shape index: {}]
  %s1 = inlined_call_operand.vmem [shape: bf16[128,64], index: 1, kind: input, shape index: {}]
  %s2 = inlined_call_operand.vmem [shape: f32[1,64], index: 2, kind: input, shape index: {}]
  %s3 = inlined_call_operand.vmem [shape: bf16[9,32,128], index: 3, kind: input, shape index: {}]
  %s4 = inlined_call_operand.vmem [shape: bf16[9,64,128], index: 4, kind: input, shape index: {}]
  %s5 = inlined_call_operand.vmem [shape: f32[1,128], index: 5, kind: input, shape index: {}]
  %s6 = inlined_call_operand.vmem [shape: bf16[9,8,32], index: 6, kind: input, shape index: {}]
  %s7 = inlined_call_operand.vmem [shape: bf16[9,128,128], index: 7, kind: input, shape index: {}]
  %s8 = inlined_call_operand.vmem [shape: f32[1,128], index: 8, kind: input, shape index: {}]
  %s9 = inlined_call_operand.vmem [shape: bf16[9,2,8], index: 9, kind: input, shape index: {}]
  %s10 = inlined_call_operand.vmem [shape: bf16[9,128,32], index: 10, kind: input, shape index: {}]
  %s11 = inlined_call_operand.vmem [shape: f32[1,32], index: 11, kind: input, shape index: {}]
  %s12 = inlined_call_operand.vmem [shape: bf16[2,3072], index: 12, kind: input, shape index: {}]
  %s13 = inlined_call_operand.vmem [shape: bf16[3072,64], index: 13, kind: input, shape index: {}]
  %s14 = inlined_call_operand.vmem [shape: f32[1,64], index: 14, kind: input, shape index: {}]
  %s15 = inlined_call_operand.hbm [shape: f32[2,128], index: 15, kind: output, shape index: {}]
  %s16 = sld [smem:[#allocation0]]
  $region70: #{encoder_forward.1} parent=0
    _
  %s18 = ssub.s32 1, %s16
  %s19 = scalar_select 0, %s18, %s16
  $region1: #{encoder_forward.1} parent=0
    #allocation2 [shape = 'u8[1024]{0}', space=vmem, size = 0x400, scoped, tag = 'output window, operand 0, single buffered']
    #allocation3 [shape = 's32[1]{0}', space=sflag, size = 0x4, scoped, tag = 'scoped memory for encoder_forward.1']
    %20 = vsyncpa [#allocation3], 0
    // Predicated region
    $region2: #{encoder_forward.1} parent=1 // pred_check
      _
    $region3: #{encoder_forward.1} parent=1 // pred_check_branch
      %22 = sbr.rel (0) target = $region5
    $region4: #{encoder_forward.1} parent=1 // pred_region
      _
    $region5: #{encoder_forward.1} parent=1 // pred_fallthru
      _
    // Predicated region
    $region6: #{encoder_forward.1} parent=1 // pred_check
      _
    $region7: #{encoder_forward.1} parent=1 // pred_check_branch
      %24 = sbr.rel (0) target = $region9
    $region8: #{encoder_forward.1} parent=1 // pred_region
      _
    $region9: #{encoder_forward.1} parent=1 // pred_fallthru
      _
    // Predicated region
    $region10: #{encoder_forward.1} parent=1 // pred_check
      _
    $region11: #{encoder_forward.1} parent=1 // pred_check_branch
      %26 = sbr.rel (0) target = $region13
    $region12: #{encoder_forward.1} parent=1 // pred_region
      _
    $region13: #{encoder_forward.1} parent=1 // pred_fallthru
      _
    // Predicated region
    $region14: #{encoder_forward.1} parent=1 // pred_check
      _
    $region15: #{encoder_forward.1} parent=1 // pred_check_branch
      %28 = sbr.rel (0) target = $region17
    $region16: #{encoder_forward.1} parent=1 // pred_region
      _
    $region17: #{encoder_forward.1} parent=1 // pred_fallthru
      _
    // Predicated region
    $region18: #{encoder_forward.1} parent=1 // pred_check
      _
    $region19: #{encoder_forward.1} parent=1 // pred_check_branch
      %30 = sbr.rel (0) target = $region21
    $region20: #{encoder_forward.1} parent=1 // pred_region
      _
    $region21: #{encoder_forward.1} parent=1 // pred_fallthru
      _
    // Predicated region
    $region22: #{encoder_forward.1} parent=1 // pred_check
      _
    $region23: #{encoder_forward.1} parent=1 // pred_check_branch
      %32 = sbr.rel (0) target = $region25
    $region24: #{encoder_forward.1} parent=1 // pred_region
      _
    $region25: #{encoder_forward.1} parent=1 // pred_fallthru
      _
    // Predicated region
    $region26: #{encoder_forward.1} parent=1 // pred_check
      _
    $region27: #{encoder_forward.1} parent=1 // pred_check_branch
      %34 = sbr.rel (0) target = $region29
    $region28: #{encoder_forward.1} parent=1 // pred_region
      _
    $region29: #{encoder_forward.1} parent=1 // pred_fallthru
      _
    // Predicated region
    $region30: #{encoder_forward.1} parent=1 // pred_check
      _
    $region31: #{encoder_forward.1} parent=1 // pred_check_branch
      %36 = sbr.rel (0) target = $region33
    $region32: #{encoder_forward.1} parent=1 // pred_region
      _
    $region33: #{encoder_forward.1} parent=1 // pred_fallthru
      _
    // Predicated region
    $region34: #{encoder_forward.1} parent=1 // pred_check
      _
    $region35: #{encoder_forward.1} parent=1 // pred_check_branch
      %38 = sbr.rel (0) target = $region37
    $region36: #{encoder_forward.1} parent=1 // pred_region
      _
    $region37: #{encoder_forward.1} parent=1 // pred_fallthru
      _
    // Predicated region
    $region38: #{encoder_forward.1} parent=1 // pred_check
      _
    $region39: #{encoder_forward.1} parent=1 // pred_check_branch
      %40 = sbr.rel (0) target = $region41
    $region40: #{encoder_forward.1} parent=1 // pred_region
      _
    $region41: #{encoder_forward.1} parent=1 // pred_fallthru
      _
    // Predicated region
    $region42: #{encoder_forward.1} parent=1 // pred_check
      _
    $region43: #{encoder_forward.1} parent=1 // pred_check_branch
      %42 = sbr.rel (0) target = $region45
    $region44: #{encoder_forward.1} parent=1 // pred_region
      _
    $region45: #{encoder_forward.1} parent=1 // pred_fallthru
      _
    // Predicated region
    $region46: #{encoder_forward.1} parent=1 // pred_check
      _
    $region47: #{encoder_forward.1} parent=1 // pred_check_branch
      %44 = sbr.rel (0) target = $region49
    $region48: #{encoder_forward.1} parent=1 // pred_region
      _
    $region49: #{encoder_forward.1} parent=1 // pred_fallthru
      _
    // Predicated region
    $region50: #{encoder_forward.1} parent=1 // pred_check
      _
    $region51: #{encoder_forward.1} parent=1 // pred_check_branch
      %46 = sbr.rel (0) target = $region53
    $region52: #{encoder_forward.1} parent=1 // pred_region
      _
    $region53: #{encoder_forward.1} parent=1 // pred_fallthru
      _
    // Predicated region
    $region54: #{encoder_forward.1} parent=1 // pred_check
      _
    $region55: #{encoder_forward.1} parent=1 // pred_check_branch
      %48 = sbr.rel (0) target = $region57
    $region56: #{encoder_forward.1} parent=1 // pred_region
      _
    $region57: #{encoder_forward.1} parent=1 // pred_fallthru
      _
    // Predicated region
    $region58: #{encoder_forward.1} parent=1 // pred_check
      _
    $region59: #{encoder_forward.1} parent=1 // pred_check_branch
      %50 = sbr.rel (0) target = $region61
    $region60: #{encoder_forward.1} parent=1 // pred_region
      _
    $region61: #{encoder_forward.1} parent=1 // pred_fallthru
      _
    %v52 = vld [vmem:[%s0] sm:$0xf]
    %v53 = vld [vmem:[%s0 + $0x4] sm:$0xf]
    %v54 = vld [vmem:[%s0 + $0x8] sm:$0xf]
    %v55 = vld [vmem:[%s0 + $0xc] sm:$0xf]
    %v56 = vld [vmem:[%s0 + $0x10] sm:$0xf]
    %v57 = vld [vmem:[%s0 + $0x14] sm:$0xf]
    %v58 = vld [vmem:[%s0 + $0x18] sm:$0xf]
    %v59 = vld [vmem:[%s0 + $0x1c] sm:$0xf]
    %v60 = vld [vmem:[%s0 + $0x20] sm:$0xf]
    %v61 = vld [vmem:[%s0 + $0x24] sm:$0xf]
    %v62 = vld [vmem:[%s0 + $0x28] sm:$0xf]
    %v63 = vld [vmem:[%s0 + $0x2c] sm:$0xf]
    %v64 = vld [vmem:[%s0 + $0x30] sm:$0xf]
    %v65 = vld [vmem:[%s0 + $0x34] sm:$0xf]
    %v66 = vld [vmem:[%s0 + $0x38] sm:$0xf]
    %v67 = vld [vmem:[%s0 + $0x3c] sm:$0xf]
    %v68 = vld [vmem:[%s1] sm:$0xf]
    %v69 = vld [vmem:[%s1 + $0x4] sm:$0xf]
    %v70 = vld [vmem:[%s1 + $0x8] sm:$0xf]
    %v71 = vld [vmem:[%s1 + $0xc] sm:$0xf]
    %v72 = vld [vmem:[%s1 + $0x10] sm:$0xf]
    %v73 = vld [vmem:[%s1 + $0x14] sm:$0xf]
    %v74 = vld [vmem:[%s1 + $0x18] sm:$0xf]
    %v75 = vld [vmem:[%s1 + $0x1c] sm:$0xf]
    %v76 = vld [vmem:[%s1 + $0x20] sm:$0xf]
    %v77 = vld [vmem:[%s1 + $0x24] sm:$0xf]
    %v78 = vld [vmem:[%s1 + $0x28] sm:$0xf]
    %v79 = vld [vmem:[%s1 + $0x2c] sm:$0xf]
    %v80 = vld [vmem:[%s1 + $0x30] sm:$0xf]
    %v81 = vld [vmem:[%s1 + $0x34] sm:$0xf]
    %v82 = vld [vmem:[%s1 + $0x38] sm:$0xf]
    %v83 = vld [vmem:[%s1 + $0x3c] sm:$0xf]
    %v84 = vld [vmem:[%s2] sm:$0x1]
    %v86 = vlaneseq
    %v87 = vshrl.u32 %v86, 7
    %v88 = vsub.s32 0, %v87
    %v89 = vrot.slane %v84, %v88
    %v107 = vunpack.c.l.b16 %v52
    %v108 = vunpack.c.l.b16 %v53
    %v109 = vunpack.c.l.b16 %v54
    %v110 = vunpack.c.l.b16 %v55
    %v111 = vunpack.c.l.b16 %v56
    %v112 = vunpack.c.l.b16 %v57
    %v113 = vunpack.c.l.b16 %v58
    %v114 = vunpack.c.l.b16 %v59
    %v115 = vunpack.c.l.b16 %v60
    %v116 = vunpack.c.l.b16 %v61
    %v117 = vunpack.c.l.b16 %v62
    %v118 = vunpack.c.l.b16 %v63
    %v119 = vunpack.c.l.b16 %v64
    %v120 = vunpack.c.l.b16 %v65
    %v121 = vunpack.c.l.b16 %v66
    %v122 = vunpack.c.l.b16 %v67
    %v123 = vpack.c.b16 %v108, %v107
    %v124 = vpack.c.b16 %v110, %v109
    %v125 = vpack.c.b16 %v112, %v111
    %v126 = vpack.c.b16 %v114, %v113
    %v127 = vpack.c.b16 %v116, %v115
    %v128 = vpack.c.b16 %v118, %v117
    %v129 = vpack.c.b16 %v120, %v119
    %v130 = vpack.c.b16 %v122, %v121
    %v155 = vunpack.c.l.b16 %v68
    %v156 = vunpack.c.l.b16 %v69
    %v157 = vunpack.c.l.b16 %v70
    %v158 = vunpack.c.l.b16 %v71
    %v159 = vunpack.c.l.b16 %v72
    %v160 = vunpack.c.l.b16 %v73
    %v161 = vunpack.c.l.b16 %v74
    %v162 = vunpack.c.l.b16 %v75
    %v163 = vunpack.c.l.b16 %v76
    %v164 = vunpack.c.l.b16 %v77
    %v165 = vunpack.c.l.b16 %v78
    %v166 = vunpack.c.l.b16 %v79
    %v167 = vunpack.c.l.b16 %v80
    %v168 = vunpack.c.l.b16 %v81
    %v169 = vunpack.c.l.b16 %v82
    %v170 = vunpack.c.l.b16 %v83
    %v171 = vpack.c.b16 %v156, %v155
    %v172 = vpack.c.b16 %v158, %v157
    %v173 = vpack.c.b16 %v160, %v159
    %v174 = vpack.c.b16 %v162, %v161
    %v175 = vpack.c.b16 %v164, %v163
    %v176 = vpack.c.b16 %v166, %v165
    %v177 = vpack.c.b16 %v168, %v167
    %v178 = vpack.c.b16 %v170, %v169
    %187 = vmatprep.subr.bf16.mxu0 0
    %188 = vmatpush1.bf16.msra.mxu0 %v178
    %189 = vmatprep.subr.bf16.mxu0 0
    %190 = vmatpush1.bf16.msra.mxu0 %v177
    %191 = vmatprep.subr.bf16.mxu0 0
    %192 = vmatpush1.bf16.msra.mxu0 %v176
    %193 = vmatprep.subr.bf16.mxu0 0
    %194 = vmatpush1.bf16.msra.mxu0 %v175
    %195 = vmatprep.subr.bf16.mxu0 0
    %196 = vmatpush1.bf16.msra.mxu0 %v174
    %197 = vmatprep.subr.bf16.mxu0 0
    %198 = vmatpush1.bf16.msra.mxu0 %v173
    %199 = vmatprep.subr.bf16.mxu0 0
    %200 = vmatpush1.bf16.msra.mxu0 %v172
    %201 = vmatprep.subr.bf16.mxu0 0
    %202 = vmatpush1.bf16.msra.mxu0 %v171
    %203 = vmatprep.subr.bf16.mxu0 0
    %204 = vmatpush2.bf16.msra.mxu0 0
    %205 = vmatprep.subr.bf16.mxu0 0
    %206 = vmatpush2.bf16.msra.mxu0 0
    %207 = vmatprep.subr.bf16.mxu0 0
    %208 = vmatpush2.bf16.msra.mxu0 0
    %209 = vmatprep.subr.bf16.mxu0 0
    %210 = vmatpush2.bf16.msra.mxu0 0
    %211 = vmatprep.subr.bf16.mxu0 0
    %212 = vmatpush2.bf16.msra.mxu0 0
    %213 = vmatprep.subr.bf16.mxu0 0
    %214 = vmatpush2.bf16.msra.mxu0 0
    %215 = vmatprep.subr.bf16.mxu0 0
    %216 = vmatpush2.bf16.msra.mxu0 0
    %217 = vmatprep.subr.bf16.mxu0 0
    %218 = vmatpush2.bf16.msra.mxu0 0
    %219 = vmatprep.mubr.bf16.mxu0 0
    %220 = vmatmul.mubr.bf16.gmra.mxu0 %v123
    %v221 = vpop.f32.mrf.mxu0
    %v222 = vadd.f32 %v89, %v221
    %v223 = vpop.f32.mrf.mxu0
    %v224 = vpop.f32.mrf.mxu0
    %v225 = vadd.f32 %v89, %v224
    %v226 = vpop.f32.mrf.mxu0
    %227 = vmatprep.mubr.bf16.mxu0 0
    %228 = vmatmul.mubr.bf16.gmra.mxu0 %v124
    %v229 = vpop.f32.mrf.mxu0
    %v230 = vadd.f32 %v89, %v229
    %v231 = vpop.f32.mrf.mxu0
    %v232 = vpop.f32.mrf.mxu0
    %v233 = vadd.f32 %v89, %v232
    %v234 = vpop.f32.mrf.mxu0
    %235 = vmatprep.mubr.bf16.mxu0 0
    %236 = vmatmul.mubr.bf16.gmra.mxu0 %v125
    %v237 = vpop.f32.mrf.mxu0
    %v238 = vadd.f32 %v89, %v237
    %v239 = vpop.f32.mrf.mxu0
    %v240 = vpop.f32.mrf.mxu0
    %v241 = vadd.f32 %v89, %v240
    %v242 = vpop.f32.mrf.mxu0
    %243 = vmatprep.mubr.bf16.mxu0 0
    %244 = vmatmul.mubr.bf16.gmra.mxu0 %v126
    %v245 = vpop.f32.mrf.mxu0
    %v246 = vadd.f32 %v89, %v245
    %v247 = vpop.f32.mrf.mxu0
    %v248 = vpop.f32.mrf.mxu0
    %v249 = vadd.f32 %v89, %v248
    %v250 = vpop.f32.mrf.mxu0
    %251 = vmatprep.mubr.bf16.mxu0 0
    %252 = vmatmul.mubr.bf16.gmra.mxu0 %v127
    %v253 = vpop.f32.mrf.mxu0
    %v254 = vadd.f32 %v89, %v253
    %v255 = vpop.f32.mrf.mxu0
    %v256 = vpop.f32.mrf.mxu0
    %v257 = vadd.f32 %v89, %v256
    %v258 = vpop.f32.mrf.mxu0
    %259 = vmatprep.mubr.bf16.mxu0 0
    %260 = vmatmul.mubr.bf16.gmra.mxu0 %v128
    %v261 = vpop.f32.mrf.mxu0
    %v262 = vadd.f32 %v89, %v261
    %v263 = vpop.f32.mrf.mxu0
    %v264 = vpop.f32.mrf.mxu0
    %v265 = vadd.f32 %v89, %v264
    %v266 = vpop.f32.mrf.mxu0
    %267 = vmatprep.mubr.bf16.mxu0 0
    %268 = vmatmul.mubr.bf16.gmra.mxu0 %v129
    %v269 = vpop.f32.mrf.mxu0
    %v270 = vadd.f32 %v89, %v269
    %v271 = vpop.f32.mrf.mxu0
    %v272 = vpop.f32.mrf.mxu0
    %v273 = vadd.f32 %v89, %v272
    %v274 = vpop.f32.mrf.mxu0
    %275 = vmatprep.mubr.bf16.mxu0 0
    %276 = vmatmul.mubr.bf16.gmra.mxu0 %v130
    %v277 = vpop.f32.mrf.mxu0
    %v278 = vadd.f32 %v89, %v277
    %v279 = vpop.f32.mrf.mxu0
    %v280 = vpop.f32.mrf.mxu0
    %v281 = vadd.f32 %v89, %v280
    %v282 = vpop.f32.mrf.mxu0
    %283 = vdwg.mxu0
    %v284 = vpack.c.bf16 %v225, %v222
    %v285 = vpack.c.bf16 %v233, %v230
    %v286 = vpack.c.bf16 %v241, %v238
    %v287 = vpack.c.bf16 %v249, %v246
    %v288 = vpack.c.bf16 %v257, %v254
    %v289 = vpack.c.bf16 %v265, %v262
    %v290 = vpack.c.bf16 %v273, %v270
    %v291 = vpack.c.bf16 %v281, %v278
    %v292 = vld [vmem:[%s3] sm:$0xf]
    %v293 = vld [vmem:[%s3 + $0x4] sm:$0xf]
    %v294 = vld [vmem:[%s3 + $0x8] sm:$0xf]
    %v295 = vld [vmem:[%s3 + $0xc] sm:$0xf]
    %v300 = vunpack.c.l.b16 %v292
    %v301 = vunpack.c.l.b16 %v293
    %v302 = vunpack.c.l.b16 %v294
    %v303 = vunpack.c.l.b16 %v295
    %v304 = vpack.c.b16 %v301, %v300
    %v305 = vpack.c.b16 %v303, %v302
    %308 = vmatprep.subr.bf16.mxu0 0
    %309 = vmatpush1.bf16.msra.mxu0 %v291
    %310 = vmatprep.subr.bf16.mxu0 0
    %311 = vmatpush1.bf16.msra.mxu0 %v290
    %312 = vmatprep.subr.bf16.mxu0 0
    %313 = vmatpush1.bf16.msra.mxu0 %v289
    %314 = vmatprep.subr.bf16.mxu0 0
    %315 = vmatpush1.bf16.msra.mxu0 %v288
    %316 = vmatprep.subr.bf16.mxu0 0
    %317 = vmatpush1.bf16.msra.mxu0 %v287
    %318 = vmatprep.subr.bf16.mxu0 0
    %319 = vmatpush1.bf16.msra.mxu0 %v286
    %320 = vmatprep.subr.bf16.mxu0 0
    %321 = vmatpush1.bf16.msra.mxu0 %v285
    %322 = vmatprep.subr.bf16.mxu0 0
    %323 = vmatpush1.bf16.msra.mxu0 %v284
    %324 = vmatprep.subr.bf16.mxu0 0
    %325 = vmatpush2.bf16.msra.mxu0 0
    %326 = vmatprep.subr.bf16.mxu0 0
    %327 = vmatpush2.bf16.msra.mxu0 0
    %328 = vmatprep.subr.bf16.mxu0 0
    %329 = vmatpush2.bf16.msra.mxu0 0
    %330 = vmatprep.subr.bf16.mxu0 0
    %331 = vmatpush2.bf16.msra.mxu0 0
    %332 = vmatprep.subr.bf16.mxu0 0
    %333 = vmatpush2.bf16.msra.mxu0 0
    %334 = vmatprep.subr.bf16.mxu0 0
    %335 = vmatpush2.bf16.msra.mxu0 0
    %336 = vmatprep.subr.bf16.mxu0 0
    %337 = vmatpush2.bf16.msra.mxu0 0
    %338 = vmatprep.subr.bf16.mxu0 0
    %339 = vmatpush2.bf16.msra.mxu0 0
    %340 = vmatprep.mubr.bf16.mxu0 0
    %341 = vmatmul.mubr.bf16.gmra.mxu0 %v304
    %v342 = vpop.f32.mrf.mxu0
    %v343 = vadd.f32 0.0, %v342
    %v344 = vpop.f32.mrf.mxu0
    %v345 = vpop.f32.mrf.mxu0
    %v346 = vadd.f32 0.0, %v345
    %v347 = vpop.f32.mrf.mxu0
    %348 = vmatprep.mubr.bf16.mxu0 0
    %349 = vmatmul.mubr.bf16.gmra.mxu0 %v305
    %v350 = vpop.f32.mrf.mxu0
    %v351 = vadd.f32 0.0, %v350
    %v352 = vpop.f32.mrf.mxu0
    %v353 = vpop.f32.mrf.mxu0
    %v354 = vadd.f32 0.0, %v353
    %v355 = vpop.f32.mrf.mxu0
    %356 = vdwg.mxu0
    %v357 = vpack.c.bf16 %v346, %v343
    %v358 = vpack.c.bf16 %v354, %v351
    %v359 = vld [vmem:[%s4] sm:$0xf]
    %v360 = vld [vmem:[%s4 + $0x4] sm:$0xf]
    %v361 = vld [vmem:[%s4 + $0x8] sm:$0xf]
    %v362 = vld [vmem:[%s4 + $0xc] sm:$0xf]
    %v363 = vld [vmem:[%s4 + $0x10] sm:$0xf]
    %v364 = vld [vmem:[%s4 + $0x14] sm:$0xf]
    %v365 = vld [vmem:[%s4 + $0x18] sm:$0xf]
    %v366 = vld [vmem:[%s4 + $0x1c] sm:$0xf]
    %s367 = scalar_lea.vmem %s3, 16
    %v368 = vld [vmem:[%s367] sm:$0xf]
    %v369 = vld [vmem:[%s367 + $0x4] sm:$0xf]
    %v370 = vld [vmem:[%s367 + $0x8] sm:$0xf]
    %v371 = vld [vmem:[%s367 + $0xc] sm:$0xf]
    %v376 = vunpack.c.l.b16 %v368
    %v377 = vunpack.c.l.b16 %v369
    %v378 = vunpack.c.l.b16 %v370
    %v379 = vunpack.c.l.b16 %v371
    %v380 = vpack.c.b16 %v377, %v376
    %v381 = vpack.c.b16 %v379, %v378
    %384 = vmatprep.subr.bf16.mxu0 0
    %385 = vmatpush1.bf16.msra.mxu0 %v291
    %386 = vmatprep.subr.bf16.mxu0 0
    %387 = vmatpush1.bf16.msra.mxu0 %v290
    %388 = vmatprep.subr.bf16.mxu0 0
    %389 = vmatpush1.bf16.msra.mxu0 %v289
    %390 = vmatprep.subr.bf16.mxu0 0
    %391 = vmatpush1.bf16.msra.mxu0 %v288
    %392 = vmatprep.subr.bf16.mxu0 0
    %393 = vmatpush1.bf16.msra.mxu0 %v287
    %394 = vmatprep.subr.bf16.mxu0 0
    %395 = vmatpush1.bf16.msra.mxu0 %v286
    %396 = vmatprep.subr.bf16.mxu0 0
    %397 = vmatpush1.bf16.msra.mxu0 %v285
    %398 = vmatprep.subr.bf16.mxu0 0
    %399 = vmatpush1.bf16.msra.mxu0 %v284
    %400 = vmatprep.subr.bf16.mxu0 0
    %401 = vmatpush2.bf16.msra.mxu0 0
    %402 = vmatprep.subr.bf16.mxu0 0
    %403 = vmatpush2.bf16.msra.mxu0 0
    %404 = vmatprep.subr.bf16.mxu0 0
    %405 = vmatpush2.bf16.msra.mxu0 0
    %406 = vmatprep.subr.bf16.mxu0 0
    %407 = vmatpush2.bf16.msra.mxu0 0
    %408 = vmatprep.subr.bf16.mxu0 0
    %409 = vmatpush2.bf16.msra.mxu0 0
    %410 = vmatprep.subr.bf16.mxu0 0
    %411 = vmatpush2.bf16.msra.mxu0 0
    %412 = vmatprep.subr.bf16.mxu0 0
    %413 = vmatpush2.bf16.msra.mxu0 0
    %414 = vmatprep.subr.bf16.mxu0 0
    %415 = vmatpush2.bf16.msra.mxu0 0
    %416 = vmatprep.mubr.bf16.mxu0 0
    %417 = vmatmul.mubr.bf16.gmra.mxu0 %v380
    %v418 = vpop.f32.mrf.mxu0
    %v419 = vadd.f32 0.0, %v418
    %v420 = vpop.f32.mrf.mxu0
    %v421 = vpop.f32.mrf.mxu0
    %v422 = vadd.f32 0.0, %v421
    %v423 = vpop.f32.mrf.mxu0
    %424 = vmatprep.mubr.bf16.mxu0 0
    %425 = vmatmul.mubr.bf16.gmra.mxu0 %v381
    %v426 = vpop.f32.mrf.mxu0
    %v427 = vadd.f32 0.0, %v426
    %v428 = vpop.f32.mrf.mxu0
    %v429 = vpop.f32.mrf.mxu0
    %v430 = vadd.f32 0.0, %v429
    %v431 = vpop.f32.mrf.mxu0
    %432 = vdwg.mxu0
    %v433 = vpack.c.bf16 %v422, %v419
    %v434 = vpack.c.bf16 %v430, %v427
    %s435 = scalar_lea.vmem %s4, 32
    %v436 = vld [vmem:[%s435] sm:$0xf]
    %v437 = vld [vmem:[%s435 + $0x4] sm:$0xf]
    %v438 = vld [vmem:[%s435 + $0x8] sm:$0xf]
    %v439 = vld [vmem:[%s435 + $0xc] sm:$0xf]
    %v440 = vld [vmem:[%s435 + $0x10] sm:$0xf]
    %v441 = vld [vmem:[%s435 + $0x14] sm:$0xf]
    %v442 = vld [vmem:[%s435 + $0x18] sm:$0xf]
    %v443 = vld [vmem:[%s435 + $0x1c] sm:$0xf]
    %v452 = vunpack.c.l.b16 %v436
    %v453 = vunpack.c.l.b16 %v437
    %v454 = vunpack.c.l.b16 %v438
    %v455 = vunpack.c.l.b16 %v439
    %v456 = vunpack.c.l.b16 %v440
    %v457 = vunpack.c.l.b16 %v441
    %v458 = vunpack.c.l.b16 %v442
    %v459 = vunpack.c.l.b16 %v443
    %v460 = vpack.c.b16 %v453, %v452
    %v461 = vpack.c.b16 %v455, %v454
    %v462 = vpack.c.b16 %v457, %v456
    %v463 = vpack.c.b16 %v459, %v458
    %vm468 = vcmask 523264
    %v470 = vsel %vm468, %v433, 0
    %v473 = vsel %vm468, %v434, 0
    %475 = vmatprep.subr.bf16.mxu0 0
    %476 = vmatpush1.bf16.msra.mxu0 0
    %477 = vmatprep.subr.bf16.mxu0 0
    %478 = vmatpush1.bf16.msra.mxu0 0
    %479 = vmatprep.subr.bf16.mxu0 0
    %480 = vmatpush1.bf16.msra.mxu0 0
    %481 = vmatprep.subr.bf16.mxu0 0
    %482 = vmatpush1.bf16.msra.mxu0 0
    %483 = vmatprep.subr.bf16.mxu0 0
    %484 = vmatpush1.bf16.msra.mxu0 %v463
    %485 = vmatprep.subr.bf16.mxu0 0
    %486 = vmatpush1.bf16.msra.mxu0 %v462
    %487 = vmatprep.subr.bf16.mxu0 0
    %488 = vmatpush1.bf16.msra.mxu0 %v461
    %489 = vmatprep.subr.bf16.mxu0 0
    %490 = vmatpush1.bf16.msra.mxu0 %v460
    %491 = vmatprep.subr.bf16.mxu0 0
    %492 = vmatpush2.bf16.msra.mxu0 0
    %493 = vmatprep.subr.bf16.mxu0 0
    %494 = vmatpush2.bf16.msra.mxu0 0
    %495 = vmatprep.subr.bf16.mxu0 0
    %496 = vmatpush2.bf16.msra.mxu0 0
    %497 = vmatprep.subr.bf16.mxu0 0
    %498 = vmatpush2.bf16.msra.mxu0 0
    %499 = vmatprep.subr.bf16.mxu0 0
    %500 = vmatpush2.bf16.msra.mxu0 0
    %501 = vmatprep.subr.bf16.mxu0 0
    %502 = vmatpush2.bf16.msra.mxu0 0
    %503 = vmatprep.subr.bf16.mxu0 0
    %504 = vmatpush2.bf16.msra.mxu0 0
    %505 = vmatprep.subr.bf16.mxu0 0
    %506 = vmatpush2.bf16.msra.mxu0 0
    %507 = vmatprep.mubr.bf16.mxu0 0
    %508 = vmatmul.mubr.bf16.gmra.mxu0 %v470
    %v509 = vpop.f32.mrf.mxu0
    %v510 = vadd.f32 0.0, %v509
    %v511 = vpop.f32.mrf.mxu0
    %v512 = vpop.f32.mrf.mxu0
    %v513 = vadd.f32 0.0, %v512
    %v514 = vpop.f32.mrf.mxu0
    %515 = vmatprep.mubr.bf16.mxu0 0
    %516 = vmatmul.mubr.bf16.gmra.mxu0 %v473
    %v517 = vpop.f32.mrf.mxu0
    %v518 = vadd.f32 0.0, %v517
    %v519 = vpop.f32.mrf.mxu0
    %v520 = vpop.f32.mrf.mxu0
    %v521 = vadd.f32 0.0, %v520
    %v522 = vpop.f32.mrf.mxu0
    %523 = vdwg.mxu0
    %v532 = vunpack.c.l.b16 %v359
    %v533 = vunpack.c.l.b16 %v360
    %v534 = vunpack.c.l.b16 %v361
    %v535 = vunpack.c.l.b16 %v362
    %v536 = vunpack.c.l.b16 %v363
    %v537 = vunpack.c.l.b16 %v364
    %v538 = vunpack.c.l.b16 %v365
    %v539 = vunpack.c.l.b16 %v366
    %v540 = vpack.c.b16 %v533, %v532
    %v541 = vpack.c.b16 %v535, %v534
    %v542 = vpack.c.b16 %v537, %v536
    %v543 = vpack.c.b16 %v539, %v538
    %v549 = vsel %vm468, %v357, 0
    %v552 = vsel %vm468, %v358, 0
    %554 = vmatprep.subr.bf16.mxu0 0
    %555 = vmatpush1.bf16.msra.mxu0 0
    %556 = vmatprep.subr.bf16.mxu0 0
    %557 = vmatpush1.bf16.msra.mxu0 0
    %558 = vmatprep.subr.bf16.mxu0 0
    %559 = vmatpush1.bf16.msra.mxu0 0
    %560 = vmatprep.subr.bf16.mxu0 0
    %561 = vmatpush1.bf16.msra.mxu0 0
    %562 = vmatprep.subr.bf16.mxu0 0
    %563 = vmatpush1.bf16.msra.mxu0 %v543
    %564 = vmatprep.subr.bf16.mxu0 0
    %565 = vmatpush1.bf16.msra.mxu0 %v542
    %566 = vmatprep.subr.bf16.mxu0 0
    %567 = vmatpush1.bf16.msra.mxu0 %v541
    %568 = vmatprep.subr.bf16.mxu0 0
    %569 = vmatpush1.bf16.msra.mxu0 %v540
    %570 = vmatprep.subr.bf16.mxu0 0
    %571 = vmatpush2.bf16.msra.mxu0 0
    %572 = vmatprep.subr.bf16.mxu0 0
    %573 = vmatpush2.bf16.msra.mxu0 0
    %574 = vmatprep.subr.bf16.mxu0 0
    %575 = vmatpush2.bf16.msra.mxu0 0
    %576 = vmatprep.subr.bf16.mxu0 0
    %577 = vmatpush2.bf16.msra.mxu0 0
    %578 = vmatprep.subr.bf16.mxu0 0
    %579 = vmatpush2.bf16.msra.mxu0 0
    %580 = vmatprep.subr.bf16.mxu0 0
    %581 = vmatpush2.bf16.msra.mxu0 0
    %582 = vmatprep.subr.bf16.mxu0 0
    %583 = vmatpush2.bf16.msra.mxu0 0
    %584 = vmatprep.subr.bf16.mxu0 0
    %585 = vmatpush2.bf16.msra.mxu0 0
    %586 = vmatprep.mubr.bf16.mxu0 0
    %587 = vmatmul.mubr.bf16.gmra.mxu0 %v549
    %v588 = vpop.f32.mrf.mxu0
    %v589 = vadd.f32 %v510, %v588
    %v590 = vpop.f32.mrf.mxu0
    %v591 = vpop.f32.mrf.mxu0
    %v592 = vadd.f32 %v513, %v591
    %v593 = vpop.f32.mrf.mxu0
    %594 = vmatprep.mubr.bf16.mxu0 0
    %595 = vmatmul.mubr.bf16.gmra.mxu0 %v552
    %v596 = vpop.f32.mrf.mxu0
    %v597 = vadd.f32 %v518, %v596
    %v598 = vpop.f32.mrf.mxu0
    %v599 = vpop.f32.mrf.mxu0
    %v600 = vadd.f32 %v521, %v599
    %v601 = vpop.f32.mrf.mxu0
    %602 = vdwg.mxu0
    %s603 = scalar_lea.vmem %s3, 32
    %v604 = vld [vmem:[%s603] sm:$0xf]
    %v605 = vld [vmem:[%s603 + $0x4] sm:$0xf]
    %v606 = vld [vmem:[%s603 + $0x8] sm:$0xf]
    %v607 = vld [vmem:[%s603 + $0xc] sm:$0xf]
    %v612 = vunpack.c.l.b16 %v604
    %v613 = vunpack.c.l.b16 %v605
    %v614 = vunpack.c.l.b16 %v606
    %v615 = vunpack.c.l.b16 %v607
    %v616 = vpack.c.b16 %v613, %v612
    %v617 = vpack.c.b16 %v615, %v614
    %620 = vmatprep.subr.bf16.mxu0 0
    %621 = vmatpush1.bf16.msra.mxu0 %v291
    %622 = vmatprep.subr.bf16.mxu0 0
    %623 = vmatpush1.bf16.msra.mxu0 %v290
    %624 = vmatprep.subr.bf16.mxu0 0
    %625 = vmatpush1.bf16.msra.mxu0 %v289
    %626 = vmatprep.subr.bf16.mxu0 0
    %627 = vmatpush1.bf16.msra.mxu0 %v288
    %628 = vmatprep.subr.bf16.mxu0 0
    %629 = vmatpush1.bf16.msra.mxu0 %v287
    %630 = vmatprep.subr.bf16.mxu0 0
    %631 = vmatpush1.bf16.msra.mxu0 %v286
    %632 = vmatprep.subr.bf16.mxu0 0
    %633 = vmatpush1.bf16.msra.mxu0 %v285
    %634 = vmatprep.subr.bf16.mxu0 0
    %635 = vmatpush1.bf16.msra.mxu0 %v284
    %636 = vmatprep.subr.bf16.mxu0 0
    %637 = vmatpush2.bf16.msra.mxu0 0
    %638 = vmatprep.subr.bf16.mxu0 0
    %639 = vmatpush2.bf16.msra.mxu0 0
    %640 = vmatprep.subr.bf16.mxu0 0
    %641 = vmatpush2.bf16.msra.mxu0 0
    %642 = vmatprep.subr.bf16.mxu0 0
    %643 = vmatpush2.bf16.msra.mxu0 0
    %644 = vmatprep.subr.bf16.mxu0 0
    %645 = vmatpush2.bf16.msra.mxu0 0
    %646 = vmatprep.subr.bf16.mxu0 0
    %647 = vmatpush2.bf16.msra.mxu0 0
    %648 = vmatprep.subr.bf16.mxu0 0
    %649 = vmatpush2.bf16.msra.mxu0 0
    %650 = vmatprep.subr.bf16.mxu0 0
    %651 = vmatpush2.bf16.msra.mxu0 0
    %652 = vmatprep.mubr.bf16.mxu0 0
    %653 = vmatmul.mubr.bf16.gmra.mxu0 %v616
    %v654 = vpop.f32.mrf.mxu0
    %v655 = vadd.f32 0.0, %v654
    %v656 = vpop.f32.mrf.mxu0
    %v657 = vpop.f32.mrf.mxu0
    %v658 = vadd.f32 0.0, %v657
    %v659 = vpop.f32.mrf.mxu0
    %660 = vmatprep.mubr.bf16.mxu0 0
    %661 = vmatmul.mubr.bf16.gmra.mxu0 %v617
    %v662 = vpop.f32.mrf.mxu0
    %v663 = vadd.f32 0.0, %v662
    %v664 = vpop.f32.mrf.mxu0
    %v665 = vpop.f32.mrf.mxu0
    %v666 = vadd.f32 0.0, %v665
    %v667 = vpop.f32.mrf.mxu0
    %668 = vdwg.mxu0
    %v669 = vpack.c.bf16 %v658, %v655
    %v670 = vpack.c.bf16 %v666, %v663
    %s671 = scalar_lea.vmem %s4, 64
    %v672 = vld [vmem:[%s671] sm:$0xf]
    %v673 = vld [vmem:[%s671 + $0x4] sm:$0xf]
    %v674 = vld [vmem:[%s671 + $0x8] sm:$0xf]
    %v675 = vld [vmem:[%s671 + $0xc] sm:$0xf]
    %v676 = vld [vmem:[%s671 + $0x10] sm:$0xf]
    %v677 = vld [vmem:[%s671 + $0x14] sm:$0xf]
    %v678 = vld [vmem:[%s671 + $0x18] sm:$0xf]
    %v679 = vld [vmem:[%s671 + $0x1c] sm:$0xf]
    %v688 = vunpack.c.l.b16 %v672
    %v689 = vunpack.c.l.b16 %v673
    %v690 = vunpack.c.l.b16 %v674
    %v691 = vunpack.c.l.b16 %v675
    %v692 = vunpack.c.l.b16 %v676
    %v693 = vunpack.c.l.b16 %v677
    %v694 = vunpack.c.l.b16 %v678
    %v695 = vunpack.c.l.b16 %v679
    %v696 = vpack.c.b16 %v689, %v688
    %v697 = vpack.c.b16 %v691, %v690
    %v698 = vpack.c.b16 %v693, %v692
    %v699 = vpack.c.b16 %v695, %v694
    %v705 = vsel %vm468, %v669, 0
    %v708 = vsel %vm468, %v670, 0
    %710 = vmatprep.subr.bf16.mxu0 0
    %711 = vmatpush1.bf16.msra.mxu0 0
    %712 = vmatprep.subr.bf16.mxu0 0
    %713 = vmatpush1.bf16.msra.mxu0 0
    %714 = vmatprep.subr.bf16.mxu0 0
    %715 = vmatpush1.bf16.msra.mxu0 0
    %716 = vmatprep.subr.bf16.mxu0 0
    %717 = vmatpush1.bf16.msra.mxu0 0
    %718 = vmatprep.subr.bf16.mxu0 0
    %719 = vmatpush1.bf16.msra.mxu0 %v699
    %720 = vmatprep.subr.bf16.mxu0 0
    %721 = vmatpush1.bf16.msra.mxu0 %v698
    %722 = vmatprep.subr.bf16.mxu0 0
    %723 = vmatpush1.bf16.msra.mxu0 %v697
    %724 = vmatprep.subr.bf16.mxu0 0
    %725 = vmatpush1.bf16.msra.mxu0 %v696
    %726 = vmatprep.subr.bf16.mxu0 0
    %727 = vmatpush2.bf16.msra.mxu0 0
    %728 = vmatprep.subr.bf16.mxu0 0
    %729 = vmatpush2.bf16.msra.mxu0 0
    %730 = vmatprep.subr.bf16.mxu0 0
    %731 = vmatpush2.bf16.msra.mxu0 0
    %732 = vmatprep.subr.bf16.mxu0 0
    %733 = vmatpush2.bf16.msra.mxu0 0
    %734 = vmatprep.subr.bf16.mxu0 0
    %735 = vmatpush2.bf16.msra.mxu0 0
    %736 = vmatprep.subr.bf16.mxu0 0
    %737 = vmatpush2.bf16.msra.mxu0 0
    %738 = vmatprep.subr.bf16.mxu0 0
    %739 = vmatpush2.bf16.msra.mxu0 0
    %740 = vmatprep.subr.bf16.mxu0 0
    %741 = vmatpush2.bf16.msra.mxu0 0
    %742 = vmatprep.mubr.bf16.mxu0 0
    %743 = vmatmul.mubr.bf16.gmra.mxu0 %v705
    %v744 = vpop.f32.mrf.mxu0
    %v745 = vadd.f32 0.0, %v744
    %v746 = vpop.f32.mrf.mxu0
    %v747 = vpop.f32.mrf.mxu0
    %v748 = vadd.f32 0.0, %v747
    %v749 = vpop.f32.mrf.mxu0
    %750 = vmatprep.mubr.bf16.mxu0 0
    %751 = vmatmul.mubr.bf16.gmra.mxu0 %v708
    %v752 = vpop.f32.mrf.mxu0
    %v753 = vadd.f32 0.0, %v752
    %v754 = vpop.f32.mrf.mxu0
    %v755 = vpop.f32.mrf.mxu0
    %v756 = vadd.f32 0.0, %v755
    %v757 = vpop.f32.mrf.mxu0
    %758 = vdwg.mxu0
    %v759 = vadd.f32 %v589, %v745
    %v760 = vadd.f32 %v592, %v748
    %v761 = vadd.f32 %v597, %v753
    %v762 = vadd.f32 %v600, %v756
    %s763 = scalar_lea.vmem %s3, 48
    %v764 = vld [vmem:[%s763] sm:$0xf]
    %v765 = vld [vmem:[%s763 + $0x4] sm:$0xf]
    %v766 = vld [vmem:[%s763 + $0x8] sm:$0xf]
    %v767 = vld [vmem:[%s763 + $0xc] sm:$0xf]
    %v772 = vunpack.c.l.b16 %v764
    %v773 = vunpack.c.l.b16 %v765
    %v774 = vunpack.c.l.b16 %v766
    %v775 = vunpack.c.l.b16 %v767
    %v776 = vpack.c.b16 %v773, %v772
    %v777 = vpack.c.b16 %v775, %v774
    %780 = vmatprep.subr.bf16.mxu0 0
    %781 = vmatpush1.bf16.msra.mxu0 %v291
    %782 = vmatprep.subr.bf16.mxu0 0
    %783 = vmatpush1.bf16.msra.mxu0 %v290
    %784 = vmatprep.subr.bf16.mxu0 0
    %785 = vmatpush1.bf16.msra.mxu0 %v289
    %786 = vmatprep.subr.bf16.mxu0 0
    %787 = vmatpush1.bf16.msra.mxu0 %v288
    %788 = vmatprep.subr.bf16.mxu0 0
    %789 = vmatpush1.bf16.msra.mxu0 %v287
    %790 = vmatprep.subr.bf16.mxu0 0
    %791 = vmatpush1.bf16.msra.mxu0 %v286
    %792 = vmatprep.subr.bf16.mxu0 0
    %793 = vmatpush1.bf16.msra.mxu0 %v285
    %794 = vmatprep.subr.bf16.mxu0 0
    %795 = vmatpush1.bf16.msra.mxu0 %v284
    %796 = vmatprep.subr.bf16.mxu0 0
    %797 = vmatpush2.bf16.msra.mxu0 0
    %798 = vmatprep.subr.bf16.mxu0 0
    %799 = vmatpush2.bf16.msra.mxu0 0
    %800 = vmatprep.subr.bf16.mxu0 0
    %801 = vmatpush2.bf16.msra.mxu0 0
    %802 = vmatprep.subr.bf16.mxu0 0
    %803 = vmatpush2.bf16.msra.mxu0 0
    %804 = vmatprep.subr.bf16.mxu0 0
    %805 = vmatpush2.bf16.msra.mxu0 0
    %806 = vmatprep.subr.bf16.mxu0 0
    %807 = vmatpush2.bf16.msra.mxu0 0
    %808 = vmatprep.subr.bf16.mxu0 0
    %809 = vmatpush2.bf16.msra.mxu0 0
    %810 = vmatprep.subr.bf16.mxu0 0
    %811 = vmatpush2.bf16.msra.mxu0 0
    %812 = vmatprep.mubr.bf16.mxu0 0
    %813 = vmatmul.mubr.bf16.gmra.mxu0 %v776
    %v814 = vpop.f32.mrf.mxu0
    %v815 = vadd.f32 0.0, %v814
    %v816 = vpop.f32.mrf.mxu0
    %v817 = vpop.f32.mrf.mxu0
    %v818 = vadd.f32 0.0, %v817
    %v819 = vpop.f32.mrf.mxu0
    %820 = vmatprep.mubr.bf16.mxu0 0
    %821 = vmatmul.mubr.bf16.gmra.mxu0 %v777
    %v822 = vpop.f32.mrf.mxu0
    %v823 = vadd.f32 0.0, %v822
    %v824 = vpop.f32.mrf.mxu0
    %v825 = vpop.f32.mrf.mxu0
    %v826 = vadd.f32 0.0, %v825
    %v827 = vpop.f32.mrf.mxu0
    %828 = vdwg.mxu0
    %v829 = vpack.c.bf16 %v818, %v815
    %v830 = vpack.c.bf16 %v826, %v823
    %s831 = scalar_lea.vmem %s4, 96
    %v832 = vld [vmem:[%s831] sm:$0xf]
    %v833 = vld [vmem:[%s831 + $0x4] sm:$0xf]
    %v834 = vld [vmem:[%s831 + $0x8] sm:$0xf]
    %v835 = vld [vmem:[%s831 + $0xc] sm:$0xf]
    %v836 = vld [vmem:[%s831 + $0x10] sm:$0xf]
    %v837 = vld [vmem:[%s831 + $0x14] sm:$0xf]
    %v838 = vld [vmem:[%s831 + $0x18] sm:$0xf]
    %v839 = vld [vmem:[%s831 + $0x1c] sm:$0xf]
    %v848 = vunpack.c.l.b16 %v832
    %v849 = vunpack.c.l.b16 %v833
    %v850 = vunpack.c.l.b16 %v834
    %v851 = vunpack.c.l.b16 %v835
    %v852 = vunpack.c.l.b16 %v836
    %v853 = vunpack.c.l.b16 %v837
    %v854 = vunpack.c.l.b16 %v838
    %v855 = vunpack.c.l.b16 %v839
    %v856 = vpack.c.b16 %v849, %v848
    %v857 = vpack.c.b16 %v851, %v850
    %v858 = vpack.c.b16 %v853, %v852
    %v859 = vpack.c.b16 %v855, %v854
    %v865 = vsel %vm468, %v829, 0
    %v868 = vsel %vm468, %v830, 0
    %870 = vmatprep.subr.bf16.mxu0 0
    %871 = vmatpush1.bf16.msra.mxu0 0
    %872 = vmatprep.subr.bf16.mxu0 0
    %873 = vmatpush1.bf16.msra.mxu0 0
    %874 = vmatprep.subr.bf16.mxu0 0
    %875 = vmatpush1.bf16.msra.mxu0 0
    %876 = vmatprep.subr.bf16.mxu0 0
    %877 = vmatpush1.bf16.msra.mxu0 0
    %878 = vmatprep.subr.bf16.mxu0 0
    %879 = vmatpush1.bf16.msra.mxu0 %v859
    %880 = vmatprep.subr.bf16.mxu0 0
    %881 = vmatpush1.bf16.msra.mxu0 %v858
    %882 = vmatprep.subr.bf16.mxu0 0
    %883 = vmatpush1.bf16.msra.mxu0 %v857
    %884 = vmatprep.subr.bf16.mxu0 0
    %885 = vmatpush1.bf16.msra.mxu0 %v856
    %886 = vmatprep.subr.bf16.mxu0 0
    %887 = vmatpush2.bf16.msra.mxu0 0
    %888 = vmatprep.subr.bf16.mxu0 0
    %889 = vmatpush2.bf16.msra.mxu0 0
    %890 = vmatprep.subr.bf16.mxu0 0
    %891 = vmatpush2.bf16.msra.mxu0 0
    %892 = vmatprep.subr.bf16.mxu0 0
    %893 = vmatpush2.bf16.msra.mxu0 0
    %894 = vmatprep.subr.bf16.mxu0 0
    %895 = vmatpush2.bf16.msra.mxu0 0
    %896 = vmatprep.subr.bf16.mxu0 0
    %897 = vmatpush2.bf16.msra.mxu0 0
    %898 = vmatprep.subr.bf16.mxu0 0
    %899 = vmatpush2.bf16.msra.mxu0 0
    %900 = vmatprep.subr.bf16.mxu0 0
    %901 = vmatpush2.bf16.msra.mxu0 0
    %902 = vmatprep.mubr.bf16.mxu0 0
    %903 = vmatmul.mubr.bf16.gmra.mxu0 %v865
    %v904 = vpop.f32.mrf.mxu0
    %v905 = vadd.f32 0.0, %v904
    %v906 = vpop.f32.mrf.mxu0
    %v907 = vpop.f32.mrf.mxu0
    %v908 = vadd.f32 0.0, %v907
    %v909 = vpop.f32.mrf.mxu0
    %910 = vmatprep.mubr.bf16.mxu0 0
    %911 = vmatmul.mubr.bf16.gmra.mxu0 %v868
    %v912 = vpop.f32.mrf.mxu0
    %v913 = vadd.f32 0.0, %v912
    %v914 = vpop.f32.mrf.mxu0
    %v915 = vpop.f32.mrf.mxu0
    %v916 = vadd.f32 0.0, %v915
    %v917 = vpop.f32.mrf.mxu0
    %918 = vdwg.mxu0
    %v919 = vadd.f32 %v759, %v905
    %v920 = vadd.f32 %v760, %v908
    %v921 = vadd.f32 %v761, %v913
    %v922 = vadd.f32 %v762, %v916
    %s923 = scalar_lea.vmem %s3, 64
    %v924 = vld [vmem:[%s923] sm:$0xf]
    %v925 = vld [vmem:[%s923 + $0x4] sm:$0xf]
    %v926 = vld [vmem:[%s923 + $0x8] sm:$0xf]
    %v927 = vld [vmem:[%s923 + $0xc] sm:$0xf]
    %v932 = vunpack.c.l.b16 %v924
    %v933 = vunpack.c.l.b16 %v925
    %v934 = vunpack.c.l.b16 %v926
    %v935 = vunpack.c.l.b16 %v927
    %v936 = vpack.c.b16 %v933, %v932
    %v937 = vpack.c.b16 %v935, %v934
    %940 = vmatprep.subr.bf16.mxu0 0
    %941 = vmatpush1.bf16.msra.mxu0 %v291
    %942 = vmatprep.subr.bf16.mxu0 0
    %943 = vmatpush1.bf16.msra.mxu0 %v290
    %944 = vmatprep.subr.bf16.mxu0 0
    %945 = vmatpush1.bf16.msra.mxu0 %v289
    %946 = vmatprep.subr.bf16.mxu0 0
    %947 = vmatpush1.bf16.msra.mxu0 %v288
    %948 = vmatprep.subr.bf16.mxu0 0
    %949 = vmatpush1.bf16.msra.mxu0 %v287
    %950 = vmatprep.subr.bf16.mxu0 0
    %951 = vmatpush1.bf16.msra.mxu0 %v286
    %952 = vmatprep.subr.bf16.mxu0 0
    %953 = vmatpush1.bf16.msra.mxu0 %v285
    %954 = vmatprep.subr.bf16.mxu0 0
    %955 = vmatpush1.bf16.msra.mxu0 %v284
    %956 = vmatprep.subr.bf16.mxu0 0
    %957 = vmatpush2.bf16.msra.mxu0 0
    %958 = vmatprep.subr.bf16.mxu0 0
    %959 = vmatpush2.bf16.msra.mxu0 0
    %960 = vmatprep.subr.bf16.mxu0 0
    %961 = vmatpush2.bf16.msra.mxu0 0
    %962 = vmatprep.subr.bf16.mxu0 0
    %963 = vmatpush2.bf16.msra.mxu0 0
    %964 = vmatprep.subr.bf16.mxu0 0
    %965 = vmatpush2.bf16.msra.mxu0 0
    %966 = vmatprep.subr.bf16.mxu0 0
    %967 = vmatpush2.bf16.msra.mxu0 0
    %968 = vmatprep.subr.bf16.mxu0 0
    %969 = vmatpush2.bf16.msra.mxu0 0
    %970 = vmatprep.subr.bf16.mxu0 0
    %971 = vmatpush2.bf16.msra.mxu0 0
    %972 = vmatprep.mubr.bf16.mxu0 0
    %973 = vmatmul.mubr.bf16.gmra.mxu0 %v936
    %v974 = vpop.f32.mrf.mxu0
    %v975 = vadd.f32 0.0, %v974
    %v976 = vpop.f32.mrf.mxu0
    %v977 = vpop.f32.mrf.mxu0
    %v978 = vadd.f32 0.0, %v977
    %v979 = vpop.f32.mrf.mxu0
    %980 = vmatprep.mubr.bf16.mxu0 0
    %981 = vmatmul.mubr.bf16.gmra.mxu0 %v937
    %v982 = vpop.f32.mrf.mxu0
    %v983 = vadd.f32 0.0, %v982
    %v984 = vpop.f32.mrf.mxu0
    %v985 = vpop.f32.mrf.mxu0
    %v986 = vadd.f32 0.0, %v985
    %v987 = vpop.f32.mrf.mxu0
    %988 = vdwg.mxu0
    %v989 = vpack.c.bf16 %v978, %v975
    %v990 = vpack.c.bf16 %v986, %v983
    %s991 = scalar_lea.vmem %s4, 128
    %v992 = vld [vmem:[%s991] sm:$0xf]
    %v993 = vld [vmem:[%s991 + $0x4] sm:$0xf]
    %v994 = vld [vmem:[%s991 + $0x8] sm:$0xf]
    %v995 = vld [vmem:[%s991 + $0xc] sm:$0xf]
    %v996 = vld [vmem:[%s991 + $0x10] sm:$0xf]
    %v997 = vld [vmem:[%s991 + $0x14] sm:$0xf]
    %v998 = vld [vmem:[%s991 + $0x18] sm:$0xf]
    %v999 = vld [vmem:[%s991 + $0x1c] sm:$0xf]
    %v1008 = vunpack.c.l.b16 %v992
    %v1009 = vunpack.c.l.b16 %v993
    %v1010 = vunpack.c.l.b16 %v994
    %v1011 = vunpack.c.l.b16 %v995
    %v1012 = vunpack.c.l.b16 %v996
    %v1013 = vunpack.c.l.b16 %v997
    %v1014 = vunpack.c.l.b16 %v998
    %v1015 = vunpack.c.l.b16 %v999
    %v1016 = vpack.c.b16 %v1009, %v1008
    %v1017 = vpack.c.b16 %v1011, %v1010
    %v1018 = vpack.c.b16 %v1013, %v1012
    %v1019 = vpack.c.b16 %v1015, %v1014
    %v1025 = vsel %vm468, %v989, 0
    %v1028 = vsel %vm468, %v990, 0
    %1030 = vmatprep.subr.bf16.mxu0 0
    %1031 = vmatpush1.bf16.msra.mxu0 0
    %1032 = vmatprep.subr.bf16.mxu0 0
    %1033 = vmatpush1.bf16.msra.mxu0 0
    %1034 = vmatprep.subr.bf16.mxu0 0
    %1035 = vmatpush1.bf16.msra.mxu0 0
    %1036 = vmatprep.subr.bf16.mxu0 0
    %1037 = vmatpush1.bf16.msra.mxu0 0
    %1038 = vmatprep.subr.bf16.mxu0 0
    %1039 = vmatpush1.bf16.msra.mxu0 %v1019
    %1040 = vmatprep.subr.bf16.mxu0 0
    %1041 = vmatpush1.bf16.msra.mxu0 %v1018
    %1042 = vmatprep.subr.bf16.mxu0 0
    %1043 = vmatpush1.bf16.msra.mxu0 %v1017
    %1044 = vmatprep.subr.bf16.mxu0 0
    %1045 = vmatpush1.bf16.msra.mxu0 %v1016
    %1046 = vmatprep.subr.bf16.mxu0 0
    %1047 = vmatpush2.bf16.msra.mxu0 0
    %1048 = vmatprep.subr.bf16.mxu0 0
    %1049 = vmatpush2.bf16.msra.mxu0 0
    %1050 = vmatprep.subr.bf16.mxu0 0
    %1051 = vmatpush2.bf16.msra.mxu0 0
    %1052 = vmatprep.subr.bf16.mxu0 0
    %1053 = vmatpush2.bf16.msra.mxu0 0
    %1054 = vmatprep.subr.bf16.mxu0 0
    %1055 = vmatpush2.bf16.msra.mxu0 0
    %1056 = vmatprep.subr.bf16.mxu0 0
    %1057 = vmatpush2.bf16.msra.mxu0 0
    %1058 = vmatprep.subr.bf16.mxu0 0
    %1059 = vmatpush2.bf16.msra.mxu0 0
    %1060 = vmatprep.subr.bf16.mxu0 0
    %1061 = vmatpush2.bf16.msra.mxu0 0
    %1062 = vmatprep.mubr.bf16.mxu0 0
    %1063 = vmatmul.mubr.bf16.gmra.mxu0 %v1025
    %v1064 = vpop.f32.mrf.mxu0
    %v1065 = vadd.f32 0.0, %v1064
    %v1066 = vpop.f32.mrf.mxu0
    %v1067 = vpop.f32.mrf.mxu0
    %v1068 = vadd.f32 0.0, %v1067
    %v1069 = vpop.f32.mrf.mxu0
    %1070 = vmatprep.mubr.bf16.mxu0 0
    %1071 = vmatmul.mubr.bf16.gmra.mxu0 %v1028
    %v1072 = vpop.f32.mrf.mxu0
    %v1073 = vadd.f32 0.0, %v1072
    %v1074 = vpop.f32.mrf.mxu0
    %v1075 = vpop.f32.mrf.mxu0
    %v1076 = vadd.f32 0.0, %v1075
    %v1077 = vpop.f32.mrf.mxu0
    %1078 = vdwg.mxu0
    %v1079 = vadd.f32 %v919, %v1065
    %v1080 = vadd.f32 %v920, %v1068
    %v1081 = vadd.f32 %v921, %v1073
    %v1082 = vadd.f32 %v922, %v1076
    %s1083 = scalar_lea.vmem %s3, 80
    %v1084 = vld [vmem:[%s1083] sm:$0xf]
    %v1085 = vld [vmem:[%s1083 + $0x4] sm:$0xf]
    %v1086 = vld [vmem:[%s1083 + $0x8] sm:$0xf]
    %v1087 = vld [vmem:[%s1083 + $0xc] sm:$0xf]
    %v1092 = vunpack.c.l.b16 %v1084
    %v1093 = vunpack.c.l.b16 %v1085
    %v1094 = vunpack.c.l.b16 %v1086
    %v1095 = vunpack.c.l.b16 %v1087
    %v1096 = vpack.c.b16 %v1093, %v1092
    %v1097 = vpack.c.b16 %v1095, %v1094
    %1100 = vmatprep.subr.bf16.mxu0 0
    %1101 = vmatpush1.bf16.msra.mxu0 %v291
    %1102 = vmatprep.subr.bf16.mxu0 0
    %1103 = vmatpush1.bf16.msra.mxu0 %v290
    %1104 = vmatprep.subr.bf16.mxu0 0
    %1105 = vmatpush1.bf16.msra.mxu0 %v289
    %1106 = vmatprep.subr.bf16.mxu0 0
    %1107 = vmatpush1.bf16.msra.mxu0 %v288
    %1108 = vmatprep.subr.bf16.mxu0 0
    %1109 = vmatpush1.bf16.msra.mxu0 %v287
    %1110 = vmatprep.subr.bf16.mxu0 0
    %1111 = vmatpush1.bf16.msra.mxu0 %v286
    %1112 = vmatprep.subr.bf16.mxu0 0
    %1113 = vmatpush1.bf16.msra.mxu0 %v285
    %1114 = vmatprep.subr.bf16.mxu0 0
    %1115 = vmatpush1.bf16.msra.mxu0 %v284
    %1116 = vmatprep.subr.bf16.mxu0 0
    %1117 = vmatpush2.bf16.msra.mxu0 0
    %1118 = vmatprep.subr.bf16.mxu0 0
    %1119 = vmatpush2.bf16.msra.mxu0 0
    %1120 = vmatprep.subr.bf16.mxu0 0
    %1121 = vmatpush2.bf16.msra.mxu0 0
    %1122 = vmatprep.subr.bf16.mxu0 0
    %1123 = vmatpush2.bf16.msra.mxu0 0
    %1124 = vmatprep.subr.bf16.mxu0 0
    %1125 = vmatpush2.bf16.msra.mxu0 0
    %1126 = vmatprep.subr.bf16.mxu0 0
    %1127 = vmatpush2.bf16.msra.mxu0 0
    %1128 = vmatprep.subr.bf16.mxu0 0
    %1129 = vmatpush2.bf16.msra.mxu0 0
    %1130 = vmatprep.subr.bf16.mxu0 0
    %1131 = vmatpush2.bf16.msra.mxu0 0
    %1132 = vmatprep.mubr.bf16.mxu0 0
    %1133 = vmatmul.mubr.bf16.gmra.mxu0 %v1096
    %v1134 = vpop.f32.mrf.mxu0
    %v1135 = vadd.f32 0.0, %v1134
    %v1136 = vpop.f32.mrf.mxu0
    %v1137 = vpop.f32.mrf.mxu0
    %v1138 = vadd.f32 0.0, %v1137
    %v1139 = vpop.f32.mrf.mxu0
    %1140 = vmatprep.mubr.bf16.mxu0 0
    %1141 = vmatmul.mubr.bf16.gmra.mxu0 %v1097
    %v1142 = vpop.f32.mrf.mxu0
    %v1143 = vadd.f32 0.0, %v1142
    %v1144 = vpop.f32.mrf.mxu0
    %v1145 = vpop.f32.mrf.mxu0
    %v1146 = vadd.f32 0.0, %v1145
    %v1147 = vpop.f32.mrf.mxu0
    %1148 = vdwg.mxu0
    %v1149 = vpack.c.bf16 %v1138, %v1135
    %v1150 = vpack.c.bf16 %v1146, %v1143
    %s1151 = scalar_lea.vmem %s4, 160
    %v1152 = vld [vmem:[%s1151] sm:$0xf]
    %v1153 = vld [vmem:[%s1151 + $0x4] sm:$0xf]
    %v1154 = vld [vmem:[%s1151 + $0x8] sm:$0xf]
    %v1155 = vld [vmem:[%s1151 + $0xc] sm:$0xf]
    %v1156 = vld [vmem:[%s1151 + $0x10] sm:$0xf]
    %v1157 = vld [vmem:[%s1151 + $0x14] sm:$0xf]
    %v1158 = vld [vmem:[%s1151 + $0x18] sm:$0xf]
    %v1159 = vld [vmem:[%s1151 + $0x1c] sm:$0xf]
    %v1168 = vunpack.c.l.b16 %v1152
    %v1169 = vunpack.c.l.b16 %v1153
    %v1170 = vunpack.c.l.b16 %v1154
    %v1171 = vunpack.c.l.b16 %v1155
    %v1172 = vunpack.c.l.b16 %v1156
    %v1173 = vunpack.c.l.b16 %v1157
    %v1174 = vunpack.c.l.b16 %v1158
    %v1175 = vunpack.c.l.b16 %v1159
    %v1176 = vpack.c.b16 %v1169, %v1168
    %v1177 = vpack.c.b16 %v1171, %v1170
    %v1178 = vpack.c.b16 %v1173, %v1172
    %v1179 = vpack.c.b16 %v1175, %v1174
    %v1185 = vsel %vm468, %v1149, 0
    %v1188 = vsel %vm468, %v1150, 0
    %1190 = vmatprep.subr.bf16.mxu0 0
    %1191 = vmatpush1.bf16.msra.mxu0 0
    %1192 = vmatprep.subr.bf16.mxu0 0
    %1193 = vmatpush1.bf16.msra.mxu0 0
    %1194 = vmatprep.subr.bf16.mxu0 0
    %1195 = vmatpush1.bf16.msra.mxu0 0
    %1196 = vmatprep.subr.bf16.mxu0 0
    %1197 = vmatpush1.bf16.msra.mxu0 0
    %1198 = vmatprep.subr.bf16.mxu0 0
    %1199 = vmatpush1.bf16.msra.mxu0 %v1179
    %1200 = vmatprep.subr.bf16.mxu0 0
    %1201 = vmatpush1.bf16.msra.mxu0 %v1178
    %1202 = vmatprep.subr.bf16.mxu0 0
    %1203 = vmatpush1.bf16.msra.mxu0 %v1177
    %1204 = vmatprep.subr.bf16.mxu0 0
    %1205 = vmatpush1.bf16.msra.mxu0 %v1176
    %1206 = vmatprep.subr.bf16.mxu0 0
    %1207 = vmatpush2.bf16.msra.mxu0 0
    %1208 = vmatprep.subr.bf16.mxu0 0
    %1209 = vmatpush2.bf16.msra.mxu0 0
    %1210 = vmatprep.subr.bf16.mxu0 0
    %1211 = vmatpush2.bf16.msra.mxu0 0
    %1212 = vmatprep.subr.bf16.mxu0 0
    %1213 = vmatpush2.bf16.msra.mxu0 0
    %1214 = vmatprep.subr.bf16.mxu0 0
    %1215 = vmatpush2.bf16.msra.mxu0 0
    %1216 = vmatprep.subr.bf16.mxu0 0
    %1217 = vmatpush2.bf16.msra.mxu0 0
    %1218 = vmatprep.subr.bf16.mxu0 0
    %1219 = vmatpush2.bf16.msra.mxu0 0
    %1220 = vmatprep.subr.bf16.mxu0 0
    %1221 = vmatpush2.bf16.msra.mxu0 0
    %1222 = vmatprep.mubr.bf16.mxu0 0
    %1223 = vmatmul.mubr.bf16.gmra.mxu0 %v1185
    %v1224 = vpop.f32.mrf.mxu0
    %v1225 = vadd.f32 0.0, %v1224
    %v1226 = vpop.f32.mrf.mxu0
    %v1227 = vpop.f32.mrf.mxu0
    %v1228 = vadd.f32 0.0, %v1227
    %v1229 = vpop.f32.mrf.mxu0
    %1230 = vmatprep.mubr.bf16.mxu0 0
    %1231 = vmatmul.mubr.bf16.gmra.mxu0 %v1188
    %v1232 = vpop.f32.mrf.mxu0
    %v1233 = vadd.f32 0.0, %v1232
    %v1234 = vpop.f32.mrf.mxu0
    %v1235 = vpop.f32.mrf.mxu0
    %v1236 = vadd.f32 0.0, %v1235
    %v1237 = vpop.f32.mrf.mxu0
    %1238 = vdwg.mxu0
    %v1239 = vadd.f32 %v1079, %v1225
    %v1240 = vadd.f32 %v1080, %v1228
    %v1241 = vadd.f32 %v1081, %v1233
    %v1242 = vadd.f32 %v1082, %v1236
    %s1243 = scalar_lea.vmem %s3, 96
    %v1244 = vld [vmem:[%s1243] sm:$0xf]
    %v1245 = vld [vmem:[%s1243 + $0x4] sm:$0xf]
    %v1246 = vld [vmem:[%s1243 + $0x8] sm:$0xf]
    %v1247 = vld [vmem:[%s1243 + $0xc] sm:$0xf]
    %v1252 = vunpack.c.l.b16 %v1244
    %v1253 = vunpack.c.l.b16 %v1245
    %v1254 = vunpack.c.l.b16 %v1246
    %v1255 = vunpack.c.l.b16 %v1247
    %v1256 = vpack.c.b16 %v1253, %v1252
    %v1257 = vpack.c.b16 %v1255, %v1254
    %1260 = vmatprep.subr.bf16.mxu0 0
    %1261 = vmatpush1.bf16.msra.mxu0 %v291
    %1262 = vmatprep.subr.bf16.mxu0 0
    %1263 = vmatpush1.bf16.msra.mxu0 %v290
    %1264 = vmatprep.subr.bf16.mxu0 0
    %1265 = vmatpush1.bf16.msra.mxu0 %v289
    %1266 = vmatprep.subr.bf16.mxu0 0
    %1267 = vmatpush1.bf16.msra.mxu0 %v288
    %1268 = vmatprep.subr.bf16.mxu0 0
    %1269 = vmatpush1.bf16.msra.mxu0 %v287
    %1270 = vmatprep.subr.bf16.mxu0 0
    %1271 = vmatpush1.bf16.msra.mxu0 %v286
    %1272 = vmatprep.subr.bf16.mxu0 0
    %1273 = vmatpush1.bf16.msra.mxu0 %v285
    %1274 = vmatprep.subr.bf16.mxu0 0
    %1275 = vmatpush1.bf16.msra.mxu0 %v284
    %1276 = vmatprep.subr.bf16.mxu0 0
    %1277 = vmatpush2.bf16.msra.mxu0 0
    %1278 = vmatprep.subr.bf16.mxu0 0
    %1279 = vmatpush2.bf16.msra.mxu0 0
    %1280 = vmatprep.subr.bf16.mxu0 0
    %1281 = vmatpush2.bf16.msra.mxu0 0
    %1282 = vmatprep.subr.bf16.mxu0 0
    %1283 = vmatpush2.bf16.msra.mxu0 0
    %1284 = vmatprep.subr.bf16.mxu0 0
    %1285 = vmatpush2.bf16.msra.mxu0 0
    %1286 = vmatprep.subr.bf16.mxu0 0
    %1287 = vmatpush2.bf16.msra.mxu0 0
    %1288 = vmatprep.subr.bf16.mxu0 0
    %1289 = vmatpush2.bf16.msra.mxu0 0
    %1290 = vmatprep.subr.bf16.mxu0 0
    %1291 = vmatpush2.bf16.msra.mxu0 0
    %1292 = vmatprep.mubr.bf16.mxu0 0
    %1293 = vmatmul.mubr.bf16.gmra.mxu0 %v1256
    %v1294 = vpop.f32.mrf.mxu0
    %v1295 = vadd.f32 0.0, %v1294
    %v1296 = vpop.f32.mrf.mxu0
    %v1297 = vpop.f32.mrf.mxu0
    %v1298 = vadd.f32 0.0, %v1297
    %v1299 = vpop.f32.mrf.mxu0
    %1300 = vmatprep.mubr.bf16.mxu0 0
    %1301 = vmatmul.mubr.bf16.gmra.mxu0 %v1257
    %v1302 = vpop.f32.mrf.mxu0
    %v1303 = vadd.f32 0.0, %v1302
    %v1304 = vpop.f32.mrf.mxu0
    %v1305 = vpop.f32.mrf.mxu0
    %v1306 = vadd.f32 0.0, %v1305
    %v1307 = vpop.f32.mrf.mxu0
    %1308 = vdwg.mxu0
    %v1309 = vpack.c.bf16 %v1298, %v1295
    %v1310 = vpack.c.bf16 %v1306, %v1303
    %s1311 = scalar_lea.vmem %s4, 192
    %v1312 = vld [vmem:[%s1311] sm:$0xf]
    %v1313 = vld [vmem:[%s1311 + $0x4] sm:$0xf]
    %v1314 = vld [vmem:[%s1311 + $0x8] sm:$0xf]
    %v1315 = vld [vmem:[%s1311 + $0xc] sm:$0xf]
    %v1316 = vld [vmem:[%s1311 + $0x10] sm:$0xf]
    %v1317 = vld [vmem:[%s1311 + $0x14] sm:$0xf]
    %v1318 = vld [vmem:[%s1311 + $0x18] sm:$0xf]
    %v1319 = vld [vmem:[%s1311 + $0x1c] sm:$0xf]
    %v1328 = vunpack.c.l.b16 %v1312
    %v1329 = vunpack.c.l.b16 %v1313
    %v1330 = vunpack.c.l.b16 %v1314
    %v1331 = vunpack.c.l.b16 %v1315
    %v1332 = vunpack.c.l.b16 %v1316
    %v1333 = vunpack.c.l.b16 %v1317
    %v1334 = vunpack.c.l.b16 %v1318
    %v1335 = vunpack.c.l.b16 %v1319
    %v1336 = vpack.c.b16 %v1329, %v1328
    %v1337 = vpack.c.b16 %v1331, %v1330
    %v1338 = vpack.c.b16 %v1333, %v1332
    %v1339 = vpack.c.b16 %v1335, %v1334
    %v1345 = vsel %vm468, %v1309, 0
    %v1348 = vsel %vm468, %v1310, 0
    %1350 = vmatprep.subr.bf16.mxu0 0
    %1351 = vmatpush1.bf16.msra.mxu0 0
    %1352 = vmatprep.subr.bf16.mxu0 0
    %1353 = vmatpush1.bf16.msra.mxu0 0
    %1354 = vmatprep.subr.bf16.mxu0 0
    %1355 = vmatpush1.bf16.msra.mxu0 0
    %1356 = vmatprep.subr.bf16.mxu0 0
    %1357 = vmatpush1.bf16.msra.mxu0 0
    %1358 = vmatprep.subr.bf16.mxu0 0
    %1359 = vmatpush1.bf16.msra.mxu0 %v1339
    %1360 = vmatprep.subr.bf16.mxu0 0
    %1361 = vmatpush1.bf16.msra.mxu0 %v1338
    %1362 = vmatprep.subr.bf16.mxu0 0
    %1363 = vmatpush1.bf16.msra.mxu0 %v1337
    %1364 = vmatprep.subr.bf16.mxu0 0
    %1365 = vmatpush1.bf16.msra.mxu0 %v1336
    %1366 = vmatprep.subr.bf16.mxu0 0
    %1367 = vmatpush2.bf16.msra.mxu0 0
    %1368 = vmatprep.subr.bf16.mxu0 0
    %1369 = vmatpush2.bf16.msra.mxu0 0
    %1370 = vmatprep.subr.bf16.mxu0 0
    %1371 = vmatpush2.bf16.msra.mxu0 0
    %1372 = vmatprep.subr.bf16.mxu0 0
    %1373 = vmatpush2.bf16.msra.mxu0 0
    %1374 = vmatprep.subr.bf16.mxu0 0
    %1375 = vmatpush2.bf16.msra.mxu0 0
    %1376 = vmatprep.subr.bf16.mxu0 0
    %1377 = vmatpush2.bf16.msra.mxu0 0
    %1378 = vmatprep.subr.bf16.mxu0 0
    %1379 = vmatpush2.bf16.msra.mxu0 0
    %1380 = vmatprep.subr.bf16.mxu0 0
    %1381 = vmatpush2.bf16.msra.mxu0 0
    %1382 = vmatprep.mubr.bf16.mxu0 0
    %1383 = vmatmul.mubr.bf16.gmra.mxu0 %v1345
    %v1384 = vpop.f32.mrf.mxu0
    %v1385 = vadd.f32 0.0, %v1384
    %v1386 = vpop.f32.mrf.mxu0
    %v1387 = vpop.f32.mrf.mxu0
    %v1388 = vadd.f32 0.0, %v1387
    %v1389 = vpop.f32.mrf.mxu0
    %1390 = vmatprep.mubr.bf16.mxu0 0
    %1391 = vmatmul.mubr.bf16.gmra.mxu0 %v1348
    %v1392 = vpop.f32.mrf.mxu0
    %v1393 = vadd.f32 0.0, %v1392
    %v1394 = vpop.f32.mrf.mxu0
    %v1395 = vpop.f32.mrf.mxu0
    %v1396 = vadd.f32 0.0, %v1395
    %v1397 = vpop.f32.mrf.mxu0
    %1398 = vdwg.mxu0
    %v1399 = vadd.f32 %v1239, %v1385
    %v1400 = vadd.f32 %v1240, %v1388
    %v1401 = vadd.f32 %v1241, %v1393
    %v1402 = vadd.f32 %v1242, %v1396
    %s1403 = scalar_lea.vmem %s3, 112
    %v1404 = vld [vmem:[%s1403] sm:$0xf]
    %v1405 = vld [vmem:[%s1403 + $0x4] sm:$0xf]
    %v1406 = vld [vmem:[%s1403 + $0x8] sm:$0xf]
    %v1407 = vld [vmem:[%s1403 + $0xc] sm:$0xf]
    %v1412 = vunpack.c.l.b16 %v1404
    %v1413 = vunpack.c.l.b16 %v1405
    %v1414 = vunpack.c.l.b16 %v1406
    %v1415 = vunpack.c.l.b16 %v1407
    %v1416 = vpack.c.b16 %v1413, %v1412
    %v1417 = vpack.c.b16 %v1415, %v1414
    %1420 = vmatprep.subr.bf16.mxu0 0
    %1421 = vmatpush1.bf16.msra.mxu0 %v291
    %1422 = vmatprep.subr.bf16.mxu0 0
    %1423 = vmatpush1.bf16.msra.mxu0 %v290
    %1424 = vmatprep.subr.bf16.mxu0 0
    %1425 = vmatpush1.bf16.msra.mxu0 %v289
    %1426 = vmatprep.subr.bf16.mxu0 0
    %1427 = vmatpush1.bf16.msra.mxu0 %v288
    %1428 = vmatprep.subr.bf16.mxu0 0
    %1429 = vmatpush1.bf16.msra.mxu0 %v287
    %1430 = vmatprep.subr.bf16.mxu0 0
    %1431 = vmatpush1.bf16.msra.mxu0 %v286
    %1432 = vmatprep.subr.bf16.mxu0 0
    %1433 = vmatpush1.bf16.msra.mxu0 %v285
    %1434 = vmatprep.subr.bf16.mxu0 0
    %1435 = vmatpush1.bf16.msra.mxu0 %v284
    %1436 = vmatprep.subr.bf16.mxu0 0
    %1437 = vmatpush2.bf16.msra.mxu0 0
    %1438 = vmatprep.subr.bf16.mxu0 0
    %1439 = vmatpush2.bf16.msra.mxu0 0
    %1440 = vmatprep.subr.bf16.mxu0 0
    %1441 = vmatpush2.bf16.msra.mxu0 0
    %1442 = vmatprep.subr.bf16.mxu0 0
    %1443 = vmatpush2.bf16.msra.mxu0 0
    %1444 = vmatprep.subr.bf16.mxu0 0
    %1445 = vmatpush2.bf16.msra.mxu0 0
    %1446 = vmatprep.subr.bf16.mxu0 0
    %1447 = vmatpush2.bf16.msra.mxu0 0
    %1448 = vmatprep.subr.bf16.mxu0 0
    %1449 = vmatpush2.bf16.msra.mxu0 0
    %1450 = vmatprep.subr.bf16.mxu0 0
    %1451 = vmatpush2.bf16.msra.mxu0 0
    %1452 = vmatprep.mubr.bf16.mxu0 0
    %1453 = vmatmul.mubr.bf16.gmra.mxu0 %v1416
    %v1454 = vpop.f32.mrf.mxu0
    %v1455 = vadd.f32 0.0, %v1454
    %v1456 = vpop.f32.mrf.mxu0
    %v1457 = vpop.f32.mrf.mxu0
    %v1458 = vadd.f32 0.0, %v1457
    %v1459 = vpop.f32.mrf.mxu0
    %1460 = vmatprep.mubr.bf16.mxu0 0
    %1461 = vmatmul.mubr.bf16.gmra.mxu0 %v1417
    %v1462 = vpop.f32.mrf.mxu0
    %v1463 = vadd.f32 0.0, %v1462
    %v1464 = vpop.f32.mrf.mxu0
    %v1465 = vpop.f32.mrf.mxu0
    %v1466 = vadd.f32 0.0, %v1465
    %v1467 = vpop.f32.mrf.mxu0
    %1468 = vdwg.mxu0
    %v1469 = vpack.c.bf16 %v1458, %v1455
    %v1470 = vpack.c.bf16 %v1466, %v1463
    %s1471 = scalar_lea.vmem %s4, 224
    %v1472 = vld [vmem:[%s1471] sm:$0xf]
    %v1473 = vld [vmem:[%s1471 + $0x4] sm:$0xf]
    %v1474 = vld [vmem:[%s1471 + $0x8] sm:$0xf]
    %v1475 = vld [vmem:[%s1471 + $0xc] sm:$0xf]
    %v1476 = vld [vmem:[%s1471 + $0x10] sm:$0xf]
    %v1477 = vld [vmem:[%s1471 + $0x14] sm:$0xf]
    %v1478 = vld [vmem:[%s1471 + $0x18] sm:$0xf]
    %v1479 = vld [vmem:[%s1471 + $0x1c] sm:$0xf]
    %v1488 = vunpack.c.l.b16 %v1472
    %v1489 = vunpack.c.l.b16 %v1473
    %v1490 = vunpack.c.l.b16 %v1474
    %v1491 = vunpack.c.l.b16 %v1475
    %v1492 = vunpack.c.l.b16 %v1476
    %v1493 = vunpack.c.l.b16 %v1477
    %v1494 = vunpack.c.l.b16 %v1478
    %v1495 = vunpack.c.l.b16 %v1479
    %v1496 = vpack.c.b16 %v1489, %v1488
    %v1497 = vpack.c.b16 %v1491, %v1490
    %v1498 = vpack.c.b16 %v1493, %v1492
    %v1499 = vpack.c.b16 %v1495, %v1494
    %v1505 = vsel %vm468, %v1469, 0
    %v1508 = vsel %vm468, %v1470, 0
    %1510 = vmatprep.subr.bf16.mxu0 0
    %1511 = vmatpush1.bf16.msra.mxu0 0
    %1512 = vmatprep.subr.bf16.mxu0 0
    %1513 = vmatpush1.bf16.msra.mxu0 0
    %1514 = vmatprep.subr.bf16.mxu0 0
    %1515 = vmatpush1.bf16.msra.mxu0 0
    %1516 = vmatprep.subr.bf16.mxu0 0
    %1517 = vmatpush1.bf16.msra.mxu0 0
    %1518 = vmatprep.subr.bf16.mxu0 0
    %1519 = vmatpush1.bf16.msra.mxu0 %v1499
    %1520 = vmatprep.subr.bf16.mxu0 0
    %1521 = vmatpush1.bf16.msra.mxu0 %v1498
    %1522 = vmatprep.subr.bf16.mxu0 0
    %1523 = vmatpush1.bf16.msra.mxu0 %v1497
    %1524 = vmatprep.subr.bf16.mxu0 0
    %1525 = vmatpush1.bf16.msra.mxu0 %v1496
    %1526 = vmatprep.subr.bf16.mxu0 0
    %1527 = vmatpush2.bf16.msra.mxu0 0
    %1528 = vmatprep.subr.bf16.mxu0 0
    %1529 = vmatpush2.bf16.msra.mxu0 0
    %1530 = vmatprep.subr.bf16.mxu0 0
    %1531 = vmatpush2.bf16.msra.mxu0 0
    %1532 = vmatprep.subr.bf16.mxu0 0
    %1533 = vmatpush2.bf16.msra.mxu0 0
    %1534 = vmatprep.subr.bf16.mxu0 0
    %1535 = vmatpush2.bf16.msra.mxu0 0
    %1536 = vmatprep.subr.bf16.mxu0 0
    %1537 = vmatpush2.bf16.msra.mxu0 0
    %1538 = vmatprep.subr.bf16.mxu0 0
    %1539 = vmatpush2.bf16.msra.mxu0 0
    %1540 = vmatprep.subr.bf16.mxu0 0
    %1541 = vmatpush2.bf16.msra.mxu0 0
    %1542 = vmatprep.mubr.bf16.mxu0 0
    %1543 = vmatmul.mubr.bf16.gmra.mxu0 %v1505
    %v1544 = vpop.f32.mrf.mxu0
    %v1545 = vadd.f32 0.0, %v1544
    %v1546 = vpop.f32.mrf.mxu0
    %v1547 = vpop.f32.mrf.mxu0
    %v1548 = vadd.f32 0.0, %v1547
    %v1549 = vpop.f32.mrf.mxu0
    %1550 = vmatprep.mubr.bf16.mxu0 0
    %1551 = vmatmul.mubr.bf16.gmra.mxu0 %v1508
    %v1552 = vpop.f32.mrf.mxu0
    %v1553 = vadd.f32 0.0, %v1552
    %v1554 = vpop.f32.mrf.mxu0
    %v1555 = vpop.f32.mrf.mxu0
    %v1556 = vadd.f32 0.0, %v1555
    %v1557 = vpop.f32.mrf.mxu0
    %1558 = vdwg.mxu0
    %v1559 = vadd.f32 %v1399, %v1545
    %v1560 = vadd.f32 %v1400, %v1548
    %v1561 = vadd.f32 %v1401, %v1553
    %v1562 = vadd.f32 %v1402, %v1556
    %s1563 = scalar_lea.vmem %s3, 128
    %v1564 = vld [vmem:[%s1563] sm:$0xf]
    %v1565 = vld [vmem:[%s1563 + $0x4] sm:$0xf]
    %v1566 = vld [vmem:[%s1563 + $0x8] sm:$0xf]
    %v1567 = vld [vmem:[%s1563 + $0xc] sm:$0xf]
    %v1572 = vunpack.c.l.b16 %v1564
    %v1573 = vunpack.c.l.b16 %v1565
    %v1574 = vunpack.c.l.b16 %v1566
    %v1575 = vunpack.c.l.b16 %v1567
    %v1576 = vpack.c.b16 %v1573, %v1572
    %v1577 = vpack.c.b16 %v1575, %v1574
    %1580 = vmatprep.subr.bf16.mxu0 0
    %1581 = vmatpush1.bf16.msra.mxu0 %v291
    %1582 = vmatprep.subr.bf16.mxu0 0
    %1583 = vmatpush1.bf16.msra.mxu0 %v290
    %1584 = vmatprep.subr.bf16.mxu0 0
    %1585 = vmatpush1.bf16.msra.mxu0 %v289
    %1586 = vmatprep.subr.bf16.mxu0 0
    %1587 = vmatpush1.bf16.msra.mxu0 %v288
    %1588 = vmatprep.subr.bf16.mxu0 0
    %1589 = vmatpush1.bf16.msra.mxu0 %v287
    %1590 = vmatprep.subr.bf16.mxu0 0
    %1591 = vmatpush1.bf16.msra.mxu0 %v286
    %1592 = vmatprep.subr.bf16.mxu0 0
    %1593 = vmatpush1.bf16.msra.mxu0 %v285
    %1594 = vmatprep.subr.bf16.mxu0 0
    %1595 = vmatpush1.bf16.msra.mxu0 %v284
    %1596 = vmatprep.subr.bf16.mxu0 0
    %1597 = vmatpush2.bf16.msra.mxu0 0
    %1598 = vmatprep.subr.bf16.mxu0 0
    %1599 = vmatpush2.bf16.msra.mxu0 0
    %1600 = vmatprep.subr.bf16.mxu0 0
    %1601 = vmatpush2.bf16.msra.mxu0 0
    %1602 = vmatprep.subr.bf16.mxu0 0
    %1603 = vmatpush2.bf16.msra.mxu0 0
    %1604 = vmatprep.subr.bf16.mxu0 0
    %1605 = vmatpush2.bf16.msra.mxu0 0
    %1606 = vmatprep.subr.bf16.mxu0 0
    %1607 = vmatpush2.bf16.msra.mxu0 0
    %1608 = vmatprep.subr.bf16.mxu0 0
    %1609 = vmatpush2.bf16.msra.mxu0 0
    %1610 = vmatprep.subr.bf16.mxu0 0
    %1611 = vmatpush2.bf16.msra.mxu0 0
    %1612 = vmatprep.mubr.bf16.mxu0 0
    %1613 = vmatmul.mubr.bf16.gmra.mxu0 %v1576
    %v1614 = vpop.f32.mrf.mxu0
    %v1615 = vadd.f32 0.0, %v1614
    %v1616 = vpop.f32.mrf.mxu0
    %v1617 = vpop.f32.mrf.mxu0
    %v1618 = vadd.f32 0.0, %v1617
    %v1619 = vpop.f32.mrf.mxu0
    %1620 = vmatprep.mubr.bf16.mxu0 0
    %1621 = vmatmul.mubr.bf16.gmra.mxu0 %v1577
    %v1622 = vpop.f32.mrf.mxu0
    %v1623 = vadd.f32 0.0, %v1622
    %v1624 = vpop.f32.mrf.mxu0
    %v1625 = vpop.f32.mrf.mxu0
    %v1626 = vadd.f32 0.0, %v1625
    %v1627 = vpop.f32.mrf.mxu0
    %1628 = vdwg.mxu0
    %v1629 = vpack.c.bf16 %v1618, %v1615
    %v1630 = vpack.c.bf16 %v1626, %v1623
    %s1631 = scalar_lea.vmem %s4, 256
    %v1632 = vld [vmem:[%s1631] sm:$0xf]
    %v1633 = vld [vmem:[%s1631 + $0x4] sm:$0xf]
    %v1634 = vld [vmem:[%s1631 + $0x8] sm:$0xf]
    %v1635 = vld [vmem:[%s1631 + $0xc] sm:$0xf]
    %v1636 = vld [vmem:[%s1631 + $0x10] sm:$0xf]
    %v1637 = vld [vmem:[%s1631 + $0x14] sm:$0xf]
    %v1638 = vld [vmem:[%s1631 + $0x18] sm:$0xf]
    %v1639 = vld [vmem:[%s1631 + $0x1c] sm:$0xf]
    %v1648 = vunpack.c.l.b16 %v1632
    %v1649 = vunpack.c.l.b16 %v1633
    %v1650 = vunpack.c.l.b16 %v1634
    %v1651 = vunpack.c.l.b16 %v1635
    %v1652 = vunpack.c.l.b16 %v1636
    %v1653 = vunpack.c.l.b16 %v1637
    %v1654 = vunpack.c.l.b16 %v1638
    %v1655 = vunpack.c.l.b16 %v1639
    %v1656 = vpack.c.b16 %v1649, %v1648
    %v1657 = vpack.c.b16 %v1651, %v1650
    %v1658 = vpack.c.b16 %v1653, %v1652
    %v1659 = vpack.c.b16 %v1655, %v1654
    %v1665 = vsel %vm468, %v1629, 0
    %v1668 = vsel %vm468, %v1630, 0
    %1670 = vmatprep.subr.bf16.mxu0 0
    %1671 = vmatpush1.bf16.msra.mxu0 0
    %1672 = vmatprep.subr.bf16.mxu0 0
    %1673 = vmatpush1.bf16.msra.mxu0 0
    %1674 = vmatprep.subr.bf16.mxu0 0
    %1675 = vmatpush1.bf16.msra.mxu0 0
    %1676 = vmatprep.subr.bf16.mxu0 0
    %1677 = vmatpush1.bf16.msra.mxu0 0
    %1678 = vmatprep.subr.bf16.mxu0 0
    %1679 = vmatpush1.bf16.msra.mxu0 %v1659
    %1680 = vmatprep.subr.bf16.mxu0 0
    %1681 = vmatpush1.bf16.msra.mxu0 %v1658
    %1682 = vmatprep.subr.bf16.mxu0 0
    %1683 = vmatpush1.bf16.msra.mxu0 %v1657
    %1684 = vmatprep.subr.bf16.mxu0 0
    %1685 = vmatpush1.bf16.msra.mxu0 %v1656
    %1686 = vmatprep.subr.bf16.mxu0 0
    %1687 = vmatpush2.bf16.msra.mxu0 0
    %1688 = vmatprep.subr.bf16.mxu0 0
    %1689 = vmatpush2.bf16.msra.mxu0 0
    %1690 = vmatprep.subr.bf16.mxu0 0
    %1691 = vmatpush2.bf16.msra.mxu0 0
    %1692 = vmatprep.subr.bf16.mxu0 0
    %1693 = vmatpush2.bf16.msra.mxu0 0
    %1694 = vmatprep.subr.bf16.mxu0 0
    %1695 = vmatpush2.bf16.msra.mxu0 0
    %1696 = vmatprep.subr.bf16.mxu0 0
    %1697 = vmatpush2.bf16.msra.mxu0 0
    %1698 = vmatprep.subr.bf16.mxu0 0
    %1699 = vmatpush2.bf16.msra.mxu0 0
    %1700 = vmatprep.subr.bf16.mxu0 0
    %1701 = vmatpush2.bf16.msra.mxu0 0
    %1702 = vmatprep.mubr.bf16.mxu0 0
    %1703 = vmatmul.mubr.bf16.gmra.mxu0 %v1665
    %v1704 = vpop.f32.mrf.mxu0
    %v1705 = vadd.f32 0.0, %v1704
    %v1706 = vpop.f32.mrf.mxu0
    %v1707 = vpop.f32.mrf.mxu0
    %v1708 = vadd.f32 0.0, %v1707
    %v1709 = vpop.f32.mrf.mxu0
    %1710 = vmatprep.mubr.bf16.mxu0 0
    %1711 = vmatmul.mubr.bf16.gmra.mxu0 %v1668
    %v1712 = vpop.f32.mrf.mxu0
    %v1713 = vadd.f32 0.0, %v1712
    %v1714 = vpop.f32.mrf.mxu0
    %v1715 = vpop.f32.mrf.mxu0
    %v1716 = vadd.f32 0.0, %v1715
    %v1717 = vpop.f32.mrf.mxu0
    %1718 = vdwg.mxu0
    %v1719 = vadd.f32 %v1559, %v1705
    %v1720 = vadd.f32 %v1560, %v1708
    %v1721 = vadd.f32 %v1561, %v1713
    %v1722 = vadd.f32 %v1562, %v1716
    %v1723 = vld [vmem:[%s5] sm:$0x1]
    %v1725 = vlaneseq
    %v1726 = vshrl.u32 %v1725, 7
    %v1727 = vsub.s32 0, %v1726
    %v1728 = vrot.slane %v1723, %v1727
    %v1730 = vadd.f32 %v1719, %v1728
    %v1731 = vadd.f32 %v1720, %v1728
    %v1732 = vadd.f32 %v1721, %v1728
    %v1733 = vadd.f32 %v1722, %v1728
    %v1734 = vpack.c.bf16 %v1731, %v1730
    %v1735 = vpack.c.bf16 %v1733, %v1732
    %v1736 = vld [vmem:[%s6] sm:$0xf]
    %vm1737 = vcmask 261120
    %v1739 = vsel %vm1737, %v1736, 0
    %1741 = vmatprep.subr.bf16.mxu0 0
    %1742 = vmatpush1.bf16.msra.mxu0 0
    %1743 = vmatprep.subr.bf16.mxu0 0
    %1744 = vmatpush1.bf16.msra.mxu0 0
    %1745 = vmatprep.subr.bf16.mxu0 0
    %1746 = vmatpush1.bf16.msra.mxu0 0
    %1747 = vmatprep.subr.bf16.mxu0 0
    %1748 = vmatpush1.bf16.msra.mxu0 0
    %1749 = vmatprep.subr.bf16.mxu0 0
    %1750 = vmatpush1.bf16.msra.mxu0 0
    %1751 = vmatprep.subr.bf16.mxu0 0
    %1752 = vmatpush1.bf16.msra.mxu0 0
    %1753 = vmatprep.subr.bf16.mxu0 0
    %1754 = vmatpush1.bf16.msra.mxu0 %v1735
    %1755 = vmatprep.subr.bf16.mxu0 0
    %1756 = vmatpush1.bf16.msra.mxu0 %v1734
    %1757 = vmatprep.subr.bf16.mxu0 0
    %1758 = vmatpush2.bf16.msra.mxu0 0
    %1759 = vmatprep.subr.bf16.mxu0 0
    %1760 = vmatpush2.bf16.msra.mxu0 0
    %1761 = vmatprep.subr.bf16.mxu0 0
    %1762 = vmatpush2.bf16.msra.mxu0 0
    %1763 = vmatprep.subr.bf16.mxu0 0
    %1764 = vmatpush2.bf16.msra.mxu0 0
    %1765 = vmatprep.subr.bf16.mxu0 0
    %1766 = vmatpush2.bf16.msra.mxu0 0
    %1767 = vmatprep.subr.bf16.mxu0 0
    %1768 = vmatpush2.bf16.msra.mxu0 0
    %1769 = vmatprep.subr.bf16.mxu0 0
    %1770 = vmatpush2.bf16.msra.mxu0 0
    %1771 = vmatprep.subr.bf16.mxu0 0
    %1772 = vmatpush2.bf16.msra.mxu0 0
    %1773 = vmatprep.mubr.bf16.mxu0 0
    %1774 = vmatmul.mubr.bf16.gmra.mxu0 %v1739
    %v1775 = vpop.f32.mrf.mxu0
    %v1776 = vadd.f32 0.0, %v1775
    %v1777 = vpop.f32.mrf.mxu0
    %v1778 = vpop.f32.mrf.mxu0
    %v1779 = vpop.f32.mrf.mxu0
    %1780 = vdwg.mxu0
    %v1781 = vpack.c.bf16 %v1776, %v1776
    %v1782 = vld [vmem:[%s7] sm:$0xf]
    %v1783 = vld [vmem:[%s7 + $0x4] sm:$0xf]
    %v1784 = vld [vmem:[%s7 + $0x8] sm:$0xf]
    %v1785 = vld [vmem:[%s7 + $0xc] sm:$0xf]
    %v1786 = vld [vmem:[%s7 + $0x10] sm:$0xf]
    %v1787 = vld [vmem:[%s7 + $0x14] sm:$0xf]
    %v1788 = vld [vmem:[%s7 + $0x18] sm:$0xf]
    %v1789 = vld [vmem:[%s7 + $0x1c] sm:$0xf]
    %v1790 = vld [vmem:[%s7 + $0x20] sm:$0xf]
    %v1791 = vld [vmem:[%s7 + $0x24] sm:$0xf]
    %v1792 = vld [vmem:[%s7 + $0x28] sm:$0xf]
    %v1793 = vld [vmem:[%s7 + $0x2c] sm:$0xf]
    %v1794 = vld [vmem:[%s7 + $0x30] sm:$0xf]
    %v1795 = vld [vmem:[%s7 + $0x34] sm:$0xf]
    %v1796 = vld [vmem:[%s7 + $0x38] sm:$0xf]
    %v1797 = vld [vmem:[%s7 + $0x3c] sm:$0xf]
    %s1798 = scalar_lea.vmem %s6, 4
    %v1799 = vld [vmem:[%s1798] sm:$0xf]
    %v1801 = vsel %vm1737, %v1799, 0
    %1803 = vmatprep.subr.bf16.mxu0 0
    %1804 = vmatpush1.bf16.msra.mxu0 0
    %1805 = vmatprep.subr.bf16.mxu0 0
    %1806 = vmatpush1.bf16.msra.mxu0 0
    %1807 = vmatprep.subr.bf16.mxu0 0
    %1808 = vmatpush1.bf16.msra.mxu0 0
    %1809 = vmatprep.subr.bf16.mxu0 0
    %1810 = vmatpush1.bf16.msra.mxu0 0
    %1811 = vmatprep.subr.bf16.mxu0 0
    %1812 = vmatpush1.bf16.msra.mxu0 0
    %1813 = vmatprep.subr.bf16.mxu0 0
    %1814 = vmatpush1.bf16.msra.mxu0 0
    %1815 = vmatprep.subr.bf16.mxu0 0
    %1816 = vmatpush1.bf16.msra.mxu0 %v1735
    %1817 = vmatprep.subr.bf16.mxu0 0
    %1818 = vmatpush1.bf16.msra.mxu0 %v1734
    %1819 = vmatprep.subr.bf16.mxu0 0
    %1820 = vmatpush2.bf16.msra.mxu0 0
    %1821 = vmatprep.subr.bf16.mxu0 0
    %1822 = vmatpush2.bf16.msra.mxu0 0
    %1823 = vmatprep.subr.bf16.mxu0 0
    %1824 = vmatpush2.bf16.msra.mxu0 0
    %1825 = vmatprep.subr.bf16.mxu0 0
    %1826 = vmatpush2.bf16.msra.mxu0 0
    %1827 = vmatprep.subr.bf16.mxu0 0
    %1828 = vmatpush2.bf16.msra.mxu0 0
    %1829 = vmatprep.subr.bf16.mxu0 0
    %1830 = vmatpush2.bf16.msra.mxu0 0
    %1831 = vmatprep.subr.bf16.mxu0 0
    %1832 = vmatpush2.bf16.msra.mxu0 0
    %1833 = vmatprep.subr.bf16.mxu0 0
    %1834 = vmatpush2.bf16.msra.mxu0 0
    %1835 = vmatprep.mubr.bf16.mxu0 0
    %1836 = vmatmul.mubr.bf16.gmra.mxu0 %v1801
    %v1837 = vpop.f32.mrf.mxu0
    %v1838 = vadd.f32 0.0, %v1837
    %v1839 = vpop.f32.mrf.mxu0
    %v1840 = vpop.f32.mrf.mxu0
    %v1841 = vpop.f32.mrf.mxu0
    %1842 = vdwg.mxu0
    %v1843 = vpack.c.bf16 %v1838, %v1838
    %s1844 = scalar_lea.vmem %s7, 64
    %v1845 = vld [vmem:[%s1844] sm:$0xf]
    %v1846 = vld [vmem:[%s1844 + $0x4] sm:$0xf]
    %v1847 = vld [vmem:[%s1844 + $0x8] sm:$0xf]
    %v1848 = vld [vmem:[%s1844 + $0xc] sm:$0xf]
    %v1849 = vld [vmem:[%s1844 + $0x10] sm:$0xf]
    %v1850 = vld [vmem:[%s1844 + $0x14] sm:$0xf]
    %v1851 = vld [vmem:[%s1844 + $0x18] sm:$0xf]
    %v1852 = vld [vmem:[%s1844 + $0x1c] sm:$0xf]
    %v1853 = vld [vmem:[%s1844 + $0x20] sm:$0xf]
    %v1854 = vld [vmem:[%s1844 + $0x24] sm:$0xf]
    %v1855 = vld [vmem:[%s1844 + $0x28] sm:$0xf]
    %v1856 = vld [vmem:[%s1844 + $0x2c] sm:$0xf]
    %v1857 = vld [vmem:[%s1844 + $0x30] sm:$0xf]
    %v1858 = vld [vmem:[%s1844 + $0x34] sm:$0xf]
    %v1859 = vld [vmem:[%s1844 + $0x38] sm:$0xf]
    %v1860 = vld [vmem:[%s1844 + $0x3c] sm:$0xf]
    %v1877 = vunpack.c.l.b16 %v1845
    %v1878 = vunpack.c.l.b16 %v1846
    %v1879 = vunpack.c.l.b16 %v1847
    %v1880 = vunpack.c.l.b16 %v1848
    %v1881 = vunpack.c.l.b16 %v1849
    %v1882 = vunpack.c.l.b16 %v1850
    %v1883 = vunpack.c.l.b16 %v1851
    %v1884 = vunpack.c.l.b16 %v1852
    %v1885 = vunpack.c.l.b16 %v1853
    %v1886 = vunpack.c.l.b16 %v1854
    %v1887 = vunpack.c.l.b16 %v1855
    %v1888 = vunpack.c.l.b16 %v1856
    %v1889 = vunpack.c.l.b16 %v1857
    %v1890 = vunpack.c.l.b16 %v1858
    %v1891 = vunpack.c.l.b16 %v1859
    %v1892 = vunpack.c.l.b16 %v1860
    %v1893 = vpack.c.b16 %v1878, %v1877
    %v1894 = vpack.c.b16 %v1880, %v1879
    %v1895 = vpack.c.b16 %v1882, %v1881
    %v1896 = vpack.c.b16 %v1884, %v1883
    %v1897 = vpack.c.b16 %v1886, %v1885
    %v1898 = vpack.c.b16 %v1888, %v1887
    %v1899 = vpack.c.b16 %v1890, %v1889
    %v1900 = vpack.c.b16 %v1892, %v1891
    %1909 = vmatprep.subr.bf16.mxu0 0
    %1910 = vmatpush1.bf16.msra.mxu0 %v1900
    %1911 = vmatprep.subr.bf16.mxu0 0
    %1912 = vmatpush1.bf16.msra.mxu0 %v1899
    %1913 = vmatprep.subr.bf16.mxu0 0
    %1914 = vmatpush1.bf16.msra.mxu0 %v1898
    %1915 = vmatprep.subr.bf16.mxu0 0
    %1916 = vmatpush1.bf16.msra.mxu0 %v1897
    %1917 = vmatprep.subr.bf16.mxu0 0
    %1918 = vmatpush1.bf16.msra.mxu0 %v1896
    %1919 = vmatprep.subr.bf16.mxu0 0
    %1920 = vmatpush1.bf16.msra.mxu0 %v1895
    %1921 = vmatprep.subr.bf16.mxu0 0
    %1922 = vmatpush1.bf16.msra.mxu0 %v1894
    %1923 = vmatprep.subr.bf16.mxu0 0
    %1924 = vmatpush1.bf16.msra.mxu0 %v1893
    %1925 = vmatprep.subr.bf16.mxu0 0
    %1926 = vmatpush2.bf16.msra.mxu0 0
    %1927 = vmatprep.subr.bf16.mxu0 0
    %1928 = vmatpush2.bf16.msra.mxu0 0
    %1929 = vmatprep.subr.bf16.mxu0 0
    %1930 = vmatpush2.bf16.msra.mxu0 0
    %1931 = vmatprep.subr.bf16.mxu0 0
    %1932 = vmatpush2.bf16.msra.mxu0 0
    %1933 = vmatprep.subr.bf16.mxu0 0
    %1934 = vmatpush2.bf16.msra.mxu0 0
    %1935 = vmatprep.subr.bf16.mxu0 0
    %1936 = vmatpush2.bf16.msra.mxu0 0
    %1937 = vmatprep.subr.bf16.mxu0 0
    %1938 = vmatpush2.bf16.msra.mxu0 0
    %1939 = vmatprep.subr.bf16.mxu0 0
    %1940 = vmatpush2.bf16.msra.mxu0 0
    %1941 = vmatprep.mubr.bf16.mxu0 0
    %1942 = vmatmul.mubr.bf16.gmra.mxu0 %v1843
    %v1943 = vpop.f32.mrf.mxu0
    %v1944 = vadd.f32 0.0, %v1943
    %v1945 = vpop.f32.mrf.mxu0
    %v1946 = vpop.f32.mrf.mxu0
    %v1947 = vpop.f32.mrf.mxu0
    %1948 = vdwg.mxu0
    %v1965 = vunpack.c.l.b16 %v1782
    %v1966 = vunpack.c.l.b16 %v1783
    %v1967 = vunpack.c.l.b16 %v1784
    %v1968 = vunpack.c.l.b16 %v1785
    %v1969 = vunpack.c.l.b16 %v1786
    %v1970 = vunpack.c.l.b16 %v1787
    %v1971 = vunpack.c.l.b16 %v1788
    %v1972 = vunpack.c.l.b16 %v1789
    %v1973 = vunpack.c.l.b16 %v1790
    %v1974 = vunpack.c.l.b16 %v1791
    %v1975 = vunpack.c.l.b16 %v1792
    %v1976 = vunpack.c.l.b16 %v1793
    %v1977 = vunpack.c.l.b16 %v1794
    %v1978 = vunpack.c.l.b16 %v1795
    %v1979 = vunpack.c.l.b16 %v1796
    %v1980 = vunpack.c.l.b16 %v1797
    %v1981 = vpack.c.b16 %v1966, %v1965
    %v1982 = vpack.c.b16 %v1968, %v1967
    %v1983 = vpack.c.b16 %v1970, %v1969
    %v1984 = vpack.c.b16 %v1972, %v1971
    %v1985 = vpack.c.b16 %v1974, %v1973
    %v1986 = vpack.c.b16 %v1976, %v1975
    %v1987 = vpack.c.b16 %v1978, %v1977
    %v1988 = vpack.c.b16 %v1980, %v1979
    %1997 = vmatprep.subr.bf16.mxu0 0
    %1998 = vmatpush1.bf16.msra.mxu0 %v1988
    %1999 = vmatprep.subr.bf16.mxu0 0
    %2000 = vmatpush1.bf16.msra.mxu0 %v1987
    %2001 = vmatprep.subr.bf16.mxu0 0
    %2002 = vmatpush1.bf16.msra.mxu0 %v1986
    %2003 = vmatprep.subr.bf16.mxu0 0
    %2004 = vmatpush1.bf16.msra.mxu0 %v1985
    %2005 = vmatprep.subr.bf16.mxu0 0
    %2006 = vmatpush1.bf16.msra.mxu0 %v1984
    %2007 = vmatprep.subr.bf16.mxu0 0
    %2008 = vmatpush1.bf16.msra.mxu0 %v1983
    %2009 = vmatprep.subr.bf16.mxu0 0
    %2010 = vmatpush1.bf16.msra.mxu0 %v1982
    %2011 = vmatprep.subr.bf16.mxu0 0
    %2012 = vmatpush1.bf16.msra.mxu0 %v1981
    %2013 = vmatprep.subr.bf16.mxu0 0
    %2014 = vmatpush2.bf16.msra.mxu0 0
    %2015 = vmatprep.subr.bf16.mxu0 0
    %2016 = vmatpush2.bf16.msra.mxu0 0
    %2017 = vmatprep.subr.bf16.mxu0 0
    %2018 = vmatpush2.bf16.msra.mxu0 0
    %2019 = vmatprep.subr.bf16.mxu0 0
    %2020 = vmatpush2.bf16.msra.mxu0 0
    %2021 = vmatprep.subr.bf16.mxu0 0
    %2022 = vmatpush2.bf16.msra.mxu0 0
    %2023 = vmatprep.subr.bf16.mxu0 0
    %2024 = vmatpush2.bf16.msra.mxu0 0
    %2025 = vmatprep.subr.bf16.mxu0 0
    %2026 = vmatpush2.bf16.msra.mxu0 0
    %2027 = vmatprep.subr.bf16.mxu0 0
    %2028 = vmatpush2.bf16.msra.mxu0 0
    %2029 = vmatprep.mubr.bf16.mxu0 0
    %2030 = vmatmul.mubr.bf16.gmra.mxu0 %v1781
    %v2031 = vpop.f32.mrf.mxu0
    %v2032 = vadd.f32 %v1944, %v2031
    %v2033 = vpop.f32.mrf.mxu0
    %v2034 = vpop.f32.mrf.mxu0
    %v2035 = vpop.f32.mrf.mxu0
    %2036 = vdwg.mxu0
    %s2037 = scalar_lea.vmem %s6, 8
    %v2038 = vld [vmem:[%s2037] sm:$0xf]
    %v2040 = vsel %vm1737, %v2038, 0
    %2042 = vmatprep.subr.bf16.mxu0 0
    %2043 = vmatpush1.bf16.msra.mxu0 0
    %2044 = vmatprep.subr.bf16.mxu0 0
    %2045 = vmatpush1.bf16.msra.mxu0 0
    %2046 = vmatprep.subr.bf16.mxu0 0
    %2047 = vmatpush1.bf16.msra.mxu0 0
    %2048 = vmatprep.subr.bf16.mxu0 0
    %2049 = vmatpush1.bf16.msra.mxu0 0
    %2050 = vmatprep.subr.bf16.mxu0 0
    %2051 = vmatpush1.bf16.msra.mxu0 0
    %2052 = vmatprep.subr.bf16.mxu0 0
    %2053 = vmatpush1.bf16.msra.mxu0 0
    %2054 = vmatprep.subr.bf16.mxu0 0
    %2055 = vmatpush1.bf16.msra.mxu0 %v1735
    %2056 = vmatprep.subr.bf16.mxu0 0
    %2057 = vmatpush1.bf16.msra.mxu0 %v1734
    %2058 = vmatprep.subr.bf16.mxu0 0
    %2059 = vmatpush2.bf16.msra.mxu0 0
    %2060 = vmatprep.subr.bf16.mxu0 0
    %2061 = vmatpush2.bf16.msra.mxu0 0
    %2062 = vmatprep.subr.bf16.mxu0 0
    %2063 = vmatpush2.bf16.msra.mxu0 0
    %2064 = vmatprep.subr.bf16.mxu0 0
    %2065 = vmatpush2.bf16.msra.mxu0 0
    %2066 = vmatprep.subr.bf16.mxu0 0
    %2067 = vmatpush2.bf16.msra.mxu0 0
    %2068 = vmatprep.subr.bf16.mxu0 0
    %2069 = vmatpush2.bf16.msra.mxu0 0
    %2070 = vmatprep.subr.bf16.mxu0 0
    %2071 = vmatpush2.bf16.msra.mxu0 0
    %2072 = vmatprep.subr.bf16.mxu0 0
    %2073 = vmatpush2.bf16.msra.mxu0 0
    %2074 = vmatprep.mubr.bf16.mxu0 0
    %2075 = vmatmul.mubr.bf16.gmra.mxu0 %v2040
    %v2076 = vpop.f32.mrf.mxu0
    %v2077 = vadd.f32 0.0, %v2076
    %v2078 = vpop.f32.mrf.mxu0
    %v2079 = vpop.f32.mrf.mxu0
    %v2080 = vpop.f32.mrf.mxu0
    %2081 = vdwg.mxu0
    %v2082 = vpack.c.bf16 %v2077, %v2077
    %s2083 = scalar_lea.vmem %s7, 128
    %v2084 = vld [vmem:[%s2083] sm:$0xf]
    %v2085 = vld [vmem:[%s2083 + $0x4] sm:$0xf]
    %v2086 = vld [vmem:[%s2083 + $0x8] sm:$0xf]
    %v2087 = vld [vmem:[%s2083 + $0xc] sm:$0xf]
    %v2088 = vld [vmem:[%s2083 + $0x10] sm:$0xf]
    %v2089 = vld [vmem:[%s2083 + $0x14] sm:$0xf]
    %v2090 = vld [vmem:[%s2083 + $0x18] sm:$0xf]
    %v2091 = vld [vmem:[%s2083 + $0x1c] sm:$0xf]
    %v2092 = vld [vmem:[%s2083 + $0x20] sm:$0xf]
    %v2093 = vld [vmem:[%s2083 + $0x24] sm:$0xf]
    %v2094 = vld [vmem:[%s2083 + $0x28] sm:$0xf]
    %v2095 = vld [vmem:[%s2083 + $0x2c] sm:$0xf]
    %v2096 = vld [vmem:[%s2083 + $0x30] sm:$0xf]
    %v2097 = vld [vmem:[%s2083 + $0x34] sm:$0xf]
    %v2098 = vld [vmem:[%s2083 + $0x38] sm:$0xf]
    %v2099 = vld [vmem:[%s2083 + $0x3c] sm:$0xf]
    %v2116 = vunpack.c.l.b16 %v2084
    %v2117 = vunpack.c.l.b16 %v2085
    %v2118 = vunpack.c.l.b16 %v2086
    %v2119 = vunpack.c.l.b16 %v2087
    %v2120 = vunpack.c.l.b16 %v2088
    %v2121 = vunpack.c.l.b16 %v2089
    %v2122 = vunpack.c.l.b16 %v2090
    %v2123 = vunpack.c.l.b16 %v2091
    %v2124 = vunpack.c.l.b16 %v2092
    %v2125 = vunpack.c.l.b16 %v2093
    %v2126 = vunpack.c.l.b16 %v2094
    %v2127 = vunpack.c.l.b16 %v2095
    %v2128 = vunpack.c.l.b16 %v2096
    %v2129 = vunpack.c.l.b16 %v2097
    %v2130 = vunpack.c.l.b16 %v2098
    %v2131 = vunpack.c.l.b16 %v2099
    %v2132 = vpack.c.b16 %v2117, %v2116
    %v2133 = vpack.c.b16 %v2119, %v2118
    %v2134 = vpack.c.b16 %v2121, %v2120
    %v2135 = vpack.c.b16 %v2123, %v2122
    %v2136 = vpack.c.b16 %v2125, %v2124
    %v2137 = vpack.c.b16 %v2127, %v2126
    %v2138 = vpack.c.b16 %v2129, %v2128
    %v2139 = vpack.c.b16 %v2131, %v2130
    %2148 = vmatprep.subr.bf16.mxu0 0
    %2149 = vmatpush1.bf16.msra.mxu0 %v2139
    %2150 = vmatprep.subr.bf16.mxu0 0
    %2151 = vmatpush1.bf16.msra.mxu0 %v2138
    %2152 = vmatprep.subr.bf16.mxu0 0
    %2153 = vmatpush1.bf16.msra.mxu0 %v2137
    %2154 = vmatprep.subr.bf16.mxu0 0
    %2155 = vmatpush1.bf16.msra.mxu0 %v2136
    %2156 = vmatprep.subr.bf16.mxu0 0
    %2157 = vmatpush1.bf16.msra.mxu0 %v2135
    %2158 = vmatprep.subr.bf16.mxu0 0
    %2159 = vmatpush1.bf16.msra.mxu0 %v2134
    %2160 = vmatprep.subr.bf16.mxu0 0
    %2161 = vmatpush1.bf16.msra.mxu0 %v2133
    %2162 = vmatprep.subr.bf16.mxu0 0
    %2163 = vmatpush1.bf16.msra.mxu0 %v2132
    %2164 = vmatprep.subr.bf16.mxu0 0
    %2165 = vmatpush2.bf16.msra.mxu0 0
    %2166 = vmatprep.subr.bf16.mxu0 0
    %2167 = vmatpush2.bf16.msra.mxu0 0
    %2168 = vmatprep.subr.bf16.mxu0 0
    %2169 = vmatpush2.bf16.msra.mxu0 0
    %2170 = vmatprep.subr.bf16.mxu0 0
    %2171 = vmatpush2.bf16.msra.mxu0 0
    %2172 = vmatprep.subr.bf16.mxu0 0
    %2173 = vmatpush2.bf16.msra.mxu0 0
    %2174 = vmatprep.subr.bf16.mxu0 0
    %2175 = vmatpush2.bf16.msra.mxu0 0
    %2176 = vmatprep.subr.bf16.mxu0 0
    %2177 = vmatpush2.bf16.msra.mxu0 0
    %2178 = vmatprep.subr.bf16.mxu0 0
    %2179 = vmatpush2.bf16.msra.mxu0 0
    %2180 = vmatprep.mubr.bf16.mxu0 0
    %2181 = vmatmul.mubr.bf16.gmra.mxu0 %v2082
    %v2182 = vpop.f32.mrf.mxu0
    %v2183 = vadd.f32 0.0, %v2182
    %v2184 = vpop.f32.mrf.mxu0
    %v2185 = vpop.f32.mrf.mxu0
    %v2186 = vpop.f32.mrf.mxu0
    %2187 = vdwg.mxu0
    %v2188 = vadd.f32 %v2032, %v2183
    %s2189 = scalar_lea.vmem %s6, 12
    %v2190 = vld [vmem:[%s2189] sm:$0xf]
    %v2192 = vsel %vm1737, %v2190, 0
    %2194 = vmatprep.subr.bf16.mxu0 0
    %2195 = vmatpush1.bf16.msra.mxu0 0
    %2196 = vmatprep.subr.bf16.mxu0 0
    %2197 = vmatpush1.bf16.msra.mxu0 0
    %2198 = vmatprep.subr.bf16.mxu0 0
    %2199 = vmatpush1.bf16.msra.mxu0 0
    %2200 = vmatprep.subr.bf16.mxu0 0
    %2201 = vmatpush1.bf16.msra.mxu0 0
    %2202 = vmatprep.subr.bf16.mxu0 0
    %2203 = vmatpush1.bf16.msra.mxu0 0
    %2204 = vmatprep.subr.bf16.mxu0 0
    %2205 = vmatpush1.bf16.msra.mxu0 0
    %2206 = vmatprep.subr.bf16.mxu0 0
    %2207 = vmatpush1.bf16.msra.mxu0 %v1735
    %2208 = vmatprep.subr.bf16.mxu0 0
    %2209 = vmatpush1.bf16.msra.mxu0 %v1734
    %2210 = vmatprep.subr.bf16.mxu0 0
    %2211 = vmatpush2.bf16.msra.mxu0 0
    %2212 = vmatprep.subr.bf16.mxu0 0
    %2213 = vmatpush2.bf16.msra.mxu0 0
    %2214 = vmatprep.subr.bf16.mxu0 0
    %2215 = vmatpush2.bf16.msra.mxu0 0
    %2216 = vmatprep.subr.bf16.mxu0 0
    %2217 = vmatpush2.bf16.msra.mxu0 0
    %2218 = vmatprep.subr.bf16.mxu0 0
    %2219 = vmatpush2.bf16.msra.mxu0 0
    %2220 = vmatprep.subr.bf16.mxu0 0
    %2221 = vmatpush2.bf16.msra.mxu0 0
    %2222 = vmatprep.subr.bf16.mxu0 0
    %2223 = vmatpush2.bf16.msra.mxu0 0
    %2224 = vmatprep.subr.bf16.mxu0 0
    %2225 = vmatpush2.bf16.msra.mxu0 0
    %2226 = vmatprep.mubr.bf16.mxu0 0
    %2227 = vmatmul.mubr.bf16.gmra.mxu0 %v2192
    %v2228 = vpop.f32.mrf.mxu0
    %v2229 = vadd.f32 0.0, %v2228
    %v2230 = vpop.f32.mrf.mxu0
    %v2231 = vpop.f32.mrf.mxu0
    %v2232 = vpop.f32.mrf.mxu0
    %2233 = vdwg.mxu0
    %v2234 = vpack.c.bf16 %v2229, %v2229
    %s2235 = scalar_lea.vmem %s7, 192
    %v2236 = vld [vmem:[%s2235] sm:$0xf]
    %v2237 = vld [vmem:[%s2235 + $0x4] sm:$0xf]
    %v2238 = vld [vmem:[%s2235 + $0x8] sm:$0xf]
    %v2239 = vld [vmem:[%s2235 + $0xc] sm:$0xf]
    %v2240 = vld [vmem:[%s2235 + $0x10] sm:$0xf]
    %v2241 = vld [vmem:[%s2235 + $0x14] sm:$0xf]
    %v2242 = vld [vmem:[%s2235 + $0x18] sm:$0xf]
    %v2243 = vld [vmem:[%s2235 + $0x1c] sm:$0xf]
    %v2244 = vld [vmem:[%s2235 + $0x20] sm:$0xf]
    %v2245 = vld [vmem:[%s2235 + $0x24] sm:$0xf]
    %v2246 = vld [vmem:[%s2235 + $0x28] sm:$0xf]
    %v2247 = vld [vmem:[%s2235 + $0x2c] sm:$0xf]
    %v2248 = vld [vmem:[%s2235 + $0x30] sm:$0xf]
    %v2249 = vld [vmem:[%s2235 + $0x34] sm:$0xf]
    %v2250 = vld [vmem:[%s2235 + $0x38] sm:$0xf]
    %v2251 = vld [vmem:[%s2235 + $0x3c] sm:$0xf]
    %v2268 = vunpack.c.l.b16 %v2236
    %v2269 = vunpack.c.l.b16 %v2237
    %v2270 = vunpack.c.l.b16 %v2238
    %v2271 = vunpack.c.l.b16 %v2239
    %v2272 = vunpack.c.l.b16 %v2240
    %v2273 = vunpack.c.l.b16 %v2241
    %v2274 = vunpack.c.l.b16 %v2242
    %v2275 = vunpack.c.l.b16 %v2243
    %v2276 = vunpack.c.l.b16 %v2244
    %v2277 = vunpack.c.l.b16 %v2245
    %v2278 = vunpack.c.l.b16 %v2246
    %v2279 = vunpack.c.l.b16 %v2247
    %v2280 = vunpack.c.l.b16 %v2248
    %v2281 = vunpack.c.l.b16 %v2249
    %v2282 = vunpack.c.l.b16 %v2250
    %v2283 = vunpack.c.l.b16 %v2251
    %v2284 = vpack.c.b16 %v2269, %v2268
    %v2285 = vpack.c.b16 %v2271, %v2270
    %v2286 = vpack.c.b16 %v2273, %v2272
    %v2287 = vpack.c.b16 %v2275, %v2274
    %v2288 = vpack.c.b16 %v2277, %v2276
    %v2289 = vpack.c.b16 %v2279, %v2278
    %v2290 = vpack.c.b16 %v2281, %v2280
    %v2291 = vpack.c.b16 %v2283, %v2282
    %2300 = vmatprep.subr.bf16.mxu0 0
    %2301 = vmatpush1.bf16.msra.mxu0 %v2291
    %2302 = vmatprep.subr.bf16.mxu0 0
    %2303 = vmatpush1.bf16.msra.mxu0 %v2290
    %2304 = vmatprep.subr.bf16.mxu0 0
    %2305 = vmatpush1.bf16.msra.mxu0 %v2289
    %2306 = vmatprep.subr.bf16.mxu0 0
    %2307 = vmatpush1.bf16.msra.mxu0 %v2288
    %2308 = vmatprep.subr.bf16.mxu0 0
    %2309 = vmatpush1.bf16.msra.mxu0 %v2287
    %2310 = vmatprep.subr.bf16.mxu0 0
    %2311 = vmatpush1.bf16.msra.mxu0 %v2286
    %2312 = vmatprep.subr.bf16.mxu0 0
    %2313 = vmatpush1.bf16.msra.mxu0 %v2285
    %2314 = vmatprep.subr.bf16.mxu0 0
    %2315 = vmatpush1.bf16.msra.mxu0 %v2284
    %2316 = vmatprep.subr.bf16.mxu0 0
    %2317 = vmatpush2.bf16.msra.mxu0 0
    %2318 = vmatprep.subr.bf16.mxu0 0
    %2319 = vmatpush2.bf16.msra.mxu0 0
    %2320 = vmatprep.subr.bf16.mxu0 0
    %2321 = vmatpush2.bf16.msra.mxu0 0
    %2322 = vmatprep.subr.bf16.mxu0 0
    %2323 = vmatpush2.bf16.msra.mxu0 0
    %2324 = vmatprep.subr.bf16.mxu0 0
    %2325 = vmatpush2.bf16.msra.mxu0 0
    %2326 = vmatprep.subr.bf16.mxu0 0
    %2327 = vmatpush2.bf16.msra.mxu0 0
    %2328 = vmatprep.subr.bf16.mxu0 0
    %2329 = vmatpush2.bf16.msra.mxu0 0
    %2330 = vmatprep.subr.bf16.mxu0 0
    %2331 = vmatpush2.bf16.msra.mxu0 0
    %2332 = vmatprep.mubr.bf16.mxu0 0
    %2333 = vmatmul.mubr.bf16.gmra.mxu0 %v2234
    %v2334 = vpop.f32.mrf.mxu0
    %v2335 = vadd.f32 0.0, %v2334
    %v2336 = vpop.f32.mrf.mxu0
    %v2337 = vpop.f32.mrf.mxu0
    %v2338 = vpop.f32.mrf.mxu0
    %2339 = vdwg.mxu0
    %v2340 = vadd.f32 %v2188, %v2335
    %s2341 = scalar_lea.vmem %s6, 16
    %v2342 = vld [vmem:[%s2341] sm:$0xf]
    %v2344 = vsel %vm1737, %v2342, 0
    %2346 = vmatprep.subr.bf16.mxu0 0
    %2347 = vmatpush1.bf16.msra.mxu0 0
    %2348 = vmatprep.subr.bf16.mxu0 0
    %2349 = vmatpush1.bf16.msra.mxu0 0
    %2350 = vmatprep.subr.bf16.mxu0 0
    %2351 = vmatpush1.bf16.msra.mxu0 0
    %2352 = vmatprep.subr.bf16.mxu0 0
    %2353 = vmatpush1.bf16.msra.mxu0 0
    %2354 = vmatprep.subr.bf16.mxu0 0
    %2355 = vmatpush1.bf16.msra.mxu0 0
    %2356 = vmatprep.subr.bf16.mxu0 0
    %2357 = vmatpush1.bf16.msra.mxu0 0
    %2358 = vmatprep.subr.bf16.mxu0 0
    %2359 = vmatpush1.bf16.msra.mxu0 %v1735
    %2360 = vmatprep.subr.bf16.mxu0 0
    %2361 = vmatpush1.bf16.msra.mxu0 %v1734
    %2362 = vmatprep.subr.bf16.mxu0 0
    %2363 = vmatpush2.bf16.msra.mxu0 0
    %2364 = vmatprep.subr.bf16.mxu0 0
    %2365 = vmatpush2.bf16.msra.mxu0 0
    %2366 = vmatprep.subr.bf16.mxu0 0
    %2367 = vmatpush2.bf16.msra.mxu0 0
    %2368 = vmatprep.subr.bf16.mxu0 0
    %2369 = vmatpush2.bf16.msra.mxu0 0
    %2370 = vmatprep.subr.bf16.mxu0 0
    %2371 = vmatpush2.bf16.msra.mxu0 0
    %2372 = vmatprep.subr.bf16.mxu0 0
    %2373 = vmatpush2.bf16.msra.mxu0 0
    %2374 = vmatprep.subr.bf16.mxu0 0
    %2375 = vmatpush2.bf16.msra.mxu0 0
    %2376 = vmatprep.subr.bf16.mxu0 0
    %2377 = vmatpush2.bf16.msra.mxu0 0
    %2378 = vmatprep.mubr.bf16.mxu0 0
    %2379 = vmatmul.mubr.bf16.gmra.mxu0 %v2344
    %v2380 = vpop.f32.mrf.mxu0
    %v2381 = vadd.f32 0.0, %v2380
    %v2382 = vpop.f32.mrf.mxu0
    %v2383 = vpop.f32.mrf.mxu0
    %v2384 = vpop.f32.mrf.mxu0
    %2385 = vdwg.mxu0
    %v2386 = vpack.c.bf16 %v2381, %v2381
    %s2387 = scalar_lea.vmem %s7, 256
    %v2388 = vld [vmem:[%s2387] sm:$0xf]
    %v2389 = vld [vmem:[%s2387 + $0x4] sm:$0xf]
    %v2390 = vld [vmem:[%s2387 + $0x8] sm:$0xf]
    %v2391 = vld [vmem:[%s2387 + $0xc] sm:$0xf]
    %v2392 = vld [vmem:[%s2387 + $0x10] sm:$0xf]
    %v2393 = vld [vmem:[%s2387 + $0x14] sm:$0xf]
    %v2394 = vld [vmem:[%s2387 + $0x18] sm:$0xf]
    %v2395 = vld [vmem:[%s2387 + $0x1c] sm:$0xf]
    %v2396 = vld [vmem:[%s2387 + $0x20] sm:$0xf]
    %v2397 = vld [vmem:[%s2387 + $0x24] sm:$0xf]
    %v2398 = vld [vmem:[%s2387 + $0x28] sm:$0xf]
    %v2399 = vld [vmem:[%s2387 + $0x2c] sm:$0xf]
    %v2400 = vld [vmem:[%s2387 + $0x30] sm:$0xf]
    %v2401 = vld [vmem:[%s2387 + $0x34] sm:$0xf]
    %v2402 = vld [vmem:[%s2387 + $0x38] sm:$0xf]
    %v2403 = vld [vmem:[%s2387 + $0x3c] sm:$0xf]
    %v2420 = vunpack.c.l.b16 %v2388
    %v2421 = vunpack.c.l.b16 %v2389
    %v2422 = vunpack.c.l.b16 %v2390
    %v2423 = vunpack.c.l.b16 %v2391
    %v2424 = vunpack.c.l.b16 %v2392
    %v2425 = vunpack.c.l.b16 %v2393
    %v2426 = vunpack.c.l.b16 %v2394
    %v2427 = vunpack.c.l.b16 %v2395
    %v2428 = vunpack.c.l.b16 %v2396
    %v2429 = vunpack.c.l.b16 %v2397
    %v2430 = vunpack.c.l.b16 %v2398
    %v2431 = vunpack.c.l.b16 %v2399
    %v2432 = vunpack.c.l.b16 %v2400
    %v2433 = vunpack.c.l.b16 %v2401
    %v2434 = vunpack.c.l.b16 %v2402
    %v2435 = vunpack.c.l.b16 %v2403
    %v2436 = vpack.c.b16 %v2421, %v2420
    %v2437 = vpack.c.b16 %v2423, %v2422
    %v2438 = vpack.c.b16 %v2425, %v2424
    %v2439 = vpack.c.b16 %v2427, %v2426
    %v2440 = vpack.c.b16 %v2429, %v2428
    %v2441 = vpack.c.b16 %v2431, %v2430
    %v2442 = vpack.c.b16 %v2433, %v2432
    %v2443 = vpack.c.b16 %v2435, %v2434
    %2452 = vmatprep.subr.bf16.mxu0 0
    %2453 = vmatpush1.bf16.msra.mxu0 %v2443
    %2454 = vmatprep.subr.bf16.mxu0 0
    %2455 = vmatpush1.bf16.msra.mxu0 %v2442
    %2456 = vmatprep.subr.bf16.mxu0 0
    %2457 = vmatpush1.bf16.msra.mxu0 %v2441
    %2458 = vmatprep.subr.bf16.mxu0 0
    %2459 = vmatpush1.bf16.msra.mxu0 %v2440
    %2460 = vmatprep.subr.bf16.mxu0 0
    %2461 = vmatpush1.bf16.msra.mxu0 %v2439
    %2462 = vmatprep.subr.bf16.mxu0 0
    %2463 = vmatpush1.bf16.msra.mxu0 %v2438
    %2464 = vmatprep.subr.bf16.mxu0 0
    %2465 = vmatpush1.bf16.msra.mxu0 %v2437
    %2466 = vmatprep.subr.bf16.mxu0 0
    %2467 = vmatpush1.bf16.msra.mxu0 %v2436
    %2468 = vmatprep.subr.bf16.mxu0 0
    %2469 = vmatpush2.bf16.msra.mxu0 0
    %2470 = vmatprep.subr.bf16.mxu0 0
    %2471 = vmatpush2.bf16.msra.mxu0 0
    %2472 = vmatprep.subr.bf16.mxu0 0
    %2473 = vmatpush2.bf16.msra.mxu0 0
    %2474 = vmatprep.subr.bf16.mxu0 0
    %2475 = vmatpush2.bf16.msra.mxu0 0
    %2476 = vmatprep.subr.bf16.mxu0 0
    %2477 = vmatpush2.bf16.msra.mxu0 0
    %2478 = vmatprep.subr.bf16.mxu0 0
    %2479 = vmatpush2.bf16.msra.mxu0 0
    %2480 = vmatprep.subr.bf16.mxu0 0
    %2481 = vmatpush2.bf16.msra.mxu0 0
    %2482 = vmatprep.subr.bf16.mxu0 0
    %2483 = vmatpush2.bf16.msra.mxu0 0
    %2484 = vmatprep.mubr.bf16.mxu0 0
    %2485 = vmatmul.mubr.bf16.gmra.mxu0 %v2386
    %v2486 = vpop.f32.mrf.mxu0
    %v2487 = vadd.f32 0.0, %v2486
    %v2488 = vpop.f32.mrf.mxu0
    %v2489 = vpop.f32.mrf.mxu0
    %v2490 = vpop.f32.mrf.mxu0
    %2491 = vdwg.mxu0
    %v2492 = vadd.f32 %v2340, %v2487
    %s2493 = scalar_lea.vmem %s6, 20
    %v2494 = vld [vmem:[%s2493] sm:$0xf]
    %v2496 = vsel %vm1737, %v2494, 0
    %2498 = vmatprep.subr.bf16.mxu0 0
    %2499 = vmatpush1.bf16.msra.mxu0 0
    %2500 = vmatprep.subr.bf16.mxu0 0
    %2501 = vmatpush1.bf16.msra.mxu0 0
    %2502 = vmatprep.subr.bf16.mxu0 0
    %2503 = vmatpush1.bf16.msra.mxu0 0
    %2504 = vmatprep.subr.bf16.mxu0 0
    %2505 = vmatpush1.bf16.msra.mxu0 0
    %2506 = vmatprep.subr.bf16.mxu0 0
    %2507 = vmatpush1.bf16.msra.mxu0 0
    %2508 = vmatprep.subr.bf16.mxu0 0
    %2509 = vmatpush1.bf16.msra.mxu0 0
    %2510 = vmatprep.subr.bf16.mxu0 0
    %2511 = vmatpush1.bf16.msra.mxu0 %v1735
    %2512 = vmatprep.subr.bf16.mxu0 0
    %2513 = vmatpush1.bf16.msra.mxu0 %v1734
    %2514 = vmatprep.subr.bf16.mxu0 0
    %2515 = vmatpush2.bf16.msra.mxu0 0
    %2516 = vmatprep.subr.bf16.mxu0 0
    %2517 = vmatpush2.bf16.msra.mxu0 0
    %2518 = vmatprep.subr.bf16.mxu0 0
    %2519 = vmatpush2.bf16.msra.mxu0 0
    %2520 = vmatprep.subr.bf16.mxu0 0
    %2521 = vmatpush2.bf16.msra.mxu0 0
    %2522 = vmatprep.subr.bf16.mxu0 0
    %2523 = vmatpush2.bf16.msra.mxu0 0
    %2524 = vmatprep.subr.bf16.mxu0 0
    %2525 = vmatpush2.bf16.msra.mxu0 0
    %2526 = vmatprep.subr.bf16.mxu0 0
    %2527 = vmatpush2.bf16.msra.mxu0 0
    %2528 = vmatprep.subr.bf16.mxu0 0
    %2529 = vmatpush2.bf16.msra.mxu0 0
    %2530 = vmatprep.mubr.bf16.mxu0 0
    %2531 = vmatmul.mubr.bf16.gmra.mxu0 %v2496
    %v2532 = vpop.f32.mrf.mxu0
    %v2533 = vadd.f32 0.0, %v2532
    %v2534 = vpop.f32.mrf.mxu0
    %v2535 = vpop.f32.mrf.mxu0
    %v2536 = vpop.f32.mrf.mxu0
    %2537 = vdwg.mxu0
    %v2538 = vpack.c.bf16 %v2533, %v2533
    %s2539 = scalar_lea.vmem %s7, 320
    %v2540 = vld [vmem:[%s2539] sm:$0xf]
    %v2541 = vld [vmem:[%s2539 + $0x4] sm:$0xf]
    %v2542 = vld [vmem:[%s2539 + $0x8] sm:$0xf]
    %v2543 = vld [vmem:[%s2539 + $0xc] sm:$0xf]
    %v2544 = vld [vmem:[%s2539 + $0x10] sm:$0xf]
    %v2545 = vld [vmem:[%s2539 + $0x14] sm:$0xf]
    %v2546 = vld [vmem:[%s2539 + $0x18] sm:$0xf]
    %v2547 = vld [vmem:[%s2539 + $0x1c] sm:$0xf]
    %v2548 = vld [vmem:[%s2539 + $0x20] sm:$0xf]
    %v2549 = vld [vmem:[%s2539 + $0x24] sm:$0xf]
    %v2550 = vld [vmem:[%s2539 + $0x28] sm:$0xf]
    %v2551 = vld [vmem:[%s2539 + $0x2c] sm:$0xf]
    %v2552 = vld [vmem:[%s2539 + $0x30] sm:$0xf]
    %v2553 = vld [vmem:[%s2539 + $0x34] sm:$0xf]
    %v2554 = vld [vmem:[%s2539 + $0x38] sm:$0xf]
    %v2555 = vld [vmem:[%s2539 + $0x3c] sm:$0xf]
    %v2572 = vunpack.c.l.b16 %v2540
    %v2573 = vunpack.c.l.b16 %v2541
    %v2574 = vunpack.c.l.b16 %v2542
    %v2575 = vunpack.c.l.b16 %v2543
    %v2576 = vunpack.c.l.b16 %v2544
    %v2577 = vunpack.c.l.b16 %v2545
    %v2578 = vunpack.c.l.b16 %v2546
    %v2579 = vunpack.c.l.b16 %v2547
    %v2580 = vunpack.c.l.b16 %v2548
    %v2581 = vunpack.c.l.b16 %v2549
    %v2582 = vunpack.c.l.b16 %v2550
    %v2583 = vunpack.c.l.b16 %v2551
    %v2584 = vunpack.c.l.b16 %v2552
    %v2585 = vunpack.c.l.b16 %v2553
    %v2586 = vunpack.c.l.b16 %v2554
    %v2587 = vunpack.c.l.b16 %v2555
    %v2588 = vpack.c.b16 %v2573, %v2572
    %v2589 = vpack.c.b16 %v2575, %v2574
    %v2590 = vpack.c.b16 %v2577, %v2576
    %v2591 = vpack.c.b16 %v2579, %v2578
    %v2592 = vpack.c.b16 %v2581, %v2580
    %v2593 = vpack.c.b16 %v2583, %v2582
    %v2594 = vpack.c.b16 %v2585, %v2584
    %v2595 = vpack.c.b16 %v2587, %v2586
    %2604 = vmatprep.subr.bf16.mxu0 0
    %2605 = vmatpush1.bf16.msra.mxu0 %v2595
    %2606 = vmatprep.subr.bf16.mxu0 0
    %2607 = vmatpush1.bf16.msra.mxu0 %v2594
    %2608 = vmatprep.subr.bf16.mxu0 0
    %2609 = vmatpush1.bf16.msra.mxu0 %v2593
    %2610 = vmatprep.subr.bf16.mxu0 0
    %2611 = vmatpush1.bf16.msra.mxu0 %v2592
    %2612 = vmatprep.subr.bf16.mxu0 0
    %2613 = vmatpush1.bf16.msra.mxu0 %v2591
    %2614 = vmatprep.subr.bf16.mxu0 0
    %2615 = vmatpush1.bf16.msra.mxu0 %v2590
    %2616 = vmatprep.subr.bf16.mxu0 0
    %2617 = vmatpush1.bf16.msra.mxu0 %v2589
    %2618 = vmatprep.subr.bf16.mxu0 0
    %2619 = vmatpush1.bf16.msra.mxu0 %v2588
    %2620 = vmatprep.subr.bf16.mxu0 0
    %2621 = vmatpush2.bf16.msra.mxu0 0
    %2622 = vmatprep.subr.bf16.mxu0 0
    %2623 = vmatpush2.bf16.msra.mxu0 0
    %2624 = vmatprep.subr.bf16.mxu0 0
    %2625 = vmatpush2.bf16.msra.mxu0 0
    %2626 = vmatprep.subr.bf16.mxu0 0
    %2627 = vmatpush2.bf16.msra.mxu0 0
    %2628 = vmatprep.subr.bf16.mxu0 0
    %2629 = vmatpush2.bf16.msra.mxu0 0
    %2630 = vmatprep.subr.bf16.mxu0 0
    %2631 = vmatpush2.bf16.msra.mxu0 0
    %2632 = vmatprep.subr.bf16.mxu0 0
    %2633 = vmatpush2.bf16.msra.mxu0 0
    %2634 = vmatprep.subr.bf16.mxu0 0
    %2635 = vmatpush2.bf16.msra.mxu0 0
    %2636 = vmatprep.mubr.bf16.mxu0 0
    %2637 = vmatmul.mubr.bf16.gmra.mxu0 %v2538
    %v2638 = vpop.f32.mrf.mxu0
    %v2639 = vadd.f32 0.0, %v2638
    %v2640 = vpop.f32.mrf.mxu0
    %v2641 = vpop.f32.mrf.mxu0
    %v2642 = vpop.f32.mrf.mxu0
    %2643 = vdwg.mxu0
    %v2644 = vadd.f32 %v2492, %v2639
    %s2645 = scalar_lea.vmem %s6, 24
    %v2646 = vld [vmem:[%s2645] sm:$0xf]
    %v2648 = vsel %vm1737, %v2646, 0
    %2650 = vmatprep.subr.bf16.mxu0 0
    %2651 = vmatpush1.bf16.msra.mxu0 0
    %2652 = vmatprep.subr.bf16.mxu0 0
    %2653 = vmatpush1.bf16.msra.mxu0 0
    %2654 = vmatprep.subr.bf16.mxu0 0
    %2655 = vmatpush1.bf16.msra.mxu0 0
    %2656 = vmatprep.subr.bf16.mxu0 0
    %2657 = vmatpush1.bf16.msra.mxu0 0
    %2658 = vmatprep.subr.bf16.mxu0 0
    %2659 = vmatpush1.bf16.msra.mxu0 0
    %2660 = vmatprep.subr.bf16.mxu0 0
    %2661 = vmatpush1.bf16.msra.mxu0 0
    %2662 = vmatprep.subr.bf16.mxu0 0
    %2663 = vmatpush1.bf16.msra.mxu0 %v1735
    %2664 = vmatprep.subr.bf16.mxu0 0
    %2665 = vmatpush1.bf16.msra.mxu0 %v1734
    %2666 = vmatprep.subr.bf16.mxu0 0
    %2667 = vmatpush2.bf16.msra.mxu0 0
    %2668 = vmatprep.subr.bf16.mxu0 0
    %2669 = vmatpush2.bf16.msra.mxu0 0
    %2670 = vmatprep.subr.bf16.mxu0 0
    %2671 = vmatpush2.bf16.msra.mxu0 0
    %2672 = vmatprep.subr.bf16.mxu0 0
    %2673 = vmatpush2.bf16.msra.mxu0 0
    %2674 = vmatprep.subr.bf16.mxu0 0
    %2675 = vmatpush2.bf16.msra.mxu0 0
    %2676 = vmatprep.subr.bf16.mxu0 0
    %2677 = vmatpush2.bf16.msra.mxu0 0
    %2678 = vmatprep.subr.bf16.mxu0 0
    %2679 = vmatpush2.bf16.msra.mxu0 0
    %2680 = vmatprep.subr.bf16.mxu0 0
    %2681 = vmatpush2.bf16.msra.mxu0 0
    %2682 = vmatprep.mubr.bf16.mxu0 0
    %2683 = vmatmul.mubr.bf16.gmra.mxu0 %v2648
    %v2684 = vpop.f32.mrf.mxu0
    %v2685 = vadd.f32 0.0, %v2684
    %v2686 = vpop.f32.mrf.mxu0
    %v2687 = vpop.f32.mrf.mxu0
    %v2688 = vpop.f32.mrf.mxu0
    %2689 = vdwg.mxu0
    %v2690 = vpack.c.bf16 %v2685, %v2685
    %s2691 = scalar_lea.vmem %s7, 384
    %v2692 = vld [vmem:[%s2691] sm:$0xf]
    %v2693 = vld [vmem:[%s2691 + $0x4] sm:$0xf]
    %v2694 = vld [vmem:[%s2691 + $0x8] sm:$0xf]
    %v2695 = vld [vmem:[%s2691 + $0xc] sm:$0xf]
    %v2696 = vld [vmem:[%s2691 + $0x10] sm:$0xf]
    %v2697 = vld [vmem:[%s2691 + $0x14] sm:$0xf]
    %v2698 = vld [vmem:[%s2691 + $0x18] sm:$0xf]
    %v2699 = vld [vmem:[%s2691 + $0x1c] sm:$0xf]
    %v2700 = vld [vmem:[%s2691 + $0x20] sm:$0xf]
    %v2701 = vld [vmem:[%s2691 + $0x24] sm:$0xf]
    %v2702 = vld [vmem:[%s2691 + $0x28] sm:$0xf]
    %v2703 = vld [vmem:[%s2691 + $0x2c] sm:$0xf]
    %v2704 = vld [vmem:[%s2691 + $0x30] sm:$0xf]
    %v2705 = vld [vmem:[%s2691 + $0x34] sm:$0xf]
    %v2706 = vld [vmem:[%s2691 + $0x38] sm:$0xf]
    %v2707 = vld [vmem:[%s2691 + $0x3c] sm:$0xf]
    %v2724 = vunpack.c.l.b16 %v2692
    %v2725 = vunpack.c.l.b16 %v2693
    %v2726 = vunpack.c.l.b16 %v2694
    %v2727 = vunpack.c.l.b16 %v2695
    %v2728 = vunpack.c.l.b16 %v2696
    %v2729 = vunpack.c.l.b16 %v2697
    %v2730 = vunpack.c.l.b16 %v2698
    %v2731 = vunpack.c.l.b16 %v2699
    %v2732 = vunpack.c.l.b16 %v2700
    %v2733 = vunpack.c.l.b16 %v2701
    %v2734 = vunpack.c.l.b16 %v2702
    %v2735 = vunpack.c.l.b16 %v2703
    %v2736 = vunpack.c.l.b16 %v2704
    %v2737 = vunpack.c.l.b16 %v2705
    %v2738 = vunpack.c.l.b16 %v2706
    %v2739 = vunpack.c.l.b16 %v2707
    %v2740 = vpack.c.b16 %v2725, %v2724
    %v2741 = vpack.c.b16 %v2727, %v2726
    %v2742 = vpack.c.b16 %v2729, %v2728
    %v2743 = vpack.c.b16 %v2731, %v2730
    %v2744 = vpack.c.b16 %v2733, %v2732
    %v2745 = vpack.c.b16 %v2735, %v2734
    %v2746 = vpack.c.b16 %v2737, %v2736
    %v2747 = vpack.c.b16 %v2739, %v2738
    %2756 = vmatprep.subr.bf16.mxu0 0
    %2757 = vmatpush1.bf16.msra.mxu0 %v2747
    %2758 = vmatprep.subr.bf16.mxu0 0
    %2759 = vmatpush1.bf16.msra.mxu0 %v2746
    %2760 = vmatprep.subr.bf16.mxu0 0
    %2761 = vmatpush1.bf16.msra.mxu0 %v2745
    %2762 = vmatprep.subr.bf16.mxu0 0
    %2763 = vmatpush1.bf16.msra.mxu0 %v2744
    %2764 = vmatprep.subr.bf16.mxu0 0
    %2765 = vmatpush1.bf16.msra.mxu0 %v2743
    %2766 = vmatprep.subr.bf16.mxu0 0
    %2767 = vmatpush1.bf16.msra.mxu0 %v2742
    %2768 = vmatprep.subr.bf16.mxu0 0
    %2769 = vmatpush1.bf16.msra.mxu0 %v2741
    %2770 = vmatprep.subr.bf16.mxu0 0
    %2771 = vmatpush1.bf16.msra.mxu0 %v2740
    %2772 = vmatprep.subr.bf16.mxu0 0
    %2773 = vmatpush2.bf16.msra.mxu0 0
    %2774 = vmatprep.subr.bf16.mxu0 0
    %2775 = vmatpush2.bf16.msra.mxu0 0
    %2776 = vmatprep.subr.bf16.mxu0 0
    %2777 = vmatpush2.bf16.msra.mxu0 0
    %2778 = vmatprep.subr.bf16.mxu0 0
    %2779 = vmatpush2.bf16.msra.mxu0 0
    %2780 = vmatprep.subr.bf16.mxu0 0
    %2781 = vmatpush2.bf16.msra.mxu0 0
    %2782 = vmatprep.subr.bf16.mxu0 0
    %2783 = vmatpush2.bf16.msra.mxu0 0
    %2784 = vmatprep.subr.bf16.mxu0 0
    %2785 = vmatpush2.bf16.msra.mxu0 0
    %2786 = vmatprep.subr.bf16.mxu0 0
    %2787 = vmatpush2.bf16.msra.mxu0 0
    %2788 = vmatprep.mubr.bf16.mxu0 0
    %2789 = vmatmul.mubr.bf16.gmra.mxu0 %v2690
    %v2790 = vpop.f32.mrf.mxu0
    %v2791 = vadd.f32 0.0, %v2790
    %v2792 = vpop.f32.mrf.mxu0
    %v2793 = vpop.f32.mrf.mxu0
    %v2794 = vpop.f32.mrf.mxu0
    %2795 = vdwg.mxu0
    %v2796 = vadd.f32 %v2644, %v2791
    %s2797 = scalar_lea.vmem %s6, 28
    %v2798 = vld [vmem:[%s2797] sm:$0xf]
    %v2800 = vsel %vm1737, %v2798, 0
    %2802 = vmatprep.subr.bf16.mxu0 0
    %2803 = vmatpush1.bf16.msra.mxu0 0
    %2804 = vmatprep.subr.bf16.mxu0 0
    %2805 = vmatpush1.bf16.msra.mxu0 0
    %2806 = vmatprep.subr.bf16.mxu0 0
    %2807 = vmatpush1.bf16.msra.mxu0 0
    %2808 = vmatprep.subr.bf16.mxu0 0
    %2809 = vmatpush1.bf16.msra.mxu0 0
    %2810 = vmatprep.subr.bf16.mxu0 0
    %2811 = vmatpush1.bf16.msra.mxu0 0
    %2812 = vmatprep.subr.bf16.mxu0 0
    %2813 = vmatpush1.bf16.msra.mxu0 0
    %2814 = vmatprep.subr.bf16.mxu0 0
    %2815 = vmatpush1.bf16.msra.mxu0 %v1735
    %2816 = vmatprep.subr.bf16.mxu0 0
    %2817 = vmatpush1.bf16.msra.mxu0 %v1734
    %2818 = vmatprep.subr.bf16.mxu0 0
    %2819 = vmatpush2.bf16.msra.mxu0 0
    %2820 = vmatprep.subr.bf16.mxu0 0
    %2821 = vmatpush2.bf16.msra.mxu0 0
    %2822 = vmatprep.subr.bf16.mxu0 0
    %2823 = vmatpush2.bf16.msra.mxu0 0
    %2824 = vmatprep.subr.bf16.mxu0 0
    %2825 = vmatpush2.bf16.msra.mxu0 0
    %2826 = vmatprep.subr.bf16.mxu0 0
    %2827 = vmatpush2.bf16.msra.mxu0 0
    %2828 = vmatprep.subr.bf16.mxu0 0
    %2829 = vmatpush2.bf16.msra.mxu0 0
    %2830 = vmatprep.subr.bf16.mxu0 0
    %2831 = vmatpush2.bf16.msra.mxu0 0
    %2832 = vmatprep.subr.bf16.mxu0 0
    %2833 = vmatpush2.bf16.msra.mxu0 0
    %2834 = vmatprep.mubr.bf16.mxu0 0
    %2835 = vmatmul.mubr.bf16.gmra.mxu0 %v2800
    %v2836 = vpop.f32.mrf.mxu0
    %v2837 = vadd.f32 0.0, %v2836
    %v2838 = vpop.f32.mrf.mxu0
    %v2839 = vpop.f32.mrf.mxu0
    %v2840 = vpop.f32.mrf.mxu0
    %2841 = vdwg.mxu0
    %v2842 = vpack.c.bf16 %v2837, %v2837
    %s2843 = scalar_lea.vmem %s7, 448
    %v2844 = vld [vmem:[%s2843] sm:$0xf]
    %v2845 = vld [vmem:[%s2843 + $0x4] sm:$0xf]
    %v2846 = vld [vmem:[%s2843 + $0x8] sm:$0xf]
    %v2847 = vld [vmem:[%s2843 + $0xc] sm:$0xf]
    %v2848 = vld [vmem:[%s2843 + $0x10] sm:$0xf]
    %v2849 = vld [vmem:[%s2843 + $0x14] sm:$0xf]
    %v2850 = vld [vmem:[%s2843 + $0x18] sm:$0xf]
    %v2851 = vld [vmem:[%s2843 + $0x1c] sm:$0xf]
    %v2852 = vld [vmem:[%s2843 + $0x20] sm:$0xf]
    %v2853 = vld [vmem:[%s2843 + $0x24] sm:$0xf]
    %v2854 = vld [vmem:[%s2843 + $0x28] sm:$0xf]
    %v2855 = vld [vmem:[%s2843 + $0x2c] sm:$0xf]
    %v2856 = vld [vmem:[%s2843 + $0x30] sm:$0xf]
    %v2857 = vld [vmem:[%s2843 + $0x34] sm:$0xf]
    %v2858 = vld [vmem:[%s2843 + $0x38] sm:$0xf]
    %v2859 = vld [vmem:[%s2843 + $0x3c] sm:$0xf]
    %v2876 = vunpack.c.l.b16 %v2844
    %v2877 = vunpack.c.l.b16 %v2845
    %v2878 = vunpack.c.l.b16 %v2846
    %v2879 = vunpack.c.l.b16 %v2847
    %v2880 = vunpack.c.l.b16 %v2848
    %v2881 = vunpack.c.l.b16 %v2849
    %v2882 = vunpack.c.l.b16 %v2850
    %v2883 = vunpack.c.l.b16 %v2851
    %v2884 = vunpack.c.l.b16 %v2852
    %v2885 = vunpack.c.l.b16 %v2853
    %v2886 = vunpack.c.l.b16 %v2854
    %v2887 = vunpack.c.l.b16 %v2855
    %v2888 = vunpack.c.l.b16 %v2856
    %v2889 = vunpack.c.l.b16 %v2857
    %v2890 = vunpack.c.l.b16 %v2858
    %v2891 = vunpack.c.l.b16 %v2859
    %v2892 = vpack.c.b16 %v2877, %v2876
    %v2893 = vpack.c.b16 %v2879, %v2878
    %v2894 = vpack.c.b16 %v2881, %v2880
    %v2895 = vpack.c.b16 %v2883, %v2882
    %v2896 = vpack.c.b16 %v2885, %v2884
    %v2897 = vpack.c.b16 %v2887, %v2886
    %v2898 = vpack.c.b16 %v2889, %v2888
    %v2899 = vpack.c.b16 %v2891, %v2890
    %2908 = vmatprep.subr.bf16.mxu0 0
    %2909 = vmatpush1.bf16.msra.mxu0 %v2899
    %2910 = vmatprep.subr.bf16.mxu0 0
    %2911 = vmatpush1.bf16.msra.mxu0 %v2898
    %2912 = vmatprep.subr.bf16.mxu0 0
    %2913 = vmatpush1.bf16.msra.mxu0 %v2897
    %2914 = vmatprep.subr.bf16.mxu0 0
    %2915 = vmatpush1.bf16.msra.mxu0 %v2896
    %2916 = vmatprep.subr.bf16.mxu0 0
    %2917 = vmatpush1.bf16.msra.mxu0 %v2895
    %2918 = vmatprep.subr.bf16.mxu0 0
    %2919 = vmatpush1.bf16.msra.mxu0 %v2894
    %2920 = vmatprep.subr.bf16.mxu0 0
    %2921 = vmatpush1.bf16.msra.mxu0 %v2893
    %2922 = vmatprep.subr.bf16.mxu0 0
    %2923 = vmatpush1.bf16.msra.mxu0 %v2892
    %2924 = vmatprep.subr.bf16.mxu0 0
    %2925 = vmatpush2.bf16.msra.mxu0 0
    %2926 = vmatprep.subr.bf16.mxu0 0
    %2927 = vmatpush2.bf16.msra.mxu0 0
    %2928 = vmatprep.subr.bf16.mxu0 0
    %2929 = vmatpush2.bf16.msra.mxu0 0
    %2930 = vmatprep.subr.bf16.mxu0 0
    %2931 = vmatpush2.bf16.msra.mxu0 0
    %2932 = vmatprep.subr.bf16.mxu0 0
    %2933 = vmatpush2.bf16.msra.mxu0 0
    %2934 = vmatprep.subr.bf16.mxu0 0
    %2935 = vmatpush2.bf16.msra.mxu0 0
    %2936 = vmatprep.subr.bf16.mxu0 0
    %2937 = vmatpush2.bf16.msra.mxu0 0
    %2938 = vmatprep.subr.bf16.mxu0 0
    %2939 = vmatpush2.bf16.msra.mxu0 0
    %2940 = vmatprep.mubr.bf16.mxu0 0
    %2941 = vmatmul.mubr.bf16.gmra.mxu0 %v2842
    %v2942 = vpop.f32.mrf.mxu0
    %v2943 = vadd.f32 0.0, %v2942
    %v2944 = vpop.f32.mrf.mxu0
    %v2945 = vpop.f32.mrf.mxu0
    %v2946 = vpop.f32.mrf.mxu0
    %2947 = vdwg.mxu0
    %v2948 = vadd.f32 %v2796, %v2943
    %s2949 = scalar_lea.vmem %s6, 32
    %v2950 = vld [vmem:[%s2949] sm:$0xf]
    %v2952 = vsel %vm1737, %v2950, 0
    %2954 = vmatprep.subr.bf16.mxu0 0
    %2955 = vmatpush1.bf16.msra.mxu0 0
    %2956 = vmatprep.subr.bf16.mxu0 0
    %2957 = vmatpush1.bf16.msra.mxu0 0
    %2958 = vmatprep.subr.bf16.mxu0 0
    %2959 = vmatpush1.bf16.msra.mxu0 0
    %2960 = vmatprep.subr.bf16.mxu0 0
    %2961 = vmatpush1.bf16.msra.mxu0 0
    %2962 = vmatprep.subr.bf16.mxu0 0
    %2963 = vmatpush1.bf16.msra.mxu0 0
    %2964 = vmatprep.subr.bf16.mxu0 0
    %2965 = vmatpush1.bf16.msra.mxu0 0
    %2966 = vmatprep.subr.bf16.mxu0 0
    %2967 = vmatpush1.bf16.msra.mxu0 %v1735
    %2968 = vmatprep.subr.bf16.mxu0 0
    %2969 = vmatpush1.bf16.msra.mxu0 %v1734
    %2970 = vmatprep.subr.bf16.mxu0 0
    %2971 = vmatpush2.bf16.msra.mxu0 0
    %2972 = vmatprep.subr.bf16.mxu0 0
    %2973 = vmatpush2.bf16.msra.mxu0 0
    %2974 = vmatprep.subr.bf16.mxu0 0
    %2975 = vmatpush2.bf16.msra.mxu0 0
    %2976 = vmatprep.subr.bf16.mxu0 0
    %2977 = vmatpush2.bf16.msra.mxu0 0
    %2978 = vmatprep.subr.bf16.mxu0 0
    %2979 = vmatpush2.bf16.msra.mxu0 0
    %2980 = vmatprep.subr.bf16.mxu0 0
    %2981 = vmatpush2.bf16.msra.mxu0 0
    %2982 = vmatprep.subr.bf16.mxu0 0
    %2983 = vmatpush2.bf16.msra.mxu0 0
    %2984 = vmatprep.subr.bf16.mxu0 0
    %2985 = vmatpush2.bf16.msra.mxu0 0
    %2986 = vmatprep.mubr.bf16.mxu0 0
    %2987 = vmatmul.mubr.bf16.gmra.mxu0 %v2952
    %v2988 = vpop.f32.mrf.mxu0
    %v2989 = vadd.f32 0.0, %v2988
    %v2990 = vpop.f32.mrf.mxu0
    %v2991 = vpop.f32.mrf.mxu0
    %v2992 = vpop.f32.mrf.mxu0
    %2993 = vdwg.mxu0
    %v2994 = vpack.c.bf16 %v2989, %v2989
    %s2995 = scalar_lea.vmem %s7, 512
    %v2996 = vld [vmem:[%s2995] sm:$0xf]
    %v2997 = vld [vmem:[%s2995 + $0x4] sm:$0xf]
    %v2998 = vld [vmem:[%s2995 + $0x8] sm:$0xf]
    %v2999 = vld [vmem:[%s2995 + $0xc] sm:$0xf]
    %v3000 = vld [vmem:[%s2995 + $0x10] sm:$0xf]
    %v3001 = vld [vmem:[%s2995 + $0x14] sm:$0xf]
    %v3002 = vld [vmem:[%s2995 + $0x18] sm:$0xf]
    %v3003 = vld [vmem:[%s2995 + $0x1c] sm:$0xf]
    %v3004 = vld [vmem:[%s2995 + $0x20] sm:$0xf]
    %v3005 = vld [vmem:[%s2995 + $0x24] sm:$0xf]
    %v3006 = vld [vmem:[%s2995 + $0x28] sm:$0xf]
    %v3007 = vld [vmem:[%s2995 + $0x2c] sm:$0xf]
    %v3008 = vld [vmem:[%s2995 + $0x30] sm:$0xf]
    %v3009 = vld [vmem:[%s2995 + $0x34] sm:$0xf]
    %v3010 = vld [vmem:[%s2995 + $0x38] sm:$0xf]
    %v3011 = vld [vmem:[%s2995 + $0x3c] sm:$0xf]
    %v3028 = vunpack.c.l.b16 %v2996
    %v3029 = vunpack.c.l.b16 %v2997
    %v3030 = vunpack.c.l.b16 %v2998
    %v3031 = vunpack.c.l.b16 %v2999
    %v3032 = vunpack.c.l.b16 %v3000
    %v3033 = vunpack.c.l.b16 %v3001
    %v3034 = vunpack.c.l.b16 %v3002
    %v3035 = vunpack.c.l.b16 %v3003
    %v3036 = vunpack.c.l.b16 %v3004
    %v3037 = vunpack.c.l.b16 %v3005
    %v3038 = vunpack.c.l.b16 %v3006
    %v3039 = vunpack.c.l.b16 %v3007
    %v3040 = vunpack.c.l.b16 %v3008
    %v3041 = vunpack.c.l.b16 %v3009
    %v3042 = vunpack.c.l.b16 %v3010
    %v3043 = vunpack.c.l.b16 %v3011
    %v3044 = vpack.c.b16 %v3029, %v3028
    %v3045 = vpack.c.b16 %v3031, %v3030
    %v3046 = vpack.c.b16 %v3033, %v3032
    %v3047 = vpack.c.b16 %v3035, %v3034
    %v3048 = vpack.c.b16 %v3037, %v3036
    %v3049 = vpack.c.b16 %v3039, %v3038
    %v3050 = vpack.c.b16 %v3041, %v3040
    %v3051 = vpack.c.b16 %v3043, %v3042
    %3060 = vmatprep.subr.bf16.mxu0 0
    %3061 = vmatpush1.bf16.msra.mxu0 %v3051
    %3062 = vmatprep.subr.bf16.mxu0 0
    %3063 = vmatpush1.bf16.msra.mxu0 %v3050
    %3064 = vmatprep.subr.bf16.mxu0 0
    %3065 = vmatpush1.bf16.msra.mxu0 %v3049
    %3066 = vmatprep.subr.bf16.mxu0 0
    %3067 = vmatpush1.bf16.msra.mxu0 %v3048
    %3068 = vmatprep.subr.bf16.mxu0 0
    %3069 = vmatpush1.bf16.msra.mxu0 %v3047
    %3070 = vmatprep.subr.bf16.mxu0 0
    %3071 = vmatpush1.bf16.msra.mxu0 %v3046
    %3072 = vmatprep.subr.bf16.mxu0 0
    %3073 = vmatpush1.bf16.msra.mxu0 %v3045
    %3074 = vmatprep.subr.bf16.mxu0 0
    %3075 = vmatpush1.bf16.msra.mxu0 %v3044
    %3076 = vmatprep.subr.bf16.mxu0 0
    %3077 = vmatpush2.bf16.msra.mxu0 0
    %3078 = vmatprep.subr.bf16.mxu0 0
    %3079 = vmatpush2.bf16.msra.mxu0 0
    %3080 = vmatprep.subr.bf16.mxu0 0
    %3081 = vmatpush2.bf16.msra.mxu0 0
    %3082 = vmatprep.subr.bf16.mxu0 0
    %3083 = vmatpush2.bf16.msra.mxu0 0
    %3084 = vmatprep.subr.bf16.mxu0 0
    %3085 = vmatpush2.bf16.msra.mxu0 0
    %3086 = vmatprep.subr.bf16.mxu0 0
    %3087 = vmatpush2.bf16.msra.mxu0 0
    %3088 = vmatprep.subr.bf16.mxu0 0
    %3089 = vmatpush2.bf16.msra.mxu0 0
    %3090 = vmatprep.subr.bf16.mxu0 0
    %3091 = vmatpush2.bf16.msra.mxu0 0
    %3092 = vmatprep.mubr.bf16.mxu0 0
    %3093 = vmatmul.mubr.bf16.gmra.mxu0 %v2994
    %v3094 = vpop.f32.mrf.mxu0
    %v3095 = vadd.f32 0.0, %v3094
    %v3096 = vpop.f32.mrf.mxu0
    %v3097 = vpop.f32.mrf.mxu0
    %v3098 = vpop.f32.mrf.mxu0
    %3099 = vdwg.mxu0
    %v3100 = vadd.f32 %v2948, %v3095
    %v3101 = vld [vmem:[%s8] sm:$0x1]
    %v3103 = vlaneseq
    %v3104 = vshrl.u32 %v3103, 7
    %v3105 = vsub.s32 0, %v3104
    %v3106 = vrot.slane %v3101, %v3105
    %v3108 = vadd.f32 %v3100, %v3106
    %v3109 = vpack.c.bf16 %v3108, %v3108
    %v3110 = vld [vmem:[%s9] sm:$0x1]
    %vm3111 = vcmask 64512
    %v3113 = vsel %vm3111, %v3110, 0
    %vm3115 = vcmask 1043456
    %v3117 = vsel %vm3115, %v3109, 0
    %3119 = vmatprep.subr.bf16.mxu0 0
    %3120 = vmatpush1.bf16.msra.mxu0 0
    %3121 = vmatprep.subr.bf16.mxu0 0
    %3122 = vmatpush1.bf16.msra.mxu0 0
    %3123 = vmatprep.subr.bf16.mxu0 0
    %3124 = vmatpush1.bf16.msra.mxu0 0
    %3125 = vmatprep.subr.bf16.mxu0 0
    %3126 = vmatpush1.bf16.msra.mxu0 0
    %3127 = vmatprep.subr.bf16.mxu0 0
    %3128 = vmatpush1.bf16.msra.mxu0 0
    %3129 = vmatprep.subr.bf16.mxu0 0
    %3130 = vmatpush1.bf16.msra.mxu0 0
    %3131 = vmatprep.subr.bf16.mxu0 0
    %3132 = vmatpush1.bf16.msra.mxu0 0
    %3133 = vmatprep.subr.bf16.mxu0 0
    %3134 = vmatpush1.bf16.msra.mxu0 %v3117
    %3135 = vmatprep.subr.bf16.mxu0 0
    %3136 = vmatpush2.bf16.msra.mxu0 0
    %3137 = vmatprep.subr.bf16.mxu0 0
    %3138 = vmatpush2.bf16.msra.mxu0 0
    %3139 = vmatprep.subr.bf16.mxu0 0
    %3140 = vmatpush2.bf16.msra.mxu0 0
    %3141 = vmatprep.subr.bf16.mxu0 0
    %3142 = vmatpush2.bf16.msra.mxu0 0
    %3143 = vmatprep.subr.bf16.mxu0 0
    %3144 = vmatpush2.bf16.msra.mxu0 0
    %3145 = vmatprep.subr.bf16.mxu0 0
    %3146 = vmatpush2.bf16.msra.mxu0 0
    %3147 = vmatprep.subr.bf16.mxu0 0
    %3148 = vmatpush2.bf16.msra.mxu0 0
    %3149 = vmatprep.subr.bf16.mxu0 0
    %3150 = vmatpush2.bf16.msra.mxu0 0
    %3151 = vmatprep.mubr.bf16.mxu0 0
    %3152 = vmatmul.mubr.bf16.gmra.mxu0 %v3113
    %v3153 = vpop.f32.mrf.mxu0
    %v3154 = vadd.f32 0.0, %v3153
    %v3155 = vpop.f32.mrf.mxu0
    %v3156 = vpop.f32.mrf.mxu0
    %v3157 = vpop.f32.mrf.mxu0
    %3158 = vdwg.mxu0
    %v3159 = vpack.c.bf16 %v3154, %v3154
    %v3160 = vld [vmem:[%s10] sm:$0xf]
    %v3161 = vld [vmem:[%s10 + $0x4] sm:$0xf]
    %v3162 = vld [vmem:[%s10 + $0x8] sm:$0xf]
    %v3163 = vld [vmem:[%s10 + $0xc] sm:$0xf]
    %v3164 = vld [vmem:[%s10 + $0x10] sm:$0xf]
    %v3165 = vld [vmem:[%s10 + $0x14] sm:$0xf]
    %v3166 = vld [vmem:[%s10 + $0x18] sm:$0xf]
    %v3167 = vld [vmem:[%s10 + $0x1c] sm:$0xf]
    %v3168 = vld [vmem:[%s10 + $0x20] sm:$0xf]
    %v3169 = vld [vmem:[%s10 + $0x24] sm:$0xf]
    %v3170 = vld [vmem:[%s10 + $0x28] sm:$0xf]
    %v3171 = vld [vmem:[%s10 + $0x2c] sm:$0xf]
    %v3172 = vld [vmem:[%s10 + $0x30] sm:$0xf]
    %v3173 = vld [vmem:[%s10 + $0x34] sm:$0xf]
    %v3174 = vld [vmem:[%s10 + $0x38] sm:$0xf]
    %v3175 = vld [vmem:[%s10 + $0x3c] sm:$0xf]
    %s3176 = scalar_lea.vmem %s9, 1
    %v3177 = vld [vmem:[%s3176] sm:$0x1]
    %v3179 = vsel %vm3111, %v3177, 0
    %3181 = vmatprep.subr.bf16.mxu0 0
    %3182 = vmatpush1.bf16.msra.mxu0 0
    %3183 = vmatprep.subr.bf16.mxu0 0
    %3184 = vmatpush1.bf16.msra.mxu0 0
    %3185 = vmatprep.subr.bf16.mxu0 0
    %3186 = vmatpush1.bf16.msra.mxu0 0
    %3187 = vmatprep.subr.bf16.mxu0 0
    %3188 = vmatpush1.bf16.msra.mxu0 0
    %3189 = vmatprep.subr.bf16.mxu0 0
    %3190 = vmatpush1.bf16.msra.mxu0 0
    %3191 = vmatprep.subr.bf16.mxu0 0
    %3192 = vmatpush1.bf16.msra.mxu0 0
    %3193 = vmatprep.subr.bf16.mxu0 0
    %3194 = vmatpush1.bf16.msra.mxu0 0
    %3195 = vmatprep.subr.bf16.mxu0 0
    %3196 = vmatpush1.bf16.msra.mxu0 %v3117
    %3197 = vmatprep.subr.bf16.mxu0 0
    %3198 = vmatpush2.bf16.msra.mxu0 0
    %3199 = vmatprep.subr.bf16.mxu0 0
    %3200 = vmatpush2.bf16.msra.mxu0 0
    %3201 = vmatprep.subr.bf16.mxu0 0
    %3202 = vmatpush2.bf16.msra.mxu0 0
    %3203 = vmatprep.subr.bf16.mxu0 0
    %3204 = vmatpush2.bf16.msra.mxu0 0
    %3205 = vmatprep.subr.bf16.mxu0 0
    %3206 = vmatpush2.bf16.msra.mxu0 0
    %3207 = vmatprep.subr.bf16.mxu0 0
    %3208 = vmatpush2.bf16.msra.mxu0 0
    %3209 = vmatprep.subr.bf16.mxu0 0
    %3210 = vmatpush2.bf16.msra.mxu0 0
    %3211 = vmatprep.subr.bf16.mxu0 0
    %3212 = vmatpush2.bf16.msra.mxu0 0
    %3213 = vmatprep.mubr.bf16.mxu0 0
    %3214 = vmatmul.mubr.bf16.gmra.mxu0 %v3179
    %v3215 = vpop.f32.mrf.mxu0
    %v3216 = vadd.f32 0.0, %v3215
    %v3217 = vpop.f32.mrf.mxu0
    %v3218 = vpop.f32.mrf.mxu0
    %v3219 = vpop.f32.mrf.mxu0
    %3220 = vdwg.mxu0
    %v3221 = vpack.c.bf16 %v3216, %v3216
    %s3222 = scalar_lea.vmem %s10, 64
    %v3223 = vld [vmem:[%s3222] sm:$0xf]
    %v3224 = vld [vmem:[%s3222 + $0x4] sm:$0xf]
    %v3225 = vld [vmem:[%s3222 + $0x8] sm:$0xf]
    %v3226 = vld [vmem:[%s3222 + $0xc] sm:$0xf]
    %v3227 = vld [vmem:[%s3222 + $0x10] sm:$0xf]
    %v3228 = vld [vmem:[%s3222 + $0x14] sm:$0xf]
    %v3229 = vld [vmem:[%s3222 + $0x18] sm:$0xf]
    %v3230 = vld [vmem:[%s3222 + $0x1c] sm:$0xf]
    %v3231 = vld [vmem:[%s3222 + $0x20] sm:$0xf]
    %v3232 = vld [vmem:[%s3222 + $0x24] sm:$0xf]
    %v3233 = vld [vmem:[%s3222 + $0x28] sm:$0xf]
    %v3234 = vld [vmem:[%s3222 + $0x2c] sm:$0xf]
    %v3235 = vld [vmem:[%s3222 + $0x30] sm:$0xf]
    %v3236 = vld [vmem:[%s3222 + $0x34] sm:$0xf]
    %v3237 = vld [vmem:[%s3222 + $0x38] sm:$0xf]
    %v3238 = vld [vmem:[%s3222 + $0x3c] sm:$0xf]
    %v3255 = vunpack.c.l.b16 %v3223
    %v3256 = vunpack.c.l.b16 %v3224
    %v3257 = vunpack.c.l.b16 %v3225
    %v3258 = vunpack.c.l.b16 %v3226
    %v3259 = vunpack.c.l.b16 %v3227
    %v3260 = vunpack.c.l.b16 %v3228
    %v3261 = vunpack.c.l.b16 %v3229
    %v3262 = vunpack.c.l.b16 %v3230
    %v3263 = vunpack.c.l.b16 %v3231
    %v3264 = vunpack.c.l.b16 %v3232
    %v3265 = vunpack.c.l.b16 %v3233
    %v3266 = vunpack.c.l.b16 %v3234
    %v3267 = vunpack.c.l.b16 %v3235
    %v3268 = vunpack.c.l.b16 %v3236
    %v3269 = vunpack.c.l.b16 %v3237
    %v3270 = vunpack.c.l.b16 %v3238
    %v3271 = vpack.c.b16 %v3256, %v3255
    %v3272 = vpack.c.b16 %v3258, %v3257
    %v3273 = vpack.c.b16 %v3260, %v3259
    %v3274 = vpack.c.b16 %v3262, %v3261
    %v3275 = vpack.c.b16 %v3264, %v3263
    %v3276 = vpack.c.b16 %v3266, %v3265
    %v3277 = vpack.c.b16 %v3268, %v3267
    %v3278 = vpack.c.b16 %v3270, %v3269
    %3287 = vmatprep.subr.bf16.mxu0 0
    %3288 = vmatpush1.bf16.msra.mxu0 %v3278
    %3289 = vmatprep.subr.bf16.mxu0 0
    %3290 = vmatpush1.bf16.msra.mxu0 %v3277
    %3291 = vmatprep.subr.bf16.mxu0 0
    %3292 = vmatpush1.bf16.msra.mxu0 %v3276
    %3293 = vmatprep.subr.bf16.mxu0 0
    %3294 = vmatpush1.bf16.msra.mxu0 %v3275
    %3295 = vmatprep.subr.bf16.mxu0 0
    %3296 = vmatpush1.bf16.msra.mxu0 %v3274
    %3297 = vmatprep.subr.bf16.mxu0 0
    %3298 = vmatpush1.bf16.msra.mxu0 %v3273
    %3299 = vmatprep.subr.bf16.mxu0 0
    %3300 = vmatpush1.bf16.msra.mxu0 %v3272
    %3301 = vmatprep.subr.bf16.mxu0 0
    %3302 = vmatpush1.bf16.msra.mxu0 %v3271
    %3303 = vmatprep.subr.bf16.mxu0 0
    %3304 = vmatpush2.bf16.msra.mxu0 0
    %3305 = vmatprep.subr.bf16.mxu0 0
    %3306 = vmatpush2.bf16.msra.mxu0 0
    %3307 = vmatprep.subr.bf16.mxu0 0
    %3308 = vmatpush2.bf16.msra.mxu0 0
    %3309 = vmatprep.subr.bf16.mxu0 0
    %3310 = vmatpush2.bf16.msra.mxu0 0
    %3311 = vmatprep.subr.bf16.mxu0 0
    %3312 = vmatpush2.bf16.msra.mxu0 0
    %3313 = vmatprep.subr.bf16.mxu0 0
    %3314 = vmatpush2.bf16.msra.mxu0 0
    %3315 = vmatprep.subr.bf16.mxu0 0
    %3316 = vmatpush2.bf16.msra.mxu0 0
    %3317 = vmatprep.subr.bf16.mxu0 0
    %3318 = vmatpush2.bf16.msra.mxu0 0
    %3319 = vmatprep.mubr.bf16.mxu0 0
    %3320 = vmatmul.mubr.bf16.gmra.mxu0 %v3221
    %v3321 = vpop.f32.mrf.mxu0
    %v3322 = vadd.f32 0.0, %v3321
    %v3323 = vpop.f32.mrf.mxu0
    %v3324 = vpop.f32.mrf.mxu0
    %v3325 = vpop.f32.mrf.mxu0
    %3326 = vdwg.mxu0
    %v3343 = vunpack.c.l.b16 %v3160
    %v3344 = vunpack.c.l.b16 %v3161
    %v3345 = vunpack.c.l.b16 %v3162
    %v3346 = vunpack.c.l.b16 %v3163
    %v3347 = vunpack.c.l.b16 %v3164
    %v3348 = vunpack.c.l.b16 %v3165
    %v3349 = vunpack.c.l.b16 %v3166
    %v3350 = vunpack.c.l.b16 %v3167
    %v3351 = vunpack.c.l.b16 %v3168
    %v3352 = vunpack.c.l.b16 %v3169
    %v3353 = vunpack.c.l.b16 %v3170
    %v3354 = vunpack.c.l.b16 %v3171
    %v3355 = vunpack.c.l.b16 %v3172
    %v3356 = vunpack.c.l.b16 %v3173
    %v3357 = vunpack.c.l.b16 %v3174
    %v3358 = vunpack.c.l.b16 %v3175
    %v3359 = vpack.c.b16 %v3344, %v3343
    %v3360 = vpack.c.b16 %v3346, %v3345
    %v3361 = vpack.c.b16 %v3348, %v3347
    %v3362 = vpack.c.b16 %v3350, %v3349
    %v3363 = vpack.c.b16 %v3352, %v3351
    %v3364 = vpack.c.b16 %v3354, %v3353
    %v3365 = vpack.c.b16 %v3356, %v3355
    %v3366 = vpack.c.b16 %v3358, %v3357
    %3375 = vmatprep.subr.bf16.mxu0 0
    %3376 = vmatpush1.bf16.msra.mxu0 %v3366
    %3377 = vmatprep.subr.bf16.mxu0 0
    %3378 = vmatpush1.bf16.msra.mxu0 %v3365
    %3379 = vmatprep.subr.bf16.mxu0 0
    %3380 = vmatpush1.bf16.msra.mxu0 %v3364
    %3381 = vmatprep.subr.bf16.mxu0 0
    %3382 = vmatpush1.bf16.msra.mxu0 %v3363
    %3383 = vmatprep.subr.bf16.mxu0 0
    %3384 = vmatpush1.bf16.msra.mxu0 %v3362
    %3385 = vmatprep.subr.bf16.mxu0 0
    %3386 = vmatpush1.bf16.msra.mxu0 %v3361
    %3387 = vmatprep.subr.bf16.mxu0 0
    %3388 = vmatpush1.bf16.msra.mxu0 %v3360
    %3389 = vmatprep.subr.bf16.mxu0 0
    %3390 = vmatpush1.bf16.msra.mxu0 %v3359
    %3391 = vmatprep.subr.bf16.mxu0 0
    %3392 = vmatpush2.bf16.msra.mxu0 0
    %3393 = vmatprep.subr.bf16.mxu0 0
    %3394 = vmatpush2.bf16.msra.mxu0 0
    %3395 = vmatprep.subr.bf16.mxu0 0
    %3396 = vmatpush2.bf16.msra.mxu0 0
    %3397 = vmatprep.subr.bf16.mxu0 0
    %3398 = vmatpush2.bf16.msra.mxu0 0
    %3399 = vmatprep.subr.bf16.mxu0 0
    %3400 = vmatpush2.bf16.msra.mxu0 0
    %3401 = vmatprep.subr.bf16.mxu0 0
    %3402 = vmatpush2.bf16.msra.mxu0 0
    %3403 = vmatprep.subr.bf16.mxu0 0
    %3404 = vmatpush2.bf16.msra.mxu0 0
    %3405 = vmatprep.subr.bf16.mxu0 0
    %3406 = vmatpush2.bf16.msra.mxu0 0
    %3407 = vmatprep.mubr.bf16.mxu0 0
    %3408 = vmatmul.mubr.bf16.gmra.mxu0 %v3159
    %v3409 = vpop.f32.mrf.mxu0
    %v3410 = vadd.f32 %v3322, %v3409
    %v3411 = vpop.f32.mrf.mxu0
    %v3412 = vpop.f32.mrf.mxu0
    %v3413 = vpop.f32.mrf.mxu0
    %3414 = vdwg.mxu0
    %s3415 = scalar_lea.vmem %s9, 2
    %v3416 = vld [vmem:[%s3415] sm:$0x1]
    %v3418 = vsel %vm3111, %v3416, 0
    %3420 = vmatprep.subr.bf16.mxu0 0
    %3421 = vmatpush1.bf16.msra.mxu0 0
    %3422 = vmatprep.subr.bf16.mxu0 0
    %3423 = vmatpush1.bf16.msra.mxu0 0
    %3424 = vmatprep.subr.bf16.mxu0 0
    %3425 = vmatpush1.bf16.msra.mxu0 0
    %3426 = vmatprep.subr.bf16.mxu0 0
    %3427 = vmatpush1.bf16.msra.mxu0 0
    %3428 = vmatprep.subr.bf16.mxu0 0
    %3429 = vmatpush1.bf16.msra.mxu0 0
    %3430 = vmatprep.subr.bf16.mxu0 0
    %3431 = vmatpush1.bf16.msra.mxu0 0
    %3432 = vmatprep.subr.bf16.mxu0 0
    %3433 = vmatpush1.bf16.msra.mxu0 0
    %3434 = vmatprep.subr.bf16.mxu0 0
    %3435 = vmatpush1.bf16.msra.mxu0 %v3117
    %3436 = vmatprep.subr.bf16.mxu0 0
    %3437 = vmatpush2.bf16.msra.mxu0 0
    %3438 = vmatprep.subr.bf16.mxu0 0
    %3439 = vmatpush2.bf16.msra.mxu0 0
    %3440 = vmatprep.subr.bf16.mxu0 0
    %3441 = vmatpush2.bf16.msra.mxu0 0
    %3442 = vmatprep.subr.bf16.mxu0 0
    %3443 = vmatpush2.bf16.msra.mxu0 0
    %3444 = vmatprep.subr.bf16.mxu0 0
    %3445 = vmatpush2.bf16.msra.mxu0 0
    %3446 = vmatprep.subr.bf16.mxu0 0
    %3447 = vmatpush2.bf16.msra.mxu0 0
    %3448 = vmatprep.subr.bf16.mxu0 0
    %3449 = vmatpush2.bf16.msra.mxu0 0
    %3450 = vmatprep.subr.bf16.mxu0 0
    %3451 = vmatpush2.bf16.msra.mxu0 0
    %3452 = vmatprep.mubr.bf16.mxu0 0
    %3453 = vmatmul.mubr.bf16.gmra.mxu0 %v3418
    %v3454 = vpop.f32.mrf.mxu0
    %v3455 = vadd.f32 0.0, %v3454
    %v3456 = vpop.f32.mrf.mxu0
    %v3457 = vpop.f32.mrf.mxu0
    %v3458 = vpop.f32.mrf.mxu0
    %3459 = vdwg.mxu0
    %v3460 = vpack.c.bf16 %v3455, %v3455
    %s3461 = scalar_lea.vmem %s10, 128
    %v3462 = vld [vmem:[%s3461] sm:$0xf]
    %v3463 = vld [vmem:[%s3461 + $0x4] sm:$0xf]
    %v3464 = vld [vmem:[%s3461 + $0x8] sm:$0xf]
    %v3465 = vld [vmem:[%s3461 + $0xc] sm:$0xf]
    %v3466 = vld [vmem:[%s3461 + $0x10] sm:$0xf]
    %v3467 = vld [vmem:[%s3461 + $0x14] sm:$0xf]
    %v3468 = vld [vmem:[%s3461 + $0x18] sm:$0xf]
    %v3469 = vld [vmem:[%s3461 + $0x1c] sm:$0xf]
    %v3470 = vld [vmem:[%s3461 + $0x20] sm:$0xf]
    %v3471 = vld [vmem:[%s3461 + $0x24] sm:$0xf]
    %v3472 = vld [vmem:[%s3461 + $0x28] sm:$0xf]
    %v3473 = vld [vmem:[%s3461 + $0x2c] sm:$0xf]
    %v3474 = vld [vmem:[%s3461 + $0x30] sm:$0xf]
    %v3475 = vld [vmem:[%s3461 + $0x34] sm:$0xf]
    %v3476 = vld [vmem:[%s3461 + $0x38] sm:$0xf]
    %v3477 = vld [vmem:[%s3461 + $0x3c] sm:$0xf]
    %v3494 = vunpack.c.l.b16 %v3462
    %v3495 = vunpack.c.l.b16 %v3463
    %v3496 = vunpack.c.l.b16 %v3464
    %v3497 = vunpack.c.l.b16 %v3465
    %v3498 = vunpack.c.l.b16 %v3466
    %v3499 = vunpack.c.l.b16 %v3467
    %v3500 = vunpack.c.l.b16 %v3468
    %v3501 = vunpack.c.l.b16 %v3469
    %v3502 = vunpack.c.l.b16 %v3470
    %v3503 = vunpack.c.l.b16 %v3471
    %v3504 = vunpack.c.l.b16 %v3472
    %v3505 = vunpack.c.l.b16 %v3473
    %v3506 = vunpack.c.l.b16 %v3474
    %v3507 = vunpack.c.l.b16 %v3475
    %v3508 = vunpack.c.l.b16 %v3476
    %v3509 = vunpack.c.l.b16 %v3477
    %v3510 = vpack.c.b16 %v3495, %v3494
    %v3511 = vpack.c.b16 %v3497, %v3496
    %v3512 = vpack.c.b16 %v3499, %v3498
    %v3513 = vpack.c.b16 %v3501, %v3500
    %v3514 = vpack.c.b16 %v3503, %v3502
    %v3515 = vpack.c.b16 %v3505, %v3504
    %v3516 = vpack.c.b16 %v3507, %v3506
    %v3517 = vpack.c.b16 %v3509, %v3508
    %3526 = vmatprep.subr.bf16.mxu0 0
    %3527 = vmatpush1.bf16.msra.mxu0 %v3517
    %3528 = vmatprep.subr.bf16.mxu0 0
    %3529 = vmatpush1.bf16.msra.mxu0 %v3516
    %3530 = vmatprep.subr.bf16.mxu0 0
    %3531 = vmatpush1.bf16.msra.mxu0 %v3515
    %3532 = vmatprep.subr.bf16.mxu0 0
    %3533 = vmatpush1.bf16.msra.mxu0 %v3514
    %3534 = vmatprep.subr.bf16.mxu0 0
    %3535 = vmatpush1.bf16.msra.mxu0 %v3513
    %3536 = vmatprep.subr.bf16.mxu0 0
    %3537 = vmatpush1.bf16.msra.mxu0 %v3512
    %3538 = vmatprep.subr.bf16.mxu0 0
    %3539 = vmatpush1.bf16.msra.mxu0 %v3511
    %3540 = vmatprep.subr.bf16.mxu0 0
    %3541 = vmatpush1.bf16.msra.mxu0 %v3510
    %3542 = vmatprep.subr.bf16.mxu0 0
    %3543 = vmatpush2.bf16.msra.mxu0 0
    %3544 = vmatprep.subr.bf16.mxu0 0
    %3545 = vmatpush2.bf16.msra.mxu0 0
    %3546 = vmatprep.subr.bf16.mxu0 0
    %3547 = vmatpush2.bf16.msra.mxu0 0
    %3548 = vmatprep.subr.bf16.mxu0 0
    %3549 = vmatpush2.bf16.msra.mxu0 0
    %3550 = vmatprep.subr.bf16.mxu0 0
    %3551 = vmatpush2.bf16.msra.mxu0 0
    %3552 = vmatprep.subr.bf16.mxu0 0
    %3553 = vmatpush2.bf16.msra.mxu0 0
    %3554 = vmatprep.subr.bf16.mxu0 0
    %3555 = vmatpush2.bf16.msra.mxu0 0
    %3556 = vmatprep.subr.bf16.mxu0 0
    %3557 = vmatpush2.bf16.msra.mxu0 0
    %3558 = vmatprep.mubr.bf16.mxu0 0
    %3559 = vmatmul.mubr.bf16.gmra.mxu0 %v3460
    %v3560 = vpop.f32.mrf.mxu0
    %v3561 = vadd.f32 0.0, %v3560
    %v3562 = vpop.f32.mrf.mxu0
    %v3563 = vpop.f32.mrf.mxu0
    %v3564 = vpop.f32.mrf.mxu0
    %3565 = vdwg.mxu0
    %v3566 = vadd.f32 %v3410, %v3561
    %s3567 = scalar_lea.vmem %s9, 3
    %v3568 = vld [vmem:[%s3567] sm:$0x1]
    %v3570 = vsel %vm3111, %v3568, 0
    %3572 = vmatprep.subr.bf16.mxu0 0
    %3573 = vmatpush1.bf16.msra.mxu0 0
    %3574 = vmatprep.subr.bf16.mxu0 0
    %3575 = vmatpush1.bf16.msra.mxu0 0
    %3576 = vmatprep.subr.bf16.mxu0 0
    %3577 = vmatpush1.bf16.msra.mxu0 0
    %3578 = vmatprep.subr.bf16.mxu0 0
    %3579 = vmatpush1.bf16.msra.mxu0 0
    %3580 = vmatprep.subr.bf16.mxu0 0
    %3581 = vmatpush1.bf16.msra.mxu0 0
    %3582 = vmatprep.subr.bf16.mxu0 0
    %3583 = vmatpush1.bf16.msra.mxu0 0
    %3584 = vmatprep.subr.bf16.mxu0 0
    %3585 = vmatpush1.bf16.msra.mxu0 0
    %3586 = vmatprep.subr.bf16.mxu0 0
    %3587 = vmatpush1.bf16.msra.mxu0 %v3117
    %3588 = vmatprep.subr.bf16.mxu0 0
    %3589 = vmatpush2.bf16.msra.mxu0 0
    %3590 = vmatprep.subr.bf16.mxu0 0
    %3591 = vmatpush2.bf16.msra.mxu0 0
    %3592 = vmatprep.subr.bf16.mxu0 0
    %3593 = vmatpush2.bf16.msra.mxu0 0
    %3594 = vmatprep.subr.bf16.mxu0 0
    %3595 = vmatpush2.bf16.msra.mxu0 0
    %3596 = vmatprep.subr.bf16.mxu0 0
    %3597 = vmatpush2.bf16.msra.mxu0 0
    %3598 = vmatprep.subr.bf16.mxu0 0
    %3599 = vmatpush2.bf16.msra.mxu0 0
    %3600 = vmatprep.subr.bf16.mxu0 0
    %3601 = vmatpush2.bf16.msra.mxu0 0
    %3602 = vmatprep.subr.bf16.mxu0 0
    %3603 = vmatpush2.bf16.msra.mxu0 0
    %3604 = vmatprep.mubr.bf16.mxu0 0
    %3605 = vmatmul.mubr.bf16.gmra.mxu0 %v3570
    %v3606 = vpop.f32.mrf.mxu0
    %v3607 = vadd.f32 0.0, %v3606
    %v3608 = vpop.f32.mrf.mxu0
    %v3609 = vpop.f32.mrf.mxu0
    %v3610 = vpop.f32.mrf.mxu0
    %3611 = vdwg.mxu0
    %v3612 = vpack.c.bf16 %v3607, %v3607
    %s3613 = scalar_lea.vmem %s10, 192
    %v3614 = vld [vmem:[%s3613] sm:$0xf]
    %v3615 = vld [vmem:[%s3613 + $0x4] sm:$0xf]
    %v3616 = vld [vmem:[%s3613 + $0x8] sm:$0xf]
    %v3617 = vld [vmem:[%s3613 + $0xc] sm:$0xf]
    %v3618 = vld [vmem:[%s3613 + $0x10] sm:$0xf]
    %v3619 = vld [vmem:[%s3613 + $0x14] sm:$0xf]
    %v3620 = vld [vmem:[%s3613 + $0x18] sm:$0xf]
    %v3621 = vld [vmem:[%s3613 + $0x1c] sm:$0xf]
    %v3622 = vld [vmem:[%s3613 + $0x20] sm:$0xf]
    %v3623 = vld [vmem:[%s3613 + $0x24] sm:$0xf]
    %v3624 = vld [vmem:[%s3613 + $0x28] sm:$0xf]
    %v3625 = vld [vmem:[%s3613 + $0x2c] sm:$0xf]
    %v3626 = vld [vmem:[%s3613 + $0x30] sm:$0xf]
    %v3627 = vld [vmem:[%s3613 + $0x34] sm:$0xf]
    %v3628 = vld [vmem:[%s3613 + $0x38] sm:$0xf]
    %v3629 = vld [vmem:[%s3613 + $0x3c] sm:$0xf]
    %v3646 = vunpack.c.l.b16 %v3614
    %v3647 = vunpack.c.l.b16 %v3615
    %v3648 = vunpack.c.l.b16 %v3616
    %v3649 = vunpack.c.l.b16 %v3617
    %v3650 = vunpack.c.l.b16 %v3618
    %v3651 = vunpack.c.l.b16 %v3619
    %v3652 = vunpack.c.l.b16 %v3620
    %v3653 = vunpack.c.l.b16 %v3621
    %v3654 = vunpack.c.l.b16 %v3622
    %v3655 = vunpack.c.l.b16 %v3623
    %v3656 = vunpack.c.l.b16 %v3624
    %v3657 = vunpack.c.l.b16 %v3625
    %v3658 = vunpack.c.l.b16 %v3626
    %v3659 = vunpack.c.l.b16 %v3627
    %v3660 = vunpack.c.l.b16 %v3628
    %v3661 = vunpack.c.l.b16 %v3629
    %v3662 = vpack.c.b16 %v3647, %v3646
    %v3663 = vpack.c.b16 %v3649, %v3648
    %v3664 = vpack.c.b16 %v3651, %v3650
    %v3665 = vpack.c.b16 %v3653, %v3652
    %v3666 = vpack.c.b16 %v3655, %v3654
    %v3667 = vpack.c.b16 %v3657, %v3656
    %v3668 = vpack.c.b16 %v3659, %v3658
    %v3669 = vpack.c.b16 %v3661, %v3660
    %3678 = vmatprep.subr.bf16.mxu0 0
    %3679 = vmatpush1.bf16.msra.mxu0 %v3669
    %3680 = vmatprep.subr.bf16.mxu0 0
    %3681 = vmatpush1.bf16.msra.mxu0 %v3668
    %3682 = vmatprep.subr.bf16.mxu0 0
    %3683 = vmatpush1.bf16.msra.mxu0 %v3667
    %3684 = vmatprep.subr.bf16.mxu0 0
    %3685 = vmatpush1.bf16.msra.mxu0 %v3666
    %3686 = vmatprep.subr.bf16.mxu0 0
    %3687 = vmatpush1.bf16.msra.mxu0 %v3665
    %3688 = vmatprep.subr.bf16.mxu0 0
    %3689 = vmatpush1.bf16.msra.mxu0 %v3664
    %3690 = vmatprep.subr.bf16.mxu0 0
    %3691 = vmatpush1.bf16.msra.mxu0 %v3663
    %3692 = vmatprep.subr.bf16.mxu0 0
    %3693 = vmatpush1.bf16.msra.mxu0 %v3662
    %3694 = vmatprep.subr.bf16.mxu0 0
    %3695 = vmatpush2.bf16.msra.mxu0 0
    %3696 = vmatprep.subr.bf16.mxu0 0
    %3697 = vmatpush2.bf16.msra.mxu0 0
    %3698 = vmatprep.subr.bf16.mxu0 0
    %3699 = vmatpush2.bf16.msra.mxu0 0
    %3700 = vmatprep.subr.bf16.mxu0 0
    %3701 = vmatpush2.bf16.msra.mxu0 0
    %3702 = vmatprep.subr.bf16.mxu0 0
    %3703 = vmatpush2.bf16.msra.mxu0 0
    %3704 = vmatprep.subr.bf16.mxu0 0
    %3705 = vmatpush2.bf16.msra.mxu0 0
    %3706 = vmatprep.subr.bf16.mxu0 0
    %3707 = vmatpush2.bf16.msra.mxu0 0
    %3708 = vmatprep.subr.bf16.mxu0 0
    %3709 = vmatpush2.bf16.msra.mxu0 0
    %3710 = vmatprep.mubr.bf16.mxu0 0
    %3711 = vmatmul.mubr.bf16.gmra.mxu0 %v3612
    %v3712 = vpop.f32.mrf.mxu0
    %v3713 = vadd.f32 0.0, %v3712
    %v3714 = vpop.f32.mrf.mxu0
    %v3715 = vpop.f32.mrf.mxu0
    %v3716 = vpop.f32.mrf.mxu0
    %3717 = vdwg.mxu0
    %v3718 = vadd.f32 %v3566, %v3713
    %s3719 = scalar_lea.vmem %s9, 4
    %v3720 = vld [vmem:[%s3719] sm:$0x1]
    %v3722 = vsel %vm3111, %v3720, 0
    %3724 = vmatprep.subr.bf16.mxu0 0
    %3725 = vmatpush1.bf16.msra.mxu0 0
    %3726 = vmatprep.subr.bf16.mxu0 0
    %3727 = vmatpush1.bf16.msra.mxu0 0
    %3728 = vmatprep.subr.bf16.mxu0 0
    %3729 = vmatpush1.bf16.msra.mxu0 0
    %3730 = vmatprep.subr.bf16.mxu0 0
    %3731 = vmatpush1.bf16.msra.mxu0 0
    %3732 = vmatprep.subr.bf16.mxu0 0
    %3733 = vmatpush1.bf16.msra.mxu0 0
    %3734 = vmatprep.subr.bf16.mxu0 0
    %3735 = vmatpush1.bf16.msra.mxu0 0
    %3736 = vmatprep.subr.bf16.mxu0 0
    %3737 = vmatpush1.bf16.msra.mxu0 0
    %3738 = vmatprep.subr.bf16.mxu0 0
    %3739 = vmatpush1.bf16.msra.mxu0 %v3117
    %3740 = vmatprep.subr.bf16.mxu0 0
    %3741 = vmatpush2.bf16.msra.mxu0 0
    %3742 = vmatprep.subr.bf16.mxu0 0
    %3743 = vmatpush2.bf16.msra.mxu0 0
    %3744 = vmatprep.subr.bf16.mxu0 0
    %3745 = vmatpush2.bf16.msra.mxu0 0
    %3746 = vmatprep.subr.bf16.mxu0 0
    %3747 = vmatpush2.bf16.msra.mxu0 0
    %3748 = vmatprep.subr.bf16.mxu0 0
    %3749 = vmatpush2.bf16.msra.mxu0 0
    %3750 = vmatprep.subr.bf16.mxu0 0
    %3751 = vmatpush2.bf16.msra.mxu0 0
    %3752 = vmatprep.subr.bf16.mxu0 0
    %3753 = vmatpush2.bf16.msra.mxu0 0
    %3754 = vmatprep.subr.bf16.mxu0 0
    %3755 = vmatpush2.bf16.msra.mxu0 0
    %3756 = vmatprep.mubr.bf16.mxu0 0
    %3757 = vmatmul.mubr.bf16.gmra.mxu0 %v3722
    %v3758 = vpop.f32.mrf.mxu0
    %v3759 = vadd.f32 0.0, %v3758
    %v3760 = vpop.f32.mrf.mxu0
    %v3761 = vpop.f32.mrf.mxu0
    %v3762 = vpop.f32.mrf.mxu0
    %3763 = vdwg.mxu0
    %v3764 = vpack.c.bf16 %v3759, %v3759
    %s3765 = scalar_lea.vmem %s10, 256
    %v3766 = vld [vmem:[%s3765] sm:$0xf]
    %v3767 = vld [vmem:[%s3765 + $0x4] sm:$0xf]
    %v3768 = vld [vmem:[%s3765 + $0x8] sm:$0xf]
    %v3769 = vld [vmem:[%s3765 + $0xc] sm:$0xf]
    %v3770 = vld [vmem:[%s3765 + $0x10] sm:$0xf]
    %v3771 = vld [vmem:[%s3765 + $0x14] sm:$0xf]
    %v3772 = vld [vmem:[%s3765 + $0x18] sm:$0xf]
    %v3773 = vld [vmem:[%s3765 + $0x1c] sm:$0xf]
    %v3774 = vld [vmem:[%s3765 + $0x20] sm:$0xf]
    %v3775 = vld [vmem:[%s3765 + $0x24] sm:$0xf]
    %v3776 = vld [vmem:[%s3765 + $0x28] sm:$0xf]
    %v3777 = vld [vmem:[%s3765 + $0x2c] sm:$0xf]
    %v3778 = vld [vmem:[%s3765 + $0x30] sm:$0xf]
    %v3779 = vld [vmem:[%s3765 + $0x34] sm:$0xf]
    %v3780 = vld [vmem:[%s3765 + $0x38] sm:$0xf]
    %v3781 = vld [vmem:[%s3765 + $0x3c] sm:$0xf]
    %v3798 = vunpack.c.l.b16 %v3766
    %v3799 = vunpack.c.l.b16 %v3767
    %v3800 = vunpack.c.l.b16 %v3768
    %v3801 = vunpack.c.l.b16 %v3769
    %v3802 = vunpack.c.l.b16 %v3770
    %v3803 = vunpack.c.l.b16 %v3771
    %v3804 = vunpack.c.l.b16 %v3772
    %v3805 = vunpack.c.l.b16 %v3773
    %v3806 = vunpack.c.l.b16 %v3774
    %v3807 = vunpack.c.l.b16 %v3775
    %v3808 = vunpack.c.l.b16 %v3776
    %v3809 = vunpack.c.l.b16 %v3777
    %v3810 = vunpack.c.l.b16 %v3778
    %v3811 = vunpack.c.l.b16 %v3779
    %v3812 = vunpack.c.l.b16 %v3780
    %v3813 = vunpack.c.l.b16 %v3781
    %v3814 = vpack.c.b16 %v3799, %v3798
    %v3815 = vpack.c.b16 %v3801, %v3800
    %v3816 = vpack.c.b16 %v3803, %v3802
    %v3817 = vpack.c.b16 %v3805, %v3804
    %v3818 = vpack.c.b16 %v3807, %v3806
    %v3819 = vpack.c.b16 %v3809, %v3808
    %v3820 = vpack.c.b16 %v3811, %v3810
    %v3821 = vpack.c.b16 %v3813, %v3812
    %3830 = vmatprep.subr.bf16.mxu0 0
    %3831 = vmatpush1.bf16.msra.mxu0 %v3821
    %3832 = vmatprep.subr.bf16.mxu0 0
    %3833 = vmatpush1.bf16.msra.mxu0 %v3820
    %3834 = vmatprep.subr.bf16.mxu0 0
    %3835 = vmatpush1.bf16.msra.mxu0 %v3819
    %3836 = vmatprep.subr.bf16.mxu0 0
    %3837 = vmatpush1.bf16.msra.mxu0 %v3818
    %3838 = vmatprep.subr.bf16.mxu0 0
    %3839 = vmatpush1.bf16.msra.mxu0 %v3817
    %3840 = vmatprep.subr.bf16.mxu0 0
    %3841 = vmatpush1.bf16.msra.mxu0 %v3816
    %3842 = vmatprep.subr.bf16.mxu0 0
    %3843 = vmatpush1.bf16.msra.mxu0 %v3815
    %3844 = vmatprep.subr.bf16.mxu0 0
    %3845 = vmatpush1.bf16.msra.mxu0 %v3814
    %3846 = vmatprep.subr.bf16.mxu0 0
    %3847 = vmatpush2.bf16.msra.mxu0 0
    %3848 = vmatprep.subr.bf16.mxu0 0
    %3849 = vmatpush2.bf16.msra.mxu0 0
    %3850 = vmatprep.subr.bf16.mxu0 0
    %3851 = vmatpush2.bf16.msra.mxu0 0
    %3852 = vmatprep.subr.bf16.mxu0 0
    %3853 = vmatpush2.bf16.msra.mxu0 0
    %3854 = vmatprep.subr.bf16.mxu0 0
    %3855 = vmatpush2.bf16.msra.mxu0 0
    %3856 = vmatprep.subr.bf16.mxu0 0
    %3857 = vmatpush2.bf16.msra.mxu0 0
    %3858 = vmatprep.subr.bf16.mxu0 0
    %3859 = vmatpush2.bf16.msra.mxu0 0
    %3860 = vmatprep.subr.bf16.mxu0 0
    %3861 = vmatpush2.bf16.msra.mxu0 0
    %3862 = vmatprep.mubr.bf16.mxu0 0
    %3863 = vmatmul.mubr.bf16.gmra.mxu0 %v3764
    %v3864 = vpop.f32.mrf.mxu0
    %v3865 = vadd.f32 0.0, %v3864
    %v3866 = vpop.f32.mrf.mxu0
    %v3867 = vpop.f32.mrf.mxu0
    %v3868 = vpop.f32.mrf.mxu0
    %3869 = vdwg.mxu0
    %v3870 = vadd.f32 %v3718, %v3865
    %s3871 = scalar_lea.vmem %s9, 5
    %v3872 = vld [vmem:[%s3871] sm:$0x1]
    %v3874 = vsel %vm3111, %v3872, 0
    %3876 = vmatprep.subr.bf16.mxu0 0
    %3877 = vmatpush1.bf16.msra.mxu0 0
    %3878 = vmatprep.subr.bf16.mxu0 0
    %3879 = vmatpush1.bf16.msra.mxu0 0
    %3880 = vmatprep.subr.bf16.mxu0 0
    %3881 = vmatpush1.bf16.msra.mxu0 0
    %3882 = vmatprep.subr.bf16.mxu0 0
    %3883 = vmatpush1.bf16.msra.mxu0 0
    %3884 = vmatprep.subr.bf16.mxu0 0
    %3885 = vmatpush1.bf16.msra.mxu0 0
    %3886 = vmatprep.subr.bf16.mxu0 0
    %3887 = vmatpush1.bf16.msra.mxu0 0
    %3888 = vmatprep.subr.bf16.mxu0 0
    %3889 = vmatpush1.bf16.msra.mxu0 0
    %3890 = vmatprep.subr.bf16.mxu0 0
    %3891 = vmatpush1.bf16.msra.mxu0 %v3117
    %3892 = vmatprep.subr.bf16.mxu0 0
    %3893 = vmatpush2.bf16.msra.mxu0 0
    %3894 = vmatprep.subr.bf16.mxu0 0
    %3895 = vmatpush2.bf16.msra.mxu0 0
    %3896 = vmatprep.subr.bf16.mxu0 0
    %3897 = vmatpush2.bf16.msra.mxu0 0
    %3898 = vmatprep.subr.bf16.mxu0 0
    %3899 = vmatpush2.bf16.msra.mxu0 0
    %3900 = vmatprep.subr.bf16.mxu0 0
    %3901 = vmatpush2.bf16.msra.mxu0 0
    %3902 = vmatprep.subr.bf16.mxu0 0
    %3903 = vmatpush2.bf16.msra.mxu0 0
    %3904 = vmatprep.subr.bf16.mxu0 0
    %3905 = vmatpush2.bf16.msra.mxu0 0
    %3906 = vmatprep.subr.bf16.mxu0 0
    %3907 = vmatpush2.bf16.msra.mxu0 0
    %3908 = vmatprep.mubr.bf16.mxu0 0
    %3909 = vmatmul.mubr.bf16.gmra.mxu0 %v3874
    %v3910 = vpop.f32.mrf.mxu0
    %v3911 = vadd.f32 0.0, %v3910
    %v3912 = vpop.f32.mrf.mxu0
    %v3913 = vpop.f32.mrf.mxu0
    %v3914 = vpop.f32.mrf.mxu0
    %3915 = vdwg.mxu0
    %v3916 = vpack.c.bf16 %v3911, %v3911
    %s3917 = scalar_lea.vmem %s10, 320
    %v3918 = vld [vmem:[%s3917] sm:$0xf]
    %v3919 = vld [vmem:[%s3917 + $0x4] sm:$0xf]
    %v3920 = vld [vmem:[%s3917 + $0x8] sm:$0xf]
    %v3921 = vld [vmem:[%s3917 + $0xc] sm:$0xf]
    %v3922 = vld [vmem:[%s3917 + $0x10] sm:$0xf]
    %v3923 = vld [vmem:[%s3917 + $0x14] sm:$0xf]
    %v3924 = vld [vmem:[%s3917 + $0x18] sm:$0xf]
    %v3925 = vld [vmem:[%s3917 + $0x1c] sm:$0xf]
    %v3926 = vld [vmem:[%s3917 + $0x20] sm:$0xf]
    %v3927 = vld [vmem:[%s3917 + $0x24] sm:$0xf]
    %v3928 = vld [vmem:[%s3917 + $0x28] sm:$0xf]
    %v3929 = vld [vmem:[%s3917 + $0x2c] sm:$0xf]
    %v3930 = vld [vmem:[%s3917 + $0x30] sm:$0xf]
    %v3931 = vld [vmem:[%s3917 + $0x34] sm:$0xf]
    %v3932 = vld [vmem:[%s3917 + $0x38] sm:$0xf]
    %v3933 = vld [vmem:[%s3917 + $0x3c] sm:$0xf]
    %v3950 = vunpack.c.l.b16 %v3918
    %v3951 = vunpack.c.l.b16 %v3919
    %v3952 = vunpack.c.l.b16 %v3920
    %v3953 = vunpack.c.l.b16 %v3921
    %v3954 = vunpack.c.l.b16 %v3922
    %v3955 = vunpack.c.l.b16 %v3923
    %v3956 = vunpack.c.l.b16 %v3924
    %v3957 = vunpack.c.l.b16 %v3925
    %v3958 = vunpack.c.l.b16 %v3926
    %v3959 = vunpack.c.l.b16 %v3927
    %v3960 = vunpack.c.l.b16 %v3928
    %v3961 = vunpack.c.l.b16 %v3929
    %v3962 = vunpack.c.l.b16 %v3930
    %v3963 = vunpack.c.l.b16 %v3931
    %v3964 = vunpack.c.l.b16 %v3932
    %v3965 = vunpack.c.l.b16 %v3933
    %v3966 = vpack.c.b16 %v3951, %v3950
    %v3967 = vpack.c.b16 %v3953, %v3952
    %v3968 = vpack.c.b16 %v3955, %v3954
    %v3969 = vpack.c.b16 %v3957, %v3956
    %v3970 = vpack.c.b16 %v3959, %v3958
    %v3971 = vpack.c.b16 %v3961, %v3960
    %v3972 = vpack.c.b16 %v3963, %v3962
    %v3973 = vpack.c.b16 %v3965, %v3964
    %3982 = vmatprep.subr.bf16.mxu0 0
    %3983 = vmatpush1.bf16.msra.mxu0 %v3973
    %3984 = vmatprep.subr.bf16.mxu0 0
    %3985 = vmatpush1.bf16.msra.mxu0 %v3972
    %3986 = vmatprep.subr.bf16.mxu0 0
    %3987 = vmatpush1.bf16.msra.mxu0 %v3971
    %3988 = vmatprep.subr.bf16.mxu0 0
    %3989 = vmatpush1.bf16.msra.mxu0 %v3970
    %3990 = vmatprep.subr.bf16.mxu0 0
    %3991 = vmatpush1.bf16.msra.mxu0 %v3969
    %3992 = vmatprep.subr.bf16.mxu0 0
    %3993 = vmatpush1.bf16.msra.mxu0 %v3968
    %3994 = vmatprep.subr.bf16.mxu0 0
    %3995 = vmatpush1.bf16.msra.mxu0 %v3967
    %3996 = vmatprep.subr.bf16.mxu0 0
    %3997 = vmatpush1.bf16.msra.mxu0 %v3966
    %3998 = vmatprep.subr.bf16.mxu0 0
    %3999 = vmatpush2.bf16.msra.mxu0 0
    %4000 = vmatprep.subr.bf16.mxu0 0
    %4001 = vmatpush2.bf16.msra.mxu0 0
    %4002 = vmatprep.subr.bf16.mxu0 0
    %4003 = vmatpush2.bf16.msra.mxu0 0
    %4004 = vmatprep.subr.bf16.mxu0 0
    %4005 = vmatpush2.bf16.msra.mxu0 0
    %4006 = vmatprep.subr.bf16.mxu0 0
    %4007 = vmatpush2.bf16.msra.mxu0 0
    %4008 = vmatprep.subr.bf16.mxu0 0
    %4009 = vmatpush2.bf16.msra.mxu0 0
    %4010 = vmatprep.subr.bf16.mxu0 0
    %4011 = vmatpush2.bf16.msra.mxu0 0
    %4012 = vmatprep.subr.bf16.mxu0 0
    %4013 = vmatpush2.bf16.msra.mxu0 0
    %4014 = vmatprep.mubr.bf16.mxu0 0
    %4015 = vmatmul.mubr.bf16.gmra.mxu0 %v3916
    %v4016 = vpop.f32.mrf.mxu0
    %v4017 = vadd.f32 0.0, %v4016
    %v4018 = vpop.f32.mrf.mxu0
    %v4019 = vpop.f32.mrf.mxu0
    %v4020 = vpop.f32.mrf.mxu0
    %4021 = vdwg.mxu0
    %v4022 = vadd.f32 %v3870, %v4017
    %s4023 = scalar_lea.vmem %s9, 6
    %v4024 = vld [vmem:[%s4023] sm:$0x1]
    %v4026 = vsel %vm3111, %v4024, 0
    %4028 = vmatprep.subr.bf16.mxu0 0
    %4029 = vmatpush1.bf16.msra.mxu0 0
    %4030 = vmatprep.subr.bf16.mxu0 0
    %4031 = vmatpush1.bf16.msra.mxu0 0
    %4032 = vmatprep.subr.bf16.mxu0 0
    %4033 = vmatpush1.bf16.msra.mxu0 0
    %4034 = vmatprep.subr.bf16.mxu0 0
    %4035 = vmatpush1.bf16.msra.mxu0 0
    %4036 = vmatprep.subr.bf16.mxu0 0
    %4037 = vmatpush1.bf16.msra.mxu0 0
    %4038 = vmatprep.subr.bf16.mxu0 0
    %4039 = vmatpush1.bf16.msra.mxu0 0
    %4040 = vmatprep.subr.bf16.mxu0 0
    %4041 = vmatpush1.bf16.msra.mxu0 0
    %4042 = vmatprep.subr.bf16.mxu0 0
    %4043 = vmatpush1.bf16.msra.mxu0 %v3117
    %4044 = vmatprep.subr.bf16.mxu0 0
    %4045 = vmatpush2.bf16.msra.mxu0 0
    %4046 = vmatprep.subr.bf16.mxu0 0
    %4047 = vmatpush2.bf16.msra.mxu0 0
    %4048 = vmatprep.subr.bf16.mxu0 0
    %4049 = vmatpush2.bf16.msra.mxu0 0
    %4050 = vmatprep.subr.bf16.mxu0 0
    %4051 = vmatpush2.bf16.msra.mxu0 0
    %4052 = vmatprep.subr.bf16.mxu0 0
    %4053 = vmatpush2.bf16.msra.mxu0 0
    %4054 = vmatprep.subr.bf16.mxu0 0
    %4055 = vmatpush2.bf16.msra.mxu0 0
    %4056 = vmatprep.subr.bf16.mxu0 0
    %4057 = vmatpush2.bf16.msra.mxu0 0
    %4058 = vmatprep.subr.bf16.mxu0 0
    %4059 = vmatpush2.bf16.msra.mxu0 0
    %4060 = vmatprep.mubr.bf16.mxu0 0
    %4061 = vmatmul.mubr.bf16.gmra.mxu0 %v4026
    %v4062 = vpop.f32.mrf.mxu0
    %v4063 = vadd.f32 0.0, %v4062
    %v4064 = vpop.f32.mrf.mxu0
    %v4065 = vpop.f32.mrf.mxu0
    %v4066 = vpop.f32.mrf.mxu0
    %4067 = vdwg.mxu0
    %v4068 = vpack.c.bf16 %v4063, %v4063
    %s4069 = scalar_lea.vmem %s10, 384
    %v4070 = vld [vmem:[%s4069] sm:$0xf]
    %v4071 = vld [vmem:[%s4069 + $0x4] sm:$0xf]
    %v4072 = vld [vmem:[%s4069 + $0x8] sm:$0xf]
    %v4073 = vld [vmem:[%s4069 + $0xc] sm:$0xf]
    %v4074 = vld [vmem:[%s4069 + $0x10] sm:$0xf]
    %v4075 = vld [vmem:[%s4069 + $0x14] sm:$0xf]
    %v4076 = vld [vmem:[%s4069 + $0x18] sm:$0xf]
    %v4077 = vld [vmem:[%s4069 + $0x1c] sm:$0xf]
    %v4078 = vld [vmem:[%s4069 + $0x20] sm:$0xf]
    %v4079 = vld [vmem:[%s4069 + $0x24] sm:$0xf]
    %v4080 = vld [vmem:[%s4069 + $0x28] sm:$0xf]
    %v4081 = vld [vmem:[%s4069 + $0x2c] sm:$0xf]
    %v4082 = vld [vmem:[%s4069 + $0x30] sm:$0xf]
    %v4083 = vld [vmem:[%s4069 + $0x34] sm:$0xf]
    %v4084 = vld [vmem:[%s4069 + $0x38] sm:$0xf]
    %v4085 = vld [vmem:[%s4069 + $0x3c] sm:$0xf]
    %v4102 = vunpack.c.l.b16 %v4070
    %v4103 = vunpack.c.l.b16 %v4071
    %v4104 = vunpack.c.l.b16 %v4072
    %v4105 = vunpack.c.l.b16 %v4073
    %v4106 = vunpack.c.l.b16 %v4074
    %v4107 = vunpack.c.l.b16 %v4075
    %v4108 = vunpack.c.l.b16 %v4076
    %v4109 = vunpack.c.l.b16 %v4077
    %v4110 = vunpack.c.l.b16 %v4078
    %v4111 = vunpack.c.l.b16 %v4079
    %v4112 = vunpack.c.l.b16 %v4080
    %v4113 = vunpack.c.l.b16 %v4081
    %v4114 = vunpack.c.l.b16 %v4082
    %v4115 = vunpack.c.l.b16 %v4083
    %v4116 = vunpack.c.l.b16 %v4084
    %v4117 = vunpack.c.l.b16 %v4085
    %v4118 = vpack.c.b16 %v4103, %v4102
    %v4119 = vpack.c.b16 %v4105, %v4104
    %v4120 = vpack.c.b16 %v4107, %v4106
    %v4121 = vpack.c.b16 %v4109, %v4108
    %v4122 = vpack.c.b16 %v4111, %v4110
    %v4123 = vpack.c.b16 %v4113, %v4112
    %v4124 = vpack.c.b16 %v4115, %v4114
    %v4125 = vpack.c.b16 %v4117, %v4116
    %4134 = vmatprep.subr.bf16.mxu0 0
    %4135 = vmatpush1.bf16.msra.mxu0 %v4125
    %4136 = vmatprep.subr.bf16.mxu0 0
    %4137 = vmatpush1.bf16.msra.mxu0 %v4124
    %4138 = vmatprep.subr.bf16.mxu0 0
    %4139 = vmatpush1.bf16.msra.mxu0 %v4123
    %4140 = vmatprep.subr.bf16.mxu0 0
    %4141 = vmatpush1.bf16.msra.mxu0 %v4122
    %4142 = vmatprep.subr.bf16.mxu0 0
    %4143 = vmatpush1.bf16.msra.mxu0 %v4121
    %4144 = vmatprep.subr.bf16.mxu0 0
    %4145 = vmatpush1.bf16.msra.mxu0 %v4120
    %4146 = vmatprep.subr.bf16.mxu0 0
    %4147 = vmatpush1.bf16.msra.mxu0 %v4119
    %4148 = vmatprep.subr.bf16.mxu0 0
    %4149 = vmatpush1.bf16.msra.mxu0 %v4118
    %4150 = vmatprep.subr.bf16.mxu0 0
    %4151 = vmatpush2.bf16.msra.mxu0 0
    %4152 = vmatprep.subr.bf16.mxu0 0
    %4153 = vmatpush2.bf16.msra.mxu0 0
    %4154 = vmatprep.subr.bf16.mxu0 0
    %4155 = vmatpush2.bf16.msra.mxu0 0
    %4156 = vmatprep.subr.bf16.mxu0 0
    %4157 = vmatpush2.bf16.msra.mxu0 0
    %4158 = vmatprep.subr.bf16.mxu0 0
    %4159 = vmatpush2.bf16.msra.mxu0 0
    %4160 = vmatprep.subr.bf16.mxu0 0
    %4161 = vmatpush2.bf16.msra.mxu0 0
    %4162 = vmatprep.subr.bf16.mxu0 0
    %4163 = vmatpush2.bf16.msra.mxu0 0
    %4164 = vmatprep.subr.bf16.mxu0 0
    %4165 = vmatpush2.bf16.msra.mxu0 0
    %4166 = vmatprep.mubr.bf16.mxu0 0
    %4167 = vmatmul.mubr.bf16.gmra.mxu0 %v4068
    %v4168 = vpop.f32.mrf.mxu0
    %v4169 = vadd.f32 0.0, %v4168
    %v4170 = vpop.f32.mrf.mxu0
    %v4171 = vpop.f32.mrf.mxu0
    %v4172 = vpop.f32.mrf.mxu0
    %4173 = vdwg.mxu0
    %v4174 = vadd.f32 %v4022, %v4169
    %s4175 = scalar_lea.vmem %s9, 7
    %v4176 = vld [vmem:[%s4175] sm:$0x1]
    %v4178 = vsel %vm3111, %v4176, 0
    %4180 = vmatprep.subr.bf16.mxu0 0
    %4181 = vmatpush1.bf16.msra.mxu0 0
    %4182 = vmatprep.subr.bf16.mxu0 0
    %4183 = vmatpush1.bf16.msra.mxu0 0
    %4184 = vmatprep.subr.bf16.mxu0 0
    %4185 = vmatpush1.bf16.msra.mxu0 0
    %4186 = vmatprep.subr.bf16.mxu0 0
    %4187 = vmatpush1.bf16.msra.mxu0 0
    %4188 = vmatprep.subr.bf16.mxu0 0
    %4189 = vmatpush1.bf16.msra.mxu0 0
    %4190 = vmatprep.subr.bf16.mxu0 0
    %4191 = vmatpush1.bf16.msra.mxu0 0
    %4192 = vmatprep.subr.bf16.mxu0 0
    %4193 = vmatpush1.bf16.msra.mxu0 0
    %4194 = vmatprep.subr.bf16.mxu0 0
    %4195 = vmatpush1.bf16.msra.mxu0 %v3117
    %4196 = vmatprep.subr.bf16.mxu0 0
    %4197 = vmatpush2.bf16.msra.mxu0 0
    %4198 = vmatprep.subr.bf16.mxu0 0
    %4199 = vmatpush2.bf16.msra.mxu0 0
    %4200 = vmatprep.subr.bf16.mxu0 0
    %4201 = vmatpush2.bf16.msra.mxu0 0
    %4202 = vmatprep.subr.bf16.mxu0 0
    %4203 = vmatpush2.bf16.msra.mxu0 0
    %4204 = vmatprep.subr.bf16.mxu0 0
    %4205 = vmatpush2.bf16.msra.mxu0 0
    %4206 = vmatprep.subr.bf16.mxu0 0
    %4207 = vmatpush2.bf16.msra.mxu0 0
    %4208 = vmatprep.subr.bf16.mxu0 0
    %4209 = vmatpush2.bf16.msra.mxu0 0
    %4210 = vmatprep.subr.bf16.mxu0 0
    %4211 = vmatpush2.bf16.msra.mxu0 0
    %4212 = vmatprep.mubr.bf16.mxu0 0
    %4213 = vmatmul.mubr.bf16.gmra.mxu0 %v4178
    %v4214 = vpop.f32.mrf.mxu0
    %v4215 = vadd.f32 0.0, %v4214
    %v4216 = vpop.f32.mrf.mxu0
    %v4217 = vpop.f32.mrf.mxu0
    %v4218 = vpop.f32.mrf.mxu0
    %4219 = vdwg.mxu0
    %v4220 = vpack.c.bf16 %v4215, %v4215
    %s4221 = scalar_lea.vmem %s10, 448
    %v4222 = vld [vmem:[%s4221] sm:$0xf]
    %v4223 = vld [vmem:[%s4221 + $0x4] sm:$0xf]
    %v4224 = vld [vmem:[%s4221 + $0x8] sm:$0xf]
    %v4225 = vld [vmem:[%s4221 + $0xc] sm:$0xf]
    %v4226 = vld [vmem:[%s4221 + $0x10] sm:$0xf]
    %v4227 = vld [vmem:[%s4221 + $0x14] sm:$0xf]
    %v4228 = vld [vmem:[%s4221 + $0x18] sm:$0xf]
    %v4229 = vld [vmem:[%s4221 + $0x1c] sm:$0xf]
    %v4230 = vld [vmem:[%s4221 + $0x20] sm:$0xf]
    %v4231 = vld [vmem:[%s4221 + $0x24] sm:$0xf]
    %v4232 = vld [vmem:[%s4221 + $0x28] sm:$0xf]
    %v4233 = vld [vmem:[%s4221 + $0x2c] sm:$0xf]
    %v4234 = vld [vmem:[%s4221 + $0x30] sm:$0xf]
    %v4235 = vld [vmem:[%s4221 + $0x34] sm:$0xf]
    %v4236 = vld [vmem:[%s4221 + $0x38] sm:$0xf]
    %v4237 = vld [vmem:[%s4221 + $0x3c] sm:$0xf]
    %v4254 = vunpack.c.l.b16 %v4222
    %v4255 = vunpack.c.l.b16 %v4223
    %v4256 = vunpack.c.l.b16 %v4224
    %v4257 = vunpack.c.l.b16 %v4225
    %v4258 = vunpack.c.l.b16 %v4226
    %v4259 = vunpack.c.l.b16 %v4227
    %v4260 = vunpack.c.l.b16 %v4228
    %v4261 = vunpack.c.l.b16 %v4229
    %v4262 = vunpack.c.l.b16 %v4230
    %v4263 = vunpack.c.l.b16 %v4231
    %v4264 = vunpack.c.l.b16 %v4232
    %v4265 = vunpack.c.l.b16 %v4233
    %v4266 = vunpack.c.l.b16 %v4234
    %v4267 = vunpack.c.l.b16 %v4235
    %v4268 = vunpack.c.l.b16 %v4236
    %v4269 = vunpack.c.l.b16 %v4237
    %v4270 = vpack.c.b16 %v4255, %v4254
    %v4271 = vpack.c.b16 %v4257, %v4256
    %v4272 = vpack.c.b16 %v4259, %v4258
    %v4273 = vpack.c.b16 %v4261, %v4260
    %v4274 = vpack.c.b16 %v4263, %v4262
    %v4275 = vpack.c.b16 %v4265, %v4264
    %v4276 = vpack.c.b16 %v4267, %v4266
    %v4277 = vpack.c.b16 %v4269, %v4268
    %4286 = vmatprep.subr.bf16.mxu0 0
    %4287 = vmatpush1.bf16.msra.mxu0 %v4277
    %4288 = vmatprep.subr.bf16.mxu0 0
    %4289 = vmatpush1.bf16.msra.mxu0 %v4276
    %4290 = vmatprep.subr.bf16.mxu0 0
    %4291 = vmatpush1.bf16.msra.mxu0 %v4275
    %4292 = vmatprep.subr.bf16.mxu0 0
    %4293 = vmatpush1.bf16.msra.mxu0 %v4274
    %4294 = vmatprep.subr.bf16.mxu0 0
    %4295 = vmatpush1.bf16.msra.mxu0 %v4273
    %4296 = vmatprep.subr.bf16.mxu0 0
    %4297 = vmatpush1.bf16.msra.mxu0 %v4272
    %4298 = vmatprep.subr.bf16.mxu0 0
    %4299 = vmatpush1.bf16.msra.mxu0 %v4271
    %4300 = vmatprep.subr.bf16.mxu0 0
    %4301 = vmatpush1.bf16.msra.mxu0 %v4270
    %4302 = vmatprep.subr.bf16.mxu0 0
    %4303 = vmatpush2.bf16.msra.mxu0 0
    %4304 = vmatprep.subr.bf16.mxu0 0
    %4305 = vmatpush2.bf16.msra.mxu0 0
    %4306 = vmatprep.subr.bf16.mxu0 0
    %4307 = vmatpush2.bf16.msra.mxu0 0
    %4308 = vmatprep.subr.bf16.mxu0 0
    %4309 = vmatpush2.bf16.msra.mxu0 0
    %4310 = vmatprep.subr.bf16.mxu0 0
    %4311 = vmatpush2.bf16.msra.mxu0 0
    %4312 = vmatprep.subr.bf16.mxu0 0
    %4313 = vmatpush2.bf16.msra.mxu0 0
    %4314 = vmatprep.subr.bf16.mxu0 0
    %4315 = vmatpush2.bf16.msra.mxu0 0
    %4316 = vmatprep.subr.bf16.mxu0 0
    %4317 = vmatpush2.bf16.msra.mxu0 0
    %4318 = vmatprep.mubr.bf16.mxu0 0
    %4319 = vmatmul.mubr.bf16.gmra.mxu0 %v4220
    %v4320 = vpop.f32.mrf.mxu0
    %v4321 = vadd.f32 0.0, %v4320
    %v4322 = vpop.f32.mrf.mxu0
    %v4323 = vpop.f32.mrf.mxu0
    %v4324 = vpop.f32.mrf.mxu0
    %4325 = vdwg.mxu0
    %v4326 = vadd.f32 %v4174, %v4321
    %s4327 = scalar_lea.vmem %s9, 8
    %v4328 = vld [vmem:[%s4327] sm:$0x1]
    %v4330 = vsel %vm3111, %v4328, 0
    %4332 = vmatprep.subr.bf16.mxu0 0
    %4333 = vmatpush1.bf16.msra.mxu0 0
    %4334 = vmatprep.subr.bf16.mxu0 0
    %4335 = vmatpush1.bf16.msra.mxu0 0
    %4336 = vmatprep.subr.bf16.mxu0 0
    %4337 = vmatpush1.bf16.msra.mxu0 0
    %4338 = vmatprep.subr.bf16.mxu0 0
    %4339 = vmatpush1.bf16.msra.mxu0 0
    %4340 = vmatprep.subr.bf16.mxu0 0
    %4341 = vmatpush1.bf16.msra.mxu0 0
    %4342 = vmatprep.subr.bf16.mxu0 0
    %4343 = vmatpush1.bf16.msra.mxu0 0
    %4344 = vmatprep.subr.bf16.mxu0 0
    %4345 = vmatpush1.bf16.msra.mxu0 0
    %4346 = vmatprep.subr.bf16.mxu0 0
    %4347 = vmatpush1.bf16.msra.mxu0 %v3117
    %4348 = vmatprep.subr.bf16.mxu0 0
    %4349 = vmatpush2.bf16.msra.mxu0 0
    %4350 = vmatprep.subr.bf16.mxu0 0
    %4351 = vmatpush2.bf16.msra.mxu0 0
    %4352 = vmatprep.subr.bf16.mxu0 0
    %4353 = vmatpush2.bf16.msra.mxu0 0
    %4354 = vmatprep.subr.bf16.mxu0 0
    %4355 = vmatpush2.bf16.msra.mxu0 0
    %4356 = vmatprep.subr.bf16.mxu0 0
    %4357 = vmatpush2.bf16.msra.mxu0 0
    %4358 = vmatprep.subr.bf16.mxu0 0
    %4359 = vmatpush2.bf16.msra.mxu0 0
    %4360 = vmatprep.subr.bf16.mxu0 0
    %4361 = vmatpush2.bf16.msra.mxu0 0
    %4362 = vmatprep.subr.bf16.mxu0 0
    %4363 = vmatpush2.bf16.msra.mxu0 0
    %4364 = vmatprep.mubr.bf16.mxu0 0
    %4365 = vmatmul.mubr.bf16.gmra.mxu0 %v4330
    %v4366 = vpop.f32.mrf.mxu0
    %v4367 = vadd.f32 0.0, %v4366
    %v4368 = vpop.f32.mrf.mxu0
    %v4369 = vpop.f32.mrf.mxu0
    %v4370 = vpop.f32.mrf.mxu0
    %4371 = vdwg.mxu0
    %v4372 = vpack.c.bf16 %v4367, %v4367
    %s4373 = scalar_lea.vmem %s10, 512
    %v4374 = vld [vmem:[%s4373] sm:$0xf]
    %v4375 = vld [vmem:[%s4373 + $0x4] sm:$0xf]
    %v4376 = vld [vmem:[%s4373 + $0x8] sm:$0xf]
    %v4377 = vld [vmem:[%s4373 + $0xc] sm:$0xf]
    %v4378 = vld [vmem:[%s4373 + $0x10] sm:$0xf]
    %v4379 = vld [vmem:[%s4373 + $0x14] sm:$0xf]
    %v4380 = vld [vmem:[%s4373 + $0x18] sm:$0xf]
    %v4381 = vld [vmem:[%s4373 + $0x1c] sm:$0xf]
    %v4382 = vld [vmem:[%s4373 + $0x20] sm:$0xf]
    %v4383 = vld [vmem:[%s4373 + $0x24] sm:$0xf]
    %v4384 = vld [vmem:[%s4373 + $0x28] sm:$0xf]
    %v4385 = vld [vmem:[%s4373 + $0x2c] sm:$0xf]
    %v4386 = vld [vmem:[%s4373 + $0x30] sm:$0xf]
    %v4387 = vld [vmem:[%s4373 + $0x34] sm:$0xf]
    %v4388 = vld [vmem:[%s4373 + $0x38] sm:$0xf]
    %v4389 = vld [vmem:[%s4373 + $0x3c] sm:$0xf]
    %v4406 = vunpack.c.l.b16 %v4374
    %v4407 = vunpack.c.l.b16 %v4375
    %v4408 = vunpack.c.l.b16 %v4376
    %v4409 = vunpack.c.l.b16 %v4377
    %v4410 = vunpack.c.l.b16 %v4378
    %v4411 = vunpack.c.l.b16 %v4379
    %v4412 = vunpack.c.l.b16 %v4380
    %v4413 = vunpack.c.l.b16 %v4381
    %v4414 = vunpack.c.l.b16 %v4382
    %v4415 = vunpack.c.l.b16 %v4383
    %v4416 = vunpack.c.l.b16 %v4384
    %v4417 = vunpack.c.l.b16 %v4385
    %v4418 = vunpack.c.l.b16 %v4386
    %v4419 = vunpack.c.l.b16 %v4387
    %v4420 = vunpack.c.l.b16 %v4388
    %v4421 = vunpack.c.l.b16 %v4389
    %v4422 = vpack.c.b16 %v4407, %v4406
    %v4423 = vpack.c.b16 %v4409, %v4408
    %v4424 = vpack.c.b16 %v4411, %v4410
    %v4425 = vpack.c.b16 %v4413, %v4412
    %v4426 = vpack.c.b16 %v4415, %v4414
    %v4427 = vpack.c.b16 %v4417, %v4416
    %v4428 = vpack.c.b16 %v4419, %v4418
    %v4429 = vpack.c.b16 %v4421, %v4420
    %4438 = vmatprep.subr.bf16.mxu0 0
    %4439 = vmatpush1.bf16.msra.mxu0 %v4429
    %4440 = vmatprep.subr.bf16.mxu0 0
    %4441 = vmatpush1.bf16.msra.mxu0 %v4428
    %4442 = vmatprep.subr.bf16.mxu0 0
    %4443 = vmatpush1.bf16.msra.mxu0 %v4427
    %4444 = vmatprep.subr.bf16.mxu0 0
    %4445 = vmatpush1.bf16.msra.mxu0 %v4426
    %4446 = vmatprep.subr.bf16.mxu0 0
    %4447 = vmatpush1.bf16.msra.mxu0 %v4425
    %4448 = vmatprep.subr.bf16.mxu0 0
    %4449 = vmatpush1.bf16.msra.mxu0 %v4424
    %4450 = vmatprep.subr.bf16.mxu0 0
    %4451 = vmatpush1.bf16.msra.mxu0 %v4423
    %4452 = vmatprep.subr.bf16.mxu0 0
    %4453 = vmatpush1.bf16.msra.mxu0 %v4422
    %4454 = vmatprep.subr.bf16.mxu0 0
    %4455 = vmatpush2.bf16.msra.mxu0 0
    %4456 = vmatprep.subr.bf16.mxu0 0
    %4457 = vmatpush2.bf16.msra.mxu0 0
    %4458 = vmatprep.subr.bf16.mxu0 0
    %4459 = vmatpush2.bf16.msra.mxu0 0
    %4460 = vmatprep.subr.bf16.mxu0 0
    %4461 = vmatpush2.bf16.msra.mxu0 0
    %4462 = vmatprep.subr.bf16.mxu0 0
    %4463 = vmatpush2.bf16.msra.mxu0 0
    %4464 = vmatprep.subr.bf16.mxu0 0
    %4465 = vmatpush2.bf16.msra.mxu0 0
    %4466 = vmatprep.subr.bf16.mxu0 0
    %4467 = vmatpush2.bf16.msra.mxu0 0
    %4468 = vmatprep.subr.bf16.mxu0 0
    %4469 = vmatpush2.bf16.msra.mxu0 0
    %4470 = vmatprep.mubr.bf16.mxu0 0
    %4471 = vmatmul.mubr.bf16.gmra.mxu0 %v4372
    %v4472 = vpop.f32.mrf.mxu0
    %v4473 = vadd.f32 0.0, %v4472
    %v4474 = vpop.f32.mrf.mxu0
    %v4475 = vpop.f32.mrf.mxu0
    %v4476 = vpop.f32.mrf.mxu0
    %4477 = vdwg.mxu0
    %v4478 = vadd.f32 %v4326, %v4473
    %v4479 = vld [vmem:[%s11] sm:$0x1]
    %v4481 = vlaneseq
    %v4482 = vshrl.u32 %v4481, 7
    %v4483 = vsub.s32 0, %v4482
    %v4484 = vrot.slane %v4479, %v4483
    %v4486 = vadd.f32 %v4478, %v4484
    %v4487 = vld [vmem:[%s12] sm:$0xff]
    %v4488 = vld [vmem:[%s12 + $0x8] sm:$0xff]
    %v4489 = vld [vmem:[%s12 + $0x10] sm:$0xff]
    %v4490 = vld [vmem:[%s13] sm:$0xf]
    %v4491 = vld [vmem:[%s13 + $0x4] sm:$0xf]
    %v4492 = vld [vmem:[%s13 + $0x8] sm:$0xf]
    %v4493 = vld [vmem:[%s13 + $0xc] sm:$0xf]
    %v4494 = vld [vmem:[%s13 + $0x10] sm:$0xf]
    %v4495 = vld [vmem:[%s13 + $0x14] sm:$0xf]
    %v4496 = vld [vmem:[%s13 + $0x18] sm:$0xf]
    %v4497 = vld [vmem:[%s13 + $0x1c] sm:$0xf]
    %v4498 = vld [vmem:[%s13 + $0x20] sm:$0xf]
    %v4499 = vld [vmem:[%s13 + $0x24] sm:$0xf]
    %v4500 = vld [vmem:[%s13 + $0x28] sm:$0xf]
    %v4501 = vld [vmem:[%s13 + $0x2c] sm:$0xf]
    %v4502 = vld [vmem:[%s13 + $0x30] sm:$0xf]
    %v4503 = vld [vmem:[%s13 + $0x34] sm:$0xf]
    %v4504 = vld [vmem:[%s13 + $0x38] sm:$0xf]
    %v4505 = vld [vmem:[%s13 + $0x3c] sm:$0xf]
    %v4506 = vld [vmem:[%s13 + $0x40] sm:$0xf]
    %v4507 = vld [vmem:[%s13 + $0x44] sm:$0xf]
    %v4508 = vld [vmem:[%s13 + $0x48] sm:$0xf]
    %v4509 = vld [vmem:[%s13 + $0x4c] sm:$0xf]
    %v4510 = vld [vmem:[%s13 + $0x50] sm:$0xf]
    %v4511 = vld [vmem:[%s13 + $0x54] sm:$0xf]
    %v4512 = vld [vmem:[%s13 + $0x58] sm:$0xf]
    %v4513 = vld [vmem:[%s13 + $0x5c] sm:$0xf]
    %v4514 = vld [vmem:[%s13 + $0x60] sm:$0xf]
    %v4515 = vld [vmem:[%s13 + $0x64] sm:$0xf]
    %v4516 = vld [vmem:[%s13 + $0x68] sm:$0xf]
    %v4517 = vld [vmem:[%s13 + $0x6c] sm:$0xf]
    %v4518 = vld [vmem:[%s13 + $0x70] sm:$0xf]
    %v4519 = vld [vmem:[%s13 + $0x74] sm:$0xf]
    %v4520 = vld [vmem:[%s13 + $0x78] sm:$0xf]
    %v4521 = vld [vmem:[%s13 + $0x7c] sm:$0xf]
    %v4522 = vld [vmem:[%s13 + $0x80] sm:$0xf]
    %v4523 = vld [vmem:[%s13 + $0x84] sm:$0xf]
    %v4524 = vld [vmem:[%s13 + $0x88] sm:$0xf]
    %v4525 = vld [vmem:[%s13 + $0x8c] sm:$0xf]
    %v4526 = vld [vmem:[%s13 + $0x90] sm:$0xf]
    %v4527 = vld [vmem:[%s13 + $0x94] sm:$0xf]
    %v4528 = vld [vmem:[%s13 + $0x98] sm:$0xf]
    %v4529 = vld [vmem:[%s13 + $0x9c] sm:$0xf]
    %v4530 = vld [vmem:[%s13 + $0xa0] sm:$0xf]
    %v4531 = vld [vmem:[%s13 + $0xa4] sm:$0xf]
    %v4532 = vld [vmem:[%s13 + $0xa8] sm:$0xf]
    %v4533 = vld [vmem:[%s13 + $0xac] sm:$0xf]
    %v4534 = vld [vmem:[%s13 + $0xb0] sm:$0xf]
    %v4535 = vld [vmem:[%s13 + $0xb4] sm:$0xf]
    %v4536 = vld [vmem:[%s13 + $0xb8] sm:$0xf]
    %v4537 = vld [vmem:[%s13 + $0xbc] sm:$0xf]
    %v4538 = vld [vmem:[%s13 + $0xc0] sm:$0xf]
    %v4539 = vld [vmem:[%s13 + $0xc4] sm:$0xf]
    %v4540 = vld [vmem:[%s13 + $0xc8] sm:$0xf]
    %v4541 = vld [vmem:[%s13 + $0xcc] sm:$0xf]
    %v4542 = vld [vmem:[%s13 + $0xd0] sm:$0xf]
    %v4543 = vld [vmem:[%s13 + $0xd4] sm:$0xf]
    %v4544 = vld [vmem:[%s13 + $0xd8] sm:$0xf]
    %v4545 = vld [vmem:[%s13 + $0xdc] sm:$0xf]
    %v4546 = vld [vmem:[%s13 + $0xe0] sm:$0xf]
    %v4547 = vld [vmem:[%s13 + $0xe4] sm:$0xf]
    %v4548 = vld [vmem:[%s13 + $0xe8] sm:$0xf]
    %v4549 = vld [vmem:[%s13 + $0xec] sm:$0xf]
    %v4550 = vld [vmem:[%s13 + $0xf0] sm:$0xf]
    %v4551 = vld [vmem:[%s13 + $0xf4] sm:$0xf]
    %v4552 = vld [vmem:[%s13 + $0xf8] sm:$0xf]
    %v4553 = vld [vmem:[%s13 + $0xfc] sm:$0xf]
    %v4554 = vld [vmem:[%s13 + $0x100] sm:$0xf]
    %v4555 = vld [vmem:[%s13 + $0x104] sm:$0xf]
    %v4556 = vld [vmem:[%s13 + $0x108] sm:$0xf]
    %v4557 = vld [vmem:[%s13 + $0x10c] sm:$0xf]
    %v4558 = vld [vmem:[%s13 + $0x110] sm:$0xf]
    %v4559 = vld [vmem:[%s13 + $0x114] sm:$0xf]
    %v4560 = vld [vmem:[%s13 + $0x118] sm:$0xf]
    %v4561 = vld [vmem:[%s13 + $0x11c] sm:$0xf]
    %v4562 = vld [vmem:[%s13 + $0x120] sm:$0xf]
    %v4563 = vld [vmem:[%s13 + $0x124] sm:$0xf]
    %v4564 = vld [vmem:[%s13 + $0x128] sm:$0xf]
    %v4565 = vld [vmem:[%s13 + $0x12c] sm:$0xf]
    %v4566 = vld [vmem:[%s13 + $0x130] sm:$0xf]
    %v4567 = vld [vmem:[%s13 + $0x134] sm:$0xf]
    %v4568 = vld [vmem:[%s13 + $0x138] sm:$0xf]
    %v4569 = vld [vmem:[%s13 + $0x13c] sm:$0xf]
    %v4570 = vld [vmem:[%s13 + $0x140] sm:$0xf]
    %v4571 = vld [vmem:[%s13 + $0x144] sm:$0xf]
    %v4572 = vld [vmem:[%s13 + $0x148] sm:$0xf]
    %v4573 = vld [vmem:[%s13 + $0x14c] sm:$0xf]
    %v4574 = vld [vmem:[%s13 + $0x150] sm:$0xf]
    %v4575 = vld [vmem:[%s13 + $0x154] sm:$0xf]
    %v4576 = vld [vmem:[%s13 + $0x158] sm:$0xf]
    %v4577 = vld [vmem:[%s13 + $0x15c] sm:$0xf]
    %v4578 = vld [vmem:[%s13 + $0x160] sm:$0xf]
    %v4579 = vld [vmem:[%s13 + $0x164] sm:$0xf]
    %v4580 = vld [vmem:[%s13 + $0x168] sm:$0xf]
    %v4581 = vld [vmem:[%s13 + $0x16c] sm:$0xf]
    %v4582 = vld [vmem:[%s13 + $0x170] sm:$0xf]
    %v4583 = vld [vmem:[%s13 + $0x174] sm:$0xf]
    %v4584 = vld [vmem:[%s13 + $0x178] sm:$0xf]
    %v4585 = vld [vmem:[%s13 + $0x17c] sm:$0xf]
    %v4586 = vld [vmem:[%s13 + $0x180] sm:$0xf]
    %v4587 = vld [vmem:[%s13 + $0x184] sm:$0xf]
    %v4588 = vld [vmem:[%s13 + $0x188] sm:$0xf]
    %v4589 = vld [vmem:[%s13 + $0x18c] sm:$0xf]
    %v4590 = vld [vmem:[%s13 + $0x190] sm:$0xf]
    %v4591 = vld [vmem:[%s13 + $0x194] sm:$0xf]
    %v4592 = vld [vmem:[%s13 + $0x198] sm:$0xf]
    %v4593 = vld [vmem:[%s13 + $0x19c] sm:$0xf]
    %v4594 = vld [vmem:[%s13 + $0x1a0] sm:$0xf]
    %v4595 = vld [vmem:[%s13 + $0x1a4] sm:$0xf]
    %v4596 = vld [vmem:[%s13 + $0x1a8] sm:$0xf]
    %v4597 = vld [vmem:[%s13 + $0x1ac] sm:$0xf]
    %v4598 = vld [vmem:[%s13 + $0x1b0] sm:$0xf]
    %v4599 = vld [vmem:[%s13 + $0x1b4] sm:$0xf]
    %v4600 = vld [vmem:[%s13 + $0x1b8] sm:$0xf]
    %v4601 = vld [vmem:[%s13 + $0x1bc] sm:$0xf]
    %v4602 = vld [vmem:[%s13 + $0x1c0] sm:$0xf]
    %v4603 = vld [vmem:[%s13 + $0x1c4] sm:$0xf]
    %v4604 = vld [vmem:[%s13 + $0x1c8] sm:$0xf]
    %v4605 = vld [vmem:[%s13 + $0x1cc] sm:$0xf]
    %v4606 = vld [vmem:[%s13 + $0x1d0] sm:$0xf]
    %v4607 = vld [vmem:[%s13 + $0x1d4] sm:$0xf]
    %v4608 = vld [vmem:[%s13 + $0x1d8] sm:$0xf]
    %v4609 = vld [vmem:[%s13 + $0x1dc] sm:$0xf]
    %v4610 = vld [vmem:[%s13 + $0x1e0] sm:$0xf]
    %v4611 = vld [vmem:[%s13 + $0x1e4] sm:$0xf]
    %v4612 = vld [vmem:[%s13 + $0x1e8] sm:$0xf]
    %v4613 = vld [vmem:[%s13 + $0x1ec] sm:$0xf]
    %v4614 = vld [vmem:[%s13 + $0x1f0] sm:$0xf]
    %v4615 = vld [vmem:[%s13 + $0x1f4] sm:$0xf]
    %v4616 = vld [vmem:[%s13 + $0x1f8] sm:$0xf]
    %v4617 = vld [vmem:[%s13 + $0x1fc] sm:$0xf]
    %v4618 = vld [vmem:[%s13 + $0x200] sm:$0xf]
    %v4619 = vld [vmem:[%s13 + $0x204] sm:$0xf]
    %v4620 = vld [vmem:[%s13 + $0x208] sm:$0xf]
    %v4621 = vld [vmem:[%s13 + $0x20c] sm:$0xf]
    %v4622 = vld [vmem:[%s13 + $0x210] sm:$0xf]
    %v4623 = vld [vmem:[%s13 + $0x214] sm:$0xf]
    %v4624 = vld [vmem:[%s13 + $0x218] sm:$0xf]
    %v4625 = vld [vmem:[%s13 + $0x21c] sm:$0xf]
    %v4626 = vld [vmem:[%s13 + $0x220] sm:$0xf]
    %v4627 = vld [vmem:[%s13 + $0x224] sm:$0xf]
    %v4628 = vld [vmem:[%s13 + $0x228] sm:$0xf]
    %v4629 = vld [vmem:[%s13 + $0x22c] sm:$0xf]
    %v4630 = vld [vmem:[%s13 + $0x230] sm:$0xf]
    %v4631 = vld [vmem:[%s13 + $0x234] sm:$0xf]
    %v4632 = vld [vmem:[%s13 + $0x238] sm:$0xf]
    %v4633 = vld [vmem:[%s13 + $0x23c] sm:$0xf]
    %v4634 = vld [vmem:[%s13 + $0x240] sm:$0xf]
    %v4635 = vld [vmem:[%s13 + $0x244] sm:$0xf]
    %v4636 = vld [vmem:[%s13 + $0x248] sm:$0xf]
    %v4637 = vld [vmem:[%s13 + $0x24c] sm:$0xf]
    %v4638 = vld [vmem:[%s13 + $0x250] sm:$0xf]
    %v4639 = vld [vmem:[%s13 + $0x254] sm:$0xf]
    %v4640 = vld [vmem:[%s13 + $0x258] sm:$0xf]
    %v4641 = vld [vmem:[%s13 + $0x25c] sm:$0xf]
    %v4642 = vld [vmem:[%s13 + $0x260] sm:$0xf]
    %v4643 = vld [vmem:[%s13 + $0x264] sm:$0xf]
    %v4644 = vld [vmem:[%s13 + $0x268] sm:$0xf]
    %v4645 = vld [vmem:[%s13 + $0x26c] sm:$0xf]
    %v4646 = vld [vmem:[%s13 + $0x270] sm:$0xf]
    %v4647 = vld [vmem:[%s13 + $0x274] sm:$0xf]
    %v4648 = vld [vmem:[%s13 + $0x278] sm:$0xf]
    %v4649 = vld [vmem:[%s13 + $0x27c] sm:$0xf]
    %v4650 = vld [vmem:[%s13 + $0x280] sm:$0xf]
    %v4651 = vld [vmem:[%s13 + $0x284] sm:$0xf]
    %v4652 = vld [vmem:[%s13 + $0x288] sm:$0xf]
    %v4653 = vld [vmem:[%s13 + $0x28c] sm:$0xf]
    %v4654 = vld [vmem:[%s13 + $0x290] sm:$0xf]
    %v4655 = vld [vmem:[%s13 + $0x294] sm:$0xf]
    %v4656 = vld [vmem:[%s13 + $0x298] sm:$0xf]
    %v4657 = vld [vmem:[%s13 + $0x29c] sm:$0xf]
    %v4658 = vld [vmem:[%s13 + $0x2a0] sm:$0xf]
    %v4659 = vld [vmem:[%s13 + $0x2a4] sm:$0xf]
    %v4660 = vld [vmem:[%s13 + $0x2a8] sm:$0xf]
    %v4661 = vld [vmem:[%s13 + $0x2ac] sm:$0xf]
    %v4662 = vld [vmem:[%s13 + $0x2b0] sm:$0xf]
    %v4663 = vld [vmem:[%s13 + $0x2b4] sm:$0xf]
    %v4664 = vld [vmem:[%s13 + $0x2b8] sm:$0xf]
    %v4665 = vld [vmem:[%s13 + $0x2bc] sm:$0xf]
    %v4666 = vld [vmem:[%s13 + $0x2c0] sm:$0xf]
    %v4667 = vld [vmem:[%s13 + $0x2c4] sm:$0xf]
    %v4668 = vld [vmem:[%s13 + $0x2c8] sm:$0xf]
    %v4669 = vld [vmem:[%s13 + $0x2cc] sm:$0xf]
    %v4670 = vld [vmem:[%s13 + $0x2d0] sm:$0xf]
    %v4671 = vld [vmem:[%s13 + $0x2d4] sm:$0xf]
    %v4672 = vld [vmem:[%s13 + $0x2d8] sm:$0xf]
    %v4673 = vld [vmem:[%s13 + $0x2dc] sm:$0xf]
    %v4674 = vld [vmem:[%s13 + $0x2e0] sm:$0xf]
    %v4675 = vld [vmem:[%s13 + $0x2e4] sm:$0xf]
    %v4676 = vld [vmem:[%s13 + $0x2e8] sm:$0xf]
    %v4677 = vld [vmem:[%s13 + $0x2ec] sm:$0xf]
    %v4678 = vld [vmem:[%s13 + $0x2f0] sm:$0xf]
    %v4679 = vld [vmem:[%s13 + $0x2f4] sm:$0xf]
    %v4680 = vld [vmem:[%s13 + $0x2f8] sm:$0xf]
    %v4681 = vld [vmem:[%s13 + $0x2fc] sm:$0xf]
    %v4682 = vld [vmem:[%s13 + $0x300] sm:$0xf]
    %v4683 = vld [vmem:[%s13 + $0x304] sm:$0xf]
    %v4684 = vld [vmem:[%s13 + $0x308] sm:$0xf]
    %v4685 = vld [vmem:[%s13 + $0x30c] sm:$0xf]
    %v4686 = vld [vmem:[%s13 + $0x310] sm:$0xf]
    %v4687 = vld [vmem:[%s13 + $0x314] sm:$0xf]
    %v4688 = vld [vmem:[%s13 + $0x318] sm:$0xf]
    %v4689 = vld [vmem:[%s13 + $0x31c] sm:$0xf]
    %v4690 = vld [vmem:[%s13 + $0x320] sm:$0xf]
    %v4691 = vld [vmem:[%s13 + $0x324] sm:$0xf]
    %v4692 = vld [vmem:[%s13 + $0x328] sm:$0xf]
    %v4693 = vld [vmem:[%s13 + $0x32c] sm:$0xf]
    %v4694 = vld [vmem:[%s13 + $0x330] sm:$0xf]
    %v4695 = vld [vmem:[%s13 + $0x334] sm:$0xf]
    %v4696 = vld [vmem:[%s13 + $0x338] sm:$0xf]
    %v4697 = vld [vmem:[%s13 + $0x33c] sm:$0xf]
    %v4698 = vld [vmem:[%s13 + $0x340] sm:$0xf]
    %v4699 = vld [vmem:[%s13 + $0x344] sm:$0xf]
    %v4700 = vld [vmem:[%s13 + $0x348] sm:$0xf]
    %v4701 = vld [vmem:[%s13 + $0x34c] sm:$0xf]
    %v4702 = vld [vmem:[%s13 + $0x350] sm:$0xf]
    %v4703 = vld [vmem:[%s13 + $0x354] sm:$0xf]
    %v4704 = vld [vmem:[%s13 + $0x358] sm:$0xf]
    %v4705 = vld [vmem:[%s13 + $0x35c] sm:$0xf]
    %v4706 = vld [vmem:[%s13 + $0x360] sm:$0xf]
    %v4707 = vld [vmem:[%s13 + $0x364] sm:$0xf]
    %v4708 = vld [vmem:[%s13 + $0x368] sm:$0xf]
    %v4709 = vld [vmem:[%s13 + $0x36c] sm:$0xf]
    %v4710 = vld [vmem:[%s13 + $0x370] sm:$0xf]
    %v4711 = vld [vmem:[%s13 + $0x374] sm:$0xf]
    %v4712 = vld [vmem:[%s13 + $0x378] sm:$0xf]
    %v4713 = vld [vmem:[%s13 + $0x37c] sm:$0xf]
    %v4714 = vld [vmem:[%s13 + $0x380] sm:$0xf]
    %v4715 = vld [vmem:[%s13 + $0x384] sm:$0xf]
    %v4716 = vld [vmem:[%s13 + $0x388] sm:$0xf]
    %v4717 = vld [vmem:[%s13 + $0x38c] sm:$0xf]
    %v4718 = vld [vmem:[%s13 + $0x390] sm:$0xf]
    %v4719 = vld [vmem:[%s13 + $0x394] sm:$0xf]
    %v4720 = vld [vmem:[%s13 + $0x398] sm:$0xf]
    %v4721 = vld [vmem:[%s13 + $0x39c] sm:$0xf]
    %v4722 = vld [vmem:[%s13 + $0x3a0] sm:$0xf]
    %v4723 = vld [vmem:[%s13 + $0x3a4] sm:$0xf]
    %v4724 = vld [vmem:[%s13 + $0x3a8] sm:$0xf]
    %v4725 = vld [vmem:[%s13 + $0x3ac] sm:$0xf]
    %v4726 = vld [vmem:[%s13 + $0x3b0] sm:$0xf]
    %v4727 = vld [vmem:[%s13 + $0x3b4] sm:$0xf]
    %v4728 = vld [vmem:[%s13 + $0x3b8] sm:$0xf]
    %v4729 = vld [vmem:[%s13 + $0x3bc] sm:$0xf]
    %v4730 = vld [vmem:[%s13 + $0x3c0] sm:$0xf]
    %v4731 = vld [vmem:[%s13 + $0x3c4] sm:$0xf]
    %v4732 = vld [vmem:[%s13 + $0x3c8] sm:$0xf]
    %v4733 = vld [vmem:[%s13 + $0x3cc] sm:$0xf]
    %v4734 = vld [vmem:[%s13 + $0x3d0] sm:$0xf]
    %v4735 = vld [vmem:[%s13 + $0x3d4] sm:$0xf]
    %v4736 = vld [vmem:[%s13 + $0x3d8] sm:$0xf]
    %v4737 = vld [vmem:[%s13 + $0x3dc] sm:$0xf]
    %v4738 = vld [vmem:[%s13 + $0x3e0] sm:$0xf]
    %v4739 = vld [vmem:[%s13 + $0x3e4] sm:$0xf]
    %v4740 = vld [vmem:[%s13 + $0x3e8] sm:$0xf]
    %v4741 = vld [vmem:[%s13 + $0x3ec] sm:$0xf]
    %v4742 = vld [vmem:[%s13 + $0x3f0] sm:$0xf]
    %v4743 = vld [vmem:[%s13 + $0x3f4] sm:$0xf]
    %v4744 = vld [vmem:[%s13 + $0x3f8] sm:$0xf]
    %v4745 = vld [vmem:[%s13 + $0x3fc] sm:$0xf]
    %v4746 = vld [vmem:[%s13 + $0x400] sm:$0xf]
    %v4747 = vld [vmem:[%s13 + $0x404] sm:$0xf]
    %v4748 = vld [vmem:[%s13 + $0x408] sm:$0xf]
    %v4749 = vld [vmem:[%s13 + $0x40c] sm:$0xf]
    %v4750 = vld [vmem:[%s13 + $0x410] sm:$0xf]
    %v4751 = vld [vmem:[%s13 + $0x414] sm:$0xf]
    %v4752 = vld [vmem:[%s13 + $0x418] sm:$0xf]
    %v4753 = vld [vmem:[%s13 + $0x41c] sm:$0xf]
    %v4754 = vld [vmem:[%s13 + $0x420] sm:$0xf]
    %v4755 = vld [vmem:[%s13 + $0x424] sm:$0xf]
    %v4756 = vld [vmem:[%s13 + $0x428] sm:$0xf]
    %v4757 = vld [vmem:[%s13 + $0x42c] sm:$0xf]
    %v4758 = vld [vmem:[%s13 + $0x430] sm:$0xf]
    %v4759 = vld [vmem:[%s13 + $0x434] sm:$0xf]
    %v4760 = vld [vmem:[%s13 + $0x438] sm:$0xf]
    %v4761 = vld [vmem:[%s13 + $0x43c] sm:$0xf]
    %v4762 = vld [vmem:[%s13 + $0x440] sm:$0xf]
    %v4763 = vld [vmem:[%s13 + $0x444] sm:$0xf]
    %v4764 = vld [vmem:[%s13 + $0x448] sm:$0xf]
    %v4765 = vld [vmem:[%s13 + $0x44c] sm:$0xf]
    %v4766 = vld [vmem:[%s13 + $0x450] sm:$0xf]
    %v4767 = vld [vmem:[%s13 + $0x454] sm:$0xf]
    %v4768 = vld [vmem:[%s13 + $0x458] sm:$0xf]
    %v4769 = vld [vmem:[%s13 + $0x45c] sm:$0xf]
    %v4770 = vld [vmem:[%s13 + $0x460] sm:$0xf]
    %v4771 = vld [vmem:[%s13 + $0x464] sm:$0xf]
    %v4772 = vld [vmem:[%s13 + $0x468] sm:$0xf]
    %v4773 = vld [vmem:[%s13 + $0x46c] sm:$0xf]
    %v4774 = vld [vmem:[%s13 + $0x470] sm:$0xf]
    %v4775 = vld [vmem:[%s13 + $0x474] sm:$0xf]
    %v4776 = vld [vmem:[%s13 + $0x478] sm:$0xf]
    %v4777 = vld [vmem:[%s13 + $0x47c] sm:$0xf]
    %v4778 = vld [vmem:[%s13 + $0x480] sm:$0xf]
    %v4779 = vld [vmem:[%s13 + $0x484] sm:$0xf]
    %v4780 = vld [vmem:[%s13 + $0x488] sm:$0xf]
    %v4781 = vld [vmem:[%s13 + $0x48c] sm:$0xf]
    %v4782 = vld [vmem:[%s13 + $0x490] sm:$0xf]
    %v4783 = vld [vmem:[%s13 + $0x494] sm:$0xf]
    %v4784 = vld [vmem:[%s13 + $0x498] sm:$0xf]
    %v4785 = vld [vmem:[%s13 + $0x49c] sm:$0xf]
    %v4786 = vld [vmem:[%s13 + $0x4a0] sm:$0xf]
    %v4787 = vld [vmem:[%s13 + $0x4a4] sm:$0xf]
    %v4788 = vld [vmem:[%s13 + $0x4a8] sm:$0xf]
    %v4789 = vld [vmem:[%s13 + $0x4ac] sm:$0xf]
    %v4790 = vld [vmem:[%s13 + $0x4b0] sm:$0xf]
    %v4791 = vld [vmem:[%s13 + $0x4b4] sm:$0xf]
    %v4792 = vld [vmem:[%s13 + $0x4b8] sm:$0xf]
    %v4793 = vld [vmem:[%s13 + $0x4bc] sm:$0xf]
    %v4794 = vld [vmem:[%s13 + $0x4c0] sm:$0xf]
    %v4795 = vld [vmem:[%s13 + $0x4c4] sm:$0xf]
    %v4796 = vld [vmem:[%s13 + $0x4c8] sm:$0xf]
    %v4797 = vld [vmem:[%s13 + $0x4cc] sm:$0xf]
    %v4798 = vld [vmem:[%s13 + $0x4d0] sm:$0xf]
    %v4799 = vld [vmem:[%s13 + $0x4d4] sm:$0xf]
    %v4800 = vld [vmem:[%s13 + $0x4d8] sm:$0xf]
    %v4801 = vld [vmem:[%s13 + $0x4dc] sm:$0xf]
    %v4802 = vld [vmem:[%s13 + $0x4e0] sm:$0xf]
    %v4803 = vld [vmem:[%s13 + $0x4e4] sm:$0xf]
    %v4804 = vld [vmem:[%s13 + $0x4e8] sm:$0xf]
    %v4805 = vld [vmem:[%s13 + $0x4ec] sm:$0xf]
    %v4806 = vld [vmem:[%s13 + $0x4f0] sm:$0xf]
    %v4807 = vld [vmem:[%s13 + $0x4f4] sm:$0xf]
    %v4808 = vld [vmem:[%s13 + $0x4f8] sm:$0xf]
    %v4809 = vld [vmem:[%s13 + $0x4fc] sm:$0xf]
    %v4810 = vld [vmem:[%s13 + $0x500] sm:$0xf]
    %v4811 = vld [vmem:[%s13 + $0x504] sm:$0xf]
    %v4812 = vld [vmem:[%s13 + $0x508] sm:$0xf]
    %v4813 = vld [vmem:[%s13 + $0x50c] sm:$0xf]
    %v4814 = vld [vmem:[%s13 + $0x510] sm:$0xf]
    %v4815 = vld [vmem:[%s13 + $0x514] sm:$0xf]
    %v4816 = vld [vmem:[%s13 + $0x518] sm:$0xf]
    %v4817 = vld [vmem:[%s13 + $0x51c] sm:$0xf]
    %v4818 = vld [vmem:[%s13 + $0x520] sm:$0xf]
    %v4819 = vld [vmem:[%s13 + $0x524] sm:$0xf]
    %v4820 = vld [vmem:[%s13 + $0x528] sm:$0xf]
    %v4821 = vld [vmem:[%s13 + $0x52c] sm:$0xf]
    %v4822 = vld [vmem:[%s13 + $0x530] sm:$0xf]
    %v4823 = vld [vmem:[%s13 + $0x534] sm:$0xf]
    %v4824 = vld [vmem:[%s13 + $0x538] sm:$0xf]
    %v4825 = vld [vmem:[%s13 + $0x53c] sm:$0xf]
    %v4826 = vld [vmem:[%s13 + $0x540] sm:$0xf]
    %v4827 = vld [vmem:[%s13 + $0x544] sm:$0xf]
    %v4828 = vld [vmem:[%s13 + $0x548] sm:$0xf]
    %v4829 = vld [vmem:[%s13 + $0x54c] sm:$0xf]
    %v4830 = vld [vmem:[%s13 + $0x550] sm:$0xf]
    %v4831 = vld [vmem:[%s13 + $0x554] sm:$0xf]
    %v4832 = vld [vmem:[%s13 + $0x558] sm:$0xf]
    %v4833 = vld [vmem:[%s13 + $0x55c] sm:$0xf]
    %v4834 = vld [vmem:[%s13 + $0x560] sm:$0xf]
    %v4835 = vld [vmem:[%s13 + $0x564] sm:$0xf]
    %v4836 = vld [vmem:[%s13 + $0x568] sm:$0xf]
    %v4837 = vld [vmem:[%s13 + $0x56c] sm:$0xf]
    %v4838 = vld [vmem:[%s13 + $0x570] sm:$0xf]
    %v4839 = vld [vmem:[%s13 + $0x574] sm:$0xf]
    %v4840 = vld [vmem:[%s13 + $0x578] sm:$0xf]
    %v4841 = vld [vmem:[%s13 + $0x57c] sm:$0xf]
    %v4842 = vld [vmem:[%s13 + $0x580] sm:$0xf]
    %v4843 = vld [vmem:[%s13 + $0x584] sm:$0xf]
    %v4844 = vld [vmem:[%s13 + $0x588] sm:$0xf]
    %v4845 = vld [vmem:[%s13 + $0x58c] sm:$0xf]
    %v4846 = vld [vmem:[%s13 + $0x590] sm:$0xf]
    %v4847 = vld [vmem:[%s13 + $0x594] sm:$0xf]
    %v4848 = vld [vmem:[%s13 + $0x598] sm:$0xf]
    %v4849 = vld [vmem:[%s13 + $0x59c] sm:$0xf]
    %v4850 = vld [vmem:[%s13 + $0x5a0] sm:$0xf]
    %v4851 = vld [vmem:[%s13 + $0x5a4] sm:$0xf]
    %v4852 = vld [vmem:[%s13 + $0x5a8] sm:$0xf]
    %v4853 = vld [vmem:[%s13 + $0x5ac] sm:$0xf]
    %v4854 = vld [vmem:[%s13 + $0x5b0] sm:$0xf]
    %v4855 = vld [vmem:[%s13 + $0x5b4] sm:$0xf]
    %v4856 = vld [vmem:[%s13 + $0x5b8] sm:$0xf]
    %v4857 = vld [vmem:[%s13 + $0x5bc] sm:$0xf]
    %v4858 = vld [vmem:[%s13 + $0x5c0] sm:$0xf]
    %v4859 = vld [vmem:[%s13 + $0x5c4] sm:$0xf]
    %v4860 = vld [vmem:[%s13 + $0x5c8] sm:$0xf]
    %v4861 = vld [vmem:[%s13 + $0x5cc] sm:$0xf]
    %v4862 = vld [vmem:[%s13 + $0x5d0] sm:$0xf]
    %v4863 = vld [vmem:[%s13 + $0x5d4] sm:$0xf]
    %v4864 = vld [vmem:[%s13 + $0x5d8] sm:$0xf]
    %v4865 = vld [vmem:[%s13 + $0x5dc] sm:$0xf]
    %v4866 = vld [vmem:[%s13 + $0x5e0] sm:$0xf]
    %v4867 = vld [vmem:[%s13 + $0x5e4] sm:$0xf]
    %v4868 = vld [vmem:[%s13 + $0x5e8] sm:$0xf]
    %v4869 = vld [vmem:[%s13 + $0x5ec] sm:$0xf]
    %v4870 = vld [vmem:[%s13 + $0x5f0] sm:$0xf]
    %v4871 = vld [vmem:[%s13 + $0x5f4] sm:$0xf]
    %v4872 = vld [vmem:[%s13 + $0x5f8] sm:$0xf]
    %v4873 = vld [vmem:[%s13 + $0x5fc] sm:$0xf]
    %v4874 = vld [vmem:[%s14] sm:$0x1]
    %v4876 = vlaneseq
    %v4877 = vshrl.u32 %v4876, 7
    %v4878 = vsub.s32 0, %v4877
    %v4879 = vrot.slane %v4874, %v4878
    %v4884 = vcombine.high %v4487, %v4487
    %v4886 = vunpack.c.l.s4 1966171168
    %v4887 = vunpack.c.0.s8 %v4886
    %v4888 = vlaneseq
    %v4889 = vshrl.u32 %v4888, 7
    %v4890 = vsub.s32 %v4887, %v4889
    %v4891 = vrot.slane %v4487, %v4890
    %v4893 = vunpack.c.l.s4 1966171168
    %v4894 = vunpack.c.0.s8 %v4893
    %v4895 = vlaneseq
    %v4896 = vshrl.u32 %v4895, 7
    %v4897 = vsub.s32 %v4894, %v4896
    %v4898 = vrot.slane %v4884, %v4897
    %v4899 = vcombine.high %v4891, %v4891
    %v4900 = vcombine.high %v4898, %v4898
    %v4902 = vunpack.c.l.s4 1966171168
    %v4903 = vunpack.c.0.s8 %v4902
    %v4904 = vlaneseq
    %v4905 = vshrl.u32 %v4904, 7
    %v4906 = vsub.s32 %v4903, %v4905
    %v4907 = vrot.slane %v4891, %v4906
    %v4909 = vunpack.c.l.s4 1966171168
    %v4910 = vunpack.c.0.s8 %v4909
    %v4911 = vlaneseq
    %v4912 = vshrl.u32 %v4911, 7
    %v4913 = vsub.s32 %v4910, %v4912
    %v4914 = vrot.slane %v4898, %v4913
    %v4916 = vunpack.c.l.s4 1966171168
    %v4917 = vunpack.c.0.s8 %v4916
    %v4918 = vlaneseq
    %v4919 = vshrl.u32 %v4918, 7
    %v4920 = vsub.s32 %v4917, %v4919
    %v4921 = vrot.slane %v4899, %v4920
    %v4923 = vunpack.c.l.s4 1966171168
    %v4924 = vunpack.c.0.s8 %v4923
    %v4925 = vlaneseq
    %v4926 = vshrl.u32 %v4925, 7
    %v4927 = vsub.s32 %v4924, %v4926
    %v4928 = vrot.slane %v4900, %v4927
    %v4929 = vcombine.high %v4907, %v4907
    %v4930 = vcombine.high %v4914, %v4914
    %v4931 = vcombine.high %v4921, %v4921
    %v4932 = vcombine.high %v4928, %v4928
    %v4933 = vcombine.high %v4488, %v4488
    %v4935 = vunpack.c.l.s4 1966171168
    %v4936 = vunpack.c.0.s8 %v4935
    %v4937 = vlaneseq
    %v4938 = vshrl.u32 %v4937, 7
    %v4939 = vsub.s32 %v4936, %v4938
    %v4940 = vrot.slane %v4488, %v4939
    %v4942 = vunpack.c.l.s4 1966171168
    %v4943 = vunpack.c.0.s8 %v4942
    %v4944 = vlaneseq
    %v4945 = vshrl.u32 %v4944, 7
    %v4946 = vsub.s32 %v4943, %v4945
    %v4947 = vrot.slane %v4933, %v4946
    %v4948 = vcombine.high %v4940, %v4940
    %v4949 = vcombine.high %v4947, %v4947
    %v4951 = vunpack.c.l.s4 1966171168
    %v4952 = vunpack.c.0.s8 %v4951
    %v4953 = vlaneseq
    %v4954 = vshrl.u32 %v4953, 7
    %v4955 = vsub.s32 %v4952, %v4954
    %v4956 = vrot.slane %v4940, %v4955
    %v4958 = vunpack.c.l.s4 1966171168
    %v4959 = vunpack.c.0.s8 %v4958
    %v4960 = vlaneseq
    %v4961 = vshrl.u32 %v4960, 7
    %v4962 = vsub.s32 %v4959, %v4961
    %v4963 = vrot.slane %v4947, %v4962
    %v4965 = vunpack.c.l.s4 1966171168
    %v4966 = vunpack.c.0.s8 %v4965
    %v4967 = vlaneseq
    %v4968 = vshrl.u32 %v4967, 7
    %v4969 = vsub.s32 %v4966, %v4968
    %v4970 = vrot.slane %v4948, %v4969
    %v4972 = vunpack.c.l.s4 1966171168
    %v4973 = vunpack.c.0.s8 %v4972
    %v4974 = vlaneseq
    %v4975 = vshrl.u32 %v4974, 7
    %v4976 = vsub.s32 %v4973, %v4975
    %v4977 = vrot.slane %v4949, %v4976
    %v4978 = vcombine.high %v4956, %v4956
    %v4979 = vcombine.high %v4963, %v4963
    %v4980 = vcombine.high %v4970, %v4970
    %v4981 = vcombine.high %v4977, %v4977
    %v4982 = vcombine.high %v4489, %v4489
    %v4984 = vunpack.c.l.s4 1966171168
    %v4985 = vunpack.c.0.s8 %v4984
    %v4986 = vlaneseq
    %v4987 = vshrl.u32 %v4986, 7
    %v4988 = vsub.s32 %v4985, %v4987
    %v4989 = vrot.slane %v4489, %v4988
    %v4991 = vunpack.c.l.s4 1966171168
    %v4992 = vunpack.c.0.s8 %v4991
    %v4993 = vlaneseq
    %v4994 = vshrl.u32 %v4993, 7
    %v4995 = vsub.s32 %v4992, %v4994
    %v4996 = vrot.slane %v4982, %v4995
    %v4997 = vcombine.high %v4989, %v4989
    %v4998 = vcombine.high %v4996, %v4996
    %v5000 = vunpack.c.l.s4 1966171168
    %v5001 = vunpack.c.0.s8 %v5000
    %v5002 = vlaneseq
    %v5003 = vshrl.u32 %v5002, 7
    %v5004 = vsub.s32 %v5001, %v5003
    %v5005 = vrot.slane %v4989, %v5004
    %v5007 = vunpack.c.l.s4 1966171168
    %v5008 = vunpack.c.0.s8 %v5007
    %v5009 = vlaneseq
    %v5010 = vshrl.u32 %v5009, 7
    %v5011 = vsub.s32 %v5008, %v5010
    %v5012 = vrot.slane %v4996, %v5011
    %v5014 = vunpack.c.l.s4 1966171168
    %v5015 = vunpack.c.0.s8 %v5014
    %v5016 = vlaneseq
    %v5017 = vshrl.u32 %v5016, 7
    %v5018 = vsub.s32 %v5015, %v5017
    %v5019 = vrot.slane %v4997, %v5018
    %v5021 = vunpack.c.l.s4 1966171168
    %v5022 = vunpack.c.0.s8 %v5021
    %v5023 = vlaneseq
    %v5024 = vshrl.u32 %v5023, 7
    %v5025 = vsub.s32 %v5022, %v5024
    %v5026 = vrot.slane %v4998, %v5025
    %v5027 = vcombine.high %v5005, %v5005
    %v5028 = vcombine.high %v5012, %v5012
    %v5029 = vcombine.high %v5019, %v5019
    %v5030 = vcombine.high %v5026, %v5026
    %v5439 = vunpack.c.l.b16 %v4490
    %v5440 = vunpack.c.l.b16 %v4491
    %v5441 = vunpack.c.l.b16 %v4492
    %v5442 = vunpack.c.l.b16 %v4493
    %v5443 = vunpack.c.l.b16 %v4494
    %v5444 = vunpack.c.l.b16 %v4495
    %v5445 = vunpack.c.l.b16 %v4496
    %v5446 = vunpack.c.l.b16 %v4497
    %v5447 = vunpack.c.l.b16 %v4498
    %v5448 = vunpack.c.l.b16 %v4499
    %v5449 = vunpack.c.l.b16 %v4500
    %v5450 = vunpack.c.l.b16 %v4501
    %v5451 = vunpack.c.l.b16 %v4502
    %v5452 = vunpack.c.l.b16 %v4503
    %v5453 = vunpack.c.l.b16 %v4504
    %v5454 = vunpack.c.l.b16 %v4505
    %v5455 = vunpack.c.l.b16 %v4506
    %v5456 = vunpack.c.l.b16 %v4507
    %v5457 = vunpack.c.l.b16 %v4508
    %v5458 = vunpack.c.l.b16 %v4509
    %v5459 = vunpack.c.l.b16 %v4510
    %v5460 = vunpack.c.l.b16 %v4511
    %v5461 = vunpack.c.l.b16 %v4512
    %v5462 = vunpack.c.l.b16 %v4513
    %v5463 = vunpack.c.l.b16 %v4514
    %v5464 = vunpack.c.l.b16 %v4515
    %v5465 = vunpack.c.l.b16 %v4516
    %v5466 = vunpack.c.l.b16 %v4517
    %v5467 = vunpack.c.l.b16 %v4518
    %v5468 = vunpack.c.l.b16 %v4519
    %v5469 = vunpack.c.l.b16 %v4520
    %v5470 = vunpack.c.l.b16 %v4521
    %v5471 = vunpack.c.l.b16 %v4522
    %v5472 = vunpack.c.l.b16 %v4523
    %v5473 = vunpack.c.l.b16 %v4524
    %v5474 = vunpack.c.l.b16 %v4525
    %v5475 = vunpack.c.l.b16 %v4526
    %v5476 = vunpack.c.l.b16 %v4527
    %v5477 = vunpack.c.l.b16 %v4528
    %v5478 = vunpack.c.l.b16 %v4529
    %v5479 = vunpack.c.l.b16 %v4530
    %v5480 = vunpack.c.l.b16 %v4531
    %v5481 = vunpack.c.l.b16 %v4532
    %v5482 = vunpack.c.l.b16 %v4533
    %v5483 = vunpack.c.l.b16 %v4534
    %v5484 = vunpack.c.l.b16 %v4535
    %v5485 = vunpack.c.l.b16 %v4536
    %v5486 = vunpack.c.l.b16 %v4537
    %v5487 = vunpack.c.l.b16 %v4538
    %v5488 = vunpack.c.l.b16 %v4539
    %v5489 = vunpack.c.l.b16 %v4540
    %v5490 = vunpack.c.l.b16 %v4541
    %v5491 = vunpack.c.l.b16 %v4542
    %v5492 = vunpack.c.l.b16 %v4543
    %v5493 = vunpack.c.l.b16 %v4544
    %v5494 = vunpack.c.l.b16 %v4545
    %v5495 = vunpack.c.l.b16 %v4546
    %v5496 = vunpack.c.l.b16 %v4547
    %v5497 = vunpack.c.l.b16 %v4548
    %v5498 = vunpack.c.l.b16 %v4549
    %v5499 = vunpack.c.l.b16 %v4550
    %v5500 = vunpack.c.l.b16 %v4551
    %v5501 = vunpack.c.l.b16 %v4552
    %v5502 = vunpack.c.l.b16 %v4553
    %v5503 = vunpack.c.l.b16 %v4554
    %v5504 = vunpack.c.l.b16 %v4555
    %v5505 = vunpack.c.l.b16 %v4556
    %v5506 = vunpack.c.l.b16 %v4557
    %v5507 = vunpack.c.l.b16 %v4558
    %v5508 = vunpack.c.l.b16 %v4559
    %v5509 = vunpack.c.l.b16 %v4560
    %v5510 = vunpack.c.l.b16 %v4561
    %v5511 = vunpack.c.l.b16 %v4562
    %v5512 = vunpack.c.l.b16 %v4563
    %v5513 = vunpack.c.l.b16 %v4564
    %v5514 = vunpack.c.l.b16 %v4565
    %v5515 = vunpack.c.l.b16 %v4566
    %v5516 = vunpack.c.l.b16 %v4567
    %v5517 = vunpack.c.l.b16 %v4568
    %v5518 = vunpack.c.l.b16 %v4569
    %v5519 = vunpack.c.l.b16 %v4570
    %v5520 = vunpack.c.l.b16 %v4571
    %v5521 = vunpack.c.l.b16 %v4572
    %v5522 = vunpack.c.l.b16 %v4573
    %v5523 = vunpack.c.l.b16 %v4574
    %v5524 = vunpack.c.l.b16 %v4575
    %v5525 = vunpack.c.l.b16 %v4576
    %v5526 = vunpack.c.l.b16 %v4577
    %v5527 = vunpack.c.l.b16 %v4578
    %v5528 = vunpack.c.l.b16 %v4579
    %v5529 = vunpack.c.l.b16 %v4580
    %v5530 = vunpack.c.l.b16 %v4581
    %v5531 = vunpack.c.l.b16 %v4582
    %v5532 = vunpack.c.l.b16 %v4583
    %v5533 = vunpack.c.l.b16 %v4584
    %v5534 = vunpack.c.l.b16 %v4585
    %v5535 = vunpack.c.l.b16 %v4586
    %v5536 = vunpack.c.l.b16 %v4587
    %v5537 = vunpack.c.l.b16 %v4588
    %v5538 = vunpack.c.l.b16 %v4589
    %v5539 = vunpack.c.l.b16 %v4590
    %v5540 = vunpack.c.l.b16 %v4591
    %v5541 = vunpack.c.l.b16 %v4592
    %v5542 = vunpack.c.l.b16 %v4593
    %v5543 = vunpack.c.l.b16 %v4594
    %v5544 = vunpack.c.l.b16 %v4595
    %v5545 = vunpack.c.l.b16 %v4596
    %v5546 = vunpack.c.l.b16 %v4597
    %v5547 = vunpack.c.l.b16 %v4598
    %v5548 = vunpack.c.l.b16 %v4599
    %v5549 = vunpack.c.l.b16 %v4600
    %v5550 = vunpack.c.l.b16 %v4601
    %v5551 = vunpack.c.l.b16 %v4602
    %v5552 = vunpack.c.l.b16 %v4603
    %v5553 = vunpack.c.l.b16 %v4604
    %v5554 = vunpack.c.l.b16 %v4605
    %v5555 = vunpack.c.l.b16 %v4606
    %v5556 = vunpack.c.l.b16 %v4607
    %v5557 = vunpack.c.l.b16 %v4608
    %v5558 = vunpack.c.l.b16 %v4609
    %v5559 = vunpack.c.l.b16 %v4610
    %v5560 = vunpack.c.l.b16 %v4611
    %v5561 = vunpack.c.l.b16 %v4612
    %v5562 = vunpack.c.l.b16 %v4613
    %v5563 = vunpack.c.l.b16 %v4614
    %v5564 = vunpack.c.l.b16 %v4615
    %v5565 = vunpack.c.l.b16 %v4616
    %v5566 = vunpack.c.l.b16 %v4617
    %v5567 = vunpack.c.l.b16 %v4618
    %v5568 = vunpack.c.l.b16 %v4619
    %v5569 = vunpack.c.l.b16 %v4620
    %v5570 = vunpack.c.l.b16 %v4621
    %v5571 = vunpack.c.l.b16 %v4622
    %v5572 = vunpack.c.l.b16 %v4623
    %v5573 = vunpack.c.l.b16 %v4624
    %v5574 = vunpack.c.l.b16 %v4625
    %v5575 = vunpack.c.l.b16 %v4626
    %v5576 = vunpack.c.l.b16 %v4627
    %v5577 = vunpack.c.l.b16 %v4628
    %v5578 = vunpack.c.l.b16 %v4629
    %v5579 = vunpack.c.l.b16 %v4630
    %v5580 = vunpack.c.l.b16 %v4631
    %v5581 = vunpack.c.l.b16 %v4632
    %v5582 = vunpack.c.l.b16 %v4633
    %v5583 = vunpack.c.l.b16 %v4634
    %v5584 = vunpack.c.l.b16 %v4635
    %v5585 = vunpack.c.l.b16 %v4636
    %v5586 = vunpack.c.l.b16 %v4637
    %v5587 = vunpack.c.l.b16 %v4638
    %v5588 = vunpack.c.l.b16 %v4639
    %v5589 = vunpack.c.l.b16 %v4640
    %v5590 = vunpack.c.l.b16 %v4641
    %v5591 = vunpack.c.l.b16 %v4642
    %v5592 = vunpack.c.l.b16 %v4643
    %v5593 = vunpack.c.l.b16 %v4644
    %v5594 = vunpack.c.l.b16 %v4645
    %v5595 = vunpack.c.l.b16 %v4646
    %v5596 = vunpack.c.l.b16 %v4647
    %v5597 = vunpack.c.l.b16 %v4648
    %v5598 = vunpack.c.l.b16 %v4649
    %v5599 = vunpack.c.l.b16 %v4650
    %v5600 = vunpack.c.l.b16 %v4651
    %v5601 = vunpack.c.l.b16 %v4652
    %v5602 = vunpack.c.l.b16 %v4653
    %v5603 = vunpack.c.l.b16 %v4654
    %v5604 = vunpack.c.l.b16 %v4655
    %v5605 = vunpack.c.l.b16 %v4656
    %v5606 = vunpack.c.l.b16 %v4657
    %v5607 = vunpack.c.l.b16 %v4658
    %v5608 = vunpack.c.l.b16 %v4659
    %v5609 = vunpack.c.l.b16 %v4660
    %v5610 = vunpack.c.l.b16 %v4661
    %v5611 = vunpack.c.l.b16 %v4662
    %v5612 = vunpack.c.l.b16 %v4663
    %v5613 = vunpack.c.l.b16 %v4664
    %v5614 = vunpack.c.l.b16 %v4665
    %v5615 = vunpack.c.l.b16 %v4666
    %v5616 = vunpack.c.l.b16 %v4667
    %v5617 = vunpack.c.l.b16 %v4668
    %v5618 = vunpack.c.l.b16 %v4669
    %v5619 = vunpack.c.l.b16 %v4670
    %v5620 = vunpack.c.l.b16 %v4671
    %v5621 = vunpack.c.l.b16 %v4672
    %v5622 = vunpack.c.l.b16 %v4673
    %v5623 = vunpack.c.l.b16 %v4674
    %v5624 = vunpack.c.l.b16 %v4675
    %v5625 = vunpack.c.l.b16 %v4676
    %v5626 = vunpack.c.l.b16 %v4677
    %v5627 = vunpack.c.l.b16 %v4678
    %v5628 = vunpack.c.l.b16 %v4679
    %v5629 = vunpack.c.l.b16 %v4680
    %v5630 = vunpack.c.l.b16 %v4681
    %v5631 = vunpack.c.l.b16 %v4682
    %v5632 = vunpack.c.l.b16 %v4683
    %v5633 = vunpack.c.l.b16 %v4684
    %v5634 = vunpack.c.l.b16 %v4685
    %v5635 = vunpack.c.l.b16 %v4686
    %v5636 = vunpack.c.l.b16 %v4687
    %v5637 = vunpack.c.l.b16 %v4688
    %v5638 = vunpack.c.l.b16 %v4689
    %v5639 = vunpack.c.l.b16 %v4690
    %v5640 = vunpack.c.l.b16 %v4691
    %v5641 = vunpack.c.l.b16 %v4692
    %v5642 = vunpack.c.l.b16 %v4693
    %v5643 = vunpack.c.l.b16 %v4694
    %v5644 = vunpack.c.l.b16 %v4695
    %v5645 = vunpack.c.l.b16 %v4696
    %v5646 = vunpack.c.l.b16 %v4697
    %v5647 = vunpack.c.l.b16 %v4698
    %v5648 = vunpack.c.l.b16 %v4699
    %v5649 = vunpack.c.l.b16 %v4700
    %v5650 = vunpack.c.l.b16 %v4701
    %v5651 = vunpack.c.l.b16 %v4702
    %v5652 = vunpack.c.l.b16 %v4703
    %v5653 = vunpack.c.l.b16 %v4704
    %v5654 = vunpack.c.l.b16 %v4705
    %v5655 = vunpack.c.l.b16 %v4706
    %v5656 = vunpack.c.l.b16 %v4707
    %v5657 = vunpack.c.l.b16 %v4708
    %v5658 = vunpack.c.l.b16 %v4709
    %v5659 = vunpack.c.l.b16 %v4710
    %v5660 = vunpack.c.l.b16 %v4711
    %v5661 = vunpack.c.l.b16 %v4712
    %v5662 = vunpack.c.l.b16 %v4713
    %v5663 = vunpack.c.l.b16 %v4714
    %v5664 = vunpack.c.l.b16 %v4715
    %v5665 = vunpack.c.l.b16 %v4716
    %v5666 = vunpack.c.l.b16 %v4717
    %v5667 = vunpack.c.l.b16 %v4718
    %v5668 = vunpack.c.l.b16 %v4719
    %v5669 = vunpack.c.l.b16 %v4720
    %v5670 = vunpack.c.l.b16 %v4721
    %v5671 = vunpack.c.l.b16 %v4722
    %v5672 = vunpack.c.l.b16 %v4723
    %v5673 = vunpack.c.l.b16 %v4724
    %v5674 = vunpack.c.l.b16 %v4725
    %v5675 = vunpack.c.l.b16 %v4726
    %v5676 = vunpack.c.l.b16 %v4727
    %v5677 = vunpack.c.l.b16 %v4728
    %v5678 = vunpack.c.l.b16 %v4729
    %v5679 = vunpack.c.l.b16 %v4730
    %v5680 = vunpack.c.l.b16 %v4731
    %v5681 = vunpack.c.l.b16 %v4732
    %v5682 = vunpack.c.l.b16 %v4733
    %v5683 = vunpack.c.l.b16 %v4734
    %v5684 = vunpack.c.l.b16 %v4735
    %v5685 = vunpack.c.l.b16 %v4736
    %v5686 = vunpack.c.l.b16 %v4737
    %v5687 = vunpack.c.l.b16 %v4738
    %v5688 = vunpack.c.l.b16 %v4739
    %v5689 = vunpack.c.l.b16 %v4740
    %v5690 = vunpack.c.l.b16 %v4741
    %v5691 = vunpack.c.l.b16 %v4742
    %v5692 = vunpack.c.l.b16 %v4743
    %v5693 = vunpack.c.l.b16 %v4744
    %v5694 = vunpack.c.l.b16 %v4745
    %v5695 = vunpack.c.l.b16 %v4746
    %v5696 = vunpack.c.l.b16 %v4747
    %v5697 = vunpack.c.l.b16 %v4748
    %v5698 = vunpack.c.l.b16 %v4749
    %v5699 = vunpack.c.l.b16 %v4750
    %v5700 = vunpack.c.l.b16 %v4751
    %v5701 = vunpack.c.l.b16 %v4752
    %v5702 = vunpack.c.l.b16 %v4753
    %v5703 = vunpack.c.l.b16 %v4754
    %v5704 = vunpack.c.l.b16 %v4755
    %v5705 = vunpack.c.l.b16 %v4756
    %v5706 = vunpack.c.l.b16 %v4757
    %v5707 = vunpack.c.l.b16 %v4758
    %v5708 = vunpack.c.l.b16 %v4759
    %v5709 = vunpack.c.l.b16 %v4760
    %v5710 = vunpack.c.l.b16 %v4761
    %v5711 = vunpack.c.l.b16 %v4762
    %v5712 = vunpack.c.l.b16 %v4763
    %v5713 = vunpack.c.l.b16 %v4764
    %v5714 = vunpack.c.l.b16 %v4765
    %v5715 = vunpack.c.l.b16 %v4766
    %v5716 = vunpack.c.l.b16 %v4767
    %v5717 = vunpack.c.l.b16 %v4768
    %v5718 = vunpack.c.l.b16 %v4769
    %v5719 = vunpack.c.l.b16 %v4770
    %v5720 = vunpack.c.l.b16 %v4771
    %v5721 = vunpack.c.l.b16 %v4772
    %v5722 = vunpack.c.l.b16 %v4773
    %v5723 = vunpack.c.l.b16 %v4774
    %v5724 = vunpack.c.l.b16 %v4775
    %v5725 = vunpack.c.l.b16 %v4776
    %v5726 = vunpack.c.l.b16 %v4777
    %v5727 = vunpack.c.l.b16 %v4778
    %v5728 = vunpack.c.l.b16 %v4779
    %v5729 = vunpack.c.l.b16 %v4780
    %v5730 = vunpack.c.l.b16 %v4781
    %v5731 = vunpack.c.l.b16 %v4782
    %v5732 = vunpack.c.l.b16 %v4783
    %v5733 = vunpack.c.l.b16 %v4784
    %v5734 = vunpack.c.l.b16 %v4785
    %v5735 = vunpack.c.l.b16 %v4786
    %v5736 = vunpack.c.l.b16 %v4787
    %v5737 = vunpack.c.l.b16 %v4788
    %v5738 = vunpack.c.l.b16 %v4789
    %v5739 = vunpack.c.l.b16 %v4790
    %v5740 = vunpack.c.l.b16 %v4791
    %v5741 = vunpack.c.l.b16 %v4792
    %v5742 = vunpack.c.l.b16 %v4793
    %v5743 = vunpack.c.l.b16 %v4794
    %v5744 = vunpack.c.l.b16 %v4795
    %v5745 = vunpack.c.l.b16 %v4796
    %v5746 = vunpack.c.l.b16 %v4797
    %v5747 = vunpack.c.l.b16 %v4798
    %v5748 = vunpack.c.l.b16 %v4799
    %v5749 = vunpack.c.l.b16 %v4800
    %v5750 = vunpack.c.l.b16 %v4801
    %v5751 = vunpack.c.l.b16 %v4802
    %v5752 = vunpack.c.l.b16 %v4803
    %v5753 = vunpack.c.l.b16 %v4804
    %v5754 = vunpack.c.l.b16 %v4805
    %v5755 = vunpack.c.l.b16 %v4806
    %v5756 = vunpack.c.l.b16 %v4807
    %v5757 = vunpack.c.l.b16 %v4808
    %v5758 = vunpack.c.l.b16 %v4809
    %v5759 = vunpack.c.l.b16 %v4810
    %v5760 = vunpack.c.l.b16 %v4811
    %v5761 = vunpack.c.l.b16 %v4812
    %v5762 = vunpack.c.l.b16 %v4813
    %v5763 = vunpack.c.l.b16 %v4814
    %v5764 = vunpack.c.l.b16 %v4815
    %v5765 = vunpack.c.l.b16 %v4816
    %v5766 = vunpack.c.l.b16 %v4817
    %v5767 = vunpack.c.l.b16 %v4818
    %v5768 = vunpack.c.l.b16 %v4819
    %v5769 = vunpack.c.l.b16 %v4820
    %v5770 = vunpack.c.l.b16 %v4821
    %v5771 = vunpack.c.l.b16 %v4822
    %v5772 = vunpack.c.l.b16 %v4823
    %v5773 = vunpack.c.l.b16 %v4824
    %v5774 = vunpack.c.l.b16 %v4825
    %v5775 = vunpack.c.l.b16 %v4826
    %v5776 = vunpack.c.l.b16 %v4827
    %v5777 = vunpack.c.l.b16 %v4828
    %v5778 = vunpack.c.l.b16 %v4829
    %v5779 = vunpack.c.l.b16 %v4830
    %v5780 = vunpack.c.l.b16 %v4831
    %v5781 = vunpack.c.l.b16 %v4832
    %v5782 = vunpack.c.l.b16 %v4833
    %v5783 = vunpack.c.l.b16 %v4834
    %v5784 = vunpack.c.l.b16 %v4835
    %v5785 = vunpack.c.l.b16 %v4836
    %v5786 = vunpack.c.l.b16 %v4837
    %v5787 = vunpack.c.l.b16 %v4838
    %v5788 = vunpack.c.l.b16 %v4839
    %v5789 = vunpack.c.l.b16 %v4840
    %v5790 = vunpack.c.l.b16 %v4841
    %v5791 = vunpack.c.l.b16 %v4842
    %v5792 = vunpack.c.l.b16 %v4843
    %v5793 = vunpack.c.l.b16 %v4844
    %v5794 = vunpack.c.l.b16 %v4845
    %v5795 = vunpack.c.l.b16 %v4846
    %v5796 = vunpack.c.l.b16 %v4847
    %v5797 = vunpack.c.l.b16 %v4848
    %v5798 = vunpack.c.l.b16 %v4849
    %v5799 = vunpack.c.l.b16 %v4850
    %v5800 = vunpack.c.l.b16 %v4851
    %v5801 = vunpack.c.l.b16 %v4852
    %v5802 = vunpack.c.l.b16 %v4853
    %v5803 = vunpack.c.l.b16 %v4854
    %v5804 = vunpack.c.l.b16 %v4855
    %v5805 = vunpack.c.l.b16 %v4856
    %v5806 = vunpack.c.l.b16 %v4857
    %v5807 = vunpack.c.l.b16 %v4858
    %v5808 = vunpack.c.l.b16 %v4859
    %v5809 = vunpack.c.l.b16 %v4860
    %v5810 = vunpack.c.l.b16 %v4861
    %v5811 = vunpack.c.l.b16 %v4862
    %v5812 = vunpack.c.l.b16 %v4863
    %v5813 = vunpack.c.l.b16 %v4864
    %v5814 = vunpack.c.l.b16 %v4865
    %v5815 = vunpack.c.l.b16 %v4866
    %v5816 = vunpack.c.l.b16 %v4867
    %v5817 = vunpack.c.l.b16 %v4868
    %v5818 = vunpack.c.l.b16 %v4869
    %v5819 = vunpack.c.l.b16 %v4870
    %v5820 = vunpack.c.l.b16 %v4871
    %v5821 = vunpack.c.l.b16 %v4872
    %v5822 = vunpack.c.l.b16 %v4873
    %v5823 = vpack.c.b16 %v5440, %v5439
    %v5824 = vpack.c.b16 %v5442, %v5441
    %v5825 = vpack.c.b16 %v5444, %v5443
    %v5826 = vpack.c.b16 %v5446, %v5445
    %v5827 = vpack.c.b16 %v5448, %v5447
    %v5828 = vpack.c.b16 %v5450, %v5449
    %v5829 = vpack.c.b16 %v5452, %v5451
    %v5830 = vpack.c.b16 %v5454, %v5453
    %v5831 = vpack.c.b16 %v5456, %v5455
    %v5832 = vpack.c.b16 %v5458, %v5457
    %v5833 = vpack.c.b16 %v5460, %v5459
    %v5834 = vpack.c.b16 %v5462, %v5461
    %v5835 = vpack.c.b16 %v5464, %v5463
    %v5836 = vpack.c.b16 %v5466, %v5465
    %v5837 = vpack.c.b16 %v5468, %v5467
    %v5838 = vpack.c.b16 %v5470, %v5469
    %v5839 = vpack.c.b16 %v5472, %v5471
    %v5840 = vpack.c.b16 %v5474, %v5473
    %v5841 = vpack.c.b16 %v5476, %v5475
    %v5842 = vpack.c.b16 %v5478, %v5477
    %v5843 = vpack.c.b16 %v5480, %v5479
    %v5844 = vpack.c.b16 %v5482, %v5481
    %v5845 = vpack.c.b16 %v5484, %v5483
    %v5846 = vpack.c.b16 %v5486, %v5485
    %v5847 = vpack.c.b16 %v5488, %v5487
    %v5848 = vpack.c.b16 %v5490, %v5489
    %v5849 = vpack.c.b16 %v5492, %v5491
    %v5850 = vpack.c.b16 %v5494, %v5493
    %v5851 = vpack.c.b16 %v5496, %v5495
    %v5852 = vpack.c.b16 %v5498, %v5497
    %v5853 = vpack.c.b16 %v5500, %v5499
    %v5854 = vpack.c.b16 %v5502, %v5501
    %v5855 = vpack.c.b16 %v5504, %v5503
    %v5856 = vpack.c.b16 %v5506, %v5505
    %v5857 = vpack.c.b16 %v5508, %v5507
    %v5858 = vpack.c.b16 %v5510, %v5509
    %v5859 = vpack.c.b16 %v5512, %v5511
    %v5860 = vpack.c.b16 %v5514, %v5513
    %v5861 = vpack.c.b16 %v5516, %v5515
    %v5862 = vpack.c.b16 %v5518, %v5517
    %v5863 = vpack.c.b16 %v5520, %v5519
    %v5864 = vpack.c.b16 %v5522, %v5521
    %v5865 = vpack.c.b16 %v5524, %v5523
    %v5866 = vpack.c.b16 %v5526, %v5525
    %v5867 = vpack.c.b16 %v5528, %v5527
    %v5868 = vpack.c.b16 %v5530, %v5529
    %v5869 = vpack.c.b16 %v5532, %v5531
    %v5870 = vpack.c.b16 %v5534, %v5533
    %v5871 = vpack.c.b16 %v5536, %v5535
    %v5872 = vpack.c.b16 %v5538, %v5537
    %v5873 = vpack.c.b16 %v5540, %v5539
    %v5874 = vpack.c.b16 %v5542, %v5541
    %v5875 = vpack.c.b16 %v5544, %v5543
    %v5876 = vpack.c.b16 %v5546, %v5545
    %v5877 = vpack.c.b16 %v5548, %v5547
    %v5878 = vpack.c.b16 %v5550, %v5549
    %v5879 = vpack.c.b16 %v5552, %v5551
    %v5880 = vpack.c.b16 %v5554, %v5553
    %v5881 = vpack.c.b16 %v5556, %v5555
    %v5882 = vpack.c.b16 %v5558, %v5557
    %v5883 = vpack.c.b16 %v5560, %v5559
    %v5884 = vpack.c.b16 %v5562, %v5561
    %v5885 = vpack.c.b16 %v5564, %v5563
    %v5886 = vpack.c.b16 %v5566, %v5565
    %v5887 = vpack.c.b16 %v5568, %v5567
    %v5888 = vpack.c.b16 %v5570, %v5569
    %v5889 = vpack.c.b16 %v5572, %v5571
    %v5890 = vpack.c.b16 %v5574, %v5573
    %v5891 = vpack.c.b16 %v5576, %v5575
    %v5892 = vpack.c.b16 %v5578, %v5577
    %v5893 = vpack.c.b16 %v5580, %v5579
    %v5894 = vpack.c.b16 %v5582, %v5581
    %v5895 = vpack.c.b16 %v5584, %v5583
    %v5896 = vpack.c.b16 %v5586, %v5585
    %v5897 = vpack.c.b16 %v5588, %v5587
    %v5898 = vpack.c.b16 %v5590, %v5589
    %v5899 = vpack.c.b16 %v5592, %v5591
    %v5900 = vpack.c.b16 %v5594, %v5593
    %v5901 = vpack.c.b16 %v5596, %v5595
    %v5902 = vpack.c.b16 %v5598, %v5597
    %v5903 = vpack.c.b16 %v5600, %v5599
    %v5904 = vpack.c.b16 %v5602, %v5601
    %v5905 = vpack.c.b16 %v5604, %v5603
    %v5906 = vpack.c.b16 %v5606, %v5605
    %v5907 = vpack.c.b16 %v5608, %v5607
    %v5908 = vpack.c.b16 %v5610, %v5609
    %v5909 = vpack.c.b16 %v5612, %v5611
    %v5910 = vpack.c.b16 %v5614, %v5613
    %v5911 = vpack.c.b16 %v5616, %v5615
    %v5912 = vpack.c.b16 %v5618, %v5617
    %v5913 = vpack.c.b16 %v5620, %v5619
    %v5914 = vpack.c.b16 %v5622, %v5621
    %v5915 = vpack.c.b16 %v5624, %v5623
    %v5916 = vpack.c.b16 %v5626, %v5625
    %v5917 = vpack.c.b16 %v5628, %v5627
    %v5918 = vpack.c.b16 %v5630, %v5629
    %v5919 = vpack.c.b16 %v5632, %v5631
    %v5920 = vpack.c.b16 %v5634, %v5633
    %v5921 = vpack.c.b16 %v5636, %v5635
    %v5922 = vpack.c.b16 %v5638, %v5637
    %v5923 = vpack.c.b16 %v5640, %v5639
    %v5924 = vpack.c.b16 %v5642, %v5641
    %v5925 = vpack.c.b16 %v5644, %v5643
    %v5926 = vpack.c.b16 %v5646, %v5645
    %v5927 = vpack.c.b16 %v5648, %v5647
    %v5928 = vpack.c.b16 %v5650, %v5649
    %v5929 = vpack.c.b16 %v5652, %v5651
    %v5930 = vpack.c.b16 %v5654, %v5653
    %v5931 = vpack.c.b16 %v5656, %v5655
    %v5932 = vpack.c.b16 %v5658, %v5657
    %v5933 = vpack.c.b16 %v5660, %v5659
    %v5934 = vpack.c.b16 %v5662, %v5661
    %v5935 = vpack.c.b16 %v5664, %v5663
    %v5936 = vpack.c.b16 %v5666, %v5665
    %v5937 = vpack.c.b16 %v5668, %v5667
    %v5938 = vpack.c.b16 %v5670, %v5669
    %v5939 = vpack.c.b16 %v5672, %v5671
    %v5940 = vpack.c.b16 %v5674, %v5673
    %v5941 = vpack.c.b16 %v5676, %v5675
    %v5942 = vpack.c.b16 %v5678, %v5677
    %v5943 = vpack.c.b16 %v5680, %v5679
    %v5944 = vpack.c.b16 %v5682, %v5681
    %v5945 = vpack.c.b16 %v5684, %v5683
    %v5946 = vpack.c.b16 %v5686, %v5685
    %v5947 = vpack.c.b16 %v5688, %v5687
    %v5948 = vpack.c.b16 %v5690, %v5689
    %v5949 = vpack.c.b16 %v5692, %v5691
    %v5950 = vpack.c.b16 %v5694, %v5693
    %v5951 = vpack.c.b16 %v5696, %v5695
    %v5952 = vpack.c.b16 %v5698, %v5697
    %v5953 = vpack.c.b16 %v5700, %v5699
    %v5954 = vpack.c.b16 %v5702, %v5701
    %v5955 = vpack.c.b16 %v5704, %v5703
    %v5956 = vpack.c.b16 %v5706, %v5705
    %v5957 = vpack.c.b16 %v5708, %v5707
    %v5958 = vpack.c.b16 %v5710, %v5709
    %v5959 = vpack.c.b16 %v5712, %v5711
    %v5960 = vpack.c.b16 %v5714, %v5713
    %v5961 = vpack.c.b16 %v5716, %v5715
    %v5962 = vpack.c.b16 %v5718, %v5717
    %v5963 = vpack.c.b16 %v5720, %v5719
    %v5964 = vpack.c.b16 %v5722, %v5721
    %v5965 = vpack.c.b16 %v5724, %v5723
    %v5966 = vpack.c.b16 %v5726, %v5725
    %v5967 = vpack.c.b16 %v5728, %v5727
    %v5968 = vpack.c.b16 %v5730, %v5729
    %v5969 = vpack.c.b16 %v5732, %v5731
    %v5970 = vpack.c.b16 %v5734, %v5733
    %v5971 = vpack.c.b16 %v5736, %v5735
    %v5972 = vpack.c.b16 %v5738, %v5737
    %v5973 = vpack.c.b16 %v5740, %v5739
    %v5974 = vpack.c.b16 %v5742, %v5741
    %v5975 = vpack.c.b16 %v5744, %v5743
    %v5976 = vpack.c.b16 %v5746, %v5745
    %v5977 = vpack.c.b16 %v5748, %v5747
    %v5978 = vpack.c.b16 %v5750, %v5749
    %v5979 = vpack.c.b16 %v5752, %v5751
    %v5980 = vpack.c.b16 %v5754, %v5753
    %v5981 = vpack.c.b16 %v5756, %v5755
    %v5982 = vpack.c.b16 %v5758, %v5757
    %v5983 = vpack.c.b16 %v5760, %v5759
    %v5984 = vpack.c.b16 %v5762, %v5761
    %v5985 = vpack.c.b16 %v5764, %v5763
    %v5986 = vpack.c.b16 %v5766, %v5765
    %v5987 = vpack.c.b16 %v5768, %v5767
    %v5988 = vpack.c.b16 %v5770, %v5769
    %v5989 = vpack.c.b16 %v5772, %v5771
    %v5990 = vpack.c.b16 %v5774, %v5773
    %v5991 = vpack.c.b16 %v5776, %v5775
    %v5992 = vpack.c.b16 %v5778, %v5777
    %v5993 = vpack.c.b16 %v5780, %v5779
    %v5994 = vpack.c.b16 %v5782, %v5781
    %v5995 = vpack.c.b16 %v5784, %v5783
    %v5996 = vpack.c.b16 %v5786, %v5785
    %v5997 = vpack.c.b16 %v5788, %v5787
    %v5998 = vpack.c.b16 %v5790, %v5789
    %v5999 = vpack.c.b16 %v5792, %v5791
    %v6000 = vpack.c.b16 %v5794, %v5793
    %v6001 = vpack.c.b16 %v5796, %v5795
    %v6002 = vpack.c.b16 %v5798, %v5797
    %v6003 = vpack.c.b16 %v5800, %v5799
    %v6004 = vpack.c.b16 %v5802, %v5801
    %v6005 = vpack.c.b16 %v5804, %v5803
    %v6006 = vpack.c.b16 %v5806, %v5805
    %v6007 = vpack.c.b16 %v5808, %v5807
    %v6008 = vpack.c.b16 %v5810, %v5809
    %v6009 = vpack.c.b16 %v5812, %v5811
    %v6010 = vpack.c.b16 %v5814, %v5813
    %v6011 = vpack.c.b16 %v5816, %v5815
    %v6012 = vpack.c.b16 %v5818, %v5817
    %v6013 = vpack.c.b16 %v5820, %v5819
    %v6014 = vpack.c.b16 %v5822, %v5821
    %6207 = vmatprep.subr.bf16.mxu0 0
    %6208 = vmatpush1.bf16.msra.mxu0 %v5830
    %6209 = vmatprep.subr.bf16.mxu0 0
    %6210 = vmatpush1.bf16.msra.mxu0 %v5829
    %6211 = vmatprep.subr.bf16.mxu0 0
    %6212 = vmatpush1.bf16.msra.mxu0 %v5828
    %6213 = vmatprep.subr.bf16.mxu0 0
    %6214 = vmatpush1.bf16.msra.mxu0 %v5827
    %6215 = vmatprep.subr.bf16.mxu0 0
    %6216 = vmatpush1.bf16.msra.mxu0 %v5826
    %6217 = vmatprep.subr.bf16.mxu0 0
    %6218 = vmatpush1.bf16.msra.mxu0 %v5825
    %6219 = vmatprep.subr.bf16.mxu0 0
    %6220 = vmatpush1.bf16.msra.mxu0 %v5824
    %6221 = vmatprep.subr.bf16.mxu0 0
    %6222 = vmatpush1.bf16.msra.mxu0 %v5823
    %6223 = vmatprep.subr.bf16.mxu0 0
    %6224 = vmatpush2.bf16.msra.mxu0 %v5838
    %6225 = vmatprep.subr.bf16.mxu0 0
    %6226 = vmatpush2.bf16.msra.mxu0 %v5837
    %6227 = vmatprep.subr.bf16.mxu0 0
    %6228 = vmatpush2.bf16.msra.mxu0 %v5836
    %6229 = vmatprep.subr.bf16.mxu0 0
    %6230 = vmatpush2.bf16.msra.mxu0 %v5835
    %6231 = vmatprep.subr.bf16.mxu0 0
    %6232 = vmatpush2.bf16.msra.mxu0 %v5834
    %6233 = vmatprep.subr.bf16.mxu0 0
    %6234 = vmatpush2.bf16.msra.mxu0 %v5833
    %6235 = vmatprep.subr.bf16.mxu0 0
    %6236 = vmatpush2.bf16.msra.mxu0 %v5832
    %6237 = vmatprep.subr.bf16.mxu0 0
    %6238 = vmatpush2.bf16.msra.mxu0 %v5831
    %6239 = vmatprep.mubr.bf16.mxu0 %v4921
    %6240 = vmatmul.mubr.bf16.gmra.mxu0 %v4907
    %v6241 = vpop.f32.mrf.mxu0
    %v6242 = vadd.f32 %v4879, %v6241
    %v6243 = vpop.f32.mrf.mxu0
    %v6244 = vpop.f32.mrf.mxu0
    %v6245 = vpop.f32.mrf.mxu0
    %6246 = vdwg.mxu0
    %6247 = vmatprep.subr.bf16.mxu0 0
    %6248 = vmatpush1.bf16.msra.mxu0 %v5846
    %6249 = vmatprep.subr.bf16.mxu0 0
    %6250 = vmatpush1.bf16.msra.mxu0 %v5845
    %6251 = vmatprep.subr.bf16.mxu0 0
    %6252 = vmatpush1.bf16.msra.mxu0 %v5844
    %6253 = vmatprep.subr.bf16.mxu0 0
    %6254 = vmatpush1.bf16.msra.mxu0 %v5843
    %6255 = vmatprep.subr.bf16.mxu0 0
    %6256 = vmatpush1.bf16.msra.mxu0 %v5842
    %6257 = vmatprep.subr.bf16.mxu0 0
    %6258 = vmatpush1.bf16.msra.mxu0 %v5841
    %6259 = vmatprep.subr.bf16.mxu0 0
    %6260 = vmatpush1.bf16.msra.mxu0 %v5840
    %6261 = vmatprep.subr.bf16.mxu0 0
    %6262 = vmatpush1.bf16.msra.mxu0 %v5839
    %6263 = vmatprep.subr.bf16.mxu0 0
    %6264 = vmatpush2.bf16.msra.mxu0 %v5854
    %6265 = vmatprep.subr.bf16.mxu0 0
    %6266 = vmatpush2.bf16.msra.mxu0 %v5853
    %6267 = vmatprep.subr.bf16.mxu0 0
    %6268 = vmatpush2.bf16.msra.mxu0 %v5852
    %6269 = vmatprep.subr.bf16.mxu0 0
    %6270 = vmatpush2.bf16.msra.mxu0 %v5851
    %6271 = vmatprep.subr.bf16.mxu0 0
    %6272 = vmatpush2.bf16.msra.mxu0 %v5850
    %6273 = vmatprep.subr.bf16.mxu0 0
    %6274 = vmatpush2.bf16.msra.mxu0 %v5849
    %6275 = vmatprep.subr.bf16.mxu0 0
    %6276 = vmatpush2.bf16.msra.mxu0 %v5848
    %6277 = vmatprep.subr.bf16.mxu0 0
    %6278 = vmatpush2.bf16.msra.mxu0 %v5847
    %6279 = vmatprep.mubr.bf16.mxu0 %v4931
    %6280 = vmatmul.mubr.bf16.gmra.mxu0 %v4929
    %v6281 = vpop.f32.mrf.mxu0
    %v6282 = vadd.f32 %v6242, %v6281
    %v6283 = vpop.f32.mrf.mxu0
    %v6284 = vpop.f32.mrf.mxu0
    %v6285 = vpop.f32.mrf.mxu0
    %6286 = vdwg.mxu0
    %6287 = vmatprep.subr.bf16.mxu0 0
    %6288 = vmatpush1.bf16.msra.mxu0 %v5862
    %6289 = vmatprep.subr.bf16.mxu0 0
    %6290 = vmatpush1.bf16.msra.mxu0 %v5861
    %6291 = vmatprep.subr.bf16.mxu0 0
    %6292 = vmatpush1.bf16.msra.mxu0 %v5860
    %6293 = vmatprep.subr.bf16.mxu0 0
    %6294 = vmatpush1.bf16.msra.mxu0 %v5859
    %6295 = vmatprep.subr.bf16.mxu0 0
    %6296 = vmatpush1.bf16.msra.mxu0 %v5858
    %6297 = vmatprep.subr.bf16.mxu0 0
    %6298 = vmatpush1.bf16.msra.mxu0 %v5857
    %6299 = vmatprep.subr.bf16.mxu0 0
    %6300 = vmatpush1.bf16.msra.mxu0 %v5856
    %6301 = vmatprep.subr.bf16.mxu0 0
    %6302 = vmatpush1.bf16.msra.mxu0 %v5855
    %6303 = vmatprep.subr.bf16.mxu0 0
    %6304 = vmatpush2.bf16.msra.mxu0 %v5870
    %6305 = vmatprep.subr.bf16.mxu0 0
    %6306 = vmatpush2.bf16.msra.mxu0 %v5869
    %6307 = vmatprep.subr.bf16.mxu0 0
    %6308 = vmatpush2.bf16.msra.mxu0 %v5868
    %6309 = vmatprep.subr.bf16.mxu0 0
    %6310 = vmatpush2.bf16.msra.mxu0 %v5867
    %6311 = vmatprep.subr.bf16.mxu0 0
    %6312 = vmatpush2.bf16.msra.mxu0 %v5866
    %6313 = vmatprep.subr.bf16.mxu0 0
    %6314 = vmatpush2.bf16.msra.mxu0 %v5865
    %6315 = vmatprep.subr.bf16.mxu0 0
    %6316 = vmatpush2.bf16.msra.mxu0 %v5864
    %6317 = vmatprep.subr.bf16.mxu0 0
    %6318 = vmatpush2.bf16.msra.mxu0 %v5863
    %6319 = vmatprep.mubr.bf16.mxu0 %v4928
    %6320 = vmatmul.mubr.bf16.gmra.mxu0 %v4914
    %v6321 = vpop.f32.mrf.mxu0
    %v6322 = vadd.f32 %v6282, %v6321
    %v6323 = vpop.f32.mrf.mxu0
    %v6324 = vpop.f32.mrf.mxu0
    %v6325 = vpop.f32.mrf.mxu0
    %6326 = vdwg.mxu0
    %6327 = vmatprep.subr.bf16.mxu0 0
    %6328 = vmatpush1.bf16.msra.mxu0 %v5878
    %6329 = vmatprep.subr.bf16.mxu0 0
    %6330 = vmatpush1.bf16.msra.mxu0 %v5877
    %6331 = vmatprep.subr.bf16.mxu0 0
    %6332 = vmatpush1.bf16.msra.mxu0 %v5876
    %6333 = vmatprep.subr.bf16.mxu0 0
    %6334 = vmatpush1.bf16.msra.mxu0 %v5875
    %6335 = vmatprep.subr.bf16.mxu0 0
    %6336 = vmatpush1.bf16.msra.mxu0 %v5874
    %6337 = vmatprep.subr.bf16.mxu0 0
    %6338 = vmatpush1.bf16.msra.mxu0 %v5873
    %6339 = vmatprep.subr.bf16.mxu0 0
    %6340 = vmatpush1.bf16.msra.mxu0 %v5872
    %6341 = vmatprep.subr.bf16.mxu0 0
    %6342 = vmatpush1.bf16.msra.mxu0 %v5871
    %6343 = vmatprep.subr.bf16.mxu0 0
    %6344 = vmatpush2.bf16.msra.mxu0 %v5886
    %6345 = vmatprep.subr.bf16.mxu0 0
    %6346 = vmatpush2.bf16.msra.mxu0 %v5885
    %6347 = vmatprep.subr.bf16.mxu0 0
    %6348 = vmatpush2.bf16.msra.mxu0 %v5884
    %6349 = vmatprep.subr.bf16.mxu0 0
    %6350 = vmatpush2.bf16.msra.mxu0 %v5883
    %6351 = vmatprep.subr.bf16.mxu0 0
    %6352 = vmatpush2.bf16.msra.mxu0 %v5882
    %6353 = vmatprep.subr.bf16.mxu0 0
    %6354 = vmatpush2.bf16.msra.mxu0 %v5881
    %6355 = vmatprep.subr.bf16.mxu0 0
    %6356 = vmatpush2.bf16.msra.mxu0 %v5880
    %6357 = vmatprep.subr.bf16.mxu0 0
    %6358 = vmatpush2.bf16.msra.mxu0 %v5879
    %6359 = vmatprep.mubr.bf16.mxu0 %v4932
    %6360 = vmatmul.mubr.bf16.gmra.mxu0 %v4930
    %v6361 = vpop.f32.mrf.mxu0
    %v6362 = vadd.f32 %v6322, %v6361
    %v6363 = vpop.f32.mrf.mxu0
    %v6364 = vpop.f32.mrf.mxu0
    %v6365 = vpop.f32.mrf.mxu0
    %6366 = vdwg.mxu0
    %6367 = vmatprep.subr.bf16.mxu0 0
    %6368 = vmatpush1.bf16.msra.mxu0 %v5894
    %6369 = vmatprep.subr.bf16.mxu0 0
    %6370 = vmatpush1.bf16.msra.mxu0 %v5893
    %6371 = vmatprep.subr.bf16.mxu0 0
    %6372 = vmatpush1.bf16.msra.mxu0 %v5892
    %6373 = vmatprep.subr.bf16.mxu0 0
    %6374 = vmatpush1.bf16.msra.mxu0 %v5891
    %6375 = vmatprep.subr.bf16.mxu0 0
    %6376 = vmatpush1.bf16.msra.mxu0 %v5890
    %6377 = vmatprep.subr.bf16.mxu0 0
    %6378 = vmatpush1.bf16.msra.mxu0 %v5889
    %6379 = vmatprep.subr.bf16.mxu0 0
    %6380 = vmatpush1.bf16.msra.mxu0 %v5888
    %6381 = vmatprep.subr.bf16.mxu0 0
    %6382 = vmatpush1.bf16.msra.mxu0 %v5887
    %6383 = vmatprep.subr.bf16.mxu0 0
    %6384 = vmatpush2.bf16.msra.mxu0 %v5902
    %6385 = vmatprep.subr.bf16.mxu0 0
    %6386 = vmatpush2.bf16.msra.mxu0 %v5901
    %6387 = vmatprep.subr.bf16.mxu0 0
    %6388 = vmatpush2.bf16.msra.mxu0 %v5900
    %6389 = vmatprep.subr.bf16.mxu0 0
    %6390 = vmatpush2.bf16.msra.mxu0 %v5899
    %6391 = vmatprep.subr.bf16.mxu0 0
    %6392 = vmatpush2.bf16.msra.mxu0 %v5898
    %6393 = vmatprep.subr.bf16.mxu0 0
    %6394 = vmatpush2.bf16.msra.mxu0 %v5897
    %6395 = vmatprep.subr.bf16.mxu0 0
    %6396 = vmatpush2.bf16.msra.mxu0 %v5896
    %6397 = vmatprep.subr.bf16.mxu0 0
    %6398 = vmatpush2.bf16.msra.mxu0 %v5895
    %6399 = vmatprep.mubr.bf16.mxu0 %v4970
    %6400 = vmatmul.mubr.bf16.gmra.mxu0 %v4956
    %v6401 = vpop.f32.mrf.mxu0
    %v6402 = vadd.f32 %v6362, %v6401
    %v6403 = vpop.f32.mrf.mxu0
    %v6404 = vpop.f32.mrf.mxu0
    %v6405 = vpop.f32.mrf.mxu0
    %6406 = vdwg.mxu0
    %6407 = vmatprep.subr.bf16.mxu0 0
    %6408 = vmatpush1.bf16.msra.mxu0 %v5910
    %6409 = vmatprep.subr.bf16.mxu0 0
    %6410 = vmatpush1.bf16.msra.mxu0 %v5909
    %6411 = vmatprep.subr.bf16.mxu0 0
    %6412 = vmatpush1.bf16.msra.mxu0 %v5908
    %6413 = vmatprep.subr.bf16.mxu0 0
    %6414 = vmatpush1.bf16.msra.mxu0 %v5907
    %6415 = vmatprep.subr.bf16.mxu0 0
    %6416 = vmatpush1.bf16.msra.mxu0 %v5906
    %6417 = vmatprep.subr.bf16.mxu0 0
    %6418 = vmatpush1.bf16.msra.mxu0 %v5905
    %6419 = vmatprep.subr.bf16.mxu0 0
    %6420 = vmatpush1.bf16.msra.mxu0 %v5904
    %6421 = vmatprep.subr.bf16.mxu0 0
    %6422 = vmatpush1.bf16.msra.mxu0 %v5903
    %6423 = vmatprep.subr.bf16.mxu0 0
    %6424 = vmatpush2.bf16.msra.mxu0 %v5918
    %6425 = vmatprep.subr.bf16.mxu0 0
    %6426 = vmatpush2.bf16.msra.mxu0 %v5917
    %6427 = vmatprep.subr.bf16.mxu0 0
    %6428 = vmatpush2.bf16.msra.mxu0 %v5916
    %6429 = vmatprep.subr.bf16.mxu0 0
    %6430 = vmatpush2.bf16.msra.mxu0 %v5915
    %6431 = vmatprep.subr.bf16.mxu0 0
    %6432 = vmatpush2.bf16.msra.mxu0 %v5914
    %6433 = vmatprep.subr.bf16.mxu0 0
    %6434 = vmatpush2.bf16.msra.mxu0 %v5913
    %6435 = vmatprep.subr.bf16.mxu0 0
    %6436 = vmatpush2.bf16.msra.mxu0 %v5912
    %6437 = vmatprep.subr.bf16.mxu0 0
    %6438 = vmatpush2.bf16.msra.mxu0 %v5911
    %6439 = vmatprep.mubr.bf16.mxu0 %v4980
    %6440 = vmatmul.mubr.bf16.gmra.mxu0 %v4978
    %v6441 = vpop.f32.mrf.mxu0
    %v6442 = vadd.f32 %v6402, %v6441
    %v6443 = vpop.f32.mrf.mxu0
    %v6444 = vpop.f32.mrf.mxu0
    %v6445 = vpop.f32.mrf.mxu0
    %6446 = vdwg.mxu0
    %6447 = vmatprep.subr.bf16.mxu0 0
    %6448 = vmatpush1.bf16.msra.mxu0 %v5926
    %6449 = vmatprep.subr.bf16.mxu0 0
    %6450 = vmatpush1.bf16.msra.mxu0 %v5925
    %6451 = vmatprep.subr.bf16.mxu0 0
    %6452 = vmatpush1.bf16.msra.mxu0 %v5924
    %6453 = vmatprep.subr.bf16.mxu0 0
    %6454 = vmatpush1.bf16.msra.mxu0 %v5923
    %6455 = vmatprep.subr.bf16.mxu0 0
    %6456 = vmatpush1.bf16.msra.mxu0 %v5922
    %6457 = vmatprep.subr.bf16.mxu0 0
    %6458 = vmatpush1.bf16.msra.mxu0 %v5921
    %6459 = vmatprep.subr.bf16.mxu0 0
    %6460 = vmatpush1.bf16.msra.mxu0 %v5920
    %6461 = vmatprep.subr.bf16.mxu0 0
    %6462 = vmatpush1.bf16.msra.mxu0 %v5919
    %6463 = vmatprep.subr.bf16.mxu0 0
    %6464 = vmatpush2.bf16.msra.mxu0 %v5934
    %6465 = vmatprep.subr.bf16.mxu0 0
    %6466 = vmatpush2.bf16.msra.mxu0 %v5933
    %6467 = vmatprep.subr.bf16.mxu0 0
    %6468 = vmatpush2.bf16.msra.mxu0 %v5932
    %6469 = vmatprep.subr.bf16.mxu0 0
    %6470 = vmatpush2.bf16.msra.mxu0 %v5931
    %6471 = vmatprep.subr.bf16.mxu0 0
    %6472 = vmatpush2.bf16.msra.mxu0 %v5930
    %6473 = vmatprep.subr.bf16.mxu0 0
    %6474 = vmatpush2.bf16.msra.mxu0 %v5929
    %6475 = vmatprep.subr.bf16.mxu0 0
    %6476 = vmatpush2.bf16.msra.mxu0 %v5928
    %6477 = vmatprep.subr.bf16.mxu0 0
    %6478 = vmatpush2.bf16.msra.mxu0 %v5927
    %6479 = vmatprep.mubr.bf16.mxu0 %v4977
    %6480 = vmatmul.mubr.bf16.gmra.mxu0 %v4963
    %v6481 = vpop.f32.mrf.mxu0
    %v6482 = vadd.f32 %v6442, %v6481
    %v6483 = vpop.f32.mrf.mxu0
    %v6484 = vpop.f32.mrf.mxu0
    %v6485 = vpop.f32.mrf.mxu0
    %6486 = vdwg.mxu0
    %6487 = vmatprep.subr.bf16.mxu0 0
    %6488 = vmatpush1.bf16.msra.mxu0 %v5942
    %6489 = vmatprep.subr.bf16.mxu0 0
    %6490 = vmatpush1.bf16.msra.mxu0 %v5941
    %6491 = vmatprep.subr.bf16.mxu0 0
    %6492 = vmatpush1.bf16.msra.mxu0 %v5940
    %6493 = vmatprep.subr.bf16.mxu0 0
    %6494 = vmatpush1.bf16.msra.mxu0 %v5939
    %6495 = vmatprep.subr.bf16.mxu0 0
    %6496 = vmatpush1.bf16.msra.mxu0 %v5938
    %6497 = vmatprep.subr.bf16.mxu0 0
    %6498 = vmatpush1.bf16.msra.mxu0 %v5937
    %6499 = vmatprep.subr.bf16.mxu0 0
    %6500 = vmatpush1.bf16.msra.mxu0 %v5936
    %6501 = vmatprep.subr.bf16.mxu0 0
    %6502 = vmatpush1.bf16.msra.mxu0 %v5935
    %6503 = vmatprep.subr.bf16.mxu0 0
    %6504 = vmatpush2.bf16.msra.mxu0 %v5950
    %6505 = vmatprep.subr.bf16.mxu0 0
    %6506 = vmatpush2.bf16.msra.mxu0 %v5949
    %6507 = vmatprep.subr.bf16.mxu0 0
    %6508 = vmatpush2.bf16.msra.mxu0 %v5948
    %6509 = vmatprep.subr.bf16.mxu0 0
    %6510 = vmatpush2.bf16.msra.mxu0 %v5947
    %6511 = vmatprep.subr.bf16.mxu0 0
    %6512 = vmatpush2.bf16.msra.mxu0 %v5946
    %6513 = vmatprep.subr.bf16.mxu0 0
    %6514 = vmatpush2.bf16.msra.mxu0 %v5945
    %6515 = vmatprep.subr.bf16.mxu0 0
    %6516 = vmatpush2.bf16.msra.mxu0 %v5944
    %6517 = vmatprep.subr.bf16.mxu0 0
    %6518 = vmatpush2.bf16.msra.mxu0 %v5943
    %6519 = vmatprep.mubr.bf16.mxu0 %v4981
    %6520 = vmatmul.mubr.bf16.gmra.mxu0 %v4979
    %v6521 = vpop.f32.mrf.mxu0
    %v6522 = vadd.f32 %v6482, %v6521
    %v6523 = vpop.f32.mrf.mxu0
    %v6524 = vpop.f32.mrf.mxu0
    %v6525 = vpop.f32.mrf.mxu0
    %6526 = vdwg.mxu0
    %6527 = vmatprep.subr.bf16.mxu0 0
    %6528 = vmatpush1.bf16.msra.mxu0 %v5958
    %6529 = vmatprep.subr.bf16.mxu0 0
    %6530 = vmatpush1.bf16.msra.mxu0 %v5957
    %6531 = vmatprep.subr.bf16.mxu0 0
    %6532 = vmatpush1.bf16.msra.mxu0 %v5956
    %6533 = vmatprep.subr.bf16.mxu0 0
    %6534 = vmatpush1.bf16.msra.mxu0 %v5955
    %6535 = vmatprep.subr.bf16.mxu0 0
    %6536 = vmatpush1.bf16.msra.mxu0 %v5954
    %6537 = vmatprep.subr.bf16.mxu0 0
    %6538 = vmatpush1.bf16.msra.mxu0 %v5953
    %6539 = vmatprep.subr.bf16.mxu0 0
    %6540 = vmatpush1.bf16.msra.mxu0 %v5952
    %6541 = vmatprep.subr.bf16.mxu0 0
    %6542 = vmatpush1.bf16.msra.mxu0 %v5951
    %6543 = vmatprep.subr.bf16.mxu0 0
    %6544 = vmatpush2.bf16.msra.mxu0 %v5966
    %6545 = vmatprep.subr.bf16.mxu0 0
    %6546 = vmatpush2.bf16.msra.mxu0 %v5965
    %6547 = vmatprep.subr.bf16.mxu0 0
    %6548 = vmatpush2.bf16.msra.mxu0 %v5964
    %6549 = vmatprep.subr.bf16.mxu0 0
    %6550 = vmatpush2.bf16.msra.mxu0 %v5963
    %6551 = vmatprep.subr.bf16.mxu0 0
    %6552 = vmatpush2.bf16.msra.mxu0 %v5962
    %6553 = vmatprep.subr.bf16.mxu0 0
    %6554 = vmatpush2.bf16.msra.mxu0 %v5961
    %6555 = vmatprep.subr.bf16.mxu0 0
    %6556 = vmatpush2.bf16.msra.mxu0 %v5960
    %6557 = vmatprep.subr.bf16.mxu0 0
    %6558 = vmatpush2.bf16.msra.mxu0 %v5959
    %6559 = vmatprep.mubr.bf16.mxu0 %v5019
    %6560 = vmatmul.mubr.bf16.gmra.mxu0 %v5005
    %v6561 = vpop.f32.mrf.mxu0
    %v6562 = vadd.f32 %v6522, %v6561
    %v6563 = vpop.f32.mrf.mxu0
    %v6564 = vpop.f32.mrf.mxu0
    %v6565 = vpop.f32.mrf.mxu0
    %6566 = vdwg.mxu0
    %6567 = vmatprep.subr.bf16.mxu0 0
    %6568 = vmatpush1.bf16.msra.mxu0 %v5974
    %6569 = vmatprep.subr.bf16.mxu0 0
    %6570 = vmatpush1.bf16.msra.mxu0 %v5973
    %6571 = vmatprep.subr.bf16.mxu0 0
    %6572 = vmatpush1.bf16.msra.mxu0 %v5972
    %6573 = vmatprep.subr.bf16.mxu0 0
    %6574 = vmatpush1.bf16.msra.mxu0 %v5971
    %6575 = vmatprep.subr.bf16.mxu0 0
    %6576 = vmatpush1.bf16.msra.mxu0 %v5970
    %6577 = vmatprep.subr.bf16.mxu0 0
    %6578 = vmatpush1.bf16.msra.mxu0 %v5969
    %6579 = vmatprep.subr.bf16.mxu0 0
    %6580 = vmatpush1.bf16.msra.mxu0 %v5968
    %6581 = vmatprep.subr.bf16.mxu0 0
    %6582 = vmatpush1.bf16.msra.mxu0 %v5967
    %6583 = vmatprep.subr.bf16.mxu0 0
    %6584 = vmatpush2.bf16.msra.mxu0 %v5982
    %6585 = vmatprep.subr.bf16.mxu0 0
    %6586 = vmatpush2.bf16.msra.mxu0 %v5981
    %6587 = vmatprep.subr.bf16.mxu0 0
    %6588 = vmatpush2.bf16.msra.mxu0 %v5980
    %6589 = vmatprep.subr.bf16.mxu0 0
    %6590 = vmatpush2.bf16.msra.mxu0 %v5979
    %6591 = vmatprep.subr.bf16.mxu0 0
    %6592 = vmatpush2.bf16.msra.mxu0 %v5978
    %6593 = vmatprep.subr.bf16.mxu0 0
    %6594 = vmatpush2.bf16.msra.mxu0 %v5977
    %6595 = vmatprep.subr.bf16.mxu0 0
    %6596 = vmatpush2.bf16.msra.mxu0 %v5976
    %6597 = vmatprep.subr.bf16.mxu0 0
    %6598 = vmatpush2.bf16.msra.mxu0 %v5975
    %6599 = vmatprep.mubr.bf16.mxu0 %v5029
    %6600 = vmatmul.mubr.bf16.gmra.mxu0 %v5027
    %v6601 = vpop.f32.mrf.mxu0
    %v6602 = vadd.f32 %v6562, %v6601
    %v6603 = vpop.f32.mrf.mxu0
    %v6604 = vpop.f32.mrf.mxu0
    %v6605 = vpop.f32.mrf.mxu0
    %6606 = vdwg.mxu0
    %6607 = vmatprep.subr.bf16.mxu0 0
    %6608 = vmatpush1.bf16.msra.mxu0 %v5990
    %6609 = vmatprep.subr.bf16.mxu0 0
    %6610 = vmatpush1.bf16.msra.mxu0 %v5989
    %6611 = vmatprep.subr.bf16.mxu0 0
    %6612 = vmatpush1.bf16.msra.mxu0 %v5988
    %6613 = vmatprep.subr.bf16.mxu0 0
    %6614 = vmatpush1.bf16.msra.mxu0 %v5987
    %6615 = vmatprep.subr.bf16.mxu0 0
    %6616 = vmatpush1.bf16.msra.mxu0 %v5986
    %6617 = vmatprep.subr.bf16.mxu0 0
    %6618 = vmatpush1.bf16.msra.mxu0 %v5985
    %6619 = vmatprep.subr.bf16.mxu0 0
    %6620 = vmatpush1.bf16.msra.mxu0 %v5984
    %6621 = vmatprep.subr.bf16.mxu0 0
    %6622 = vmatpush1.bf16.msra.mxu0 %v5983
    %6623 = vmatprep.subr.bf16.mxu0 0
    %6624 = vmatpush2.bf16.msra.mxu0 %v5998
    %6625 = vmatprep.subr.bf16.mxu0 0
    %6626 = vmatpush2.bf16.msra.mxu0 %v5997
    %6627 = vmatprep.subr.bf16.mxu0 0
    %6628 = vmatpush2.bf16.msra.mxu0 %v5996
    %6629 = vmatprep.subr.bf16.mxu0 0
    %6630 = vmatpush2.bf16.msra.mxu0 %v5995
    %6631 = vmatprep.subr.bf16.mxu0 0
    %6632 = vmatpush2.bf16.msra.mxu0 %v5994
    %6633 = vmatprep.subr.bf16.mxu0 0
    %6634 = vmatpush2.bf16.msra.mxu0 %v5993
    %6635 = vmatprep.subr.bf16.mxu0 0
    %6636 = vmatpush2.bf16.msra.mxu0 %v5992
    %6637 = vmatprep.subr.bf16.mxu0 0
    %6638 = vmatpush2.bf16.msra.mxu0 %v5991
    %6639 = vmatprep.mubr.bf16.mxu0 %v5026
    %6640 = vmatmul.mubr.bf16.gmra.mxu0 %v5012
    %v6641 = vpop.f32.mrf.mxu0
    %v6642 = vadd.f32 %v6602, %v6641
    %v6643 = vpop.f32.mrf.mxu0
    %v6644 = vpop.f32.mrf.mxu0
    %v6645 = vpop.f32.mrf.mxu0
    %6646 = vdwg.mxu0
    %6647 = vmatprep.subr.bf16.mxu0 0
    %6648 = vmatpush1.bf16.msra.mxu0 %v6006
    %6649 = vmatprep.subr.bf16.mxu0 0
    %6650 = vmatpush1.bf16.msra.mxu0 %v6005
    %6651 = vmatprep.subr.bf16.mxu0 0
    %6652 = vmatpush1.bf16.msra.mxu0 %v6004
    %6653 = vmatprep.subr.bf16.mxu0 0
    %6654 = vmatpush1.bf16.msra.mxu0 %v6003
    %6655 = vmatprep.subr.bf16.mxu0 0
    %6656 = vmatpush1.bf16.msra.mxu0 %v6002
    %6657 = vmatprep.subr.bf16.mxu0 0
    %6658 = vmatpush1.bf16.msra.mxu0 %v6001
    %6659 = vmatprep.subr.bf16.mxu0 0
    %6660 = vmatpush1.bf16.msra.mxu0 %v6000
    %6661 = vmatprep.subr.bf16.mxu0 0
    %6662 = vmatpush1.bf16.msra.mxu0 %v5999
    %6663 = vmatprep.subr.bf16.mxu0 0
    %6664 = vmatpush2.bf16.msra.mxu0 %v6014
    %6665 = vmatprep.subr.bf16.mxu0 0
    %6666 = vmatpush2.bf16.msra.mxu0 %v6013
    %6667 = vmatprep.subr.bf16.mxu0 0
    %6668 = vmatpush2.bf16.msra.mxu0 %v6012
    %6669 = vmatprep.subr.bf16.mxu0 0
    %6670 = vmatpush2.bf16.msra.mxu0 %v6011
    %6671 = vmatprep.subr.bf16.mxu0 0
    %6672 = vmatpush2.bf16.msra.mxu0 %v6010
    %6673 = vmatprep.subr.bf16.mxu0 0
    %6674 = vmatpush2.bf16.msra.mxu0 %v6009
    %6675 = vmatprep.subr.bf16.mxu0 0
    %6676 = vmatpush2.bf16.msra.mxu0 %v6008
    %6677 = vmatprep.subr.bf16.mxu0 0
    %6678 = vmatpush2.bf16.msra.mxu0 %v6007
    %6679 = vmatprep.mubr.bf16.mxu0 %v5030
    %6680 = vmatmul.mubr.bf16.gmra.mxu0 %v5028
    %v6681 = vpop.f32.mrf.mxu0
    %v6682 = vadd.f32 %v6642, %v6681
    %v6683 = vpop.f32.mrf.mxu0
    %v6684 = vpop.f32.mrf.mxu0
    %v6685 = vpop.f32.mrf.mxu0
    %6686 = vdwg.mxu0
    %vm6687 = vcmask 517120
    %6688 = vst.msk [vmem:[#allocation2] sm:$0x3] %vm6687, %v6682
    %6690 = vrot.lane.b32.xlu0 %v4486, 64
    %v6691 = vpop.permute.xlu0 %6690
    %vm6693 = vcmask 779776
    %6694 = vst.msk [vmem:[#allocation2] sm:$0x3] %vm6693, %v6691
    %vm6695 = vcmask 1042176
    %6696 = vst.msk [vmem:[#allocation2] sm:$0x3] %vm6695, 0.0
    // Predicated region
    $region62: #{encoder_forward.1} parent=1 // pred_check
      _
    $region63: #{encoder_forward.1} parent=1 // pred_check_branch
      %6698 = sbr.rel (0) target = $region65
    $region64: #{encoder_forward.1} parent=1 // pred_region
      %s6700 = ssub.s32 32, 32
      %6701 = vsyncadd [#allocation3], %s6700
      %s6703 = sshll.u32 [#allocation2], 4
      %s6704 = int_to_ptr.vmem [resolvable:$true] %s6703
      %6706 = dma.vmem_to_hbm [thread:$0]  %s6704, 32, %s15, [#allocation3]
    $region65: #{encoder_forward.1} parent=1 // pred_fallthru
      _
    // Predicated region
    $region66: #{encoder_forward.1} parent=1 // pred_check
      _
    $region67: #{encoder_forward.1} parent=1 // pred_check_branch
      %6708 = sbr.rel (0) target = $region69
    $region68: #{encoder_forward.1} parent=1 // pred_region
      %6709 = dma.done [#allocation3], 32
    $region69: #{encoder_forward.1} parent=1 // pred_fallthru
      _
    %6710 = vsyncpa [#allocation3], 1

</llo_original>
